<compile_context>
chip_gen: v5e
topology: v5e:2x2
jax: 0.10.0
libtpu: 0.0.40
codegen_flags: <defaults>
</compile_context>

<pallas_src>
import functools

import jax
import jax.numpy as jnp
from jax.experimental import pallas as pl
from jax.experimental.pallas import tpu as pltpu

ALPHA = 1.0            # ELU alpha (constants['alpha'])
BN_EPS = 1e-5
K = 10                 # conv kernel width, kernel_size=(1, 10)
PAD_L, PAD_R = 4, 5    # PyTorch padding='same' for an even kernel: left=(K-1)//2
POOL = 3               # MaxPool2d kernel_size=(1, 3), stride=(1, 3)

CPAD = 128             # lane-dense channel padding (conv in/out, layers 1-3)
CPAD_LAST = 256        # layer-4 output channels (200) padded to 2*128 lanes
HPAD = 128             # fc1 / GRU-hidden / fc2 lane padding (one gate per 128 lanes)
OUT_DIM = 4


def _const_spec(shape):
    n = len(shape)
    return pl.BlockSpec(shape, lambda r, _n=n: (0,) * _n)


# ---------------------------------------------------------------------------
# Fused forward kernel: processes ONE batch row per grid step (grid = (B,)).
# ---------------------------------------------------------------------------
def fused_forward_kernel(xp_ref,
                         wc1_ref, wc2_ref, wc3_ref, wc4_ref,
                         bn1_ref, bn2_ref, bn3_ref, bn4_ref,
                         fw1_ref, fb1_ref, wih_ref, bih_ref, bhh_ref,
                         fw2_ref, fb2_ref,
                         out_ref,
                         p2_ref, p3_ref, p4_ref,
                         *, alpha):

    def conv_block(tap, wlen, w_ref, bn_ref):
        """Conv2d(1xK,'same') + bias + ELU + MaxPool(1,3) + BatchNorm2d(eval).

        tap(kw) -> (wlen, cin_pad) f32 slice of the zero-padded input at offset kw.
        Returns the pooled, normalized activation (wlen // 3, cout_pad) in f32.
        """
        cout = w_ref.shape[2]
        bias = bn_ref[0:1, :]
        scale = bn_ref[1:2, :]
        shift = bn_ref[2:3, :]
        acc = jnp.zeros((wlen, cout), jnp.float32)
        # Conv as K shifted-tap matmuls: im2col never materializes outside VMEM.
        # bf16 operands on the MXU, f32 accumulation.
        for kw in range(K):
            acc = acc + jnp.dot(tap(kw).astype(jnp.bfloat16), w_ref[kw],
                                preferred_element_type=jnp.float32)
        y = acc + bias
        # ELU; exp is clamped so the inactive branch never overflows.
        y = jnp.where(y > 0.0, y, alpha * (jnp.exp(jnp.minimum(y, 0.0)) - 1.0))
        # MaxPool2d(1, 3): wlen is divisible by 3 at every stage.
        wq = wlen // POOL
        y = jnp.max(y.reshape(wq, POOL, cout), axis=1)
        # BatchNorm2d (running stats) folded to a per-channel affine;
        # Dropout == identity in eval mode.
        return y * scale + shift

    def stage(pad_ref, y):
        """Write the pooled activation into the next layer's zero-padded buffer."""
        wq = pad_ref.shape[0] - (K - 1)
        pad_ref[...] = jnp.zeros(pad_ref.shape, pad_ref.dtype)
        pad_ref[PAD_L:PAD_L + wq, :] = y

    w0 = xp_ref.shape[1] - (K - 1)          # 81
    w1l = w0 // POOL                        # 27
    w2l = w1l // POOL                       # 9
    w3l = w2l // POOL                       # 3

    y = conv_block(lambda kw: xp_ref[0, kw:kw + w0, :], w0, wc1_ref, bn1_ref)
    stage(p2_ref, y)
    y = conv_block(lambda kw: p2_ref[kw:kw + w1l, :], w1l, wc2_ref, bn2_ref)
    stage(p3_ref, y)
    y = conv_block(lambda kw: p3_ref[kw:kw + w2l, :], w2l, wc3_ref, bn3_ref)
    stage(p4_ref, y)
    feat = conv_block(lambda kw: p4_ref[kw:kw + w3l, :], w3l, wc4_ref, bn4_ref)
    # feat: (1, 256).  Final spatial extent is 1x1, so PyTorch's NCHW flatten is just
    # the channel axis (valid channels 0..199; the padded tail is exactly zero).

    # fc1 (Flatten + LazyLinear(100)), padded to 128 output lanes.
    h1 = jnp.dot(feat.astype(jnp.bfloat16), fw1_ref[...],
                 preferred_element_type=jnp.float32) + fb1_ref[...]      # (1, 128)
    # GRU(100 -> 10), single time step, h0 == 0: the W_hh @ h0 term vanishes, only
    # bias_hh contributes.  PyTorch gate order [r, z, n]; one gate per 128 lanes.
    gi = jnp.dot(h1.astype(jnp.bfloat16), wih_ref[...],
                 preferred_element_type=jnp.float32) + bih_ref[...]      # (1, 384)
    gh = bhh_ref[...]                                                    # (1, 384)
    r = jax.nn.sigmoid(gi[:, :HPAD] + gh[:, :HPAD])
    z = jax.nn.sigmoid(gi[:, HPAD:2 * HPAD] + gh[:, HPAD:2 * HPAD])
    n = jnp.tanh(gi[:, 2 * HPAD:] + r * gh[:, 2 * HPAD:])
    h_new = (1.0 - z) * n                                                # + z * h0 (== 0)
    # fc2 (Linear(10, 4)); columns >= 4 are zero padding, sliced off by the wrapper.
    res = jnp.dot(h_new.astype(jnp.bfloat16), fw2_ref[...],
                  preferred_element_type=jnp.float32) + fb2_ref[...]     # (1, 128)
    out_ref[0] = res


# ---------------------------------------------------------------------------
# Wrapper: layout plumbing + single pallas_call.
# ---------------------------------------------------------------------------
@jax.jit
def cnn_gru_forward(x_nchw, params):
    conv_ws, conv_bns, fw1, fb1, wih, bih, bhh, fw2, fb2 = params
    B, Cin, Hh, W = x_nchw.shape
    # Fused kernel assumes the PyTorch flatten degenerates to the channel axis:
    # H == 1 and W collapses to 1 after the four MaxPool(1,3) stages.
    # TODO(synk): general H / residual-width flatten needs an in-kernel transpose.
    assert Hh == 1 and W == POOL ** 4
    wq1, wq2, wq3 = W // POOL, W // POOL ** 2, W // POOL ** 3

    # NCHW -> channels-last rows, conv 'same' width pad, channel pad to 128 lanes.
    # (cheap layout plumbing; the 10x im2col expansion happens inside the kernel).
    x_rwc = jnp.transpose(x_nchw, (0, 2, 3, 1)).reshape(B * Hh, W, Cin)
    xp = jnp.pad(x_rwc, ((0, 0), (PAD_L, PAD_R), (0, CPAD - Cin)))

    operands = (xp, *conv_ws, *conv_bns, fw1, fb1, wih, bih, bhh, fw2, fb2)

    # Advisory cost estimate (padded MXU shapes).
    flops = 2 * B * K * CPAD * (W * CPAD + wq1 * CPAD + wq2 * CPAD + wq3 * CPAD_LAST)
    flops += 2 * B * (CPAD_LAST * HPAD + HPAD * 3 * HPAD + HPAD * HPAD)
    transcendentals = B * (CPAD * (W + wq1 + wq2) + CPAD_LAST * wq3 + 3 * HPAD)
    bytes_accessed = sum(int(a.size) * a.dtype.itemsize for a in operands) + B * HPAD * 4

    in_specs = [pl.BlockSpec((1, W + K - 1, CPAD), lambda r: (r, 0, 0))]
    in_specs += [_const_spec(a.shape) for a in operands[1:]]

    out = pl.pallas_call(
        functools.partial(fused_forward_kernel, alpha=ALPHA),
        out_shape=jax.ShapeDtypeStruct((B, 1, HPAD), jnp.float32),
        grid=(B,),
        in_specs=in_specs,
        out_specs=pl.BlockSpec((1, 1, HPAD), lambda r: (r, 0, 0)),
        scratch_shapes=[
            pltpu.VMEM((wq1 + K - 1, CPAD), jnp.float32),   # padded input of layer 2
            pltpu.VMEM((wq2 + K - 1, CPAD), jnp.float32),   # padded input of layer 3
            pltpu.VMEM((wq3 + K - 1, CPAD), jnp.float32),   # padded input of layer 4
        ],
        compiler_params=pltpu.CompilerParams(
            dimension_semantics=("parallel",)),             # v7x: split batch over 2 TCs
        cost_estimate=pl.CostEstimate(
            flops=int(flops), transcendentals=int(transcendentals),
            bytes_accessed=int(bytes_accessed)),
    )(*operands)
    return out[:, 0, :OUT_DIM]


# ---------------------------------------------------------------------------
# Parameter preparation: PyTorch layouts -> padded, lane-dense kernel layouts.
# ---------------------------------------------------------------------------
def prepare_params(raw_conv, raw_head):
    conv_ws, conv_bns = [], []
    for li, (w, b, gamma, beta, mean, var) in enumerate(raw_conv):
        cout, cin, _, k = w.shape                     # PyTorch (Cout, Cin, 1, K)
        coutp = CPAD_LAST if li == len(raw_conv) - 1 else CPAD
        wk = jnp.transpose(w[:, :, 0, :], (2, 1, 0))  # (K, Cin, Cout)
        wkp = jnp.zeros((k, CPAD, coutp), jnp.float32).at[:, :cin, :cout].set(wk)
        conv_ws.append(wkp.astype(jnp.bfloat16))
        scale = gamma / jnp.sqrt(var + BN_EPS)
        shift = beta - mean * scale
        bn = jnp.zeros((3, coutp), jnp.float32)
        bn = bn.at[0, :cout].set(b).at[1, :cout].set(scale).at[2, :cout].set(shift)
        conv_bns.append(bn)

    w1, b1, wih, bih, whh, bhh, w2, b2 = raw_head
    f_out1, f_in1 = w1.shape                          # (100, 200)
    fw1 = (jnp.zeros((CPAD_LAST, HPAD), jnp.float32)
           .at[:f_in1, :f_out1].set(w1.T).astype(jnp.bfloat16))
    fb1 = jnp.zeros((1, HPAD), jnp.float32).at[0, :f_out1].set(b1)

    hg = wih.shape[0] // 3                            # GRU hidden size (10)
    wihp = jnp.zeros((HPAD, 3 * HPAD), jnp.float32)
    bihp = jnp.zeros((1, 3 * HPAD), jnp.float32)
    bhhp = jnp.zeros((1, 3 * HPAD), jnp.float32)
    for g in range(3):                                # gates [r, z, n], one per 128 lanes
        wihp = wihp.at[:f_out1, g * HPAD:g * HPAD + hg].set(wih[g * hg:(g + 1) * hg, :].T)
        bihp = bihp.at[0, g * HPAD:g * HPAD + hg].set(bih[g * hg:(g + 1) * hg])
        bhhp = bhhp.at[0, g * HPAD:g * HPAD + hg].set(bhh[g * hg:(g + 1) * hg])
    wihp = wihp.astype(jnp.bfloat16)
    # NOTE: weight_hh_l0 (whh) multiplies h0 == 0 on the length-1 sequence, so it is
    # intentionally not shipped to the kernel.
    del whh

    f_out2, hg2 = w2.shape                            # (4, 10)
    fw2 = (jnp.zeros((HPAD, HPAD), jnp.float32)
           .at[:hg2, :f_out2].set(w2.T).astype(jnp.bfloat16))
    fb2 = jnp.zeros((1, HPAD), jnp.float32).at[0, :f_out2].set(b2)

    return (tuple(conv_ws), tuple(conv_bns), fw1, fb1, wihp, bihp, bhhp, fw2, fb2)


# ---------------------------------------------------------------------------
# Pure-JAX f32 reference of the PyTorch forward (eval mode) for validation.
# ---------------------------------------------------------------------------
def reference_forward(x_nchw, raw_conv, raw_head, alpha=ALPHA):
    B, Cin, Hh, W = x_nchw.shape
    h = jnp.transpose(x_nchw, (0, 2, 3, 1)).reshape(B * Hh, W, Cin)
    for (w, b, gamma, beta, mean, var) in raw_conv:
        cout, cin, _, k = w.shape
        rows, wlen, _ = h.shape
        hp = jnp.pad(h, ((0, 0), (PAD_L, PAD_R), (0, 0)))
        y = jnp.zeros((rows, wlen, cout), jnp.float32) + b
        for kw in range(k):
            y = y + jnp.einsum('rwc,oc->rwo', hp[:, kw:kw + wlen, :], w[:, :, 0, kw])
        y = jnp.where(y > 0.0, y, alpha * (jnp.exp(jnp.minimum(y, 0.0)) - 1.0))
        y = jnp.max(y.reshape(rows, wlen // POOL, POOL, cout), axis=2)
        scale = gamma / jnp.sqrt(var + BN_EPS)
        h = y * scale + (beta - mean * scale)
    feat = h.reshape(B, -1)                           # H == 1, final W == 1
    w1, b1, wih, bih, whh, bhh, w2, b2 = raw_head
    h1 = feat @ w1.T + b1
    gi = h1 @ wih.T + bih
    gh = bhh                                          # h0 == 0 -> whh contributes nothing
    hg = wih.shape[0] // 3
    r = jax.nn.sigmoid(gi[:, :hg] + gh[:hg])
    z = jax.nn.sigmoid(gi[:, hg:2 * hg] + gh[hg:2 * hg])
    n = jnp.tanh(gi[:, 2 * hg:] + r * gh[2 * hg:])
    h_new = (1.0 - z) * n
    return h_new @ w2.T + b2


if __name__ == "__main__":
    key = jax.random.PRNGKey(0)
    keys = jax.random.split(key, 32)

    # 22 EEG channels, H=1, W=81 so that four MaxPool(1,3) stages give 81->27->9->3->1.
    B, Cin, Hh, W = 2, 22, 1, 81
    x = jax.random.normal(keys[0], (B, Cin, Hh, W), dtype=jnp.float32)

    # ---- deterministic synthetic parameters in native PyTorch layouts ----------
    chans = [22, 25, 50, 100, 200]
    raw_conv = []
    ki = 1
    for layer in range(4):
        cin, cout = chans[layer], chans[layer + 1]
        w = 0.05 * jax.random.normal(keys[ki], (cout, cin, 1, K), jnp.float32); ki += 1
        b = 0.05 * jax.random.normal(keys[ki], (cout,), jnp.float32); ki += 1
        gamma = 1.0 + 0.1 * jax.random.normal(keys[ki], (cout,), jnp.float32); ki += 1
        beta = 0.1 * jax.random.normal(keys[ki], (cout,), jnp.float32); ki += 1
        mean = jnp.zeros((cout,), jnp.float32)        # fresh BatchNorm2d running stats
        var = jnp.ones((cout,), jnp.float32)
        raw_conv.append((w, b, gamma, beta, mean, var))

    F_in, F_fc1, H_gru, F_out = 200, 100, 10, 4       # LazyLinear infers 200*1*1
    w1 = 0.05 * jax.random.normal(keys[ki], (F_fc1, F_in), jnp.float32); ki += 1
    b1 = 0.05 * jax.random.normal(keys[ki], (F_fc1,), jnp.float32); ki += 1
    wih = 0.1 * jax.random.normal(keys[ki], (3 * H_gru, F_fc1), jnp.float32); ki += 1
    bih = 0.1 * jax.random.normal(keys[ki], (3 * H_gru,), jnp.float32); ki += 1
    whh = 0.1 * jax.random.normal(keys[ki], (3 * H_gru, H_gru), jnp.float32); ki += 1
    bhh = 0.1 * jax.random.normal(keys[ki], (3 * H_gru,), jnp.float32); ki += 1
    w2 = 0.1 * jax.random.normal(keys[ki], (F_out, H_gru), jnp.float32); ki += 1
    b2 = 0.1 * jax.random.normal(keys[ki], (F_out,), jnp.float32); ki += 1
    raw_head = (w1, b1, wih, bih, whh, bhh, w2, b2)

    params = prepare_params(raw_conv, raw_head)
    out = jax.block_until_ready(cnn_gru_forward(x, params))

    assert out.shape == (B, 4) and out.dtype == jnp.float32
    assert bool(jnp.all(jnp.isfinite(out)))

    # Validate against the pure-f32 reference (bf16 MXU operands -> loose tolerance).
    ref = reference_forward(x, raw_conv, raw_head)
    err = float(jnp.max(jnp.abs(out - ref)))
    assert err < 7.5e-2, f"kernel deviates from f32 reference: max abs err = {err}"

    print("KERNEL_OK")
</pallas_src>

<mosaic_0001>
module attributes {stable_mosaic.version = 11 : i64} {
  func.func @fused_forward_kernel(%arg0: i32, %arg1: memref<1x90x128xf32, #tpu.memory_space<vmem>>, %arg2: memref<10x128x128xbf16, #tpu.memory_space<vmem>>, %arg3: memref<10x128x128xbf16, #tpu.memory_space<vmem>>, %arg4: memref<10x128x128xbf16, #tpu.memory_space<vmem>>, %arg5: memref<10x128x256xbf16, #tpu.memory_space<vmem>>, %arg6: memref<3x128xf32, #tpu.memory_space<vmem>>, %arg7: memref<3x128xf32, #tpu.memory_space<vmem>>, %arg8: memref<3x128xf32, #tpu.memory_space<vmem>>, %arg9: memref<3x256xf32, #tpu.memory_space<vmem>>, %arg10: memref<256x128xbf16, #tpu.memory_space<vmem>>, %arg11: memref<1x128xf32, #tpu.memory_space<vmem>>, %arg12: memref<128x384xbf16, #tpu.memory_space<vmem>>, %arg13: memref<1x384xf32, #tpu.memory_space<vmem>>, %arg14: memref<1x384xf32, #tpu.memory_space<vmem>>, %arg15: memref<128x128xbf16, #tpu.memory_space<vmem>>, %arg16: memref<1x128xf32, #tpu.memory_space<vmem>>, %arg17: memref<1x1x128xf32, #tpu.memory_space<vmem>>, %arg18: memref<36x128xf32, #tpu.memory_space<vmem>>, %arg19: memref<18x128xf32, #tpu.memory_space<vmem>>, %arg20: memref<12x128xf32, #tpu.memory_space<vmem>>) attributes {dimension_semantics = [#tpu.dimension_semantics<parallel>], iteration_bounds = array<i64: 2>, scalar_prefetch = 0 : i64, scratch_operands = 3 : i64, tpu.core_type = #tpu.core_type<tc>, window_params = [{transform_indices = @transform_0, window_bounds = array<i64: 1, 90, 128>}, {pipeline_mode = #tpu.pipeline_mode<synchronous>, transform_indices = @transform_1, window_bounds = array<i64: 10, 128, 128>}, {pipeline_mode = #tpu.pipeline_mode<synchronous>, transform_indices = @transform_2, window_bounds = array<i64: 10, 128, 128>}, {pipeline_mode = #tpu.pipeline_mode<synchronous>, transform_indices = @transform_3, window_bounds = array<i64: 10, 128, 128>}, {pipeline_mode = #tpu.pipeline_mode<synchronous>, transform_indices = @transform_4, window_bounds = array<i64: 10, 128, 256>}, {pipeline_mode = #tpu.pipeline_mode<synchronous>, transform_indices = @transform_5, window_bounds = array<i64: 3, 128>}, {pipeline_mode = #tpu.pipeline_mode<synchronous>, transform_indices = @transform_6, window_bounds = array<i64: 3, 128>}, {pipeline_mode = #tpu.pipeline_mode<synchronous>, transform_indices = @transform_7, window_bounds = array<i64: 3, 128>}, {pipeline_mode = #tpu.pipeline_mode<synchronous>, transform_indices = @transform_8, window_bounds = array<i64: 3, 256>}, {pipeline_mode = #tpu.pipeline_mode<synchronous>, transform_indices = @transform_9, window_bounds = array<i64: 256, 128>}, {pipeline_mode = #tpu.pipeline_mode<synchronous>, transform_indices = @transform_10, window_bounds = array<i64: 1, 128>}, {pipeline_mode = #tpu.pipeline_mode<synchronous>, transform_indices = @transform_11, window_bounds = array<i64: 128, 384>}, {pipeline_mode = #tpu.pipeline_mode<synchronous>, transform_indices = @transform_12, window_bounds = array<i64: 1, 384>}, {pipeline_mode = #tpu.pipeline_mode<synchronous>, transform_indices = @transform_13, window_bounds = array<i64: 1, 384>}, {pipeline_mode = #tpu.pipeline_mode<synchronous>, transform_indices = @transform_14, window_bounds = array<i64: 128, 128>}, {pipeline_mode = #tpu.pipeline_mode<synchronous>, transform_indices = @transform_15, window_bounds = array<i64: 1, 128>}, {transform_indices = @transform_16, window_bounds = array<i64: 1, 1, 128>}]} {
    %c0 = arith.constant 0 : index
    %c0_0 = arith.constant 0 : index
    %0 = vector.load %arg6[%c0, %c0_0] : memref<3x128xf32, #tpu.memory_space<vmem>>, vector<1x128xf32>
    %c1 = arith.constant 1 : index
    %c0_1 = arith.constant 0 : index
    %1 = vector.load %arg6[%c1, %c0_1] : memref<3x128xf32, #tpu.memory_space<vmem>>, vector<1x128xf32>
    %c2 = arith.constant 2 : index
    %c0_2 = arith.constant 0 : index
    %2 = vector.load %arg6[%c2, %c0_2] : memref<3x128xf32, #tpu.memory_space<vmem>>, vector<1x128xf32>
    %cst = arith.constant 0.000000e+00 : f32
    %3 = vector.broadcast %cst : f32 to vector<81x128xf32>
    %c0_3 = arith.constant 0 : index
    %c0_4 = arith.constant 0 : index
    %c0_5 = arith.constant 0 : index
    %4 = vector.load %arg1[%c0_3, %c0_4, %c0_5] : memref<1x90x128xf32, #tpu.memory_space<vmem>>, vector<1x81x128xf32>
    %5 = vector.shape_cast %4 : vector<1x81x128xf32> to vector<81x128xf32>
    %6 = arith.truncf %5 : vector<81x128xf32> to vector<81x128xbf16>
    %c0_6 = arith.constant 0 : index
    %c0_7 = arith.constant 0 : index
    %c0_8 = arith.constant 0 : index
    %7 = vector.load %arg2[%c0_6, %c0_7, %c0_8] : memref<10x128x128xbf16, #tpu.memory_space<vmem>>, vector<1x128x128xbf16>
    %8 = vector.shape_cast %7 : vector<1x128x128xbf16> to vector<128x128xbf16>
    %cst_9 = arith.constant dense<0.000000e+00> : vector<81x128xf32>
    %9 = tpu.matmul %6, %8, %cst_9 {dimension_numbers = #tpu.dot_dimension_numbers<[1], [0], [0], [1], [0, 0, 1, 1], [], []>} : vector<81x128xbf16>, vector<128x128xbf16>, vector<81x128xf32> -> vector<81x128xf32>
    %10 = arith.addf %3, %9 : vector<81x128xf32>
    %c0_10 = arith.constant 0 : index
    %c1_11 = arith.constant 1 : index
    %c0_12 = arith.constant 0 : index
    %11 = vector.load %arg1[%c0_10, %c1_11, %c0_12] : memref<1x90x128xf32, #tpu.memory_space<vmem>>, vector<1x81x128xf32>
    %12 = vector.shape_cast %11 : vector<1x81x128xf32> to vector<81x128xf32>
    %13 = arith.truncf %12 : vector<81x128xf32> to vector<81x128xbf16>
    %c1_13 = arith.constant 1 : index
    %c0_14 = arith.constant 0 : index
    %c0_15 = arith.constant 0 : index
    %14 = vector.load %arg2[%c1_13, %c0_14, %c0_15] : memref<10x128x128xbf16, #tpu.memory_space<vmem>>, vector<1x128x128xbf16>
    %15 = vector.shape_cast %14 : vector<1x128x128xbf16> to vector<128x128xbf16>
    %cst_16 = arith.constant dense<0.000000e+00> : vector<81x128xf32>
    %16 = tpu.matmul %13, %15, %cst_16 {dimension_numbers = #tpu.dot_dimension_numbers<[1], [0], [0], [1], [0, 0, 1, 1], [], []>} : vector<81x128xbf16>, vector<128x128xbf16>, vector<81x128xf32> -> vector<81x128xf32>
    %17 = arith.addf %10, %16 : vector<81x128xf32>
    %c0_17 = arith.constant 0 : index
    %c2_18 = arith.constant 2 : index
    %c0_19 = arith.constant 0 : index
    %18 = vector.load %arg1[%c0_17, %c2_18, %c0_19] : memref<1x90x128xf32, #tpu.memory_space<vmem>>, vector<1x81x128xf32>
    %19 = vector.shape_cast %18 : vector<1x81x128xf32> to vector<81x128xf32>
    %20 = arith.truncf %19 : vector<81x128xf32> to vector<81x128xbf16>
    %c2_20 = arith.constant 2 : index
    %c0_21 = arith.constant 0 : index
    %c0_22 = arith.constant 0 : index
    %21 = vector.load %arg2[%c2_20, %c0_21, %c0_22] : memref<10x128x128xbf16, #tpu.memory_space<vmem>>, vector<1x128x128xbf16>
    %22 = vector.shape_cast %21 : vector<1x128x128xbf16> to vector<128x128xbf16>
    %cst_23 = arith.constant dense<0.000000e+00> : vector<81x128xf32>
    %23 = tpu.matmul %20, %22, %cst_23 {dimension_numbers = #tpu.dot_dimension_numbers<[1], [0], [0], [1], [0, 0, 1, 1], [], []>} : vector<81x128xbf16>, vector<128x128xbf16>, vector<81x128xf32> -> vector<81x128xf32>
    %24 = arith.addf %17, %23 : vector<81x128xf32>
    %c0_24 = arith.constant 0 : index
    %c3 = arith.constant 3 : index
    %c0_25 = arith.constant 0 : index
    %25 = vector.load %arg1[%c0_24, %c3, %c0_25] : memref<1x90x128xf32, #tpu.memory_space<vmem>>, vector<1x81x128xf32>
    %26 = vector.shape_cast %25 : vector<1x81x128xf32> to vector<81x128xf32>
    %27 = arith.truncf %26 : vector<81x128xf32> to vector<81x128xbf16>
    %c3_26 = arith.constant 3 : index
    %c0_27 = arith.constant 0 : index
    %c0_28 = arith.constant 0 : index
    %28 = vector.load %arg2[%c3_26, %c0_27, %c0_28] : memref<10x128x128xbf16, #tpu.memory_space<vmem>>, vector<1x128x128xbf16>
    %29 = vector.shape_cast %28 : vector<1x128x128xbf16> to vector<128x128xbf16>
    %cst_29 = arith.constant dense<0.000000e+00> : vector<81x128xf32>
    %30 = tpu.matmul %27, %29, %cst_29 {dimension_numbers = #tpu.dot_dimension_numbers<[1], [0], [0], [1], [0, 0, 1, 1], [], []>} : vector<81x128xbf16>, vector<128x128xbf16>, vector<81x128xf32> -> vector<81x128xf32>
    %31 = arith.addf %24, %30 : vector<81x128xf32>
    %c0_30 = arith.constant 0 : index
    %c4 = arith.constant 4 : index
    %c0_31 = arith.constant 0 : index
    %32 = vector.load %arg1[%c0_30, %c4, %c0_31] : memref<1x90x128xf32, #tpu.memory_space<vmem>>, vector<1x81x128xf32>
    %33 = vector.shape_cast %32 : vector<1x81x128xf32> to vector<81x128xf32>
    %34 = arith.truncf %33 : vector<81x128xf32> to vector<81x128xbf16>
    %c4_32 = arith.constant 4 : index
    %c0_33 = arith.constant 0 : index
    %c0_34 = arith.constant 0 : index
    %35 = vector.load %arg2[%c4_32, %c0_33, %c0_34] : memref<10x128x128xbf16, #tpu.memory_space<vmem>>, vector<1x128x128xbf16>
    %36 = vector.shape_cast %35 : vector<1x128x128xbf16> to vector<128x128xbf16>
    %cst_35 = arith.constant dense<0.000000e+00> : vector<81x128xf32>
    %37 = tpu.matmul %34, %36, %cst_35 {dimension_numbers = #tpu.dot_dimension_numbers<[1], [0], [0], [1], [0, 0, 1, 1], [], []>} : vector<81x128xbf16>, vector<128x128xbf16>, vector<81x128xf32> -> vector<81x128xf32>
    %38 = arith.addf %31, %37 : vector<81x128xf32>
    %c0_36 = arith.constant 0 : index
    %c5 = arith.constant 5 : index
    %c0_37 = arith.constant 0 : index
    %39 = vector.load %arg1[%c0_36, %c5, %c0_37] : memref<1x90x128xf32, #tpu.memory_space<vmem>>, vector<1x81x128xf32>
    %40 = vector.shape_cast %39 : vector<1x81x128xf32> to vector<81x128xf32>
    %41 = arith.truncf %40 : vector<81x128xf32> to vector<81x128xbf16>
    %c5_38 = arith.constant 5 : index
    %c0_39 = arith.constant 0 : index
    %c0_40 = arith.constant 0 : index
    %42 = vector.load %arg2[%c5_38, %c0_39, %c0_40] : memref<10x128x128xbf16, #tpu.memory_space<vmem>>, vector<1x128x128xbf16>
    %43 = vector.shape_cast %42 : vector<1x128x128xbf16> to vector<128x128xbf16>
    %cst_41 = arith.constant dense<0.000000e+00> : vector<81x128xf32>
    %44 = tpu.matmul %41, %43, %cst_41 {dimension_numbers = #tpu.dot_dimension_numbers<[1], [0], [0], [1], [0, 0, 1, 1], [], []>} : vector<81x128xbf16>, vector<128x128xbf16>, vector<81x128xf32> -> vector<81x128xf32>
    %45 = arith.addf %38, %44 : vector<81x128xf32>
    %c0_42 = arith.constant 0 : index
    %c6 = arith.constant 6 : index
    %c0_43 = arith.constant 0 : index
    %46 = vector.load %arg1[%c0_42, %c6, %c0_43] : memref<1x90x128xf32, #tpu.memory_space<vmem>>, vector<1x81x128xf32>
    %47 = vector.shape_cast %46 : vector<1x81x128xf32> to vector<81x128xf32>
    %48 = arith.truncf %47 : vector<81x128xf32> to vector<81x128xbf16>
    %c6_44 = arith.constant 6 : index
    %c0_45 = arith.constant 0 : index
    %c0_46 = arith.constant 0 : index
    %49 = vector.load %arg2[%c6_44, %c0_45, %c0_46] : memref<10x128x128xbf16, #tpu.memory_space<vmem>>, vector<1x128x128xbf16>
    %50 = vector.shape_cast %49 : vector<1x128x128xbf16> to vector<128x128xbf16>
    %cst_47 = arith.constant dense<0.000000e+00> : vector<81x128xf32>
    %51 = tpu.matmul %48, %50, %cst_47 {dimension_numbers = #tpu.dot_dimension_numbers<[1], [0], [0], [1], [0, 0, 1, 1], [], []>} : vector<81x128xbf16>, vector<128x128xbf16>, vector<81x128xf32> -> vector<81x128xf32>
    %52 = arith.addf %45, %51 : vector<81x128xf32>
    %c0_48 = arith.constant 0 : index
    %c7 = arith.constant 7 : index
    %c0_49 = arith.constant 0 : index
    %53 = vector.load %arg1[%c0_48, %c7, %c0_49] : memref<1x90x128xf32, #tpu.memory_space<vmem>>, vector<1x81x128xf32>
    %54 = vector.shape_cast %53 : vector<1x81x128xf32> to vector<81x128xf32>
    %55 = arith.truncf %54 : vector<81x128xf32> to vector<81x128xbf16>
    %c7_50 = arith.constant 7 : index
    %c0_51 = arith.constant 0 : index
    %c0_52 = arith.constant 0 : index
    %56 = vector.load %arg2[%c7_50, %c0_51, %c0_52] : memref<10x128x128xbf16, #tpu.memory_space<vmem>>, vector<1x128x128xbf16>
    %57 = vector.shape_cast %56 : vector<1x128x128xbf16> to vector<128x128xbf16>
    %cst_53 = arith.constant dense<0.000000e+00> : vector<81x128xf32>
    %58 = tpu.matmul %55, %57, %cst_53 {dimension_numbers = #tpu.dot_dimension_numbers<[1], [0], [0], [1], [0, 0, 1, 1], [], []>} : vector<81x128xbf16>, vector<128x128xbf16>, vector<81x128xf32> -> vector<81x128xf32>
    %59 = arith.addf %52, %58 : vector<81x128xf32>
    %c0_54 = arith.constant 0 : index
    %c8 = arith.constant 8 : index
    %c0_55 = arith.constant 0 : index
    %60 = vector.load %arg1[%c0_54, %c8, %c0_55] : memref<1x90x128xf32, #tpu.memory_space<vmem>>, vector<1x81x128xf32>
    %61 = vector.shape_cast %60 : vector<1x81x128xf32> to vector<81x128xf32>
    %62 = arith.truncf %61 : vector<81x128xf32> to vector<81x128xbf16>
    %c8_56 = arith.constant 8 : index
    %c0_57 = arith.constant 0 : index
    %c0_58 = arith.constant 0 : index
    %63 = vector.load %arg2[%c8_56, %c0_57, %c0_58] : memref<10x128x128xbf16, #tpu.memory_space<vmem>>, vector<1x128x128xbf16>
    %64 = vector.shape_cast %63 : vector<1x128x128xbf16> to vector<128x128xbf16>
    %cst_59 = arith.constant dense<0.000000e+00> : vector<81x128xf32>
    %65 = tpu.matmul %62, %64, %cst_59 {dimension_numbers = #tpu.dot_dimension_numbers<[1], [0], [0], [1], [0, 0, 1, 1], [], []>} : vector<81x128xbf16>, vector<128x128xbf16>, vector<81x128xf32> -> vector<81x128xf32>
    %66 = arith.addf %59, %65 : vector<81x128xf32>
    %c0_60 = arith.constant 0 : index
    %c9 = arith.constant 9 : index
    %c0_61 = arith.constant 0 : index
    %67 = vector.load %arg1[%c0_60, %c9, %c0_61] : memref<1x90x128xf32, #tpu.memory_space<vmem>>, vector<1x81x128xf32>
    %68 = vector.shape_cast %67 : vector<1x81x128xf32> to vector<81x128xf32>
    %69 = arith.truncf %68 : vector<81x128xf32> to vector<81x128xbf16>
    %c9_62 = arith.constant 9 : index
    %c0_63 = arith.constant 0 : index
    %c0_64 = arith.constant 0 : index
    %70 = vector.load %arg2[%c9_62, %c0_63, %c0_64] : memref<10x128x128xbf16, #tpu.memory_space<vmem>>, vector<1x128x128xbf16>
    %71 = vector.shape_cast %70 : vector<1x128x128xbf16> to vector<128x128xbf16>
    %cst_65 = arith.constant dense<0.000000e+00> : vector<81x128xf32>
    %72 = tpu.matmul %69, %71, %cst_65 {dimension_numbers = #tpu.dot_dimension_numbers<[1], [0], [0], [1], [0, 0, 1, 1], [], []>} : vector<81x128xbf16>, vector<128x128xbf16>, vector<81x128xf32> -> vector<81x128xf32>
    %73 = arith.addf %66, %72 : vector<81x128xf32>
    %74 = vector.broadcast %0 : vector<1x128xf32> to vector<81x128xf32>
    %75 = arith.addf %73, %74 : vector<81x128xf32>
    %cst_66 = arith.constant 0.000000e+00 : f32
    %76 = vector.broadcast %cst_66 : f32 to vector<81x128xf32>
    %77 = arith.cmpf ogt, %75, %76 : vector<81x128xf32>
    %cst_67 = arith.constant 0.000000e+00 : f32
    %78 = vector.broadcast %cst_67 : f32 to vector<81x128xf32>
    %79 = arith.minimumf %75, %78 : vector<81x128xf32>
    %80 = math.exp %79 : vector<81x128xf32>
    %cst_68 = arith.constant 1.000000e+00 : f32
    %81 = vector.broadcast %cst_68 : f32 to vector<81x128xf32>
    %82 = arith.subf %80, %81 : vector<81x128xf32>
    %cst_69 = arith.constant 1.000000e+00 : f32
    %83 = vector.broadcast %cst_69 : f32 to vector<81x128xf32>
    %84 = arith.mulf %83, %82 : vector<81x128xf32>
    %85 = arith.select %77, %75, %84 : vector<81x128xi1>, vector<81x128xf32>
    %86 = vector.shape_cast %85 : vector<81x128xf32> to vector<27x3x128xf32>
    %cst_70 = arith.constant dense<0xFF800000> : vector<27x128xf32>
    %87 = vector.multi_reduction <maximumf>, %86, %cst_70 [1] : vector<27x3x128xf32> to vector<27x128xf32>
    %88 = vector.broadcast %1 : vector<1x128xf32> to vector<27x128xf32>
    %89 = arith.mulf %87, %88 : vector<27x128xf32>
    %90 = vector.broadcast %2 : vector<1x128xf32> to vector<27x128xf32>
    %91 = arith.addf %89, %90 : vector<27x128xf32>
    %cst_71 = arith.constant 0.000000e+00 : f32
    %92 = vector.broadcast %cst_71 : f32 to vector<36x128xf32>
    %c0_72 = arith.constant 0 : index
    %c0_73 = arith.constant 0 : index
    %93 = vector.load %arg18[%c0_72, %c0_73] : memref<36x128xf32, #tpu.memory_space<vmem>>, vector<36x128xf32>
    tpu.vector_store %arg18[%c0_72, %c0_73], %92 {strides = array<i32>} : memref<36x128xf32, #tpu.memory_space<vmem>>, vector<36x128xf32>,
    %c4_74 = arith.constant 4 : index
    %c0_75 = arith.constant 0 : index
    %94 = vector.load %arg18[%c4_74, %c0_75] : memref<36x128xf32, #tpu.memory_space<vmem>>, vector<27x128xf32>
    tpu.vector_store %arg18[%c4_74, %c0_75], %91 {strides = array<i32>} : memref<36x128xf32, #tpu.memory_space<vmem>>, vector<27x128xf32>,
    %c0_76 = arith.constant 0 : index
    %c0_77 = arith.constant 0 : index
    %95 = vector.load %arg7[%c0_76, %c0_77] : memref<3x128xf32, #tpu.memory_space<vmem>>, vector<1x128xf32>
    %c1_78 = arith.constant 1 : index
    %c0_79 = arith.constant 0 : index
    %96 = vector.load %arg7[%c1_78, %c0_79] : memref<3x128xf32, #tpu.memory_space<vmem>>, vector<1x128xf32>
    %c2_80 = arith.constant 2 : index
    %c0_81 = arith.constant 0 : index
    %97 = vector.load %arg7[%c2_80, %c0_81] : memref<3x128xf32, #tpu.memory_space<vmem>>, vector<1x128xf32>
    %cst_82 = arith.constant 0.000000e+00 : f32
    %98 = vector.broadcast %cst_82 : f32 to vector<27x128xf32>
    %c0_83 = arith.constant 0 : index
    %c0_84 = arith.constant 0 : index
    %99 = vector.load %arg18[%c0_83, %c0_84] : memref<36x128xf32, #tpu.memory_space<vmem>>, vector<27x128xf32>
    %100 = arith.truncf %99 : vector<27x128xf32> to vector<27x128xbf16>
    %c0_85 = arith.constant 0 : index
    %c0_86 = arith.constant 0 : index
    %c0_87 = arith.constant 0 : index
    %101 = vector.load %arg3[%c0_85, %c0_86, %c0_87] : memref<10x128x128xbf16, #tpu.memory_space<vmem>>, vector<1x128x128xbf16>
    %102 = vector.shape_cast %101 : vector<1x128x128xbf16> to vector<128x128xbf16>
    %cst_88 = arith.constant dense<0.000000e+00> : vector<27x128xf32>
    %103 = tpu.matmul %100, %102, %cst_88 {dimension_numbers = #tpu.dot_dimension_numbers<[1], [0], [0], [1], [0, 0, 1, 1], [], []>} : vector<27x128xbf16>, vector<128x128xbf16>, vector<27x128xf32> -> vector<27x128xf32>
    %104 = arith.addf %98, %103 : vector<27x128xf32>
    %c1_89 = arith.constant 1 : index
    %c0_90 = arith.constant 0 : index
    %105 = vector.load %arg18[%c1_89, %c0_90] : memref<36x128xf32, #tpu.memory_space<vmem>>, vector<27x128xf32>
    %106 = arith.truncf %105 : vector<27x128xf32> to vector<27x128xbf16>
    %c1_91 = arith.constant 1 : index
    %c0_92 = arith.constant 0 : index
    %c0_93 = arith.constant 0 : index
    %107 = vector.load %arg3[%c1_91, %c0_92, %c0_93] : memref<10x128x128xbf16, #tpu.memory_space<vmem>>, vector<1x128x128xbf16>
    %108 = vector.shape_cast %107 : vector<1x128x128xbf16> to vector<128x128xbf16>
    %cst_94 = arith.constant dense<0.000000e+00> : vector<27x128xf32>
    %109 = tpu.matmul %106, %108, %cst_94 {dimension_numbers = #tpu.dot_dimension_numbers<[1], [0], [0], [1], [0, 0, 1, 1], [], []>} : vector<27x128xbf16>, vector<128x128xbf16>, vector<27x128xf32> -> vector<27x128xf32>
    %110 = arith.addf %104, %109 : vector<27x128xf32>
    %c2_95 = arith.constant 2 : index
    %c0_96 = arith.constant 0 : index
    %111 = vector.load %arg18[%c2_95, %c0_96] : memref<36x128xf32, #tpu.memory_space<vmem>>, vector<27x128xf32>
    %112 = arith.truncf %111 : vector<27x128xf32> to vector<27x128xbf16>
    %c2_97 = arith.constant 2 : index
    %c0_98 = arith.constant 0 : index
    %c0_99 = arith.constant 0 : index
    %113 = vector.load %arg3[%c2_97, %c0_98, %c0_99] : memref<10x128x128xbf16, #tpu.memory_space<vmem>>, vector<1x128x128xbf16>
    %114 = vector.shape_cast %113 : vector<1x128x128xbf16> to vector<128x128xbf16>
    %cst_100 = arith.constant dense<0.000000e+00> : vector<27x128xf32>
    %115 = tpu.matmul %112, %114, %cst_100 {dimension_numbers = #tpu.dot_dimension_numbers<[1], [0], [0], [1], [0, 0, 1, 1], [], []>} : vector<27x128xbf16>, vector<128x128xbf16>, vector<27x128xf32> -> vector<27x128xf32>
    %116 = arith.addf %110, %115 : vector<27x128xf32>
    %c3_101 = arith.constant 3 : index
    %c0_102 = arith.constant 0 : index
    %117 = vector.load %arg18[%c3_101, %c0_102] : memref<36x128xf32, #tpu.memory_space<vmem>>, vector<27x128xf32>
    %118 = arith.truncf %117 : vector<27x128xf32> to vector<27x128xbf16>
    %c3_103 = arith.constant 3 : index
    %c0_104 = arith.constant 0 : index
    %c0_105 = arith.constant 0 : index
    %119 = vector.load %arg3[%c3_103, %c0_104, %c0_105] : memref<10x128x128xbf16, #tpu.memory_space<vmem>>, vector<1x128x128xbf16>
    %120 = vector.shape_cast %119 : vector<1x128x128xbf16> to vector<128x128xbf16>
    %cst_106 = arith.constant dense<0.000000e+00> : vector<27x128xf32>
    %121 = tpu.matmul %118, %120, %cst_106 {dimension_numbers = #tpu.dot_dimension_numbers<[1], [0], [0], [1], [0, 0, 1, 1], [], []>} : vector<27x128xbf16>, vector<128x128xbf16>, vector<27x128xf32> -> vector<27x128xf32>
    %122 = arith.addf %116, %121 : vector<27x128xf32>
    %c4_107 = arith.constant 4 : index
    %c0_108 = arith.constant 0 : index
    %123 = vector.load %arg18[%c4_107, %c0_108] : memref<36x128xf32, #tpu.memory_space<vmem>>, vector<27x128xf32>
    %124 = arith.truncf %123 : vector<27x128xf32> to vector<27x128xbf16>
    %c4_109 = arith.constant 4 : index
    %c0_110 = arith.constant 0 : index
    %c0_111 = arith.constant 0 : index
    %125 = vector.load %arg3[%c4_109, %c0_110, %c0_111] : memref<10x128x128xbf16, #tpu.memory_space<vmem>>, vector<1x128x128xbf16>
    %126 = vector.shape_cast %125 : vector<1x128x128xbf16> to vector<128x128xbf16>
    %cst_112 = arith.constant dense<0.000000e+00> : vector<27x128xf32>
    %127 = tpu.matmul %124, %126, %cst_112 {dimension_numbers = #tpu.dot_dimension_numbers<[1], [0], [0], [1], [0, 0, 1, 1], [], []>} : vector<27x128xbf16>, vector<128x128xbf16>, vector<27x128xf32> -> vector<27x128xf32>
    %128 = arith.addf %122, %127 : vector<27x128xf32>
    %c5_113 = arith.constant 5 : index
    %c0_114 = arith.constant 0 : index
    %129 = vector.load %arg18[%c5_113, %c0_114] : memref<36x128xf32, #tpu.memory_space<vmem>>, vector<27x128xf32>
    %130 = arith.truncf %129 : vector<27x128xf32> to vector<27x128xbf16>
    %c5_115 = arith.constant 5 : index
    %c0_116 = arith.constant 0 : index
    %c0_117 = arith.constant 0 : index
    %131 = vector.load %arg3[%c5_115, %c0_116, %c0_117] : memref<10x128x128xbf16, #tpu.memory_space<vmem>>, vector<1x128x128xbf16>
    %132 = vector.shape_cast %131 : vector<1x128x128xbf16> to vector<128x128xbf16>
    %cst_118 = arith.constant dense<0.000000e+00> : vector<27x128xf32>
    %133 = tpu.matmul %130, %132, %cst_118 {dimension_numbers = #tpu.dot_dimension_numbers<[1], [0], [0], [1], [0, 0, 1, 1], [], []>} : vector<27x128xbf16>, vector<128x128xbf16>, vector<27x128xf32> -> vector<27x128xf32>
    %134 = arith.addf %128, %133 : vector<27x128xf32>
    %c6_119 = arith.constant 6 : index
    %c0_120 = arith.constant 0 : index
    %135 = vector.load %arg18[%c6_119, %c0_120] : memref<36x128xf32, #tpu.memory_space<vmem>>, vector<27x128xf32>
    %136 = arith.truncf %135 : vector<27x128xf32> to vector<27x128xbf16>
    %c6_121 = arith.constant 6 : index
    %c0_122 = arith.constant 0 : index
    %c0_123 = arith.constant 0 : index
    %137 = vector.load %arg3[%c6_121, %c0_122, %c0_123] : memref<10x128x128xbf16, #tpu.memory_space<vmem>>, vector<1x128x128xbf16>
    %138 = vector.shape_cast %137 : vector<1x128x128xbf16> to vector<128x128xbf16>
    %cst_124 = arith.constant dense<0.000000e+00> : vector<27x128xf32>
    %139 = tpu.matmul %136, %138, %cst_124 {dimension_numbers = #tpu.dot_dimension_numbers<[1], [0], [0], [1], [0, 0, 1, 1], [], []>} : vector<27x128xbf16>, vector<128x128xbf16>, vector<27x128xf32> -> vector<27x128xf32>
    %140 = arith.addf %134, %139 : vector<27x128xf32>
    %c7_125 = arith.constant 7 : index
    %c0_126 = arith.constant 0 : index
    %141 = vector.load %arg18[%c7_125, %c0_126] : memref<36x128xf32, #tpu.memory_space<vmem>>, vector<27x128xf32>
    %142 = arith.truncf %141 : vector<27x128xf32> to vector<27x128xbf16>
    %c7_127 = arith.constant 7 : index
    %c0_128 = arith.constant 0 : index
    %c0_129 = arith.constant 0 : index
    %143 = vector.load %arg3[%c7_127, %c0_128, %c0_129] : memref<10x128x128xbf16, #tpu.memory_space<vmem>>, vector<1x128x128xbf16>
    %144 = vector.shape_cast %143 : vector<1x128x128xbf16> to vector<128x128xbf16>
    %cst_130 = arith.constant dense<0.000000e+00> : vector<27x128xf32>
    %145 = tpu.matmul %142, %144, %cst_130 {dimension_numbers = #tpu.dot_dimension_numbers<[1], [0], [0], [1], [0, 0, 1, 1], [], []>} : vector<27x128xbf16>, vector<128x128xbf16>, vector<27x128xf32> -> vector<27x128xf32>
    %146 = arith.addf %140, %145 : vector<27x128xf32>
    %c8_131 = arith.constant 8 : index
    %c0_132 = arith.constant 0 : index
    %147 = vector.load %arg18[%c8_131, %c0_132] : memref<36x128xf32, #tpu.memory_space<vmem>>, vector<27x128xf32>
    %148 = arith.truncf %147 : vector<27x128xf32> to vector<27x128xbf16>
    %c8_133 = arith.constant 8 : index
    %c0_134 = arith.constant 0 : index
    %c0_135 = arith.constant 0 : index
    %149 = vector.load %arg3[%c8_133, %c0_134, %c0_135] : memref<10x128x128xbf16, #tpu.memory_space<vmem>>, vector<1x128x128xbf16>
    %150 = vector.shape_cast %149 : vector<1x128x128xbf16> to vector<128x128xbf16>
    %cst_136 = arith.constant dense<0.000000e+00> : vector<27x128xf32>
    %151 = tpu.matmul %148, %150, %cst_136 {dimension_numbers = #tpu.dot_dimension_numbers<[1], [0], [0], [1], [0, 0, 1, 1], [], []>} : vector<27x128xbf16>, vector<128x128xbf16>, vector<27x128xf32> -> vector<27x128xf32>
    %152 = arith.addf %146, %151 : vector<27x128xf32>
    %c9_137 = arith.constant 9 : index
    %c0_138 = arith.constant 0 : index
    %153 = vector.load %arg18[%c9_137, %c0_138] : memref<36x128xf32, #tpu.memory_space<vmem>>, vector<27x128xf32>
    %154 = arith.truncf %153 : vector<27x128xf32> to vector<27x128xbf16>
    %c9_139 = arith.constant 9 : index
    %c0_140 = arith.constant 0 : index
    %c0_141 = arith.constant 0 : index
    %155 = vector.load %arg3[%c9_139, %c0_140, %c0_141] : memref<10x128x128xbf16, #tpu.memory_space<vmem>>, vector<1x128x128xbf16>
    %156 = vector.shape_cast %155 : vector<1x128x128xbf16> to vector<128x128xbf16>
    %cst_142 = arith.constant dense<0.000000e+00> : vector<27x128xf32>
    %157 = tpu.matmul %154, %156, %cst_142 {dimension_numbers = #tpu.dot_dimension_numbers<[1], [0], [0], [1], [0, 0, 1, 1], [], []>} : vector<27x128xbf16>, vector<128x128xbf16>, vector<27x128xf32> -> vector<27x128xf32>
    %158 = arith.addf %152, %157 : vector<27x128xf32>
    %159 = vector.broadcast %95 : vector<1x128xf32> to vector<27x128xf32>
    %160 = arith.addf %158, %159 : vector<27x128xf32>
    %cst_143 = arith.constant 0.000000e+00 : f32
    %161 = vector.broadcast %cst_143 : f32 to vector<27x128xf32>
    %162 = arith.cmpf ogt, %160, %161 : vector<27x128xf32>
    %cst_144 = arith.constant 0.000000e+00 : f32
    %163 = vector.broadcast %cst_144 : f32 to vector<27x128xf32>
    %164 = arith.minimumf %160, %163 : vector<27x128xf32>
    %165 = math.exp %164 : vector<27x128xf32>
    %cst_145 = arith.constant 1.000000e+00 : f32
    %166 = vector.broadcast %cst_145 : f32 to vector<27x128xf32>
    %167 = arith.subf %165, %166 : vector<27x128xf32>
    %cst_146 = arith.constant 1.000000e+00 : f32
    %168 = vector.broadcast %cst_146 : f32 to vector<27x128xf32>
    %169 = arith.mulf %168, %167 : vector<27x128xf32>
    %170 = arith.select %162, %160, %169 : vector<27x128xi1>, vector<27x128xf32>
    %171 = vector.shape_cast %170 : vector<27x128xf32> to vector<9x3x128xf32>
    %cst_147 = arith.constant dense<0xFF800000> : vector<9x128xf32>
    %172 = vector.multi_reduction <maximumf>, %171, %cst_147 [1] : vector<9x3x128xf32> to vector<9x128xf32>
    %173 = vector.broadcast %96 : vector<1x128xf32> to vector<9x128xf32>
    %174 = arith.mulf %172, %173 : vector<9x128xf32>
    %175 = vector.broadcast %97 : vector<1x128xf32> to vector<9x128xf32>
    %176 = arith.addf %174, %175 : vector<9x128xf32>
    %cst_148 = arith.constant 0.000000e+00 : f32
    %177 = vector.broadcast %cst_148 : f32 to vector<18x128xf32>
    %c0_149 = arith.constant 0 : index
    %c0_150 = arith.constant 0 : index
    %178 = vector.load %arg19[%c0_149, %c0_150] : memref<18x128xf32, #tpu.memory_space<vmem>>, vector<18x128xf32>
    tpu.vector_store %arg19[%c0_149, %c0_150], %177 {strides = array<i32>} : memref<18x128xf32, #tpu.memory_space<vmem>>, vector<18x128xf32>,
    %c4_151 = arith.constant 4 : index
    %c0_152 = arith.constant 0 : index
    %179 = vector.load %arg19[%c4_151, %c0_152] : memref<18x128xf32, #tpu.memory_space<vmem>>, vector<9x128xf32>
    tpu.vector_store %arg19[%c4_151, %c0_152], %176 {strides = array<i32>} : memref<18x128xf32, #tpu.memory_space<vmem>>, vector<9x128xf32>,
    %c0_153 = arith.constant 0 : index
    %c0_154 = arith.constant 0 : index
    %180 = vector.load %arg8[%c0_153, %c0_154] : memref<3x128xf32, #tpu.memory_space<vmem>>, vector<1x128xf32>
    %c1_155 = arith.constant 1 : index
    %c0_156 = arith.constant 0 : index
    %181 = vector.load %arg8[%c1_155, %c0_156] : memref<3x128xf32, #tpu.memory_space<vmem>>, vector<1x128xf32>
    %c2_157 = arith.constant 2 : index
    %c0_158 = arith.constant 0 : index
    %182 = vector.load %arg8[%c2_157, %c0_158] : memref<3x128xf32, #tpu.memory_space<vmem>>, vector<1x128xf32>
    %cst_159 = arith.constant 0.000000e+00 : f32
    %183 = vector.broadcast %cst_159 : f32 to vector<9x128xf32>
    %c0_160 = arith.constant 0 : index
    %c0_161 = arith.constant 0 : index
    %184 = vector.load %arg19[%c0_160, %c0_161] : memref<18x128xf32, #tpu.memory_space<vmem>>, vector<9x128xf32>
    %185 = arith.truncf %184 : vector<9x128xf32> to vector<9x128xbf16>
    %c0_162 = arith.constant 0 : index
    %c0_163 = arith.constant 0 : index
    %c0_164 = arith.constant 0 : index
    %186 = vector.load %arg4[%c0_162, %c0_163, %c0_164] : memref<10x128x128xbf16, #tpu.memory_space<vmem>>, vector<1x128x128xbf16>
    %187 = vector.shape_cast %186 : vector<1x128x128xbf16> to vector<128x128xbf16>
    %cst_165 = arith.constant dense<0.000000e+00> : vector<9x128xf32>
    %188 = tpu.matmul %185, %187, %cst_165 {dimension_numbers = #tpu.dot_dimension_numbers<[1], [0], [0], [1], [0, 0, 1, 1], [], []>} : vector<9x128xbf16>, vector<128x128xbf16>, vector<9x128xf32> -> vector<9x128xf32>
    %189 = arith.addf %183, %188 : vector<9x128xf32>
    %c1_166 = arith.constant 1 : index
    %c0_167 = arith.constant 0 : index
    %190 = vector.load %arg19[%c1_166, %c0_167] : memref<18x128xf32, #tpu.memory_space<vmem>>, vector<9x128xf32>
    %191 = arith.truncf %190 : vector<9x128xf32> to vector<9x128xbf16>
    %c1_168 = arith.constant 1 : index
    %c0_169 = arith.constant 0 : index
    %c0_170 = arith.constant 0 : index
    %192 = vector.load %arg4[%c1_168, %c0_169, %c0_170] : memref<10x128x128xbf16, #tpu.memory_space<vmem>>, vector<1x128x128xbf16>
    %193 = vector.shape_cast %192 : vector<1x128x128xbf16> to vector<128x128xbf16>
    %cst_171 = arith.constant dense<0.000000e+00> : vector<9x128xf32>
    %194 = tpu.matmul %191, %193, %cst_171 {dimension_numbers = #tpu.dot_dimension_numbers<[1], [0], [0], [1], [0, 0, 1, 1], [], []>} : vector<9x128xbf16>, vector<128x128xbf16>, vector<9x128xf32> -> vector<9x128xf32>
    %195 = arith.addf %189, %194 : vector<9x128xf32>
    %c2_172 = arith.constant 2 : index
    %c0_173 = arith.constant 0 : index
    %196 = vector.load %arg19[%c2_172, %c0_173] : memref<18x128xf32, #tpu.memory_space<vmem>>, vector<9x128xf32>
    %197 = arith.truncf %196 : vector<9x128xf32> to vector<9x128xbf16>
    %c2_174 = arith.constant 2 : index
    %c0_175 = arith.constant 0 : index
    %c0_176 = arith.constant 0 : index
    %198 = vector.load %arg4[%c2_174, %c0_175, %c0_176] : memref<10x128x128xbf16, #tpu.memory_space<vmem>>, vector<1x128x128xbf16>
    %199 = vector.shape_cast %198 : vector<1x128x128xbf16> to vector<128x128xbf16>
    %cst_177 = arith.constant dense<0.000000e+00> : vector<9x128xf32>
    %200 = tpu.matmul %197, %199, %cst_177 {dimension_numbers = #tpu.dot_dimension_numbers<[1], [0], [0], [1], [0, 0, 1, 1], [], []>} : vector<9x128xbf16>, vector<128x128xbf16>, vector<9x128xf32> -> vector<9x128xf32>
    %201 = arith.addf %195, %200 : vector<9x128xf32>
    %c3_178 = arith.constant 3 : index
    %c0_179 = arith.constant 0 : index
    %202 = vector.load %arg19[%c3_178, %c0_179] : memref<18x128xf32, #tpu.memory_space<vmem>>, vector<9x128xf32>
    %203 = arith.truncf %202 : vector<9x128xf32> to vector<9x128xbf16>
    %c3_180 = arith.constant 3 : index
    %c0_181 = arith.constant 0 : index
    %c0_182 = arith.constant 0 : index
    %204 = vector.load %arg4[%c3_180, %c0_181, %c0_182] : memref<10x128x128xbf16, #tpu.memory_space<vmem>>, vector<1x128x128xbf16>
    %205 = vector.shape_cast %204 : vector<1x128x128xbf16> to vector<128x128xbf16>
    %cst_183 = arith.constant dense<0.000000e+00> : vector<9x128xf32>
    %206 = tpu.matmul %203, %205, %cst_183 {dimension_numbers = #tpu.dot_dimension_numbers<[1], [0], [0], [1], [0, 0, 1, 1], [], []>} : vector<9x128xbf16>, vector<128x128xbf16>, vector<9x128xf32> -> vector<9x128xf32>
    %207 = arith.addf %201, %206 : vector<9x128xf32>
    %c4_184 = arith.constant 4 : index
    %c0_185 = arith.constant 0 : index
    %208 = vector.load %arg19[%c4_184, %c0_185] : memref<18x128xf32, #tpu.memory_space<vmem>>, vector<9x128xf32>
    %209 = arith.truncf %208 : vector<9x128xf32> to vector<9x128xbf16>
    %c4_186 = arith.constant 4 : index
    %c0_187 = arith.constant 0 : index
    %c0_188 = arith.constant 0 : index
    %210 = vector.load %arg4[%c4_186, %c0_187, %c0_188] : memref<10x128x128xbf16, #tpu.memory_space<vmem>>, vector<1x128x128xbf16>
    %211 = vector.shape_cast %210 : vector<1x128x128xbf16> to vector<128x128xbf16>
    %cst_189 = arith.constant dense<0.000000e+00> : vector<9x128xf32>
    %212 = tpu.matmul %209, %211, %cst_189 {dimension_numbers = #tpu.dot_dimension_numbers<[1], [0], [0], [1], [0, 0, 1, 1], [], []>} : vector<9x128xbf16>, vector<128x128xbf16>, vector<9x128xf32> -> vector<9x128xf32>
    %213 = arith.addf %207, %212 : vector<9x128xf32>
    %c5_190 = arith.constant 5 : index
    %c0_191 = arith.constant 0 : index
    %214 = vector.load %arg19[%c5_190, %c0_191] : memref<18x128xf32, #tpu.memory_space<vmem>>, vector<9x128xf32>
    %215 = arith.truncf %214 : vector<9x128xf32> to vector<9x128xbf16>
    %c5_192 = arith.constant 5 : index
    %c0_193 = arith.constant 0 : index
    %c0_194 = arith.constant 0 : index
    %216 = vector.load %arg4[%c5_192, %c0_193, %c0_194] : memref<10x128x128xbf16, #tpu.memory_space<vmem>>, vector<1x128x128xbf16>
    %217 = vector.shape_cast %216 : vector<1x128x128xbf16> to vector<128x128xbf16>
    %cst_195 = arith.constant dense<0.000000e+00> : vector<9x128xf32>
    %218 = tpu.matmul %215, %217, %cst_195 {dimension_numbers = #tpu.dot_dimension_numbers<[1], [0], [0], [1], [0, 0, 1, 1], [], []>} : vector<9x128xbf16>, vector<128x128xbf16>, vector<9x128xf32> -> vector<9x128xf32>
    %219 = arith.addf %213, %218 : vector<9x128xf32>
    %c6_196 = arith.constant 6 : index
    %c0_197 = arith.constant 0 : index
    %220 = vector.load %arg19[%c6_196, %c0_197] : memref<18x128xf32, #tpu.memory_space<vmem>>, vector<9x128xf32>
    %221 = arith.truncf %220 : vector<9x128xf32> to vector<9x128xbf16>
    %c6_198 = arith.constant 6 : index
    %c0_199 = arith.constant 0 : index
    %c0_200 = arith.constant 0 : index
    %222 = vector.load %arg4[%c6_198, %c0_199, %c0_200] : memref<10x128x128xbf16, #tpu.memory_space<vmem>>, vector<1x128x128xbf16>
    %223 = vector.shape_cast %222 : vector<1x128x128xbf16> to vector<128x128xbf16>
    %cst_201 = arith.constant dense<0.000000e+00> : vector<9x128xf32>
    %224 = tpu.matmul %221, %223, %cst_201 {dimension_numbers = #tpu.dot_dimension_numbers<[1], [0], [0], [1], [0, 0, 1, 1], [], []>} : vector<9x128xbf16>, vector<128x128xbf16>, vector<9x128xf32> -> vector<9x128xf32>
    %225 = arith.addf %219, %224 : vector<9x128xf32>
    %c7_202 = arith.constant 7 : index
    %c0_203 = arith.constant 0 : index
    %226 = vector.load %arg19[%c7_202, %c0_203] : memref<18x128xf32, #tpu.memory_space<vmem>>, vector<9x128xf32>
    %227 = arith.truncf %226 : vector<9x128xf32> to vector<9x128xbf16>
    %c7_204 = arith.constant 7 : index
    %c0_205 = arith.constant 0 : index
    %c0_206 = arith.constant 0 : index
    %228 = vector.load %arg4[%c7_204, %c0_205, %c0_206] : memref<10x128x128xbf16, #tpu.memory_space<vmem>>, vector<1x128x128xbf16>
    %229 = vector.shape_cast %228 : vector<1x128x128xbf16> to vector<128x128xbf16>
    %cst_207 = arith.constant dense<0.000000e+00> : vector<9x128xf32>
    %230 = tpu.matmul %227, %229, %cst_207 {dimension_numbers = #tpu.dot_dimension_numbers<[1], [0], [0], [1], [0, 0, 1, 1], [], []>} : vector<9x128xbf16>, vector<128x128xbf16>, vector<9x128xf32> -> vector<9x128xf32>
    %231 = arith.addf %225, %230 : vector<9x128xf32>
    %c8_208 = arith.constant 8 : index
    %c0_209 = arith.constant 0 : index
    %232 = vector.load %arg19[%c8_208, %c0_209] : memref<18x128xf32, #tpu.memory_space<vmem>>, vector<9x128xf32>
    %233 = arith.truncf %232 : vector<9x128xf32> to vector<9x128xbf16>
    %c8_210 = arith.constant 8 : index
    %c0_211 = arith.constant 0 : index
    %c0_212 = arith.constant 0 : index
    %234 = vector.load %arg4[%c8_210, %c0_211, %c0_212] : memref<10x128x128xbf16, #tpu.memory_space<vmem>>, vector<1x128x128xbf16>
    %235 = vector.shape_cast %234 : vector<1x128x128xbf16> to vector<128x128xbf16>
    %cst_213 = arith.constant dense<0.000000e+00> : vector<9x128xf32>
    %236 = tpu.matmul %233, %235, %cst_213 {dimension_numbers = #tpu.dot_dimension_numbers<[1], [0], [0], [1], [0, 0, 1, 1], [], []>} : vector<9x128xbf16>, vector<128x128xbf16>, vector<9x128xf32> -> vector<9x128xf32>
    %237 = arith.addf %231, %236 : vector<9x128xf32>
    %c9_214 = arith.constant 9 : index
    %c0_215 = arith.constant 0 : index
    %238 = vector.load %arg19[%c9_214, %c0_215] : memref<18x128xf32, #tpu.memory_space<vmem>>, vector<9x128xf32>
    %239 = arith.truncf %238 : vector<9x128xf32> to vector<9x128xbf16>
    %c9_216 = arith.constant 9 : index
    %c0_217 = arith.constant 0 : index
    %c0_218 = arith.constant 0 : index
    %240 = vector.load %arg4[%c9_216, %c0_217, %c0_218] : memref<10x128x128xbf16, #tpu.memory_space<vmem>>, vector<1x128x128xbf16>
    %241 = vector.shape_cast %240 : vector<1x128x128xbf16> to vector<128x128xbf16>
    %cst_219 = arith.constant dense<0.000000e+00> : vector<9x128xf32>
    %242 = tpu.matmul %239, %241, %cst_219 {dimension_numbers = #tpu.dot_dimension_numbers<[1], [0], [0], [1], [0, 0, 1, 1], [], []>} : vector<9x128xbf16>, vector<128x128xbf16>, vector<9x128xf32> -> vector<9x128xf32>
    %243 = arith.addf %237, %242 : vector<9x128xf32>
    %244 = vector.broadcast %180 : vector<1x128xf32> to vector<9x128xf32>
    %245 = arith.addf %243, %244 : vector<9x128xf32>
    %cst_220 = arith.constant 0.000000e+00 : f32
    %246 = vector.broadcast %cst_220 : f32 to vector<9x128xf32>
    %247 = arith.cmpf ogt, %245, %246 : vector<9x128xf32>
    %cst_221 = arith.constant 0.000000e+00 : f32
    %248 = vector.broadcast %cst_221 : f32 to vector<9x128xf32>
    %249 = arith.minimumf %245, %248 : vector<9x128xf32>
    %250 = math.exp %249 : vector<9x128xf32>
    %cst_222 = arith.constant 1.000000e+00 : f32
    %251 = vector.broadcast %cst_222 : f32 to vector<9x128xf32>
    %252 = arith.subf %250, %251 : vector<9x128xf32>
    %cst_223 = arith.constant 1.000000e+00 : f32
    %253 = vector.broadcast %cst_223 : f32 to vector<9x128xf32>
    %254 = arith.mulf %253, %252 : vector<9x128xf32>
    %255 = arith.select %247, %245, %254 : vector<9x128xi1>, vector<9x128xf32>
    %256 = vector.shape_cast %255 : vector<9x128xf32> to vector<3x3x128xf32>
    %cst_224 = arith.constant dense<0xFF800000> : vector<3x128xf32>
    %257 = vector.multi_reduction <maximumf>, %256, %cst_224 [1] : vector<3x3x128xf32> to vector<3x128xf32>
    %258 = vector.broadcast %181 : vector<1x128xf32> to vector<3x128xf32>
    %259 = arith.mulf %257, %258 : vector<3x128xf32>
    %260 = vector.broadcast %182 : vector<1x128xf32> to vector<3x128xf32>
    %261 = arith.addf %259, %260 : vector<3x128xf32>
    %cst_225 = arith.constant 0.000000e+00 : f32
    %262 = vector.broadcast %cst_225 : f32 to vector<12x128xf32>
    %c0_226 = arith.constant 0 : index
    %c0_227 = arith.constant 0 : index
    %263 = vector.load %arg20[%c0_226, %c0_227] : memref<12x128xf32, #tpu.memory_space<vmem>>, vector<12x128xf32>
    tpu.vector_store %arg20[%c0_226, %c0_227], %262 {strides = array<i32>} : memref<12x128xf32, #tpu.memory_space<vmem>>, vector<12x128xf32>,
    %c4_228 = arith.constant 4 : index
    %c0_229 = arith.constant 0 : index
    %264 = vector.load %arg20[%c4_228, %c0_229] : memref<12x128xf32, #tpu.memory_space<vmem>>, vector<3x128xf32>
    tpu.vector_store %arg20[%c4_228, %c0_229], %261 {strides = array<i32>} : memref<12x128xf32, #tpu.memory_space<vmem>>, vector<3x128xf32>,
    %c0_230 = arith.constant 0 : index
    %c0_231 = arith.constant 0 : index
    %265 = vector.load %arg9[%c0_230, %c0_231] : memref<3x256xf32, #tpu.memory_space<vmem>>, vector<1x256xf32>
    %c1_232 = arith.constant 1 : index
    %c0_233 = arith.constant 0 : index
    %266 = vector.load %arg9[%c1_232, %c0_233] : memref<3x256xf32, #tpu.memory_space<vmem>>, vector<1x256xf32>
    %c2_234 = arith.constant 2 : index
    %c0_235 = arith.constant 0 : index
    %267 = vector.load %arg9[%c2_234, %c0_235] : memref<3x256xf32, #tpu.memory_space<vmem>>, vector<1x256xf32>
    %cst_236 = arith.constant 0.000000e+00 : f32
    %268 = vector.broadcast %cst_236 : f32 to vector<3x256xf32>
    %c0_237 = arith.constant 0 : index
    %c0_238 = arith.constant 0 : index
    %269 = vector.load %arg20[%c0_237, %c0_238] : memref<12x128xf32, #tpu.memory_space<vmem>>, vector<3x128xf32>
    %270 = arith.truncf %269 : vector<3x128xf32> to vector<3x128xbf16>
    %c0_239 = arith.constant 0 : index
    %c0_240 = arith.constant 0 : index
    %c0_241 = arith.constant 0 : index
    %271 = vector.load %arg5[%c0_239, %c0_240, %c0_241] : memref<10x128x256xbf16, #tpu.memory_space<vmem>>, vector<1x128x256xbf16>
    %272 = vector.shape_cast %271 : vector<1x128x256xbf16> to vector<128x256xbf16>
    %cst_242 = arith.constant dense<0.000000e+00> : vector<3x256xf32>
    %273 = tpu.matmul %270, %272, %cst_242 {dimension_numbers = #tpu.dot_dimension_numbers<[1], [0], [0], [1], [0, 0, 1, 1], [], []>} : vector<3x128xbf16>, vector<128x256xbf16>, vector<3x256xf32> -> vector<3x256xf32>
    %274 = arith.addf %268, %273 : vector<3x256xf32>
    %c1_243 = arith.constant 1 : index
    %c0_244 = arith.constant 0 : index
    %275 = vector.load %arg20[%c1_243, %c0_244] : memref<12x128xf32, #tpu.memory_space<vmem>>, vector<3x128xf32>
    %276 = arith.truncf %275 : vector<3x128xf32> to vector<3x128xbf16>
    %c1_245 = arith.constant 1 : index
    %c0_246 = arith.constant 0 : index
    %c0_247 = arith.constant 0 : index
    %277 = vector.load %arg5[%c1_245, %c0_246, %c0_247] : memref<10x128x256xbf16, #tpu.memory_space<vmem>>, vector<1x128x256xbf16>
    %278 = vector.shape_cast %277 : vector<1x128x256xbf16> to vector<128x256xbf16>
    %cst_248 = arith.constant dense<0.000000e+00> : vector<3x256xf32>
    %279 = tpu.matmul %276, %278, %cst_248 {dimension_numbers = #tpu.dot_dimension_numbers<[1], [0], [0], [1], [0, 0, 1, 1], [], []>} : vector<3x128xbf16>, vector<128x256xbf16>, vector<3x256xf32> -> vector<3x256xf32>
    %280 = arith.addf %274, %279 : vector<3x256xf32>
    %c2_249 = arith.constant 2 : index
    %c0_250 = arith.constant 0 : index
    %281 = vector.load %arg20[%c2_249, %c0_250] : memref<12x128xf32, #tpu.memory_space<vmem>>, vector<3x128xf32>
    %282 = arith.truncf %281 : vector<3x128xf32> to vector<3x128xbf16>
    %c2_251 = arith.constant 2 : index
    %c0_252 = arith.constant 0 : index
    %c0_253 = arith.constant 0 : index
    %283 = vector.load %arg5[%c2_251, %c0_252, %c0_253] : memref<10x128x256xbf16, #tpu.memory_space<vmem>>, vector<1x128x256xbf16>
    %284 = vector.shape_cast %283 : vector<1x128x256xbf16> to vector<128x256xbf16>
    %cst_254 = arith.constant dense<0.000000e+00> : vector<3x256xf32>
    %285 = tpu.matmul %282, %284, %cst_254 {dimension_numbers = #tpu.dot_dimension_numbers<[1], [0], [0], [1], [0, 0, 1, 1], [], []>} : vector<3x128xbf16>, vector<128x256xbf16>, vector<3x256xf32> -> vector<3x256xf32>
    %286 = arith.addf %280, %285 : vector<3x256xf32>
    %c3_255 = arith.constant 3 : index
    %c0_256 = arith.constant 0 : index
    %287 = vector.load %arg20[%c3_255, %c0_256] : memref<12x128xf32, #tpu.memory_space<vmem>>, vector<3x128xf32>
    %288 = arith.truncf %287 : vector<3x128xf32> to vector<3x128xbf16>
    %c3_257 = arith.constant 3 : index
    %c0_258 = arith.constant 0 : index
    %c0_259 = arith.constant 0 : index
    %289 = vector.load %arg5[%c3_257, %c0_258, %c0_259] : memref<10x128x256xbf16, #tpu.memory_space<vmem>>, vector<1x128x256xbf16>
    %290 = vector.shape_cast %289 : vector<1x128x256xbf16> to vector<128x256xbf16>
    %cst_260 = arith.constant dense<0.000000e+00> : vector<3x256xf32>
    %291 = tpu.matmul %288, %290, %cst_260 {dimension_numbers = #tpu.dot_dimension_numbers<[1], [0], [0], [1], [0, 0, 1, 1], [], []>} : vector<3x128xbf16>, vector<128x256xbf16>, vector<3x256xf32> -> vector<3x256xf32>
    %292 = arith.addf %286, %291 : vector<3x256xf32>
    %c4_261 = arith.constant 4 : index
    %c0_262 = arith.constant 0 : index
    %293 = vector.load %arg20[%c4_261, %c0_262] : memref<12x128xf32, #tpu.memory_space<vmem>>, vector<3x128xf32>
    %294 = arith.truncf %293 : vector<3x128xf32> to vector<3x128xbf16>
    %c4_263 = arith.constant 4 : index
    %c0_264 = arith.constant 0 : index
    %c0_265 = arith.constant 0 : index
    %295 = vector.load %arg5[%c4_263, %c0_264, %c0_265] : memref<10x128x256xbf16, #tpu.memory_space<vmem>>, vector<1x128x256xbf16>
    %296 = vector.shape_cast %295 : vector<1x128x256xbf16> to vector<128x256xbf16>
    %cst_266 = arith.constant dense<0.000000e+00> : vector<3x256xf32>
    %297 = tpu.matmul %294, %296, %cst_266 {dimension_numbers = #tpu.dot_dimension_numbers<[1], [0], [0], [1], [0, 0, 1, 1], [], []>} : vector<3x128xbf16>, vector<128x256xbf16>, vector<3x256xf32> -> vector<3x256xf32>
    %298 = arith.addf %292, %297 : vector<3x256xf32>
    %c5_267 = arith.constant 5 : index
    %c0_268 = arith.constant 0 : index
    %299 = vector.load %arg20[%c5_267, %c0_268] : memref<12x128xf32, #tpu.memory_space<vmem>>, vector<3x128xf32>
    %300 = arith.truncf %299 : vector<3x128xf32> to vector<3x128xbf16>
    %c5_269 = arith.constant 5 : index
    %c0_270 = arith.constant 0 : index
    %c0_271 = arith.constant 0 : index
    %301 = vector.load %arg5[%c5_269, %c0_270, %c0_271] : memref<10x128x256xbf16, #tpu.memory_space<vmem>>, vector<1x128x256xbf16>
    %302 = vector.shape_cast %301 : vector<1x128x256xbf16> to vector<128x256xbf16>
    %cst_272 = arith.constant dense<0.000000e+00> : vector<3x256xf32>
    %303 = tpu.matmul %300, %302, %cst_272 {dimension_numbers = #tpu.dot_dimension_numbers<[1], [0], [0], [1], [0, 0, 1, 1], [], []>} : vector<3x128xbf16>, vector<128x256xbf16>, vector<3x256xf32> -> vector<3x256xf32>
    %304 = arith.addf %298, %303 : vector<3x256xf32>
    %c6_273 = arith.constant 6 : index
    %c0_274 = arith.constant 0 : index
    %305 = vector.load %arg20[%c6_273, %c0_274] : memref<12x128xf32, #tpu.memory_space<vmem>>, vector<3x128xf32>
    %306 = arith.truncf %305 : vector<3x128xf32> to vector<3x128xbf16>
    %c6_275 = arith.constant 6 : index
    %c0_276 = arith.constant 0 : index
    %c0_277 = arith.constant 0 : index
    %307 = vector.load %arg5[%c6_275, %c0_276, %c0_277] : memref<10x128x256xbf16, #tpu.memory_space<vmem>>, vector<1x128x256xbf16>
    %308 = vector.shape_cast %307 : vector<1x128x256xbf16> to vector<128x256xbf16>
    %cst_278 = arith.constant dense<0.000000e+00> : vector<3x256xf32>
    %309 = tpu.matmul %306, %308, %cst_278 {dimension_numbers = #tpu.dot_dimension_numbers<[1], [0], [0], [1], [0, 0, 1, 1], [], []>} : vector<3x128xbf16>, vector<128x256xbf16>, vector<3x256xf32> -> vector<3x256xf32>
    %310 = arith.addf %304, %309 : vector<3x256xf32>
    %c7_279 = arith.constant 7 : index
    %c0_280 = arith.constant 0 : index
    %311 = vector.load %arg20[%c7_279, %c0_280] : memref<12x128xf32, #tpu.memory_space<vmem>>, vector<3x128xf32>
    %312 = arith.truncf %311 : vector<3x128xf32> to vector<3x128xbf16>
    %c7_281 = arith.constant 7 : index
    %c0_282 = arith.constant 0 : index
    %c0_283 = arith.constant 0 : index
    %313 = vector.load %arg5[%c7_281, %c0_282, %c0_283] : memref<10x128x256xbf16, #tpu.memory_space<vmem>>, vector<1x128x256xbf16>
    %314 = vector.shape_cast %313 : vector<1x128x256xbf16> to vector<128x256xbf16>
    %cst_284 = arith.constant dense<0.000000e+00> : vector<3x256xf32>
    %315 = tpu.matmul %312, %314, %cst_284 {dimension_numbers = #tpu.dot_dimension_numbers<[1], [0], [0], [1], [0, 0, 1, 1], [], []>} : vector<3x128xbf16>, vector<128x256xbf16>, vector<3x256xf32> -> vector<3x256xf32>
    %316 = arith.addf %310, %315 : vector<3x256xf32>
    %c8_285 = arith.constant 8 : index
    %c0_286 = arith.constant 0 : index
    %317 = vector.load %arg20[%c8_285, %c0_286] : memref<12x128xf32, #tpu.memory_space<vmem>>, vector<3x128xf32>
    %318 = arith.truncf %317 : vector<3x128xf32> to vector<3x128xbf16>
    %c8_287 = arith.constant 8 : index
    %c0_288 = arith.constant 0 : index
    %c0_289 = arith.constant 0 : index
    %319 = vector.load %arg5[%c8_287, %c0_288, %c0_289] : memref<10x128x256xbf16, #tpu.memory_space<vmem>>, vector<1x128x256xbf16>
    %320 = vector.shape_cast %319 : vector<1x128x256xbf16> to vector<128x256xbf16>
    %cst_290 = arith.constant dense<0.000000e+00> : vector<3x256xf32>
    %321 = tpu.matmul %318, %320, %cst_290 {dimension_numbers = #tpu.dot_dimension_numbers<[1], [0], [0], [1], [0, 0, 1, 1], [], []>} : vector<3x128xbf16>, vector<128x256xbf16>, vector<3x256xf32> -> vector<3x256xf32>
    %322 = arith.addf %316, %321 : vector<3x256xf32>
    %c9_291 = arith.constant 9 : index
    %c0_292 = arith.constant 0 : index
    %323 = vector.load %arg20[%c9_291, %c0_292] : memref<12x128xf32, #tpu.memory_space<vmem>>, vector<3x128xf32>
    %324 = arith.truncf %323 : vector<3x128xf32> to vector<3x128xbf16>
    %c9_293 = arith.constant 9 : index
    %c0_294 = arith.constant 0 : index
    %c0_295 = arith.constant 0 : index
    %325 = vector.load %arg5[%c9_293, %c0_294, %c0_295] : memref<10x128x256xbf16, #tpu.memory_space<vmem>>, vector<1x128x256xbf16>
    %326 = vector.shape_cast %325 : vector<1x128x256xbf16> to vector<128x256xbf16>
    %cst_296 = arith.constant dense<0.000000e+00> : vector<3x256xf32>
    %327 = tpu.matmul %324, %326, %cst_296 {dimension_numbers = #tpu.dot_dimension_numbers<[1], [0], [0], [1], [0, 0, 1, 1], [], []>} : vector<3x128xbf16>, vector<128x256xbf16>, vector<3x256xf32> -> vector<3x256xf32>
    %328 = arith.addf %322, %327 : vector<3x256xf32>
    %329 = vector.broadcast %265 : vector<1x256xf32> to vector<3x256xf32>
    %330 = arith.addf %328, %329 : vector<3x256xf32>
    %cst_297 = arith.constant 0.000000e+00 : f32
    %331 = vector.broadcast %cst_297 : f32 to vector<3x256xf32>
    %332 = arith.cmpf ogt, %330, %331 : vector<3x256xf32>
    %cst_298 = arith.constant 0.000000e+00 : f32
    %333 = vector.broadcast %cst_298 : f32 to vector<3x256xf32>
    %334 = arith.minimumf %330, %333 : vector<3x256xf32>
    %335 = math.exp %334 : vector<3x256xf32>
    %cst_299 = arith.constant 1.000000e+00 : f32
    %336 = vector.broadcast %cst_299 : f32 to vector<3x256xf32>
    %337 = arith.subf %335, %336 : vector<3x256xf32>
    %cst_300 = arith.constant 1.000000e+00 : f32
    %338 = vector.broadcast %cst_300 : f32 to vector<3x256xf32>
    %339 = arith.mulf %338, %337 : vector<3x256xf32>
    %340 = arith.select %332, %330, %339 : vector<3x256xi1>, vector<3x256xf32>
    %341 = vector.shape_cast %340 : vector<3x256xf32> to vector<1x3x256xf32>
    %cst_301 = arith.constant dense<0xFF800000> : vector<1x256xf32>
    %342 = vector.multi_reduction <maximumf>, %341, %cst_301 [1] : vector<1x3x256xf32> to vector<1x256xf32>
    %343 = arith.mulf %342, %266 : vector<1x256xf32>
    %344 = arith.addf %343, %267 : vector<1x256xf32>
    %345 = arith.truncf %344 : vector<1x256xf32> to vector<1x256xbf16>
    %c0_302 = arith.constant 0 : index
    %c0_303 = arith.constant 0 : index
    %346 = vector.load %arg10[%c0_302, %c0_303] : memref<256x128xbf16, #tpu.memory_space<vmem>>, vector<256x128xbf16>
    %cst_304 = arith.constant dense<0.000000e+00> : vector<1x128xf32>
    %347 = tpu.matmul %345, %346, %cst_304 {dimension_numbers = #tpu.dot_dimension_numbers<[1], [0], [0], [1], [0, 0, 1, 1], [], []>} : vector<1x256xbf16>, vector<256x128xbf16>, vector<1x128xf32> -> vector<1x128xf32>
    %c0_305 = arith.constant 0 : index
    %c0_306 = arith.constant 0 : index
    %348 = vector.load %arg11[%c0_305, %c0_306] : memref<1x128xf32, #tpu.memory_space<vmem>>, vector<1x128xf32>
    %349 = arith.addf %347, %348 : vector<1x128xf32>
    %350 = arith.truncf %349 : vector<1x128xf32> to vector<1x128xbf16>
    %c0_307 = arith.constant 0 : index
    %c0_308 = arith.constant 0 : index
    %351 = vector.load %arg12[%c0_307, %c0_308] : memref<128x384xbf16, #tpu.memory_space<vmem>>, vector<128x384xbf16>
    %cst_309 = arith.constant dense<0.000000e+00> : vector<1x384xf32>
    %352 = tpu.matmul %350, %351, %cst_309 {dimension_numbers = #tpu.dot_dimension_numbers<[1], [0], [0], [1], [0, 0, 1, 1], [], []>} : vector<1x128xbf16>, vector<128x384xbf16>, vector<1x384xf32> -> vector<1x384xf32>
    %c0_310 = arith.constant 0 : index
    %c0_311 = arith.constant 0 : index
    %353 = vector.load %arg13[%c0_310, %c0_311] : memref<1x384xf32, #tpu.memory_space<vmem>>, vector<1x384xf32>
    %354 = arith.addf %352, %353 : vector<1x384xf32>
    %c0_312 = arith.constant 0 : index
    %c0_313 = arith.constant 0 : index
    %355 = vector.load %arg14[%c0_312, %c0_313] : memref<1x384xf32, #tpu.memory_space<vmem>>, vector<1x384xf32>
    %356 = vector.extract_strided_slice %354 {offsets = [0, 0], sizes = [1, 128], strides = [1, 1]} : vector<1x384xf32> to vector<1x128xf32>
    %357 = vector.extract_strided_slice %355 {offsets = [0, 0], sizes = [1, 128], strides = [1, 1]} : vector<1x384xf32> to vector<1x128xf32>
    %358 = arith.addf %356, %357 : vector<1x128xf32>
    %359 = arith.negf %358 : vector<1x128xf32>
    %360 = math.exp %359 : vector<1x128xf32>
    %cst_314 = arith.constant 1.000000e+00 : f32
    %361 = vector.broadcast %cst_314 : f32 to vector<1x128xf32>
    %362 = arith.addf %361, %360 : vector<1x128xf32>
    %363 = arith.divf %361, %362 : vector<1x128xf32>
    %364 = vector.extract_strided_slice %354 {offsets = [0, 128], sizes = [1, 128], strides = [1, 1]} : vector<1x384xf32> to vector<1x128xf32>
    %365 = vector.extract_strided_slice %355 {offsets = [0, 128], sizes = [1, 128], strides = [1, 1]} : vector<1x384xf32> to vector<1x128xf32>
    %366 = arith.addf %364, %365 : vector<1x128xf32>
    %367 = arith.negf %366 : vector<1x128xf32>
    %368 = math.exp %367 : vector<1x128xf32>
    %cst_315 = arith.constant 1.000000e+00 : f32
    %369 = vector.broadcast %cst_315 : f32 to vector<1x128xf32>
    %370 = arith.addf %369, %368 : vector<1x128xf32>
    %371 = arith.divf %369, %370 : vector<1x128xf32>
    %372 = vector.extract_strided_slice %354 {offsets = [0, 256], sizes = [1, 128], strides = [1, 1]} : vector<1x384xf32> to vector<1x128xf32>
    %373 = vector.extract_strided_slice %355 {offsets = [0, 256], sizes = [1, 128], strides = [1, 1]} : vector<1x384xf32> to vector<1x128xf32>
    %374 = arith.mulf %363, %373 : vector<1x128xf32>
    %375 = arith.addf %372, %374 : vector<1x128xf32>
    %376 = math.tanh %375 : vector<1x128xf32>
    %cst_316 = arith.constant 1.000000e+00 : f32
    %377 = vector.broadcast %cst_316 : f32 to vector<1x128xf32>
    %378 = arith.subf %377, %371 : vector<1x128xf32>
    %379 = arith.mulf %378, %376 : vector<1x128xf32>
    %380 = arith.truncf %379 : vector<1x128xf32> to vector<1x128xbf16>
    %c0_317 = arith.constant 0 : index
    %c0_318 = arith.constant 0 : index
    %381 = vector.load %arg15[%c0_317, %c0_318] : memref<128x128xbf16, #tpu.memory_space<vmem>>, vector<128x128xbf16>
    %cst_319 = arith.constant dense<0.000000e+00> : vector<1x128xf32>
    %382 = tpu.matmul %380, %381, %cst_319 {dimension_numbers = #tpu.dot_dimension_numbers<[1], [0], [0], [1], [0, 0, 1, 1], [], []>} : vector<1x128xbf16>, vector<128x128xbf16>, vector<1x128xf32> -> vector<1x128xf32>
    %c0_320 = arith.constant 0 : index
    %c0_321 = arith.constant 0 : index
    %383 = vector.load %arg16[%c0_320, %c0_321] : memref<1x128xf32, #tpu.memory_space<vmem>>, vector<1x128xf32>
    %384 = arith.addf %382, %383 : vector<1x128xf32>
    %c0_322 = arith.constant 0 : index
    %c0_323 = arith.constant 0 : index
    %c0_324 = arith.constant 0 : index
    %385 = vector.load %arg17[%c0_322, %c0_323, %c0_324] : memref<1x1x128xf32, #tpu.memory_space<vmem>>, vector<1x1x128xf32>
    %386 = vector.shape_cast %385 : vector<1x1x128xf32> to vector<1x128xf32>
    %387 = vector.shape_cast %384 : vector<1x128xf32> to vector<1x1x128xf32>
    tpu.vector_store %arg17[%c0_322, %c0_323, %c0_324], %387 {strides = array<i32>} : memref<1x1x128xf32, #tpu.memory_space<vmem>>, vector<1x1x128xf32>,
    return
  }
  func.func @transform_0(%arg0: i32) -> (i32, i32, i32) {
    %c0_i32 = arith.constant 0 : i32
    %c0_i32_0 = arith.constant 0 : i32
    %c0_i32_1 = arith.constant 0 : i32
    return %arg0, %c0_i32, %c0_i32_0 : i32, i32, i32
  }
  func.func @transform_1(%arg0: i32) -> (i32, i32, i32) {
    %c0_i32 = arith.constant 0 : i32
    %c0_i32_0 = arith.constant 0 : i32
    %c0_i32_1 = arith.constant 0 : i32
    %c0_i32_2 = arith.constant 0 : i32
    return %c0_i32, %c0_i32_0, %c0_i32_1 : i32, i32, i32
  }
  func.func @transform_2(%arg0: i32) -> (i32, i32, i32) {
    %c0_i32 = arith.constant 0 : i32
    %c0_i32_0 = arith.constant 0 : i32
    %c0_i32_1 = arith.constant 0 : i32
    %c0_i32_2 = arith.constant 0 : i32
    return %c0_i32, %c0_i32_0, %c0_i32_1 : i32, i32, i32
  }
  func.func @transform_3(%arg0: i32) -> (i32, i32, i32) {
    %c0_i32 = arith.constant 0 : i32
    %c0_i32_0 = arith.constant 0 : i32
    %c0_i32_1 = arith.constant 0 : i32
    %c0_i32_2 = arith.constant 0 : i32
    return %c0_i32, %c0_i32_0, %c0_i32_1 : i32, i32, i32
  }
  func.func @transform_4(%arg0: i32) -> (i32, i32, i32) {
    %c0_i32 = arith.constant 0 : i32
    %c0_i32_0 = arith.constant 0 : i32
    %c0_i32_1 = arith.constant 0 : i32
    %c0_i32_2 = arith.constant 0 : i32
    return %c0_i32, %c0_i32_0, %c0_i32_1 : i32, i32, i32
  }
  func.func @transform_5(%arg0: i32) -> (i32, i32) {
    %c0_i32 = arith.constant 0 : i32
    %c0_i32_0 = arith.constant 0 : i32
    %c0_i32_1 = arith.constant 0 : i32
    return %c0_i32, %c0_i32_0 : i32, i32
  }
  func.func @transform_6(%arg0: i32) -> (i32, i32) {
    %c0_i32 = arith.constant 0 : i32
    %c0_i32_0 = arith.constant 0 : i32
    %c0_i32_1 = arith.constant 0 : i32
    return %c0_i32, %c0_i32_0 : i32, i32
  }
  func.func @transform_7(%arg0: i32) -> (i32, i32) {
    %c0_i32 = arith.constant 0 : i32
    %c0_i32_0 = arith.constant 0 : i32
    %c0_i32_1 = arith.constant 0 : i32
    return %c0_i32, %c0_i32_0 : i32, i32
  }
  func.func @transform_8(%arg0: i32) -> (i32, i32) {
    %c0_i32 = arith.constant 0 : i32
    %c0_i32_0 = arith.constant 0 : i32
    %c0_i32_1 = arith.constant 0 : i32
    return %c0_i32, %c0_i32_0 : i32, i32
  }
  func.func @transform_9(%arg0: i32) -> (i32, i32) {
    %c0_i32 = arith.constant 0 : i32
    %c0_i32_0 = arith.constant 0 : i32
    %c0_i32_1 = arith.constant 0 : i32
    return %c0_i32, %c0_i32_0 : i32, i32
  }
  func.func @transform_10(%arg0: i32) -> (i32, i32) {
    %c0_i32 = arith.constant 0 : i32
    %c0_i32_0 = arith.constant 0 : i32
    %c0_i32_1 = arith.constant 0 : i32
    return %c0_i32, %c0_i32_0 : i32, i32
  }
  func.func @transform_11(%arg0: i32) -> (i32, i32) {
    %c0_i32 = arith.constant 0 : i32
    %c0_i32_0 = arith.constant 0 : i32
    %c0_i32_1 = arith.constant 0 : i32
    return %c0_i32, %c0_i32_0 : i32, i32
  }
  func.func @transform_12(%arg0: i32) -> (i32, i32) {
    %c0_i32 = arith.constant 0 : i32
    %c0_i32_0 = arith.constant 0 : i32
    %c0_i32_1 = arith.constant 0 : i32
    return %c0_i32, %c0_i32_0 : i32, i32
  }
  func.func @transform_13(%arg0: i32) -> (i32, i32) {
    %c0_i32 = arith.constant 0 : i32
    %c0_i32_0 = arith.constant 0 : i32
    %c0_i32_1 = arith.constant 0 : i32
    return %c0_i32, %c0_i32_0 : i32, i32
  }
  func.func @transform_14(%arg0: i32) -> (i32, i32) {
    %c0_i32 = arith.constant 0 : i32
    %c0_i32_0 = arith.constant 0 : i32
    %c0_i32_1 = arith.constant 0 : i32
    return %c0_i32, %c0_i32_0 : i32, i32
  }
  func.func @transform_15(%arg0: i32) -> (i32, i32) {
    %c0_i32 = arith.constant 0 : i32
    %c0_i32_0 = arith.constant 0 : i32
    %c0_i32_1 = arith.constant 0 : i32
    return %c0_i32, %c0_i32_0 : i32, i32
  }
  func.func @transform_16(%arg0: i32) -> (i32, i32, i32) {
    %c0_i32 = arith.constant 0 : i32
    %c0_i32_0 = arith.constant 0 : i32
    %c0_i32_1 = arith.constant 0 : i32
    return %arg0, %c0_i32, %c0_i32_0 : i32, i32, i32
  }
}

</mosaic_0001>

<llo_original>
// kernel: cnn_gru_forward.1
$region0: #{cnn_gru_forward.1}
  #allocation0 [shape = 'u32[]', space=smem, size = 0x4, offset = 0x4, fixed_abs, tag = 'smem constant byte address 0x4 - core index']
  #allocation1 [shape = 'u32[72,128]{1,0:T(1,128)}', space=vmem, size = 0x9000, scoped, tag = 'internal scratch']
  #allocation2 [shape = 'f32[36,128]{1,0:T(8,128)}', space=vmem, size = 0x5000, scoped, tag = 'scratch operand']
  #allocation3 [shape = 'f32[18,128]{1,0:T(8,128)}', space=vmem, size = 0x3000, scoped, tag = 'scratch operand']
  #allocation4 [shape = 'f32[12,128]{1,0:T(8,128)}', space=vmem, size = 0x2000, scoped, tag = 'scratch operand']
  %s0 = inlined_call_operand.vmem [shape: f32[2,90,128], index: 0, kind: input, shape index: {}]
  %s1 = inlined_call_operand.hbm [shape: bf16[10,128,128], index: 1, kind: input, shape index: {}]
  %s2 = inlined_call_operand.hbm [shape: bf16[10,128,128], index: 2, kind: input, shape index: {}]
  %s3 = inlined_call_operand.hbm [shape: bf16[10,128,128], index: 3, kind: input, shape index: {}]
  %s4 = inlined_call_operand.hbm [shape: bf16[10,128,256], index: 4, kind: input, shape index: {}]
  %s5 = inlined_call_operand.vmem [shape: f32[3,128], index: 5, kind: input, shape index: {}]
  %s6 = inlined_call_operand.vmem [shape: f32[3,128], index: 6, kind: input, shape index: {}]
  %s7 = inlined_call_operand.vmem [shape: f32[3,128], index: 7, kind: input, shape index: {}]
  %s8 = inlined_call_operand.vmem [shape: f32[3,256], index: 8, kind: input, shape index: {}]
  %s9 = inlined_call_operand.vmem [shape: bf16[256,128], index: 9, kind: input, shape index: {}]
  %s10 = inlined_call_operand.vmem [shape: f32[1,128], index: 10, kind: input, shape index: {}]
  %s11 = inlined_call_operand.vmem [shape: bf16[128,384], index: 11, kind: input, shape index: {}]
  %s12 = inlined_call_operand.vmem [shape: f32[1,384], index: 12, kind: input, shape index: {}]
  %s13 = inlined_call_operand.vmem [shape: f32[1,384], index: 13, kind: input, shape index: {}]
  %s14 = inlined_call_operand.vmem [shape: bf16[128,128], index: 14, kind: input, shape index: {}]
  %s15 = inlined_call_operand.vmem [shape: f32[1,128], index: 15, kind: input, shape index: {}]
  %s16 = inlined_call_operand.hbm [shape: f32[2,1,128], index: 16, kind: output, shape index: {}]
  %s17 = sld [smem:[#allocation0]]
  $region113: #{cnn_gru_forward.1} parent=0
    _
  %s19 = ssub.s32 1, %s17
  %s20 = scalar_select 0, %s19, %s17
  $region1: #{cnn_gru_forward.1} parent=0
    #allocation5 [shape = 'u8[327680]{0}', space=vmem, size = 0x50000, scoped, tag = 'input window, operand 1, single buffered']
    #allocation6 [shape = 's32[2]{0}', space=sflag, size = 0x8, scoped, tag = 'scoped memory for cnn_gru_forward.1']
    #allocation7 [shape = 's32[2]{0}', space=sflag, size = 0x8, scoped, tag = 'scoped memory for cnn_gru_forward.1']
    #allocation8 [shape = 'u8[327680]{0}', space=vmem, size = 0x50000, scoped, tag = 'input window, operand 2, single buffered']
    #allocation9 [shape = 's32[1]{0}', space=sflag, size = 0x4, scoped, tag = 'scoped memory for cnn_gru_forward.1']
    #allocation10 [shape = 'u8[327680]{0}', space=vmem, size = 0x50000, scoped, tag = 'input window, operand 3, single buffered']
    #allocation11 [shape = 'u8[655360]{0}', space=vmem, size = 0xa0000, scoped, tag = 'input window, operand 4, single buffered']
    #allocation12 [shape = 's32[1]{0}', space=sflag, size = 0x4, scoped, tag = 'scoped memory for cnn_gru_forward.1']
    #allocation13 [shape = 'u8[1024]{0}', space=vmem, size = 0x400, scoped, tag = 'output window, operand 0']
    %21 = vsyncpa [#allocation6], 0
    %22 = vsyncpa [#allocation9], 0
    %23 = vsyncpa [#allocation12], 0
    %24 = vsyncpa [#allocation7], 0
    %s25 = scalar_lea.sflag [#allocation7], 1
    %26 = vsyncpa %s25, 0
    loop: start=0, step=1, limit=4
    $region2: #{cnn_gru_forward.1} parent=1 // loop_pre_header
      _
    $region3: #{cnn_gru_forward.1} parent=1 // loop_header
      %s28 = sphi 0, %s32
      %p29 = scmp.ge.s32.totalorder %s28, 4
      %s38 = sphi 0, %s40
      %s41 = sphi 0, %s38
      %s42 = sphi 0, %s41
      %s58 = sphi 0, %s42
      %s62 = sphi 0, %s62
      %s64 = sphi 0, %s62
      %s65 = sphi 0, %s64
      %s79 = sphi 0, %s65
      %s83 = sphi 0, %s83
      %s85 = sphi 0, %s83
      %s86 = sphi 0, %s85
      %s100 = sphi 0, %s86
      %s104 = sphi 0, %s104
      %s106 = sphi 0, %s104
      %s107 = sphi 0, %s106
      %s121 = sphi 0, %s107
      %s125 = sphi 0, %s125
      %s127 = sphi 0, %s125
      %s128 = sphi 0, %s127
      %s142 = sphi 0, %s128
      %s146 = sphi 0, %s146
      %s148 = sphi 0, %s146
      %s149 = sphi 0, %s148
      %s163 = sphi 0, %s149
      %s167 = sphi 0, %s167
      %s169 = sphi 0, %s167
      %s170 = sphi 0, %s169
      %s184 = sphi 0, %s170
      %s188 = sphi 0, %s188
      %s190 = sphi 0, %s188
      %s191 = sphi 0, %s190
      %s205 = sphi 0, %s191
      %s209 = sphi 0, %s209
      %s211 = sphi 0, %s209
      %s212 = sphi 0, %s211
      %s226 = sphi 0, %s212
      %s230 = sphi 0, %s230
      %s232 = sphi 0, %s230
      %s233 = sphi 0, %s232
      %s247 = sphi 0, %s233
      %s251 = sphi 0, %s251
      %s253 = sphi 0, %s251
      %s254 = sphi 0, %s253
      %s268 = sphi 0, %s254
      %s272 = sphi 0, %s272
      %s274 = sphi 0, %s272
      %s275 = sphi 0, %s274
      %s289 = sphi 0, %s275
      %s293 = sphi 0, %s293
      %s295 = sphi 0, %s293
      %s296 = sphi 0, %s295
      %s310 = sphi 0, %s296
      %s314 = sphi 0, %s314
      %s316 = sphi 0, %s314
      %s317 = sphi 0, %s316
      %s331 = sphi 0, %s317
      %s335 = sphi 0, %s335
      %s337 = sphi 0, %s335
      %s338 = sphi 0, %s337
      %s352 = sphi 0, %s338
      %s356 = sphi 0, %s356
      %s358 = sphi 0, %s356
      %s359 = sphi 0, %s358
      %s373 = sphi 0, %s359
      %s379 = sphi 0, %s381
      %s382 = sphi 0, %s379
      %s383 = sphi 0, %s382
      %s399 = sphi 0, %s383
    $region4: #{cnn_gru_forward.1} parent=1 // loop_header_branch
      %31 = sbr.rel (%p29) target = $region8
    $region5: #{cnn_gru_forward.1} parent=1 // loop_body
      %s33 = ssub.s32 %s28, 1
      %s34 = ssub.s32 %s28, 2
      %s35 = sadd.s32 %s28, 1
      %s36 = ssub.s32 %s28, %s35
      %p37 = scmp.eq.s32.totalorder %s36, 0
      %s39 = sadd.s32 %s38, 1
      %s40 = scalar_select %p37, %s38, %s39
      %p43 = pneg %p37
      %p44 = scmp.eq.s32.totalorder %s28, 1
      %p45 = por %p43, %p44
      %p46 = scmp.ne.s32.totalorder %s38, %s41
      %p47 = scmp.eq.s32.totalorder %s28, 0
      %p48 = por %p46, %p47
      %p49 = scmp.ne.s32.totalorder %s38, %s41
      %p50 = scmp.eq.s32.totalorder %s33, 1
      %p51 = por %p49, %p50
      %p52 = scmp.ne.s32.totalorder %s41, %s42
      %p53 = scmp.eq.s32.totalorder %s33, 0
      %p54 = por %p52, %p53
      %p55 = scmp.ne.s32.totalorder %s41, %s42
      %p56 = scmp.eq.s32.totalorder %s34, 1
      %p57 = por %p55, %p56
      %p59 = scmp.ne.s32.totalorder %s42, %s58
      %p60 = scmp.eq.s32.totalorder %s34, 0
      %p61 = por %p59, %p60
      %s63 = sadd.s32 %s62, 1
      %p66 = scmp.eq.s32.totalorder %s28, 1
      %p67 = scmp.ne.s32.totalorder %s62, %s64
      %p68 = scmp.eq.s32.totalorder %s28, 0
      %p69 = por %p67, %p68
      %p70 = scmp.ne.s32.totalorder %s62, %s64
      %p71 = scmp.eq.s32.totalorder %s33, 1
      %p72 = por %p70, %p71
      %p73 = scmp.ne.s32.totalorder %s64, %s65
      %p74 = scmp.eq.s32.totalorder %s33, 0
      %p75 = por %p73, %p74
      %p76 = scmp.ne.s32.totalorder %s64, %s65
      %p77 = scmp.eq.s32.totalorder %s34, 1
      %p78 = por %p76, %p77
      %p80 = scmp.ne.s32.totalorder %s65, %s79
      %p81 = scmp.eq.s32.totalorder %s34, 0
      %p82 = por %p80, %p81
      %s84 = sadd.s32 %s83, 1
      %p87 = scmp.eq.s32.totalorder %s28, 1
      %p88 = scmp.ne.s32.totalorder %s83, %s85
      %p89 = scmp.eq.s32.totalorder %s28, 0
      %p90 = por %p88, %p89
      %p91 = scmp.ne.s32.totalorder %s83, %s85
      %p92 = scmp.eq.s32.totalorder %s33, 1
      %p93 = por %p91, %p92
      %p94 = scmp.ne.s32.totalorder %s85, %s86
      %p95 = scmp.eq.s32.totalorder %s33, 0
      %p96 = por %p94, %p95
      %p97 = scmp.ne.s32.totalorder %s85, %s86
      %p98 = scmp.eq.s32.totalorder %s34, 1
      %p99 = por %p97, %p98
      %p101 = scmp.ne.s32.totalorder %s86, %s100
      %p102 = scmp.eq.s32.totalorder %s34, 0
      %p103 = por %p101, %p102
      %s105 = sadd.s32 %s104, 1
      %p108 = scmp.eq.s32.totalorder %s28, 1
      %p109 = scmp.ne.s32.totalorder %s104, %s106
      %p110 = scmp.eq.s32.totalorder %s28, 0
      %p111 = por %p109, %p110
      %p112 = scmp.ne.s32.totalorder %s104, %s106
      %p113 = scmp.eq.s32.totalorder %s33, 1
      %p114 = por %p112, %p113
      %p115 = scmp.ne.s32.totalorder %s106, %s107
      %p116 = scmp.eq.s32.totalorder %s33, 0
      %p117 = por %p115, %p116
      %p118 = scmp.ne.s32.totalorder %s106, %s107
      %p119 = scmp.eq.s32.totalorder %s34, 1
      %p120 = por %p118, %p119
      %p122 = scmp.ne.s32.totalorder %s107, %s121
      %p123 = scmp.eq.s32.totalorder %s34, 0
      %p124 = por %p122, %p123
      %s126 = sadd.s32 %s125, 1
      %p129 = scmp.eq.s32.totalorder %s28, 1
      %p130 = scmp.ne.s32.totalorder %s125, %s127
      %p131 = scmp.eq.s32.totalorder %s28, 0
      %p132 = por %p130, %p131
      %p133 = scmp.ne.s32.totalorder %s125, %s127
      %p134 = scmp.eq.s32.totalorder %s33, 1
      %p135 = por %p133, %p134
      %p136 = scmp.ne.s32.totalorder %s127, %s128
      %p137 = scmp.eq.s32.totalorder %s33, 0
      %p138 = por %p136, %p137
      %p139 = scmp.ne.s32.totalorder %s127, %s128
      %p140 = scmp.eq.s32.totalorder %s34, 1
      %p141 = por %p139, %p140
      %p143 = scmp.ne.s32.totalorder %s128, %s142
      %p144 = scmp.eq.s32.totalorder %s34, 0
      %p145 = por %p143, %p144
      %s147 = sadd.s32 %s146, 1
      %p150 = scmp.eq.s32.totalorder %s28, 1
      %p151 = scmp.ne.s32.totalorder %s146, %s148
      %p152 = scmp.eq.s32.totalorder %s28, 0
      %p153 = por %p151, %p152
      %p154 = scmp.ne.s32.totalorder %s146, %s148
      %p155 = scmp.eq.s32.totalorder %s33, 1
      %p156 = por %p154, %p155
      %p157 = scmp.ne.s32.totalorder %s148, %s149
      %p158 = scmp.eq.s32.totalorder %s33, 0
      %p159 = por %p157, %p158
      %p160 = scmp.ne.s32.totalorder %s148, %s149
      %p161 = scmp.eq.s32.totalorder %s34, 1
      %p162 = por %p160, %p161
      %p164 = scmp.ne.s32.totalorder %s149, %s163
      %p165 = scmp.eq.s32.totalorder %s34, 0
      %p166 = por %p164, %p165
      %s168 = sadd.s32 %s167, 1
      %p171 = scmp.eq.s32.totalorder %s28, 1
      %p172 = scmp.ne.s32.totalorder %s167, %s169
      %p173 = scmp.eq.s32.totalorder %s28, 0
      %p174 = por %p172, %p173
      %p175 = scmp.ne.s32.totalorder %s167, %s169
      %p176 = scmp.eq.s32.totalorder %s33, 1
      %p177 = por %p175, %p176
      %p178 = scmp.ne.s32.totalorder %s169, %s170
      %p179 = scmp.eq.s32.totalorder %s33, 0
      %p180 = por %p178, %p179
      %p181 = scmp.ne.s32.totalorder %s169, %s170
      %p182 = scmp.eq.s32.totalorder %s34, 1
      %p183 = por %p181, %p182
      %p185 = scmp.ne.s32.totalorder %s170, %s184
      %p186 = scmp.eq.s32.totalorder %s34, 0
      %p187 = por %p185, %p186
      %s189 = sadd.s32 %s188, 1
      %p192 = scmp.eq.s32.totalorder %s28, 1
      %p193 = scmp.ne.s32.totalorder %s188, %s190
      %p194 = scmp.eq.s32.totalorder %s28, 0
      %p195 = por %p193, %p194
      %p196 = scmp.ne.s32.totalorder %s188, %s190
      %p197 = scmp.eq.s32.totalorder %s33, 1
      %p198 = por %p196, %p197
      %p199 = scmp.ne.s32.totalorder %s190, %s191
      %p200 = scmp.eq.s32.totalorder %s33, 0
      %p201 = por %p199, %p200
      %p202 = scmp.ne.s32.totalorder %s190, %s191
      %p203 = scmp.eq.s32.totalorder %s34, 1
      %p204 = por %p202, %p203
      %p206 = scmp.ne.s32.totalorder %s191, %s205
      %p207 = scmp.eq.s32.totalorder %s34, 0
      %p208 = por %p206, %p207
      %s210 = sadd.s32 %s209, 1
      %p213 = scmp.eq.s32.totalorder %s28, 1
      %p214 = scmp.ne.s32.totalorder %s209, %s211
      %p215 = scmp.eq.s32.totalorder %s28, 0
      %p216 = por %p214, %p215
      %p217 = scmp.ne.s32.totalorder %s209, %s211
      %p218 = scmp.eq.s32.totalorder %s33, 1
      %p219 = por %p217, %p218
      %p220 = scmp.ne.s32.totalorder %s211, %s212
      %p221 = scmp.eq.s32.totalorder %s33, 0
      %p222 = por %p220, %p221
      %p223 = scmp.ne.s32.totalorder %s211, %s212
      %p224 = scmp.eq.s32.totalorder %s34, 1
      %p225 = por %p223, %p224
      %p227 = scmp.ne.s32.totalorder %s212, %s226
      %p228 = scmp.eq.s32.totalorder %s34, 0
      %p229 = por %p227, %p228
      %s231 = sadd.s32 %s230, 1
      %p234 = scmp.eq.s32.totalorder %s28, 1
      %p235 = scmp.ne.s32.totalorder %s230, %s232
      %p236 = scmp.eq.s32.totalorder %s28, 0
      %p237 = por %p235, %p236
      %p238 = scmp.ne.s32.totalorder %s230, %s232
      %p239 = scmp.eq.s32.totalorder %s33, 1
      %p240 = por %p238, %p239
      %p241 = scmp.ne.s32.totalorder %s232, %s233
      %p242 = scmp.eq.s32.totalorder %s33, 0
      %p243 = por %p241, %p242
      %p244 = scmp.ne.s32.totalorder %s232, %s233
      %p245 = scmp.eq.s32.totalorder %s34, 1
      %p246 = por %p244, %p245
      %p248 = scmp.ne.s32.totalorder %s233, %s247
      %p249 = scmp.eq.s32.totalorder %s34, 0
      %p250 = por %p248, %p249
      %s252 = sadd.s32 %s251, 1
      %p255 = scmp.eq.s32.totalorder %s28, 1
      %p256 = scmp.ne.s32.totalorder %s251, %s253
      %p257 = scmp.eq.s32.totalorder %s28, 0
      %p258 = por %p256, %p257
      %p259 = scmp.ne.s32.totalorder %s251, %s253
      %p260 = scmp.eq.s32.totalorder %s33, 1
      %p261 = por %p259, %p260
      %p262 = scmp.ne.s32.totalorder %s253, %s254
      %p263 = scmp.eq.s32.totalorder %s33, 0
      %p264 = por %p262, %p263
      %p265 = scmp.ne.s32.totalorder %s253, %s254
      %p266 = scmp.eq.s32.totalorder %s34, 1
      %p267 = por %p265, %p266
      %p269 = scmp.ne.s32.totalorder %s254, %s268
      %p270 = scmp.eq.s32.totalorder %s34, 0
      %p271 = por %p269, %p270
      %s273 = sadd.s32 %s272, 1
      %p276 = scmp.eq.s32.totalorder %s28, 1
      %p277 = scmp.ne.s32.totalorder %s272, %s274
      %p278 = scmp.eq.s32.totalorder %s28, 0
      %p279 = por %p277, %p278
      %p280 = scmp.ne.s32.totalorder %s272, %s274
      %p281 = scmp.eq.s32.totalorder %s33, 1
      %p282 = por %p280, %p281
      %p283 = scmp.ne.s32.totalorder %s274, %s275
      %p284 = scmp.eq.s32.totalorder %s33, 0
      %p285 = por %p283, %p284
      %p286 = scmp.ne.s32.totalorder %s274, %s275
      %p287 = scmp.eq.s32.totalorder %s34, 1
      %p288 = por %p286, %p287
      %p290 = scmp.ne.s32.totalorder %s275, %s289
      %p291 = scmp.eq.s32.totalorder %s34, 0
      %p292 = por %p290, %p291
      %s294 = sadd.s32 %s293, 1
      %p297 = scmp.eq.s32.totalorder %s28, 1
      %p298 = scmp.ne.s32.totalorder %s293, %s295
      %p299 = scmp.eq.s32.totalorder %s28, 0
      %p300 = por %p298, %p299
      %p301 = scmp.ne.s32.totalorder %s293, %s295
      %p302 = scmp.eq.s32.totalorder %s33, 1
      %p303 = por %p301, %p302
      %p304 = scmp.ne.s32.totalorder %s295, %s296
      %p305 = scmp.eq.s32.totalorder %s33, 0
      %p306 = por %p304, %p305
      %p307 = scmp.ne.s32.totalorder %s295, %s296
      %p308 = scmp.eq.s32.totalorder %s34, 1
      %p309 = por %p307, %p308
      %p311 = scmp.ne.s32.totalorder %s296, %s310
      %p312 = scmp.eq.s32.totalorder %s34, 0
      %p313 = por %p311, %p312
      %s315 = sadd.s32 %s314, 1
      %p318 = scmp.eq.s32.totalorder %s28, 1
      %p319 = scmp.ne.s32.totalorder %s314, %s316
      %p320 = scmp.eq.s32.totalorder %s28, 0
      %p321 = por %p319, %p320
      %p322 = scmp.ne.s32.totalorder %s314, %s316
      %p323 = scmp.eq.s32.totalorder %s33, 1
      %p324 = por %p322, %p323
      %p325 = scmp.ne.s32.totalorder %s316, %s317
      %p326 = scmp.eq.s32.totalorder %s33, 0
      %p327 = por %p325, %p326
      %p328 = scmp.ne.s32.totalorder %s316, %s317
      %p329 = scmp.eq.s32.totalorder %s34, 1
      %p330 = por %p328, %p329
      %p332 = scmp.ne.s32.totalorder %s317, %s331
      %p333 = scmp.eq.s32.totalorder %s34, 0
      %p334 = por %p332, %p333
      %s336 = sadd.s32 %s335, 1
      %p339 = scmp.eq.s32.totalorder %s28, 1
      %p340 = scmp.ne.s32.totalorder %s335, %s337
      %p341 = scmp.eq.s32.totalorder %s28, 0
      %p342 = por %p340, %p341
      %p343 = scmp.ne.s32.totalorder %s335, %s337
      %p344 = scmp.eq.s32.totalorder %s33, 1
      %p345 = por %p343, %p344
      %p346 = scmp.ne.s32.totalorder %s337, %s338
      %p347 = scmp.eq.s32.totalorder %s33, 0
      %p348 = por %p346, %p347
      %p349 = scmp.ne.s32.totalorder %s337, %s338
      %p350 = scmp.eq.s32.totalorder %s34, 1
      %p351 = por %p349, %p350
      %p353 = scmp.ne.s32.totalorder %s338, %s352
      %p354 = scmp.eq.s32.totalorder %s34, 0
      %p355 = por %p353, %p354
      %s357 = sadd.s32 %s356, 1
      %p360 = scmp.eq.s32.totalorder %s28, 1
      %p361 = scmp.ne.s32.totalorder %s356, %s358
      %p362 = scmp.eq.s32.totalorder %s28, 0
      %p363 = por %p361, %p362
      %p364 = scmp.ne.s32.totalorder %s356, %s358
      %p365 = scmp.eq.s32.totalorder %s33, 1
      %p366 = por %p364, %p365
      %p367 = scmp.ne.s32.totalorder %s358, %s359
      %p368 = scmp.eq.s32.totalorder %s33, 0
      %p369 = por %p367, %p368
      %p370 = scmp.ne.s32.totalorder %s358, %s359
      %p371 = scmp.eq.s32.totalorder %s34, 1
      %p372 = por %p370, %p371
      %p374 = scmp.ne.s32.totalorder %s359, %s373
      %p375 = scmp.eq.s32.totalorder %s34, 0
      %p376 = por %p374, %p375
      %s377 = ssub.s32 %s28, %s35
      %p378 = scmp.eq.s32.totalorder %s377, 0
      %s380 = sadd.s32 %s379, 1
      %s381 = scalar_select %p378, %s379, %s380
      %p384 = pneg %p378
      %p385 = scmp.eq.s32.totalorder %s28, 1
      %p386 = por %p384, %p385
      %p387 = scmp.ne.s32.totalorder %s379, %s382
      %p388 = scmp.eq.s32.totalorder %s28, 0
      %p389 = por %p387, %p388
      %p390 = scmp.ne.s32.totalorder %s379, %s382
      %p391 = scmp.eq.s32.totalorder %s33, 1
      %p392 = por %p390, %p391
      %p393 = scmp.ne.s32.totalorder %s382, %s383
      %p394 = scmp.eq.s32.totalorder %s33, 0
      %p395 = por %p393, %p394
      %p396 = scmp.ne.s32.totalorder %s382, %s383
      %p397 = scmp.eq.s32.totalorder %s34, 1
      %p398 = por %p396, %p397
      %p400 = scmp.ne.s32.totalorder %s383, %s399
      %p401 = scmp.eq.s32.totalorder %s34, 0
      %p402 = por %p400, %p401
      %p403 = scmp.le.s32.totalorder 1, %s28
      %p404 = scmp.lt.s32.totalorder %s28, 3
      %p405 = pnand %p403, %p404
      %p406 = pneg %p405
      // Predicated region
      $region9: #{cnn_gru_forward.1} parent=5 // pred_check
        _
      $region10: #{cnn_gru_forward.1} parent=5 // pred_check_branch
        %408 = sbr.rel (%p405) target = $region12
      $region11: #{cnn_gru_forward.1} parent=5 // pred_region
        %s409 = ssub.s32 %s28, 1
        // Predicated region
        $region13: #{cnn_gru_forward.1} parent=11 // pred_check
          %p410 = pneg %p75
        $region14: #{cnn_gru_forward.1} parent=11 // pred_check_branch
          %412 = sbr.rel (%p410) target = $region16
        $region15: #{cnn_gru_forward.1} parent=11 // pred_region
          %414 = vsyncadd [#allocation6], 0
          %s415 = sshll.u32 %s1, 4
          %s416 = int_to_ptr.hbm [resolvable:$true] %s415
          %s417 = sshll.u32 [#allocation5], 4
          %s418 = int_to_ptr.vmem [resolvable:$true] %s417
          %423 = dma.hbm_to_vmem [thread:$0]  %s416, 10240, %s418, [#allocation6], 64, 64, 4
        $region16: #{cnn_gru_forward.1} parent=11 // pred_fallthru
          _
        // Predicated region
        $region17: #{cnn_gru_forward.1} parent=11 // pred_check
          %p424 = pneg %p96
        $region18: #{cnn_gru_forward.1} parent=11 // pred_check_branch
          %426 = sbr.rel (%p424) target = $region20
        $region19: #{cnn_gru_forward.1} parent=11 // pred_region
          %428 = vsyncadd [#allocation9], 0
          %s429 = sshll.u32 %s2, 4
          %s430 = int_to_ptr.hbm [resolvable:$true] %s429
          %s431 = sshll.u32 [#allocation8], 4
          %s432 = int_to_ptr.vmem [resolvable:$true] %s431
          %437 = dma.hbm_to_vmem [thread:$0]  %s430, 10240, %s432, [#allocation9], 64, 64, 4
        $region20: #{cnn_gru_forward.1} parent=11 // pred_fallthru
          _
        // Predicated region
        $region21: #{cnn_gru_forward.1} parent=11 // pred_check
          %p438 = pneg %p117
        $region22: #{cnn_gru_forward.1} parent=11 // pred_check_branch
          %440 = sbr.rel (%p438) target = $region24
        $region23: #{cnn_gru_forward.1} parent=11 // pred_region
          %442 = vsyncadd [#allocation9], 0
          %s443 = sshll.u32 %s3, 4
          %s444 = int_to_ptr.hbm [resolvable:$true] %s443
          %s445 = sshll.u32 [#allocation10], 4
          %s446 = int_to_ptr.vmem [resolvable:$true] %s445
          %451 = dma.hbm_to_vmem [thread:$0]  %s444, 10240, %s446, [#allocation9], 64, 64, 4
        $region24: #{cnn_gru_forward.1} parent=11 // pred_fallthru
          _
        // Predicated region
        $region25: #{cnn_gru_forward.1} parent=11 // pred_check
          %p452 = pneg %p138
        $region26: #{cnn_gru_forward.1} parent=11 // pred_check_branch
          %454 = sbr.rel (%p452) target = $region28
        $region27: #{cnn_gru_forward.1} parent=11 // pred_region
          %456 = vsyncadd [#allocation12], 0
          %s457 = sshll.u32 %s4, 4
          %s458 = int_to_ptr.hbm [resolvable:$true] %s457
          %s459 = sshll.u32 [#allocation11], 4
          %s460 = int_to_ptr.vmem [resolvable:$true] %s459
          %465 = dma.hbm_to_vmem [thread:$0]  %s458, 20480, %s460, [#allocation12], 128, 128, 8
        $region28: #{cnn_gru_forward.1} parent=11 // pred_fallthru
          _
        // Predicated region
        $region29: #{cnn_gru_forward.1} parent=11 // pred_check
          %p466 = pneg %p159
        $region30: #{cnn_gru_forward.1} parent=11 // pred_check_branch
          %468 = sbr.rel (%p466) target = $region32
        $region31: #{cnn_gru_forward.1} parent=11 // pred_region
          _
        $region32: #{cnn_gru_forward.1} parent=11 // pred_fallthru
          _
        // Predicated region
        $region33: #{cnn_gru_forward.1} parent=11 // pred_check
          %p469 = pneg %p180
        $region34: #{cnn_gru_forward.1} parent=11 // pred_check_branch
          %471 = sbr.rel (%p469) target = $region36
        $region35: #{cnn_gru_forward.1} parent=11 // pred_region
          _
        $region36: #{cnn_gru_forward.1} parent=11 // pred_fallthru
          _
        // Predicated region
        $region37: #{cnn_gru_forward.1} parent=11 // pred_check
          %p472 = pneg %p201
        $region38: #{cnn_gru_forward.1} parent=11 // pred_check_branch
          %474 = sbr.rel (%p472) target = $region40
        $region39: #{cnn_gru_forward.1} parent=11 // pred_region
          _
        $region40: #{cnn_gru_forward.1} parent=11 // pred_fallthru
          _
        // Predicated region
        $region41: #{cnn_gru_forward.1} parent=11 // pred_check
          %p475 = pneg %p222
        $region42: #{cnn_gru_forward.1} parent=11 // pred_check_branch
          %477 = sbr.rel (%p475) target = $region44
        $region43: #{cnn_gru_forward.1} parent=11 // pred_region
          _
        $region44: #{cnn_gru_forward.1} parent=11 // pred_fallthru
          _
        // Predicated region
        $region45: #{cnn_gru_forward.1} parent=11 // pred_check
          %p478 = pneg %p243
        $region46: #{cnn_gru_forward.1} parent=11 // pred_check_branch
          %480 = sbr.rel (%p478) target = $region48
        $region47: #{cnn_gru_forward.1} parent=11 // pred_region
          _
        $region48: #{cnn_gru_forward.1} parent=11 // pred_fallthru
          _
        // Predicated region
        $region49: #{cnn_gru_forward.1} parent=11 // pred_check
          %p481 = pneg %p264
        $region50: #{cnn_gru_forward.1} parent=11 // pred_check_branch
          %483 = sbr.rel (%p481) target = $region52
        $region51: #{cnn_gru_forward.1} parent=11 // pred_region
          _
        $region52: #{cnn_gru_forward.1} parent=11 // pred_fallthru
          _
        // Predicated region
        $region53: #{cnn_gru_forward.1} parent=11 // pred_check
          %p484 = pneg %p285
        $region54: #{cnn_gru_forward.1} parent=11 // pred_check_branch
          %486 = sbr.rel (%p484) target = $region56
        $region55: #{cnn_gru_forward.1} parent=11 // pred_region
          _
        $region56: #{cnn_gru_forward.1} parent=11 // pred_fallthru
          _
        // Predicated region
        $region57: #{cnn_gru_forward.1} parent=11 // pred_check
          %p487 = pneg %p306
        $region58: #{cnn_gru_forward.1} parent=11 // pred_check_branch
          %489 = sbr.rel (%p487) target = $region60
        $region59: #{cnn_gru_forward.1} parent=11 // pred_region
          _
        $region60: #{cnn_gru_forward.1} parent=11 // pred_fallthru
          _
        // Predicated region
        $region61: #{cnn_gru_forward.1} parent=11 // pred_check
          %p490 = pneg %p327
        $region62: #{cnn_gru_forward.1} parent=11 // pred_check_branch
          %492 = sbr.rel (%p490) target = $region64
        $region63: #{cnn_gru_forward.1} parent=11 // pred_region
          _
        $region64: #{cnn_gru_forward.1} parent=11 // pred_fallthru
          _
        // Predicated region
        $region65: #{cnn_gru_forward.1} parent=11 // pred_check
          %p493 = pneg %p348
        $region66: #{cnn_gru_forward.1} parent=11 // pred_check_branch
          %495 = sbr.rel (%p493) target = $region68
        $region67: #{cnn_gru_forward.1} parent=11 // pred_region
          _
        $region68: #{cnn_gru_forward.1} parent=11 // pred_fallthru
          _
        // Predicated region
        $region69: #{cnn_gru_forward.1} parent=11 // pred_check
          %p496 = pneg %p369
        $region70: #{cnn_gru_forward.1} parent=11 // pred_check_branch
          %498 = sbr.rel (%p496) target = $region72
        $region71: #{cnn_gru_forward.1} parent=11 // pred_region
          _
        $region72: #{cnn_gru_forward.1} parent=11 // pred_fallthru
          _
      $region12: #{cnn_gru_forward.1} parent=5 // pred_fallthru
        _
      %p499 = scmp.lt.s32.totalorder %s28, 2
      // Predicated region
      $region73: #{cnn_gru_forward.1} parent=5 // pred_check
        %p500 = pneg %p499
      $region74: #{cnn_gru_forward.1} parent=5 // pred_check_branch
        %502 = sbr.rel (%p500) target = $region76
      $region75: #{cnn_gru_forward.1} parent=5 // pred_region
        // Predicated region
        $region77: #{cnn_gru_forward.1} parent=75 // pred_check
          %p503 = pneg %p48
        $region78: #{cnn_gru_forward.1} parent=75 // pred_check_branch
          %505 = sbr.rel (%p503) target = $region80
        $region79: #{cnn_gru_forward.1} parent=75 // pred_region
          %p506 = scmp.lt.s32.totalorder %s28, 1
          %s507 = scalar_select %p506, %s28, 1
          %s508 = smul.addr %s507, 12
          %s509 = smul.addr %s508, 8
          %s510 = scalar_lea.vmem %s0, %s509
        $region80: #{cnn_gru_forward.1} parent=75 // pred_fallthru
          _
      $region76: #{cnn_gru_forward.1} parent=5 // pred_fallthru
        _
      %p511 = scmp.le.s32.totalorder 1, %s28
      %p512 = scmp.lt.s32.totalorder %s28, 3
      %p513 = pnand %p511, %p512
      %p514 = pneg %p513
      // Predicated region
      $region81: #{cnn_gru_forward.1} parent=5 // pred_check
        _
      $region82: #{cnn_gru_forward.1} parent=5 // pred_check_branch
        %516 = sbr.rel (%p513) target = $region84
      $region83: #{cnn_gru_forward.1} parent=5 // pred_region
        %s517 = ssub.s32 %s28, 1
        // Predicated region
        $region85: #{cnn_gru_forward.1} parent=83 // pred_check
          %p518 = pneg %p75
        $region86: #{cnn_gru_forward.1} parent=83 // pred_check_branch
          %520 = sbr.rel (%p518) target = $region88
        $region87: #{cnn_gru_forward.1} parent=83 // pred_region
          %522 = dma.done [#allocation6], 10240
        $region88: #{cnn_gru_forward.1} parent=83 // pred_fallthru
          _
        // Predicated region
        $region89: #{cnn_gru_forward.1} parent=83 // pred_check
          %p523 = pneg %p96
        $region90: #{cnn_gru_forward.1} parent=83 // pred_check_branch
          %525 = sbr.rel (%p523) target = $region92
        $region91: #{cnn_gru_forward.1} parent=83 // pred_region
          %527 = dma.done [#allocation9], 10240
        $region92: #{cnn_gru_forward.1} parent=83 // pred_fallthru
          _
        // Predicated region
        $region93: #{cnn_gru_forward.1} parent=83 // pred_check
          %p528 = pneg %p117
        $region94: #{cnn_gru_forward.1} parent=83 // pred_check_branch
          %530 = sbr.rel (%p528) target = $region96
        $region95: #{cnn_gru_forward.1} parent=83 // pred_region
          %532 = dma.done [#allocation9], 10240
        $region96: #{cnn_gru_forward.1} parent=83 // pred_fallthru
          _
        // Predicated region
        $region97: #{cnn_gru_forward.1} parent=83 // pred_check
          %p533 = pneg %p138
        $region98: #{cnn_gru_forward.1} parent=83 // pred_check_branch
          %535 = sbr.rel (%p533) target = $region100
        $region99: #{cnn_gru_forward.1} parent=83 // pred_region
          %537 = dma.done [#allocation12], 20480
        $region100: #{cnn_gru_forward.1} parent=83 // pred_fallthru
          _
        %p538 = scmp.lt.s32.totalorder %s33, 1
        %s539 = scalar_select %p538, %s33, 1
        %s540 = smul.addr %s539, 12
        %s541 = smul.addr %s540, 8
        %s542 = scalar_lea.vmem %s0, %s541
        %p543 = pneg %p54
        %p544 = pneg %p51
        %p545 = pneg %p75
        %p546 = pneg %p72
        %p547 = pneg %p96
        %p548 = pneg %p93
        %p549 = pneg %p117
        %p550 = pneg %p114
        %p551 = pneg %p138
        %p552 = pneg %p135
        %p553 = pneg %p159
        %p554 = pneg %p156
        %p555 = pneg %p180
        %p556 = pneg %p177
        %p557 = pneg %p201
        %p558 = pneg %p198
        %p559 = pneg %p222
        %p560 = pneg %p219
        %p561 = pneg %p243
        %p562 = pneg %p240
        %p563 = pneg %p264
        %p564 = pneg %p261
        %p565 = pneg %p285
        %p566 = pneg %p282
        %p567 = pneg %p306
        %p568 = pneg %p303
        %p569 = pneg %p327
        %p570 = pneg %p324
        %p571 = pneg %p348
        %p572 = pneg %p345
        %p573 = pneg %p369
        %p574 = pneg %p366
        %p575 = pneg %p395
        %p576 = pneg %p392
        %s577 = sand.u32 %s382, 1
        %s578 = scalar_lea.sflag [#allocation7], %s577
        %s579 = sand.u32 %s382, 1
        %s580 = scalar_lea.vmem [#allocation13], %s579
        %p581 = scmp.lt.s32.totalorder %s33, 1
        %s582 = scalar_select %p581, %s33, 1
        %s583 = smul.addr %s582, 12
        %s584 = smul.addr %s583, 8
        %s585 = scalar_lea.vmem %s0, %s584
        %v586 = vld [vmem:[%s5] sm:$0x1]
        %v587 = vld [vmem:[%s5 + $0x1] sm:$0x1]
        %v588 = vld [vmem:[%s5 + $0x2] sm:$0x1]
        %v589 = vld [vmem:[%s585] sm:$0xff]
        %v590 = vld [vmem:[%s585 + $0x8] sm:$0xff]
        %v591 = vld [vmem:[%s585 + $0x10] sm:$0xff]
        %v592 = vld [vmem:[%s585 + $0x18] sm:$0xff]
        %v593 = vld [vmem:[%s585 + $0x20] sm:$0xff]
        %v594 = vld [vmem:[%s585 + $0x28] sm:$0xff]
        %v595 = vld [vmem:[%s585 + $0x30] sm:$0xff]
        %v596 = vld [vmem:[%s585 + $0x38] sm:$0xff]
        %v597 = vld [vmem:[%s585 + $0x40] sm:$0xff]
        %v598 = vld [vmem:[%s585 + $0x48] sm:$0xff]
        %v599 = vld [vmem:[%s585 + $0x50] sm:$0x1]
        %v600 = vpack.c.bf16 %v590, %v589
        %v601 = vpack.c.bf16 %v592, %v591
        %v602 = vpack.c.bf16 %v594, %v593
        %v603 = vpack.c.bf16 %v596, %v595
        %v604 = vpack.c.bf16 %v598, %v597
        %v605 = vpack.c.bf16 %v599, %v599
        %v606 = vld [vmem:[#allocation5] sm:$0xf]
        %v607 = vld [vmem:[#allocation5 + $0x4] sm:$0xf]
        %v608 = vld [vmem:[#allocation5 + $0x8] sm:$0xf]
        %v609 = vld [vmem:[#allocation5 + $0xc] sm:$0xf]
        %v610 = vld [vmem:[#allocation5 + $0x10] sm:$0xf]
        %v611 = vld [vmem:[#allocation5 + $0x14] sm:$0xf]
        %v612 = vld [vmem:[#allocation5 + $0x18] sm:$0xf]
        %v613 = vld [vmem:[#allocation5 + $0x1c] sm:$0xf]
        %v614 = vld [vmem:[#allocation5 + $0x20] sm:$0xf]
        %v615 = vld [vmem:[#allocation5 + $0x24] sm:$0xf]
        %v616 = vld [vmem:[#allocation5 + $0x28] sm:$0xf]
        %v617 = vld [vmem:[#allocation5 + $0x2c] sm:$0xf]
        %v618 = vld [vmem:[#allocation5 + $0x30] sm:$0xf]
        %v619 = vld [vmem:[#allocation5 + $0x34] sm:$0xf]
        %v620 = vld [vmem:[#allocation5 + $0x38] sm:$0xf]
        %v621 = vld [vmem:[#allocation5 + $0x3c] sm:$0xf]
        %v622 = vld [vmem:[%s585 + $0x1] sm:$0xff]
        %v623 = vld [vmem:[%s585 + $0x9] sm:$0xff]
        %v624 = vld [vmem:[%s585 + $0x11] sm:$0xff]
        %v625 = vld [vmem:[%s585 + $0x19] sm:$0xff]
        %v626 = vld [vmem:[%s585 + $0x21] sm:$0xff]
        %v627 = vld [vmem:[%s585 + $0x29] sm:$0xff]
        %v628 = vld [vmem:[%s585 + $0x31] sm:$0xff]
        %v629 = vld [vmem:[%s585 + $0x39] sm:$0xff]
        %v630 = vld [vmem:[%s585 + $0x41] sm:$0xff]
        %v631 = vld [vmem:[%s585 + $0x49] sm:$0xff]
        %v632 = vld [vmem:[%s585 + $0x51] sm:$0x1]
        %v633 = vpack.c.bf16 %v623, %v622
        %v634 = vpack.c.bf16 %v625, %v624
        %v635 = vpack.c.bf16 %v627, %v626
        %v636 = vpack.c.bf16 %v629, %v628
        %v637 = vpack.c.bf16 %v631, %v630
        %v638 = vpack.c.bf16 %v632, %v632
        %s639 = scalar_lea.vmem [#allocation5], 64
        %v640 = vld [vmem:[%s639] sm:$0xf]
        %v641 = vld [vmem:[%s639 + $0x4] sm:$0xf]
        %v642 = vld [vmem:[%s639 + $0x8] sm:$0xf]
        %v643 = vld [vmem:[%s639 + $0xc] sm:$0xf]
        %v644 = vld [vmem:[%s639 + $0x10] sm:$0xf]
        %v645 = vld [vmem:[%s639 + $0x14] sm:$0xf]
        %v646 = vld [vmem:[%s639 + $0x18] sm:$0xf]
        %v647 = vld [vmem:[%s639 + $0x1c] sm:$0xf]
        %v648 = vld [vmem:[%s639 + $0x20] sm:$0xf]
        %v649 = vld [vmem:[%s639 + $0x24] sm:$0xf]
        %v650 = vld [vmem:[%s639 + $0x28] sm:$0xf]
        %v651 = vld [vmem:[%s639 + $0x2c] sm:$0xf]
        %v652 = vld [vmem:[%s639 + $0x30] sm:$0xf]
        %v653 = vld [vmem:[%s639 + $0x34] sm:$0xf]
        %v654 = vld [vmem:[%s639 + $0x38] sm:$0xf]
        %v655 = vld [vmem:[%s639 + $0x3c] sm:$0xf]
        %v672 = vunpack.c.l.b16 %v640
        %v673 = vunpack.c.l.b16 %v641
        %v674 = vunpack.c.l.b16 %v642
        %v675 = vunpack.c.l.b16 %v643
        %v676 = vunpack.c.l.b16 %v644
        %v677 = vunpack.c.l.b16 %v645
        %v678 = vunpack.c.l.b16 %v646
        %v679 = vunpack.c.l.b16 %v647
        %v680 = vunpack.c.l.b16 %v648
        %v681 = vunpack.c.l.b16 %v649
        %v682 = vunpack.c.l.b16 %v650
        %v683 = vunpack.c.l.b16 %v651
        %v684 = vunpack.c.l.b16 %v652
        %v685 = vunpack.c.l.b16 %v653
        %v686 = vunpack.c.l.b16 %v654
        %v687 = vunpack.c.l.b16 %v655
        %v688 = vpack.c.b16 %v673, %v672
        %v689 = vpack.c.b16 %v675, %v674
        %v690 = vpack.c.b16 %v677, %v676
        %v691 = vpack.c.b16 %v679, %v678
        %v692 = vpack.c.b16 %v681, %v680
        %v693 = vpack.c.b16 %v683, %v682
        %v694 = vpack.c.b16 %v685, %v684
        %v695 = vpack.c.b16 %v687, %v686
        %704 = vmatpush.bf16.msra.mxu0 %v695
        %705 = vmatpush.bf16.msra.mxu0 %v694
        %706 = vmatpush.bf16.msra.mxu0 %v693
        %707 = vmatpush.bf16.msra.mxu0 %v692
        %708 = vmatpush.bf16.msra.mxu0 %v691
        %709 = vmatpush.bf16.msra.mxu0 %v690
        %710 = vmatpush.bf16.msra.mxu0 %v689
        %711 = vmatpush.bf16.msra.mxu0 %v688
        %712 = vmatmul.bf16.gmra.mxu0 %v633
        %v713 = vpop.f32.mrf.mxu0
        %v714 = vadd.f32 0.0, %v713
        %v715 = vpop.f32.mrf.mxu0
        %v716 = vadd.f32 0.0, %v715
        %717 = vmatmul.bf16.gmra.mxu0 %v634
        %v718 = vpop.f32.mrf.mxu0
        %v719 = vadd.f32 0.0, %v718
        %v720 = vpop.f32.mrf.mxu0
        %v721 = vadd.f32 0.0, %v720
        %722 = vmatmul.bf16.gmra.mxu0 %v635
        %v723 = vpop.f32.mrf.mxu0
        %v724 = vadd.f32 0.0, %v723
        %v725 = vpop.f32.mrf.mxu0
        %v726 = vadd.f32 0.0, %v725
        %727 = vmatmul.bf16.gmra.mxu0 %v636
        %v728 = vpop.f32.mrf.mxu0
        %v729 = vadd.f32 0.0, %v728
        %v730 = vpop.f32.mrf.mxu0
        %v731 = vadd.f32 0.0, %v730
        %732 = vmatmul.bf16.gmra.mxu0 %v637
        %v733 = vpop.f32.mrf.mxu0
        %v734 = vadd.f32 0.0, %v733
        %v735 = vpop.f32.mrf.mxu0
        %v736 = vadd.f32 0.0, %v735
        %737 = vmatmul.bf16.gmra.mxu0 %v638
        %v738 = vpop.f32.mrf.mxu0
        %v739 = vadd.f32 0.0, %v738
        %v740 = vpop.f32.mrf.mxu0
        %741 = vdwg.mxu0
        %v758 = vunpack.c.l.b16 %v606
        %v759 = vunpack.c.l.b16 %v607
        %v760 = vunpack.c.l.b16 %v608
        %v761 = vunpack.c.l.b16 %v609
        %v762 = vunpack.c.l.b16 %v610
        %v763 = vunpack.c.l.b16 %v611
        %v764 = vunpack.c.l.b16 %v612
        %v765 = vunpack.c.l.b16 %v613
        %v766 = vunpack.c.l.b16 %v614
        %v767 = vunpack.c.l.b16 %v615
        %v768 = vunpack.c.l.b16 %v616
        %v769 = vunpack.c.l.b16 %v617
        %v770 = vunpack.c.l.b16 %v618
        %v771 = vunpack.c.l.b16 %v619
        %v772 = vunpack.c.l.b16 %v620
        %v773 = vunpack.c.l.b16 %v621
        %v774 = vpack.c.b16 %v759, %v758
        %v775 = vpack.c.b16 %v761, %v760
        %v776 = vpack.c.b16 %v763, %v762
        %v777 = vpack.c.b16 %v765, %v764
        %v778 = vpack.c.b16 %v767, %v766
        %v779 = vpack.c.b16 %v769, %v768
        %v780 = vpack.c.b16 %v771, %v770
        %v781 = vpack.c.b16 %v773, %v772
        %790 = vmatpush.bf16.msra.mxu0 %v781
        %791 = vmatpush.bf16.msra.mxu0 %v780
        %792 = vmatpush.bf16.msra.mxu0 %v779
        %793 = vmatpush.bf16.msra.mxu0 %v778
        %794 = vmatpush.bf16.msra.mxu0 %v777
        %795 = vmatpush.bf16.msra.mxu0 %v776
        %796 = vmatpush.bf16.msra.mxu0 %v775
        %797 = vmatpush.bf16.msra.mxu0 %v774
        %798 = vmatmul.bf16.gmra.mxu0 %v600
        %v799 = vpop.f32.mrf.mxu0
        %v800 = vadd.f32 %v714, %v799
        %v801 = vpop.f32.mrf.mxu0
        %v802 = vadd.f32 %v716, %v801
        %803 = vmatmul.bf16.gmra.mxu0 %v601
        %v804 = vpop.f32.mrf.mxu0
        %v805 = vadd.f32 %v719, %v804
        %v806 = vpop.f32.mrf.mxu0
        %v807 = vadd.f32 %v721, %v806
        %808 = vmatmul.bf16.gmra.mxu0 %v602
        %v809 = vpop.f32.mrf.mxu0
        %v810 = vadd.f32 %v724, %v809
        %v811 = vpop.f32.mrf.mxu0
        %v812 = vadd.f32 %v726, %v811
        %813 = vmatmul.bf16.gmra.mxu0 %v603
        %v814 = vpop.f32.mrf.mxu0
        %v815 = vadd.f32 %v729, %v814
        %v816 = vpop.f32.mrf.mxu0
        %v817 = vadd.f32 %v731, %v816
        %818 = vmatmul.bf16.gmra.mxu0 %v604
        %v819 = vpop.f32.mrf.mxu0
        %v820 = vadd.f32 %v734, %v819
        %v821 = vpop.f32.mrf.mxu0
        %v822 = vadd.f32 %v736, %v821
        %823 = vmatmul.bf16.gmra.mxu0 %v605
        %v824 = vpop.f32.mrf.mxu0
        %v825 = vadd.f32 %v739, %v824
        %v826 = vpop.f32.mrf.mxu0
        %827 = vdwg.mxu0
        %v828 = vld [vmem:[%s585 + $0x2] sm:$0xff]
        %v829 = vld [vmem:[%s585 + $0xa] sm:$0xff]
        %v830 = vld [vmem:[%s585 + $0x12] sm:$0xff]
        %v831 = vld [vmem:[%s585 + $0x1a] sm:$0xff]
        %v832 = vld [vmem:[%s585 + $0x22] sm:$0xff]
        %v833 = vld [vmem:[%s585 + $0x2a] sm:$0xff]
        %v834 = vld [vmem:[%s585 + $0x32] sm:$0xff]
        %v835 = vld [vmem:[%s585 + $0x3a] sm:$0xff]
        %v836 = vld [vmem:[%s585 + $0x42] sm:$0xff]
        %v837 = vld [vmem:[%s585 + $0x4a] sm:$0xff]
        %v838 = vld [vmem:[%s585 + $0x52] sm:$0x1]
        %v839 = vpack.c.bf16 %v829, %v828
        %v840 = vpack.c.bf16 %v831, %v830
        %v841 = vpack.c.bf16 %v833, %v832
        %v842 = vpack.c.bf16 %v835, %v834
        %v843 = vpack.c.bf16 %v837, %v836
        %v844 = vpack.c.bf16 %v838, %v838
        %s845 = scalar_lea.vmem [#allocation5], 128
        %v846 = vld [vmem:[%s845] sm:$0xf]
        %v847 = vld [vmem:[%s845 + $0x4] sm:$0xf]
        %v848 = vld [vmem:[%s845 + $0x8] sm:$0xf]
        %v849 = vld [vmem:[%s845 + $0xc] sm:$0xf]
        %v850 = vld [vmem:[%s845 + $0x10] sm:$0xf]
        %v851 = vld [vmem:[%s845 + $0x14] sm:$0xf]
        %v852 = vld [vmem:[%s845 + $0x18] sm:$0xf]
        %v853 = vld [vmem:[%s845 + $0x1c] sm:$0xf]
        %v854 = vld [vmem:[%s845 + $0x20] sm:$0xf]
        %v855 = vld [vmem:[%s845 + $0x24] sm:$0xf]
        %v856 = vld [vmem:[%s845 + $0x28] sm:$0xf]
        %v857 = vld [vmem:[%s845 + $0x2c] sm:$0xf]
        %v858 = vld [vmem:[%s845 + $0x30] sm:$0xf]
        %v859 = vld [vmem:[%s845 + $0x34] sm:$0xf]
        %v860 = vld [vmem:[%s845 + $0x38] sm:$0xf]
        %v861 = vld [vmem:[%s845 + $0x3c] sm:$0xf]
        %v878 = vunpack.c.l.b16 %v846
        %v879 = vunpack.c.l.b16 %v847
        %v880 = vunpack.c.l.b16 %v848
        %v881 = vunpack.c.l.b16 %v849
        %v882 = vunpack.c.l.b16 %v850
        %v883 = vunpack.c.l.b16 %v851
        %v884 = vunpack.c.l.b16 %v852
        %v885 = vunpack.c.l.b16 %v853
        %v886 = vunpack.c.l.b16 %v854
        %v887 = vunpack.c.l.b16 %v855
        %v888 = vunpack.c.l.b16 %v856
        %v889 = vunpack.c.l.b16 %v857
        %v890 = vunpack.c.l.b16 %v858
        %v891 = vunpack.c.l.b16 %v859
        %v892 = vunpack.c.l.b16 %v860
        %v893 = vunpack.c.l.b16 %v861
        %v894 = vpack.c.b16 %v879, %v878
        %v895 = vpack.c.b16 %v881, %v880
        %v896 = vpack.c.b16 %v883, %v882
        %v897 = vpack.c.b16 %v885, %v884
        %v898 = vpack.c.b16 %v887, %v886
        %v899 = vpack.c.b16 %v889, %v888
        %v900 = vpack.c.b16 %v891, %v890
        %v901 = vpack.c.b16 %v893, %v892
        %910 = vmatpush.bf16.msra.mxu0 %v901
        %911 = vmatpush.bf16.msra.mxu0 %v900
        %912 = vmatpush.bf16.msra.mxu0 %v899
        %913 = vmatpush.bf16.msra.mxu0 %v898
        %914 = vmatpush.bf16.msra.mxu0 %v897
        %915 = vmatpush.bf16.msra.mxu0 %v896
        %916 = vmatpush.bf16.msra.mxu0 %v895
        %917 = vmatpush.bf16.msra.mxu0 %v894
        %918 = vmatmul.bf16.gmra.mxu0 %v839
        %v919 = vpop.f32.mrf.mxu0
        %v920 = vadd.f32 0.0, %v919
        %v921 = vpop.f32.mrf.mxu0
        %v922 = vadd.f32 0.0, %v921
        %923 = vmatmul.bf16.gmra.mxu0 %v840
        %v924 = vpop.f32.mrf.mxu0
        %v925 = vadd.f32 0.0, %v924
        %v926 = vpop.f32.mrf.mxu0
        %v927 = vadd.f32 0.0, %v926
        %928 = vmatmul.bf16.gmra.mxu0 %v841
        %v929 = vpop.f32.mrf.mxu0
        %v930 = vadd.f32 0.0, %v929
        %v931 = vpop.f32.mrf.mxu0
        %v932 = vadd.f32 0.0, %v931
        %933 = vmatmul.bf16.gmra.mxu0 %v842
        %v934 = vpop.f32.mrf.mxu0
        %v935 = vadd.f32 0.0, %v934
        %v936 = vpop.f32.mrf.mxu0
        %v937 = vadd.f32 0.0, %v936
        %938 = vmatmul.bf16.gmra.mxu0 %v843
        %v939 = vpop.f32.mrf.mxu0
        %v940 = vadd.f32 0.0, %v939
        %v941 = vpop.f32.mrf.mxu0
        %v942 = vadd.f32 0.0, %v941
        %943 = vmatmul.bf16.gmra.mxu0 %v844
        %v944 = vpop.f32.mrf.mxu0
        %v945 = vadd.f32 0.0, %v944
        %v946 = vpop.f32.mrf.mxu0
        %947 = vdwg.mxu0
        %v948 = vadd.f32 %v800, %v920
        %v949 = vadd.f32 %v802, %v922
        %v950 = vadd.f32 %v805, %v925
        %v951 = vadd.f32 %v807, %v927
        %v952 = vadd.f32 %v810, %v930
        %v953 = vadd.f32 %v812, %v932
        %v954 = vadd.f32 %v815, %v935
        %v955 = vadd.f32 %v817, %v937
        %v956 = vadd.f32 %v820, %v940
        %v957 = vadd.f32 %v822, %v942
        %v958 = vadd.f32 %v825, %v945
        %v959 = vld [vmem:[%s585 + $0x3] sm:$0xff]
        %v960 = vld [vmem:[%s585 + $0xb] sm:$0xff]
        %v961 = vld [vmem:[%s585 + $0x13] sm:$0xff]
        %v962 = vld [vmem:[%s585 + $0x1b] sm:$0xff]
        %v963 = vld [vmem:[%s585 + $0x23] sm:$0xff]
        %v964 = vld [vmem:[%s585 + $0x2b] sm:$0xff]
        %v965 = vld [vmem:[%s585 + $0x33] sm:$0xff]
        %v966 = vld [vmem:[%s585 + $0x3b] sm:$0xff]
        %v967 = vld [vmem:[%s585 + $0x43] sm:$0xff]
        %v968 = vld [vmem:[%s585 + $0x4b] sm:$0xff]
        %v969 = vld [vmem:[%s585 + $0x53] sm:$0x1]
        %v970 = vpack.c.bf16 %v960, %v959
        %v971 = vpack.c.bf16 %v962, %v961
        %v972 = vpack.c.bf16 %v964, %v963
        %v973 = vpack.c.bf16 %v966, %v965
        %v974 = vpack.c.bf16 %v968, %v967
        %v975 = vpack.c.bf16 %v969, %v969
        %s976 = scalar_lea.vmem [#allocation5], 192
        %v977 = vld [vmem:[%s976] sm:$0xf]
        %v978 = vld [vmem:[%s976 + $0x4] sm:$0xf]
        %v979 = vld [vmem:[%s976 + $0x8] sm:$0xf]
        %v980 = vld [vmem:[%s976 + $0xc] sm:$0xf]
        %v981 = vld [vmem:[%s976 + $0x10] sm:$0xf]
        %v982 = vld [vmem:[%s976 + $0x14] sm:$0xf]
        %v983 = vld [vmem:[%s976 + $0x18] sm:$0xf]
        %v984 = vld [vmem:[%s976 + $0x1c] sm:$0xf]
        %v985 = vld [vmem:[%s976 + $0x20] sm:$0xf]
        %v986 = vld [vmem:[%s976 + $0x24] sm:$0xf]
        %v987 = vld [vmem:[%s976 + $0x28] sm:$0xf]
        %v988 = vld [vmem:[%s976 + $0x2c] sm:$0xf]
        %v989 = vld [vmem:[%s976 + $0x30] sm:$0xf]
        %v990 = vld [vmem:[%s976 + $0x34] sm:$0xf]
        %v991 = vld [vmem:[%s976 + $0x38] sm:$0xf]
        %v992 = vld [vmem:[%s976 + $0x3c] sm:$0xf]
        %v1009 = vunpack.c.l.b16 %v977
        %v1010 = vunpack.c.l.b16 %v978
        %v1011 = vunpack.c.l.b16 %v979
        %v1012 = vunpack.c.l.b16 %v980
        %v1013 = vunpack.c.l.b16 %v981
        %v1014 = vunpack.c.l.b16 %v982
        %v1015 = vunpack.c.l.b16 %v983
        %v1016 = vunpack.c.l.b16 %v984
        %v1017 = vunpack.c.l.b16 %v985
        %v1018 = vunpack.c.l.b16 %v986
        %v1019 = vunpack.c.l.b16 %v987
        %v1020 = vunpack.c.l.b16 %v988
        %v1021 = vunpack.c.l.b16 %v989
        %v1022 = vunpack.c.l.b16 %v990
        %v1023 = vunpack.c.l.b16 %v991
        %v1024 = vunpack.c.l.b16 %v992
        %v1025 = vpack.c.b16 %v1010, %v1009
        %v1026 = vpack.c.b16 %v1012, %v1011
        %v1027 = vpack.c.b16 %v1014, %v1013
        %v1028 = vpack.c.b16 %v1016, %v1015
        %v1029 = vpack.c.b16 %v1018, %v1017
        %v1030 = vpack.c.b16 %v1020, %v1019
        %v1031 = vpack.c.b16 %v1022, %v1021
        %v1032 = vpack.c.b16 %v1024, %v1023
        %1041 = vmatpush.bf16.msra.mxu0 %v1032
        %1042 = vmatpush.bf16.msra.mxu0 %v1031
        %1043 = vmatpush.bf16.msra.mxu0 %v1030
        %1044 = vmatpush.bf16.msra.mxu0 %v1029
        %1045 = vmatpush.bf16.msra.mxu0 %v1028
        %1046 = vmatpush.bf16.msra.mxu0 %v1027
        %1047 = vmatpush.bf16.msra.mxu0 %v1026
        %1048 = vmatpush.bf16.msra.mxu0 %v1025
        %1049 = vmatmul.bf16.gmra.mxu0 %v970
        %v1050 = vpop.f32.mrf.mxu0
        %v1051 = vadd.f32 0.0, %v1050
        %v1052 = vpop.f32.mrf.mxu0
        %v1053 = vadd.f32 0.0, %v1052
        %1054 = vmatmul.bf16.gmra.mxu0 %v971
        %v1055 = vpop.f32.mrf.mxu0
        %v1056 = vadd.f32 0.0, %v1055
        %v1057 = vpop.f32.mrf.mxu0
        %v1058 = vadd.f32 0.0, %v1057
        %1059 = vmatmul.bf16.gmra.mxu0 %v972
        %v1060 = vpop.f32.mrf.mxu0
        %v1061 = vadd.f32 0.0, %v1060
        %v1062 = vpop.f32.mrf.mxu0
        %v1063 = vadd.f32 0.0, %v1062
        %1064 = vmatmul.bf16.gmra.mxu0 %v973
        %v1065 = vpop.f32.mrf.mxu0
        %v1066 = vadd.f32 0.0, %v1065
        %v1067 = vpop.f32.mrf.mxu0
        %v1068 = vadd.f32 0.0, %v1067
        %1069 = vmatmul.bf16.gmra.mxu0 %v974
        %v1070 = vpop.f32.mrf.mxu0
        %v1071 = vadd.f32 0.0, %v1070
        %v1072 = vpop.f32.mrf.mxu0
        %v1073 = vadd.f32 0.0, %v1072
        %1074 = vmatmul.bf16.gmra.mxu0 %v975
        %v1075 = vpop.f32.mrf.mxu0
        %v1076 = vadd.f32 0.0, %v1075
        %v1077 = vpop.f32.mrf.mxu0
        %1078 = vdwg.mxu0
        %v1079 = vadd.f32 %v948, %v1051
        %v1080 = vadd.f32 %v949, %v1053
        %v1081 = vadd.f32 %v950, %v1056
        %v1082 = vadd.f32 %v951, %v1058
        %v1083 = vadd.f32 %v952, %v1061
        %v1084 = vadd.f32 %v953, %v1063
        %v1085 = vadd.f32 %v954, %v1066
        %v1086 = vadd.f32 %v955, %v1068
        %v1087 = vadd.f32 %v956, %v1071
        %v1088 = vadd.f32 %v957, %v1073
        %v1089 = vadd.f32 %v958, %v1076
        %v1090 = vld [vmem:[%s585 + $0x4] sm:$0xff]
        %v1091 = vld [vmem:[%s585 + $0xc] sm:$0xff]
        %v1092 = vld [vmem:[%s585 + $0x14] sm:$0xff]
        %v1093 = vld [vmem:[%s585 + $0x1c] sm:$0xff]
        %v1094 = vld [vmem:[%s585 + $0x24] sm:$0xff]
        %v1095 = vld [vmem:[%s585 + $0x2c] sm:$0xff]
        %v1096 = vld [vmem:[%s585 + $0x34] sm:$0xff]
        %v1097 = vld [vmem:[%s585 + $0x3c] sm:$0xff]
        %v1098 = vld [vmem:[%s585 + $0x44] sm:$0xff]
        %v1099 = vld [vmem:[%s585 + $0x4c] sm:$0xff]
        %v1100 = vld [vmem:[%s585 + $0x54] sm:$0x1]
        %v1101 = vpack.c.bf16 %v1091, %v1090
        %v1102 = vpack.c.bf16 %v1093, %v1092
        %v1103 = vpack.c.bf16 %v1095, %v1094
        %v1104 = vpack.c.bf16 %v1097, %v1096
        %v1105 = vpack.c.bf16 %v1099, %v1098
        %v1106 = vpack.c.bf16 %v1100, %v1100
        %s1107 = scalar_lea.vmem [#allocation5], 256
        %v1108 = vld [vmem:[%s1107] sm:$0xf]
        %v1109 = vld [vmem:[%s1107 + $0x4] sm:$0xf]
        %v1110 = vld [vmem:[%s1107 + $0x8] sm:$0xf]
        %v1111 = vld [vmem:[%s1107 + $0xc] sm:$0xf]
        %v1112 = vld [vmem:[%s1107 + $0x10] sm:$0xf]
        %v1113 = vld [vmem:[%s1107 + $0x14] sm:$0xf]
        %v1114 = vld [vmem:[%s1107 + $0x18] sm:$0xf]
        %v1115 = vld [vmem:[%s1107 + $0x1c] sm:$0xf]
        %v1116 = vld [vmem:[%s1107 + $0x20] sm:$0xf]
        %v1117 = vld [vmem:[%s1107 + $0x24] sm:$0xf]
        %v1118 = vld [vmem:[%s1107 + $0x28] sm:$0xf]
        %v1119 = vld [vmem:[%s1107 + $0x2c] sm:$0xf]
        %v1120 = vld [vmem:[%s1107 + $0x30] sm:$0xf]
        %v1121 = vld [vmem:[%s1107 + $0x34] sm:$0xf]
        %v1122 = vld [vmem:[%s1107 + $0x38] sm:$0xf]
        %v1123 = vld [vmem:[%s1107 + $0x3c] sm:$0xf]
        %v1140 = vunpack.c.l.b16 %v1108
        %v1141 = vunpack.c.l.b16 %v1109
        %v1142 = vunpack.c.l.b16 %v1110
        %v1143 = vunpack.c.l.b16 %v1111
        %v1144 = vunpack.c.l.b16 %v1112
        %v1145 = vunpack.c.l.b16 %v1113
        %v1146 = vunpack.c.l.b16 %v1114
        %v1147 = vunpack.c.l.b16 %v1115
        %v1148 = vunpack.c.l.b16 %v1116
        %v1149 = vunpack.c.l.b16 %v1117
        %v1150 = vunpack.c.l.b16 %v1118
        %v1151 = vunpack.c.l.b16 %v1119
        %v1152 = vunpack.c.l.b16 %v1120
        %v1153 = vunpack.c.l.b16 %v1121
        %v1154 = vunpack.c.l.b16 %v1122
        %v1155 = vunpack.c.l.b16 %v1123
        %v1156 = vpack.c.b16 %v1141, %v1140
        %v1157 = vpack.c.b16 %v1143, %v1142
        %v1158 = vpack.c.b16 %v1145, %v1144
        %v1159 = vpack.c.b16 %v1147, %v1146
        %v1160 = vpack.c.b16 %v1149, %v1148
        %v1161 = vpack.c.b16 %v1151, %v1150
        %v1162 = vpack.c.b16 %v1153, %v1152
        %v1163 = vpack.c.b16 %v1155, %v1154
        %1172 = vmatpush.bf16.msra.mxu0 %v1163
        %1173 = vmatpush.bf16.msra.mxu0 %v1162
        %1174 = vmatpush.bf16.msra.mxu0 %v1161
        %1175 = vmatpush.bf16.msra.mxu0 %v1160
        %1176 = vmatpush.bf16.msra.mxu0 %v1159
        %1177 = vmatpush.bf16.msra.mxu0 %v1158
        %1178 = vmatpush.bf16.msra.mxu0 %v1157
        %1179 = vmatpush.bf16.msra.mxu0 %v1156
        %1180 = vmatmul.bf16.gmra.mxu0 %v1101
        %v1181 = vpop.f32.mrf.mxu0
        %v1182 = vadd.f32 0.0, %v1181
        %v1183 = vpop.f32.mrf.mxu0
        %v1184 = vadd.f32 0.0, %v1183
        %1185 = vmatmul.bf16.gmra.mxu0 %v1102
        %v1186 = vpop.f32.mrf.mxu0
        %v1187 = vadd.f32 0.0, %v1186
        %v1188 = vpop.f32.mrf.mxu0
        %v1189 = vadd.f32 0.0, %v1188
        %1190 = vmatmul.bf16.gmra.mxu0 %v1103
        %v1191 = vpop.f32.mrf.mxu0
        %v1192 = vadd.f32 0.0, %v1191
        %v1193 = vpop.f32.mrf.mxu0
        %v1194 = vadd.f32 0.0, %v1193
        %1195 = vmatmul.bf16.gmra.mxu0 %v1104
        %v1196 = vpop.f32.mrf.mxu0
        %v1197 = vadd.f32 0.0, %v1196
        %v1198 = vpop.f32.mrf.mxu0
        %v1199 = vadd.f32 0.0, %v1198
        %1200 = vmatmul.bf16.gmra.mxu0 %v1105
        %v1201 = vpop.f32.mrf.mxu0
        %v1202 = vadd.f32 0.0, %v1201
        %v1203 = vpop.f32.mrf.mxu0
        %v1204 = vadd.f32 0.0, %v1203
        %1205 = vmatmul.bf16.gmra.mxu0 %v1106
        %v1206 = vpop.f32.mrf.mxu0
        %v1207 = vadd.f32 0.0, %v1206
        %v1208 = vpop.f32.mrf.mxu0
        %1209 = vdwg.mxu0
        %v1210 = vadd.f32 %v1079, %v1182
        %v1211 = vadd.f32 %v1080, %v1184
        %v1212 = vadd.f32 %v1081, %v1187
        %v1213 = vadd.f32 %v1082, %v1189
        %v1214 = vadd.f32 %v1083, %v1192
        %v1215 = vadd.f32 %v1084, %v1194
        %v1216 = vadd.f32 %v1085, %v1197
        %v1217 = vadd.f32 %v1086, %v1199
        %v1218 = vadd.f32 %v1087, %v1202
        %v1219 = vadd.f32 %v1088, %v1204
        %v1220 = vadd.f32 %v1089, %v1207
        %v1221 = vld [vmem:[%s585 + $0x5] sm:$0xff]
        %v1222 = vld [vmem:[%s585 + $0xd] sm:$0xff]
        %v1223 = vld [vmem:[%s585 + $0x15] sm:$0xff]
        %v1224 = vld [vmem:[%s585 + $0x1d] sm:$0xff]
        %v1225 = vld [vmem:[%s585 + $0x25] sm:$0xff]
        %v1226 = vld [vmem:[%s585 + $0x2d] sm:$0xff]
        %v1227 = vld [vmem:[%s585 + $0x35] sm:$0xff]
        %v1228 = vld [vmem:[%s585 + $0x3d] sm:$0xff]
        %v1229 = vld [vmem:[%s585 + $0x45] sm:$0xff]
        %v1230 = vld [vmem:[%s585 + $0x4d] sm:$0xff]
        %v1231 = vld [vmem:[%s585 + $0x55] sm:$0x1]
        %v1232 = vpack.c.bf16 %v1222, %v1221
        %v1233 = vpack.c.bf16 %v1224, %v1223
        %v1234 = vpack.c.bf16 %v1226, %v1225
        %v1235 = vpack.c.bf16 %v1228, %v1227
        %v1236 = vpack.c.bf16 %v1230, %v1229
        %v1237 = vpack.c.bf16 %v1231, %v1231
        %s1238 = scalar_lea.vmem [#allocation5], 320
        %v1239 = vld [vmem:[%s1238] sm:$0xf]
        %v1240 = vld [vmem:[%s1238 + $0x4] sm:$0xf]
        %v1241 = vld [vmem:[%s1238 + $0x8] sm:$0xf]
        %v1242 = vld [vmem:[%s1238 + $0xc] sm:$0xf]
        %v1243 = vld [vmem:[%s1238 + $0x10] sm:$0xf]
        %v1244 = vld [vmem:[%s1238 + $0x14] sm:$0xf]
        %v1245 = vld [vmem:[%s1238 + $0x18] sm:$0xf]
        %v1246 = vld [vmem:[%s1238 + $0x1c] sm:$0xf]
        %v1247 = vld [vmem:[%s1238 + $0x20] sm:$0xf]
        %v1248 = vld [vmem:[%s1238 + $0x24] sm:$0xf]
        %v1249 = vld [vmem:[%s1238 + $0x28] sm:$0xf]
        %v1250 = vld [vmem:[%s1238 + $0x2c] sm:$0xf]
        %v1251 = vld [vmem:[%s1238 + $0x30] sm:$0xf]
        %v1252 = vld [vmem:[%s1238 + $0x34] sm:$0xf]
        %v1253 = vld [vmem:[%s1238 + $0x38] sm:$0xf]
        %v1254 = vld [vmem:[%s1238 + $0x3c] sm:$0xf]
        %v1271 = vunpack.c.l.b16 %v1239
        %v1272 = vunpack.c.l.b16 %v1240
        %v1273 = vunpack.c.l.b16 %v1241
        %v1274 = vunpack.c.l.b16 %v1242
        %v1275 = vunpack.c.l.b16 %v1243
        %v1276 = vunpack.c.l.b16 %v1244
        %v1277 = vunpack.c.l.b16 %v1245
        %v1278 = vunpack.c.l.b16 %v1246
        %v1279 = vunpack.c.l.b16 %v1247
        %v1280 = vunpack.c.l.b16 %v1248
        %v1281 = vunpack.c.l.b16 %v1249
        %v1282 = vunpack.c.l.b16 %v1250
        %v1283 = vunpack.c.l.b16 %v1251
        %v1284 = vunpack.c.l.b16 %v1252
        %v1285 = vunpack.c.l.b16 %v1253
        %v1286 = vunpack.c.l.b16 %v1254
        %v1287 = vpack.c.b16 %v1272, %v1271
        %v1288 = vpack.c.b16 %v1274, %v1273
        %v1289 = vpack.c.b16 %v1276, %v1275
        %v1290 = vpack.c.b16 %v1278, %v1277
        %v1291 = vpack.c.b16 %v1280, %v1279
        %v1292 = vpack.c.b16 %v1282, %v1281
        %v1293 = vpack.c.b16 %v1284, %v1283
        %v1294 = vpack.c.b16 %v1286, %v1285
        %1303 = vmatpush.bf16.msra.mxu0 %v1294
        %1304 = vmatpush.bf16.msra.mxu0 %v1293
        %1305 = vmatpush.bf16.msra.mxu0 %v1292
        %1306 = vmatpush.bf16.msra.mxu0 %v1291
        %1307 = vmatpush.bf16.msra.mxu0 %v1290
        %1308 = vmatpush.bf16.msra.mxu0 %v1289
        %1309 = vmatpush.bf16.msra.mxu0 %v1288
        %1310 = vmatpush.bf16.msra.mxu0 %v1287
        %1311 = vmatmul.bf16.gmra.mxu0 %v1232
        %v1312 = vpop.f32.mrf.mxu0
        %v1313 = vadd.f32 0.0, %v1312
        %v1314 = vpop.f32.mrf.mxu0
        %v1315 = vadd.f32 0.0, %v1314
        %1316 = vmatmul.bf16.gmra.mxu0 %v1233
        %v1317 = vpop.f32.mrf.mxu0
        %v1318 = vadd.f32 0.0, %v1317
        %v1319 = vpop.f32.mrf.mxu0
        %v1320 = vadd.f32 0.0, %v1319
        %1321 = vmatmul.bf16.gmra.mxu0 %v1234
        %v1322 = vpop.f32.mrf.mxu0
        %v1323 = vadd.f32 0.0, %v1322
        %v1324 = vpop.f32.mrf.mxu0
        %v1325 = vadd.f32 0.0, %v1324
        %1326 = vmatmul.bf16.gmra.mxu0 %v1235
        %v1327 = vpop.f32.mrf.mxu0
        %v1328 = vadd.f32 0.0, %v1327
        %v1329 = vpop.f32.mrf.mxu0
        %v1330 = vadd.f32 0.0, %v1329
        %1331 = vmatmul.bf16.gmra.mxu0 %v1236
        %v1332 = vpop.f32.mrf.mxu0
        %v1333 = vadd.f32 0.0, %v1332
        %v1334 = vpop.f32.mrf.mxu0
        %v1335 = vadd.f32 0.0, %v1334
        %1336 = vmatmul.bf16.gmra.mxu0 %v1237
        %v1337 = vpop.f32.mrf.mxu0
        %v1338 = vadd.f32 0.0, %v1337
        %v1339 = vpop.f32.mrf.mxu0
        %1340 = vdwg.mxu0
        %v1341 = vadd.f32 %v1210, %v1313
        %v1342 = vadd.f32 %v1211, %v1315
        %v1343 = vadd.f32 %v1212, %v1318
        %v1344 = vadd.f32 %v1213, %v1320
        %v1345 = vadd.f32 %v1214, %v1323
        %v1346 = vadd.f32 %v1215, %v1325
        %v1347 = vadd.f32 %v1216, %v1328
        %v1348 = vadd.f32 %v1217, %v1330
        %v1349 = vadd.f32 %v1218, %v1333
        %v1350 = vadd.f32 %v1219, %v1335
        %v1351 = vadd.f32 %v1220, %v1338
        %v1352 = vld [vmem:[%s585 + $0x6] sm:$0xff]
        %v1353 = vld [vmem:[%s585 + $0xe] sm:$0xff]
        %v1354 = vld [vmem:[%s585 + $0x16] sm:$0xff]
        %v1355 = vld [vmem:[%s585 + $0x1e] sm:$0xff]
        %v1356 = vld [vmem:[%s585 + $0x26] sm:$0xff]
        %v1357 = vld [vmem:[%s585 + $0x2e] sm:$0xff]
        %v1358 = vld [vmem:[%s585 + $0x36] sm:$0xff]
        %v1359 = vld [vmem:[%s585 + $0x3e] sm:$0xff]
        %v1360 = vld [vmem:[%s585 + $0x46] sm:$0xff]
        %v1361 = vld [vmem:[%s585 + $0x4e] sm:$0xff]
        %v1362 = vld [vmem:[%s585 + $0x56] sm:$0x1]
        %v1363 = vpack.c.bf16 %v1353, %v1352
        %v1364 = vpack.c.bf16 %v1355, %v1354
        %v1365 = vpack.c.bf16 %v1357, %v1356
        %v1366 = vpack.c.bf16 %v1359, %v1358
        %v1367 = vpack.c.bf16 %v1361, %v1360
        %v1368 = vpack.c.bf16 %v1362, %v1362
        %s1369 = scalar_lea.vmem [#allocation5], 384
        %v1370 = vld [vmem:[%s1369] sm:$0xf]
        %v1371 = vld [vmem:[%s1369 + $0x4] sm:$0xf]
        %v1372 = vld [vmem:[%s1369 + $0x8] sm:$0xf]
        %v1373 = vld [vmem:[%s1369 + $0xc] sm:$0xf]
        %v1374 = vld [vmem:[%s1369 + $0x10] sm:$0xf]
        %v1375 = vld [vmem:[%s1369 + $0x14] sm:$0xf]
        %v1376 = vld [vmem:[%s1369 + $0x18] sm:$0xf]
        %v1377 = vld [vmem:[%s1369 + $0x1c] sm:$0xf]
        %v1378 = vld [vmem:[%s1369 + $0x20] sm:$0xf]
        %v1379 = vld [vmem:[%s1369 + $0x24] sm:$0xf]
        %v1380 = vld [vmem:[%s1369 + $0x28] sm:$0xf]
        %v1381 = vld [vmem:[%s1369 + $0x2c] sm:$0xf]
        %v1382 = vld [vmem:[%s1369 + $0x30] sm:$0xf]
        %v1383 = vld [vmem:[%s1369 + $0x34] sm:$0xf]
        %v1384 = vld [vmem:[%s1369 + $0x38] sm:$0xf]
        %v1385 = vld [vmem:[%s1369 + $0x3c] sm:$0xf]
        %v1402 = vunpack.c.l.b16 %v1370
        %v1403 = vunpack.c.l.b16 %v1371
        %v1404 = vunpack.c.l.b16 %v1372
        %v1405 = vunpack.c.l.b16 %v1373
        %v1406 = vunpack.c.l.b16 %v1374
        %v1407 = vunpack.c.l.b16 %v1375
        %v1408 = vunpack.c.l.b16 %v1376
        %v1409 = vunpack.c.l.b16 %v1377
        %v1410 = vunpack.c.l.b16 %v1378
        %v1411 = vunpack.c.l.b16 %v1379
        %v1412 = vunpack.c.l.b16 %v1380
        %v1413 = vunpack.c.l.b16 %v1381
        %v1414 = vunpack.c.l.b16 %v1382
        %v1415 = vunpack.c.l.b16 %v1383
        %v1416 = vunpack.c.l.b16 %v1384
        %v1417 = vunpack.c.l.b16 %v1385
        %v1418 = vpack.c.b16 %v1403, %v1402
        %v1419 = vpack.c.b16 %v1405, %v1404
        %v1420 = vpack.c.b16 %v1407, %v1406
        %v1421 = vpack.c.b16 %v1409, %v1408
        %v1422 = vpack.c.b16 %v1411, %v1410
        %v1423 = vpack.c.b16 %v1413, %v1412
        %v1424 = vpack.c.b16 %v1415, %v1414
        %v1425 = vpack.c.b16 %v1417, %v1416
        %1434 = vmatpush.bf16.msra.mxu0 %v1425
        %1435 = vmatpush.bf16.msra.mxu0 %v1424
        %1436 = vmatpush.bf16.msra.mxu0 %v1423
        %1437 = vmatpush.bf16.msra.mxu0 %v1422
        %1438 = vmatpush.bf16.msra.mxu0 %v1421
        %1439 = vmatpush.bf16.msra.mxu0 %v1420
        %1440 = vmatpush.bf16.msra.mxu0 %v1419
        %1441 = vmatpush.bf16.msra.mxu0 %v1418
        %1442 = vmatmul.bf16.gmra.mxu0 %v1363
        %v1443 = vpop.f32.mrf.mxu0
        %v1444 = vadd.f32 0.0, %v1443
        %v1445 = vpop.f32.mrf.mxu0
        %v1446 = vadd.f32 0.0, %v1445
        %1447 = vmatmul.bf16.gmra.mxu0 %v1364
        %v1448 = vpop.f32.mrf.mxu0
        %v1449 = vadd.f32 0.0, %v1448
        %v1450 = vpop.f32.mrf.mxu0
        %v1451 = vadd.f32 0.0, %v1450
        %1452 = vmatmul.bf16.gmra.mxu0 %v1365
        %v1453 = vpop.f32.mrf.mxu0
        %v1454 = vadd.f32 0.0, %v1453
        %v1455 = vpop.f32.mrf.mxu0
        %v1456 = vadd.f32 0.0, %v1455
        %1457 = vmatmul.bf16.gmra.mxu0 %v1366
        %v1458 = vpop.f32.mrf.mxu0
        %v1459 = vadd.f32 0.0, %v1458
        %v1460 = vpop.f32.mrf.mxu0
        %v1461 = vadd.f32 0.0, %v1460
        %1462 = vmatmul.bf16.gmra.mxu0 %v1367
        %v1463 = vpop.f32.mrf.mxu0
        %v1464 = vadd.f32 0.0, %v1463
        %v1465 = vpop.f32.mrf.mxu0
        %v1466 = vadd.f32 0.0, %v1465
        %1467 = vmatmul.bf16.gmra.mxu0 %v1368
        %v1468 = vpop.f32.mrf.mxu0
        %v1469 = vadd.f32 0.0, %v1468
        %v1470 = vpop.f32.mrf.mxu0
        %1471 = vdwg.mxu0
        %v1472 = vadd.f32 %v1341, %v1444
        %v1473 = vadd.f32 %v1342, %v1446
        %v1474 = vadd.f32 %v1343, %v1449
        %v1475 = vadd.f32 %v1344, %v1451
        %v1476 = vadd.f32 %v1345, %v1454
        %v1477 = vadd.f32 %v1346, %v1456
        %v1478 = vadd.f32 %v1347, %v1459
        %v1479 = vadd.f32 %v1348, %v1461
        %v1480 = vadd.f32 %v1349, %v1464
        %v1481 = vadd.f32 %v1350, %v1466
        %v1482 = vadd.f32 %v1351, %v1469
        %v1483 = vld [vmem:[%s585 + $0x7] sm:$0xff]
        %v1484 = vld [vmem:[%s585 + $0xf] sm:$0xff]
        %v1485 = vld [vmem:[%s585 + $0x17] sm:$0xff]
        %v1486 = vld [vmem:[%s585 + $0x1f] sm:$0xff]
        %v1487 = vld [vmem:[%s585 + $0x27] sm:$0xff]
        %v1488 = vld [vmem:[%s585 + $0x2f] sm:$0xff]
        %v1489 = vld [vmem:[%s585 + $0x37] sm:$0xff]
        %v1490 = vld [vmem:[%s585 + $0x3f] sm:$0xff]
        %v1491 = vld [vmem:[%s585 + $0x47] sm:$0xff]
        %v1492 = vld [vmem:[%s585 + $0x4f] sm:$0xff]
        %v1493 = vld [vmem:[%s585 + $0x57] sm:$0x1]
        %v1494 = vpack.c.bf16 %v1484, %v1483
        %v1495 = vpack.c.bf16 %v1486, %v1485
        %v1496 = vpack.c.bf16 %v1488, %v1487
        %v1497 = vpack.c.bf16 %v1490, %v1489
        %v1498 = vpack.c.bf16 %v1492, %v1491
        %v1499 = vpack.c.bf16 %v1493, %v1493
        %s1500 = scalar_lea.vmem [#allocation5], 448
        %v1501 = vld [vmem:[%s1500] sm:$0xf]
        %v1502 = vld [vmem:[%s1500 + $0x4] sm:$0xf]
        %v1503 = vld [vmem:[%s1500 + $0x8] sm:$0xf]
        %v1504 = vld [vmem:[%s1500 + $0xc] sm:$0xf]
        %v1505 = vld [vmem:[%s1500 + $0x10] sm:$0xf]
        %v1506 = vld [vmem:[%s1500 + $0x14] sm:$0xf]
        %v1507 = vld [vmem:[%s1500 + $0x18] sm:$0xf]
        %v1508 = vld [vmem:[%s1500 + $0x1c] sm:$0xf]
        %v1509 = vld [vmem:[%s1500 + $0x20] sm:$0xf]
        %v1510 = vld [vmem:[%s1500 + $0x24] sm:$0xf]
        %v1511 = vld [vmem:[%s1500 + $0x28] sm:$0xf]
        %v1512 = vld [vmem:[%s1500 + $0x2c] sm:$0xf]
        %v1513 = vld [vmem:[%s1500 + $0x30] sm:$0xf]
        %v1514 = vld [vmem:[%s1500 + $0x34] sm:$0xf]
        %v1515 = vld [vmem:[%s1500 + $0x38] sm:$0xf]
        %v1516 = vld [vmem:[%s1500 + $0x3c] sm:$0xf]
        %v1533 = vunpack.c.l.b16 %v1501
        %v1534 = vunpack.c.l.b16 %v1502
        %v1535 = vunpack.c.l.b16 %v1503
        %v1536 = vunpack.c.l.b16 %v1504
        %v1537 = vunpack.c.l.b16 %v1505
        %v1538 = vunpack.c.l.b16 %v1506
        %v1539 = vunpack.c.l.b16 %v1507
        %v1540 = vunpack.c.l.b16 %v1508
        %v1541 = vunpack.c.l.b16 %v1509
        %v1542 = vunpack.c.l.b16 %v1510
        %v1543 = vunpack.c.l.b16 %v1511
        %v1544 = vunpack.c.l.b16 %v1512
        %v1545 = vunpack.c.l.b16 %v1513
        %v1546 = vunpack.c.l.b16 %v1514
        %v1547 = vunpack.c.l.b16 %v1515
        %v1548 = vunpack.c.l.b16 %v1516
        %v1549 = vpack.c.b16 %v1534, %v1533
        %v1550 = vpack.c.b16 %v1536, %v1535
        %v1551 = vpack.c.b16 %v1538, %v1537
        %v1552 = vpack.c.b16 %v1540, %v1539
        %v1553 = vpack.c.b16 %v1542, %v1541
        %v1554 = vpack.c.b16 %v1544, %v1543
        %v1555 = vpack.c.b16 %v1546, %v1545
        %v1556 = vpack.c.b16 %v1548, %v1547
        %1565 = vmatpush.bf16.msra.mxu0 %v1556
        %1566 = vmatpush.bf16.msra.mxu0 %v1555
        %1567 = vmatpush.bf16.msra.mxu0 %v1554
        %1568 = vmatpush.bf16.msra.mxu0 %v1553
        %1569 = vmatpush.bf16.msra.mxu0 %v1552
        %1570 = vmatpush.bf16.msra.mxu0 %v1551
        %1571 = vmatpush.bf16.msra.mxu0 %v1550
        %1572 = vmatpush.bf16.msra.mxu0 %v1549
        %1573 = vmatmul.bf16.gmra.mxu0 %v1494
        %v1574 = vpop.f32.mrf.mxu0
        %v1575 = vadd.f32 0.0, %v1574
        %v1576 = vpop.f32.mrf.mxu0
        %v1577 = vadd.f32 0.0, %v1576
        %1578 = vmatmul.bf16.gmra.mxu0 %v1495
        %v1579 = vpop.f32.mrf.mxu0
        %v1580 = vadd.f32 0.0, %v1579
        %v1581 = vpop.f32.mrf.mxu0
        %v1582 = vadd.f32 0.0, %v1581
        %1583 = vmatmul.bf16.gmra.mxu0 %v1496
        %v1584 = vpop.f32.mrf.mxu0
        %v1585 = vadd.f32 0.0, %v1584
        %v1586 = vpop.f32.mrf.mxu0
        %v1587 = vadd.f32 0.0, %v1586
        %1588 = vmatmul.bf16.gmra.mxu0 %v1497
        %v1589 = vpop.f32.mrf.mxu0
        %v1590 = vadd.f32 0.0, %v1589
        %v1591 = vpop.f32.mrf.mxu0
        %v1592 = vadd.f32 0.0, %v1591
        %1593 = vmatmul.bf16.gmra.mxu0 %v1498
        %v1594 = vpop.f32.mrf.mxu0
        %v1595 = vadd.f32 0.0, %v1594
        %v1596 = vpop.f32.mrf.mxu0
        %v1597 = vadd.f32 0.0, %v1596
        %1598 = vmatmul.bf16.gmra.mxu0 %v1499
        %v1599 = vpop.f32.mrf.mxu0
        %v1600 = vadd.f32 0.0, %v1599
        %v1601 = vpop.f32.mrf.mxu0
        %1602 = vdwg.mxu0
        %v1603 = vadd.f32 %v1472, %v1575
        %v1604 = vadd.f32 %v1473, %v1577
        %v1605 = vadd.f32 %v1474, %v1580
        %v1606 = vadd.f32 %v1475, %v1582
        %v1607 = vadd.f32 %v1476, %v1585
        %v1608 = vadd.f32 %v1477, %v1587
        %v1609 = vadd.f32 %v1478, %v1590
        %v1610 = vadd.f32 %v1479, %v1592
        %v1611 = vadd.f32 %v1480, %v1595
        %v1612 = vadd.f32 %v1481, %v1597
        %v1613 = vadd.f32 %v1482, %v1600
        %v1614 = vld [vmem:[%s585 + $0x8] sm:$0xff]
        %v1615 = vld [vmem:[%s585 + $0x10] sm:$0xff]
        %v1616 = vld [vmem:[%s585 + $0x18] sm:$0xff]
        %v1617 = vld [vmem:[%s585 + $0x20] sm:$0xff]
        %v1618 = vld [vmem:[%s585 + $0x28] sm:$0xff]
        %v1619 = vld [vmem:[%s585 + $0x30] sm:$0xff]
        %v1620 = vld [vmem:[%s585 + $0x38] sm:$0xff]
        %v1621 = vld [vmem:[%s585 + $0x40] sm:$0xff]
        %v1622 = vld [vmem:[%s585 + $0x48] sm:$0xff]
        %v1623 = vld [vmem:[%s585 + $0x50] sm:$0xff]
        %v1624 = vld [vmem:[%s585 + $0x58] sm:$0x1]
        %v1625 = vpack.c.bf16 %v1615, %v1614
        %v1626 = vpack.c.bf16 %v1617, %v1616
        %v1627 = vpack.c.bf16 %v1619, %v1618
        %v1628 = vpack.c.bf16 %v1621, %v1620
        %v1629 = vpack.c.bf16 %v1623, %v1622
        %v1630 = vpack.c.bf16 %v1624, %v1624
        %s1631 = scalar_lea.vmem [#allocation5], 512
        %v1632 = vld [vmem:[%s1631] sm:$0xf]
        %v1633 = vld [vmem:[%s1631 + $0x4] sm:$0xf]
        %v1634 = vld [vmem:[%s1631 + $0x8] sm:$0xf]
        %v1635 = vld [vmem:[%s1631 + $0xc] sm:$0xf]
        %v1636 = vld [vmem:[%s1631 + $0x10] sm:$0xf]
        %v1637 = vld [vmem:[%s1631 + $0x14] sm:$0xf]
        %v1638 = vld [vmem:[%s1631 + $0x18] sm:$0xf]
        %v1639 = vld [vmem:[%s1631 + $0x1c] sm:$0xf]
        %v1640 = vld [vmem:[%s1631 + $0x20] sm:$0xf]
        %v1641 = vld [vmem:[%s1631 + $0x24] sm:$0xf]
        %v1642 = vld [vmem:[%s1631 + $0x28] sm:$0xf]
        %v1643 = vld [vmem:[%s1631 + $0x2c] sm:$0xf]
        %v1644 = vld [vmem:[%s1631 + $0x30] sm:$0xf]
        %v1645 = vld [vmem:[%s1631 + $0x34] sm:$0xf]
        %v1646 = vld [vmem:[%s1631 + $0x38] sm:$0xf]
        %v1647 = vld [vmem:[%s1631 + $0x3c] sm:$0xf]
        %v1664 = vunpack.c.l.b16 %v1632
        %v1665 = vunpack.c.l.b16 %v1633
        %v1666 = vunpack.c.l.b16 %v1634
        %v1667 = vunpack.c.l.b16 %v1635
        %v1668 = vunpack.c.l.b16 %v1636
        %v1669 = vunpack.c.l.b16 %v1637
        %v1670 = vunpack.c.l.b16 %v1638
        %v1671 = vunpack.c.l.b16 %v1639
        %v1672 = vunpack.c.l.b16 %v1640
        %v1673 = vunpack.c.l.b16 %v1641
        %v1674 = vunpack.c.l.b16 %v1642
        %v1675 = vunpack.c.l.b16 %v1643
        %v1676 = vunpack.c.l.b16 %v1644
        %v1677 = vunpack.c.l.b16 %v1645
        %v1678 = vunpack.c.l.b16 %v1646
        %v1679 = vunpack.c.l.b16 %v1647
        %v1680 = vpack.c.b16 %v1665, %v1664
        %v1681 = vpack.c.b16 %v1667, %v1666
        %v1682 = vpack.c.b16 %v1669, %v1668
        %v1683 = vpack.c.b16 %v1671, %v1670
        %v1684 = vpack.c.b16 %v1673, %v1672
        %v1685 = vpack.c.b16 %v1675, %v1674
        %v1686 = vpack.c.b16 %v1677, %v1676
        %v1687 = vpack.c.b16 %v1679, %v1678
        %1696 = vmatpush.bf16.msra.mxu0 %v1687
        %1697 = vmatpush.bf16.msra.mxu0 %v1686
        %1698 = vmatpush.bf16.msra.mxu0 %v1685
        %1699 = vmatpush.bf16.msra.mxu0 %v1684
        %1700 = vmatpush.bf16.msra.mxu0 %v1683
        %1701 = vmatpush.bf16.msra.mxu0 %v1682
        %1702 = vmatpush.bf16.msra.mxu0 %v1681
        %1703 = vmatpush.bf16.msra.mxu0 %v1680
        %1704 = vmatmul.bf16.gmra.mxu0 %v1625
        %v1705 = vpop.f32.mrf.mxu0
        %v1706 = vadd.f32 0.0, %v1705
        %v1707 = vpop.f32.mrf.mxu0
        %v1708 = vadd.f32 0.0, %v1707
        %1709 = vmatmul.bf16.gmra.mxu0 %v1626
        %v1710 = vpop.f32.mrf.mxu0
        %v1711 = vadd.f32 0.0, %v1710
        %v1712 = vpop.f32.mrf.mxu0
        %v1713 = vadd.f32 0.0, %v1712
        %1714 = vmatmul.bf16.gmra.mxu0 %v1627
        %v1715 = vpop.f32.mrf.mxu0
        %v1716 = vadd.f32 0.0, %v1715
        %v1717 = vpop.f32.mrf.mxu0
        %v1718 = vadd.f32 0.0, %v1717
        %1719 = vmatmul.bf16.gmra.mxu0 %v1628
        %v1720 = vpop.f32.mrf.mxu0
        %v1721 = vadd.f32 0.0, %v1720
        %v1722 = vpop.f32.mrf.mxu0
        %v1723 = vadd.f32 0.0, %v1722
        %1724 = vmatmul.bf16.gmra.mxu0 %v1629
        %v1725 = vpop.f32.mrf.mxu0
        %v1726 = vadd.f32 0.0, %v1725
        %v1727 = vpop.f32.mrf.mxu0
        %v1728 = vadd.f32 0.0, %v1727
        %1729 = vmatmul.bf16.gmra.mxu0 %v1630
        %v1730 = vpop.f32.mrf.mxu0
        %v1731 = vadd.f32 0.0, %v1730
        %v1732 = vpop.f32.mrf.mxu0
        %1733 = vdwg.mxu0
        %v1734 = vadd.f32 %v1603, %v1706
        %v1735 = vadd.f32 %v1604, %v1708
        %v1736 = vadd.f32 %v1605, %v1711
        %v1737 = vadd.f32 %v1606, %v1713
        %v1738 = vadd.f32 %v1607, %v1716
        %v1739 = vadd.f32 %v1608, %v1718
        %v1740 = vadd.f32 %v1609, %v1721
        %v1741 = vadd.f32 %v1610, %v1723
        %v1742 = vadd.f32 %v1611, %v1726
        %v1743 = vadd.f32 %v1612, %v1728
        %v1744 = vadd.f32 %v1613, %v1731
        %v1745 = vld [vmem:[%s585 + $0x9] sm:$0xff]
        %v1746 = vld [vmem:[%s585 + $0x11] sm:$0xff]
        %v1747 = vld [vmem:[%s585 + $0x19] sm:$0xff]
        %v1748 = vld [vmem:[%s585 + $0x21] sm:$0xff]
        %v1749 = vld [vmem:[%s585 + $0x29] sm:$0xff]
        %v1750 = vld [vmem:[%s585 + $0x31] sm:$0xff]
        %v1751 = vld [vmem:[%s585 + $0x39] sm:$0xff]
        %v1752 = vld [vmem:[%s585 + $0x41] sm:$0xff]
        %v1753 = vld [vmem:[%s585 + $0x49] sm:$0xff]
        %v1754 = vld [vmem:[%s585 + $0x51] sm:$0xff]
        %v1755 = vld [vmem:[%s585 + $0x59] sm:$0x1]
        %v1756 = vpack.c.bf16 %v1746, %v1745
        %v1757 = vpack.c.bf16 %v1748, %v1747
        %v1758 = vpack.c.bf16 %v1750, %v1749
        %v1759 = vpack.c.bf16 %v1752, %v1751
        %v1760 = vpack.c.bf16 %v1754, %v1753
        %v1761 = vpack.c.bf16 %v1755, %v1755
        %s1762 = scalar_lea.vmem [#allocation5], 576
        %v1763 = vld [vmem:[%s1762] sm:$0xf]
        %v1764 = vld [vmem:[%s1762 + $0x4] sm:$0xf]
        %v1765 = vld [vmem:[%s1762 + $0x8] sm:$0xf]
        %v1766 = vld [vmem:[%s1762 + $0xc] sm:$0xf]
        %v1767 = vld [vmem:[%s1762 + $0x10] sm:$0xf]
        %v1768 = vld [vmem:[%s1762 + $0x14] sm:$0xf]
        %v1769 = vld [vmem:[%s1762 + $0x18] sm:$0xf]
        %v1770 = vld [vmem:[%s1762 + $0x1c] sm:$0xf]
        %v1771 = vld [vmem:[%s1762 + $0x20] sm:$0xf]
        %v1772 = vld [vmem:[%s1762 + $0x24] sm:$0xf]
        %v1773 = vld [vmem:[%s1762 + $0x28] sm:$0xf]
        %v1774 = vld [vmem:[%s1762 + $0x2c] sm:$0xf]
        %v1775 = vld [vmem:[%s1762 + $0x30] sm:$0xf]
        %v1776 = vld [vmem:[%s1762 + $0x34] sm:$0xf]
        %v1777 = vld [vmem:[%s1762 + $0x38] sm:$0xf]
        %v1778 = vld [vmem:[%s1762 + $0x3c] sm:$0xf]
        %v1795 = vunpack.c.l.b16 %v1763
        %v1796 = vunpack.c.l.b16 %v1764
        %v1797 = vunpack.c.l.b16 %v1765
        %v1798 = vunpack.c.l.b16 %v1766
        %v1799 = vunpack.c.l.b16 %v1767
        %v1800 = vunpack.c.l.b16 %v1768
        %v1801 = vunpack.c.l.b16 %v1769
        %v1802 = vunpack.c.l.b16 %v1770
        %v1803 = vunpack.c.l.b16 %v1771
        %v1804 = vunpack.c.l.b16 %v1772
        %v1805 = vunpack.c.l.b16 %v1773
        %v1806 = vunpack.c.l.b16 %v1774
        %v1807 = vunpack.c.l.b16 %v1775
        %v1808 = vunpack.c.l.b16 %v1776
        %v1809 = vunpack.c.l.b16 %v1777
        %v1810 = vunpack.c.l.b16 %v1778
        %v1811 = vpack.c.b16 %v1796, %v1795
        %v1812 = vpack.c.b16 %v1798, %v1797
        %v1813 = vpack.c.b16 %v1800, %v1799
        %v1814 = vpack.c.b16 %v1802, %v1801
        %v1815 = vpack.c.b16 %v1804, %v1803
        %v1816 = vpack.c.b16 %v1806, %v1805
        %v1817 = vpack.c.b16 %v1808, %v1807
        %v1818 = vpack.c.b16 %v1810, %v1809
        %1827 = vmatpush.bf16.msra.mxu0 %v1818
        %1828 = vmatpush.bf16.msra.mxu0 %v1817
        %1829 = vmatpush.bf16.msra.mxu0 %v1816
        %1830 = vmatpush.bf16.msra.mxu0 %v1815
        %1831 = vmatpush.bf16.msra.mxu0 %v1814
        %1832 = vmatpush.bf16.msra.mxu0 %v1813
        %1833 = vmatpush.bf16.msra.mxu0 %v1812
        %1834 = vmatpush.bf16.msra.mxu0 %v1811
        %1835 = vmatmul.bf16.gmra.mxu0 %v1756
        %v1836 = vpop.f32.mrf.mxu0
        %v1837 = vadd.f32 0.0, %v1836
        %v1838 = vpop.f32.mrf.mxu0
        %v1839 = vadd.f32 0.0, %v1838
        %1840 = vmatmul.bf16.gmra.mxu0 %v1757
        %v1841 = vpop.f32.mrf.mxu0
        %v1842 = vadd.f32 0.0, %v1841
        %v1843 = vpop.f32.mrf.mxu0
        %v1844 = vadd.f32 0.0, %v1843
        %1845 = vmatmul.bf16.gmra.mxu0 %v1758
        %v1846 = vpop.f32.mrf.mxu0
        %v1847 = vadd.f32 0.0, %v1846
        %v1848 = vpop.f32.mrf.mxu0
        %v1849 = vadd.f32 0.0, %v1848
        %1850 = vmatmul.bf16.gmra.mxu0 %v1759
        %v1851 = vpop.f32.mrf.mxu0
        %v1852 = vadd.f32 0.0, %v1851
        %v1853 = vpop.f32.mrf.mxu0
        %v1854 = vadd.f32 0.0, %v1853
        %1855 = vmatmul.bf16.gmra.mxu0 %v1760
        %v1856 = vpop.f32.mrf.mxu0
        %v1857 = vadd.f32 0.0, %v1856
        %v1858 = vpop.f32.mrf.mxu0
        %v1859 = vadd.f32 0.0, %v1858
        %1860 = vmatmul.bf16.gmra.mxu0 %v1761
        %v1861 = vpop.f32.mrf.mxu0
        %v1862 = vadd.f32 0.0, %v1861
        %v1863 = vpop.f32.mrf.mxu0
        %1864 = vdwg.mxu0
        %v1865 = vadd.f32 %v1734, %v1837
        %v1866 = vadd.f32 %v1735, %v1839
        %v1867 = vadd.f32 %v1736, %v1842
        %v1868 = vadd.f32 %v1737, %v1844
        %v1869 = vadd.f32 %v1738, %v1847
        %v1870 = vadd.f32 %v1739, %v1849
        %v1871 = vadd.f32 %v1740, %v1852
        %v1872 = vadd.f32 %v1741, %v1854
        %v1873 = vadd.f32 %v1742, %v1857
        %v1874 = vadd.f32 %v1743, %v1859
        %v1875 = vadd.f32 %v1744, %v1862
        %v1876 = vperm.slane %v586, 0
        %v1877 = vadd.f32 %v1865, %v1876
        %v1878 = vadd.f32 %v1866, %v1876
        %v1879 = vadd.f32 %v1867, %v1876
        %v1880 = vadd.f32 %v1868, %v1876
        %v1881 = vadd.f32 %v1869, %v1876
        %v1882 = vadd.f32 %v1870, %v1876
        %v1883 = vadd.f32 %v1871, %v1876
        %v1884 = vadd.f32 %v1872, %v1876
        %v1885 = vadd.f32 %v1873, %v1876
        %v1886 = vadd.f32 %v1874, %v1876
        %v1887 = vadd.f32 %v1875, %v1876
        %vm1888 = vcmp.gt.f32.partialorder %v1877, 0.0
        %vm1889 = vcmp.gt.f32.partialorder %v1878, 0.0
        %vm1890 = vcmp.gt.f32.partialorder %v1879, 0.0
        %vm1891 = vcmp.gt.f32.partialorder %v1880, 0.0
        %vm1892 = vcmp.gt.f32.partialorder %v1881, 0.0
        %vm1893 = vcmp.gt.f32.partialorder %v1882, 0.0
        %vm1894 = vcmp.gt.f32.partialorder %v1883, 0.0
        %vm1895 = vcmp.gt.f32.partialorder %v1884, 0.0
        %vm1896 = vcmp.gt.f32.partialorder %v1885, 0.0
        %vm1897 = vcmp.gt.f32.partialorder %v1886, 0.0
        %vm1898 = vcmp.gt.f32.partialorder %v1887, 0.0
        %v1899 = vmin.f32 %v1877, 0.0
        %v1900 = vmin.f32 %v1878, 0.0
        %v1901 = vmin.f32 %v1879, 0.0
        %v1902 = vmin.f32 %v1880, 0.0
        %v1903 = vmin.f32 %v1881, 0.0
        %v1904 = vmin.f32 %v1882, 0.0
        %v1905 = vmin.f32 %v1883, 0.0
        %v1906 = vmin.f32 %v1884, 0.0
        %v1907 = vmin.f32 %v1885, 0.0
        %v1908 = vmin.f32 %v1886, 0.0
        %v1909 = vmin.f32 %v1887, 0.0
        %v1910 = vmul.f32 %v1899, 1.442695
        %v1911 = vpow.pop %v1910
        %v1912 = vmul.f32 %v1900, 1.442695
        %v1913 = vpow.pop %v1912
        %v1914 = vmul.f32 %v1901, 1.442695
        %v1915 = vpow.pop %v1914
        %v1916 = vmul.f32 %v1902, 1.442695
        %v1917 = vpow.pop %v1916
        %v1918 = vmul.f32 %v1903, 1.442695
        %v1919 = vpow.pop %v1918
        %v1920 = vmul.f32 %v1904, 1.442695
        %v1921 = vpow.pop %v1920
        %v1922 = vmul.f32 %v1905, 1.442695
        %v1923 = vpow.pop %v1922
        %v1924 = vmul.f32 %v1906, 1.442695
        %v1925 = vpow.pop %v1924
        %v1926 = vmul.f32 %v1907, 1.442695
        %v1927 = vpow.pop %v1926
        %v1928 = vmul.f32 %v1908, 1.442695
        %v1929 = vpow.pop %v1928
        %v1930 = vmul.f32 %v1909, 1.442695
        %v1931 = vpow.pop %v1930
        %v1932 = vsub.f32 %v1911, 1.0
        %v1933 = vsub.f32 %v1913, 1.0
        %v1934 = vsub.f32 %v1915, 1.0
        %v1935 = vsub.f32 %v1917, 1.0
        %v1936 = vsub.f32 %v1919, 1.0
        %v1937 = vsub.f32 %v1921, 1.0
        %v1938 = vsub.f32 %v1923, 1.0
        %v1939 = vsub.f32 %v1925, 1.0
        %v1940 = vsub.f32 %v1927, 1.0
        %v1941 = vsub.f32 %v1929, 1.0
        %v1942 = vsub.f32 %v1931, 1.0
        %v1943 = vsel %vm1888, %v1877, %v1932
        %v1944 = vsel %vm1889, %v1878, %v1933
        %v1945 = vsel %vm1890, %v1879, %v1934
        %v1946 = vsel %vm1891, %v1880, %v1935
        %v1947 = vsel %vm1892, %v1881, %v1936
        %v1948 = vsel %vm1893, %v1882, %v1937
        %v1949 = vsel %vm1894, %v1883, %v1938
        %v1950 = vsel %vm1895, %v1884, %v1939
        %v1951 = vsel %vm1896, %v1885, %v1940
        %v1952 = vsel %vm1897, %v1886, %v1941
        %v1953 = vsel %vm1898, %v1887, %v1942
        %v1965 = vrot.slane %v1943, 1
        %v1966 = vrot.slane %v1943, 2
        %v1967 = vrot.slane %v1943, 3
        %v1968 = vrot.slane %v1943, 4
        %v1969 = vrot.slane %v1943, 5
        %v1970 = vrot.slane %v1943, 6
        %v1971 = vrot.slane %v1943, 7
        %v1972 = vrot.slane %v1944, 1
        %v1973 = vrot.slane %v1944, 2
        %v1974 = vrot.slane %v1944, 3
        %v1975 = vrot.slane %v1944, 4
        %v1976 = vrot.slane %v1944, 5
        %v1977 = vrot.slane %v1944, 6
        %v1978 = vrot.slane %v1944, 7
        %v1979 = vrot.slane %v1945, 1
        %v1980 = vrot.slane %v1945, 2
        %v1981 = vrot.slane %v1945, 3
        %v1982 = vrot.slane %v1945, 4
        %v1983 = vrot.slane %v1945, 5
        %v1984 = vrot.slane %v1945, 6
        %v1985 = vrot.slane %v1945, 7
        %v1986 = vrot.slane %v1946, 1
        %v1987 = vrot.slane %v1946, 2
        %v1988 = vrot.slane %v1946, 3
        %v1989 = vrot.slane %v1946, 4
        %v1990 = vrot.slane %v1946, 5
        %v1991 = vrot.slane %v1946, 6
        %v1992 = vrot.slane %v1946, 7
        %v1993 = vrot.slane %v1947, 1
        %v1994 = vrot.slane %v1947, 2
        %v1995 = vrot.slane %v1947, 3
        %v1996 = vrot.slane %v1947, 4
        %v1997 = vrot.slane %v1947, 5
        %v1998 = vrot.slane %v1947, 6
        %v1999 = vrot.slane %v1947, 7
        %v2000 = vrot.slane %v1948, 1
        %v2001 = vrot.slane %v1948, 2
        %v2002 = vrot.slane %v1948, 3
        %v2003 = vrot.slane %v1948, 4
        %v2004 = vrot.slane %v1948, 5
        %v2005 = vrot.slane %v1948, 6
        %v2006 = vrot.slane %v1948, 7
        %v2007 = vrot.slane %v1949, 1
        %v2008 = vrot.slane %v1949, 2
        %v2009 = vrot.slane %v1949, 3
        %v2010 = vrot.slane %v1949, 4
        %v2011 = vrot.slane %v1949, 5
        %v2012 = vrot.slane %v1949, 6
        %v2013 = vrot.slane %v1949, 7
        %v2014 = vrot.slane %v1950, 1
        %v2015 = vrot.slane %v1950, 2
        %v2016 = vrot.slane %v1950, 3
        %v2017 = vrot.slane %v1950, 4
        %v2018 = vrot.slane %v1950, 5
        %v2019 = vrot.slane %v1950, 6
        %v2020 = vrot.slane %v1950, 7
        %v2021 = vrot.slane %v1951, 1
        %v2022 = vrot.slane %v1951, 2
        %v2023 = vrot.slane %v1951, 3
        %v2024 = vrot.slane %v1951, 4
        %v2025 = vrot.slane %v1951, 5
        %v2026 = vrot.slane %v1951, 6
        %v2027 = vrot.slane %v1951, 7
        %v2028 = vrot.slane %v1952, 1
        %v2029 = vrot.slane %v1952, 2
        %v2030 = vrot.slane %v1952, 3
        %v2031 = vrot.slane %v1952, 4
        %v2032 = vrot.slane %v1952, 5
        %v2033 = vrot.slane %v1952, 6
        %v2034 = vrot.slane %v1952, 7
        %2035 = vst [vmem:[#allocation1] ss:$9 sm:$0xff] %v1943
        %s2036 = scalar_lea.vmem [#allocation1], 1
        %2037 = vst [vmem:[%s2036] ss:$9 sm:$0xff] %v1965
        %s2038 = scalar_lea.vmem [#allocation1], 2
        %2039 = vst [vmem:[%s2038] ss:$9 sm:$0xff] %v1966
        %v2040 = vld [vmem:[#allocation1] sm:$0xff]
        %2041 = vst [vmem:[#allocation1] ss:$9 sm:$0xff] %v1967
        %2042 = vst [vmem:[%s2036] ss:$9 sm:$0xff] %v1968
        %2043 = vst [vmem:[%s2038] ss:$9 sm:$0xff] %v1969
        %v2044 = vld [vmem:[#allocation1] sm:$0xff]
        %2045 = vst [vmem:[#allocation1] ss:$9 sm:$0xff] %v1970
        %2046 = vst [vmem:[%s2036] ss:$9 sm:$0xff] %v1971
        %2047 = vst [vmem:[%s2038] ss:$9 sm:$0xff] %v1944
        %v2048 = vld [vmem:[#allocation1] sm:$0xff]
        %2049 = vst [vmem:[#allocation1] ss:$9 sm:$0xff] %v1972
        %2050 = vst [vmem:[%s2036] ss:$9 sm:$0xff] %v1973
        %2051 = vst [vmem:[%s2038] ss:$9 sm:$0xff] %v1974
        %v2052 = vld [vmem:[#allocation1] sm:$0xff]
        %2053 = vst [vmem:[#allocation1] ss:$9 sm:$0xff] %v1975
        %2054 = vst [vmem:[%s2036] ss:$9 sm:$0xff] %v1976
        %2055 = vst [vmem:[%s2038] ss:$9 sm:$0xff] %v1977
        %v2056 = vld [vmem:[#allocation1] sm:$0xff]
        %2057 = vst [vmem:[#allocation1] ss:$9 sm:$0xff] %v1978
        %2058 = vst [vmem:[%s2036] ss:$9 sm:$0xff] %v1945
        %2059 = vst [vmem:[%s2038] ss:$9 sm:$0xff] %v1979
        %v2060 = vld [vmem:[#allocation1] sm:$0xff]
        %2061 = vst [vmem:[#allocation1] ss:$9 sm:$0xff] %v1980
        %2062 = vst [vmem:[%s2036] ss:$9 sm:$0xff] %v1981
        %2063 = vst [vmem:[%s2038] ss:$9 sm:$0xff] %v1982
        %v2064 = vld [vmem:[#allocation1] sm:$0xff]
        %2065 = vst [vmem:[#allocation1] ss:$9 sm:$0xff] %v1983
        %2066 = vst [vmem:[%s2036] ss:$9 sm:$0xff] %v1984
        %2067 = vst [vmem:[%s2038] ss:$9 sm:$0xff] %v1985
        %v2068 = vld [vmem:[#allocation1] sm:$0xff]
        %2069 = vst [vmem:[#allocation1] ss:$9 sm:$0xff] %v1946
        %2070 = vst [vmem:[%s2036] ss:$9 sm:$0xff] %v1986
        %2071 = vst [vmem:[%s2038] ss:$9 sm:$0xff] %v1987
        %v2072 = vld [vmem:[#allocation1] sm:$0xff]
        %2073 = vst [vmem:[#allocation1] ss:$9 sm:$0xff] %v1988
        %2074 = vst [vmem:[%s2036] ss:$9 sm:$0xff] %v1989
        %2075 = vst [vmem:[%s2038] ss:$9 sm:$0xff] %v1990
        %v2076 = vld [vmem:[#allocation1] sm:$0xff]
        %2077 = vst [vmem:[#allocation1] ss:$9 sm:$0xff] %v1991
        %2078 = vst [vmem:[%s2036] ss:$9 sm:$0xff] %v1992
        %2079 = vst [vmem:[%s2038] ss:$9 sm:$0xff] %v1947
        %v2080 = vld [vmem:[#allocation1] sm:$0xff]
        %2081 = vst [vmem:[#allocation1] ss:$9 sm:$0xff] %v1993
        %2082 = vst [vmem:[%s2036] ss:$9 sm:$0xff] %v1994
        %2083 = vst [vmem:[%s2038] ss:$9 sm:$0xff] %v1995
        %v2084 = vld [vmem:[#allocation1] sm:$0xff]
        %2085 = vst [vmem:[#allocation1] ss:$9 sm:$0xff] %v1996
        %2086 = vst [vmem:[%s2036] ss:$9 sm:$0xff] %v1997
        %2087 = vst [vmem:[%s2038] ss:$9 sm:$0xff] %v1998
        %v2088 = vld [vmem:[#allocation1] sm:$0xff]
        %2089 = vst [vmem:[#allocation1] ss:$9 sm:$0xff] %v1999
        %2090 = vst [vmem:[%s2036] ss:$9 sm:$0xff] %v1948
        %2091 = vst [vmem:[%s2038] ss:$9 sm:$0xff] %v2000
        %v2092 = vld [vmem:[#allocation1] sm:$0xff]
        %2093 = vst [vmem:[#allocation1] ss:$9 sm:$0xff] %v2001
        %2094 = vst [vmem:[%s2036] ss:$9 sm:$0xff] %v2002
        %2095 = vst [vmem:[%s2038] ss:$9 sm:$0xff] %v2003
        %v2096 = vld [vmem:[#allocation1] sm:$0xff]
        %2097 = vst [vmem:[#allocation1] ss:$9 sm:$0xff] %v2004
        %2098 = vst [vmem:[%s2036] ss:$9 sm:$0xff] %v2005
        %2099 = vst [vmem:[%s2038] ss:$9 sm:$0xff] %v2006
        %v2100 = vld [vmem:[#allocation1] sm:$0xff]
        %2101 = vst [vmem:[#allocation1] ss:$9 sm:$0xff] %v1949
        %2102 = vst [vmem:[%s2036] ss:$9 sm:$0xff] %v2007
        %2103 = vst [vmem:[%s2038] ss:$9 sm:$0xff] %v2008
        %v2104 = vld [vmem:[#allocation1] sm:$0xff]
        %2105 = vst [vmem:[#allocation1] ss:$9 sm:$0xff] %v2009
        %2106 = vst [vmem:[%s2036] ss:$9 sm:$0xff] %v2010
        %2107 = vst [vmem:[%s2038] ss:$9 sm:$0xff] %v2011
        %v2108 = vld [vmem:[#allocation1] sm:$0xff]
        %2109 = vst [vmem:[#allocation1] ss:$9 sm:$0xff] %v2012
        %2110 = vst [vmem:[%s2036] ss:$9 sm:$0xff] %v2013
        %2111 = vst [vmem:[%s2038] ss:$9 sm:$0xff] %v1950
        %v2112 = vld [vmem:[#allocation1] sm:$0xff]
        %2113 = vst [vmem:[#allocation1] ss:$9 sm:$0xff] %v2014
        %2114 = vst [vmem:[%s2036] ss:$9 sm:$0xff] %v2015
        %2115 = vst [vmem:[%s2038] ss:$9 sm:$0xff] %v2016
        %v2116 = vld [vmem:[#allocation1] sm:$0xff]
        %2117 = vst [vmem:[#allocation1] ss:$9 sm:$0xff] %v2017
        %2118 = vst [vmem:[%s2036] ss:$9 sm:$0xff] %v2018
        %2119 = vst [vmem:[%s2038] ss:$9 sm:$0xff] %v2019
        %v2120 = vld [vmem:[#allocation1] sm:$0xff]
        %2121 = vst [vmem:[#allocation1] ss:$9 sm:$0xff] %v2020
        %2122 = vst [vmem:[%s2036] ss:$9 sm:$0xff] %v1951
        %2123 = vst [vmem:[%s2038] ss:$9 sm:$0xff] %v2021
        %v2124 = vld [vmem:[#allocation1] sm:$0xff]
        %2125 = vst [vmem:[#allocation1] ss:$9 sm:$0xff] %v2022
        %2126 = vst [vmem:[%s2036] ss:$9 sm:$0xff] %v2023
        %2127 = vst [vmem:[%s2038] ss:$9 sm:$0xff] %v2024
        %v2128 = vld [vmem:[#allocation1] sm:$0xff]
        %2129 = vst [vmem:[#allocation1] ss:$9 sm:$0xff] %v2025
        %2130 = vst [vmem:[%s2036] ss:$9 sm:$0xff] %v2026
        %2131 = vst [vmem:[%s2038] ss:$9 sm:$0xff] %v2027
        %v2132 = vld [vmem:[#allocation1] sm:$0xff]
        %2133 = vst [vmem:[#allocation1] ss:$9 sm:$0xff] %v1952
        %2134 = vst [vmem:[%s2036] ss:$9 sm:$0xff] %v2028
        %2135 = vst [vmem:[%s2038] ss:$9 sm:$0xff] %v2029
        %v2136 = vld [vmem:[#allocation1] sm:$0xff]
        %2137 = vst [vmem:[#allocation1] ss:$9 sm:$0xff] %v2030
        %2138 = vst [vmem:[%s2036] ss:$9 sm:$0xff] %v2031
        %2139 = vst [vmem:[%s2038] ss:$9 sm:$0xff] %v2032
        %v2140 = vld [vmem:[#allocation1] sm:$0xff]
        %2141 = vst [vmem:[#allocation1] ss:$9 sm:$0xff] %v2033
        %2142 = vst [vmem:[%s2036] ss:$9 sm:$0xff] %v2034
        %2143 = vst [vmem:[%s2038] ss:$9 sm:$0xff] %v1953
        %v2144 = vld [vmem:[#allocation1] sm:$0xff]
        %vm2172 = vcmask 1042432
        %v2173 = vsel %vm2172, %v2040, -inf
        %v2174 = vrot.slane %v2173, 4
        %v2175 = vmax.f32 %v2173, %v2174
        %v2176 = vrot.slane %v2175, 2
        %v2177 = vmax.f32 %v2175, %v2176
        %v2178 = vrot.slane %v2177, 1
        %v2179 = vmax.f32 %v2177, %v2178
        %v2180 = vsel %vm2172, %v2044, -inf
        %v2181 = vrot.slane %v2180, 4
        %v2182 = vmax.f32 %v2180, %v2181
        %v2183 = vrot.slane %v2182, 2
        %v2184 = vmax.f32 %v2182, %v2183
        %v2185 = vrot.slane %v2184, 1
        %v2186 = vmax.f32 %v2184, %v2185
        %v2187 = vsel %vm2172, %v2048, -inf
        %v2188 = vrot.slane %v2187, 4
        %v2189 = vmax.f32 %v2187, %v2188
        %v2190 = vrot.slane %v2189, 2
        %v2191 = vmax.f32 %v2189, %v2190
        %v2192 = vrot.slane %v2191, 1
        %v2193 = vmax.f32 %v2191, %v2192
        %v2194 = vsel %vm2172, %v2052, -inf
        %v2195 = vrot.slane %v2194, 4
        %v2196 = vmax.f32 %v2194, %v2195
        %v2197 = vrot.slane %v2196, 2
        %v2198 = vmax.f32 %v2196, %v2197
        %v2199 = vrot.slane %v2198, 1
        %v2200 = vmax.f32 %v2198, %v2199
        %v2201 = vsel %vm2172, %v2056, -inf
        %v2202 = vrot.slane %v2201, 4
        %v2203 = vmax.f32 %v2201, %v2202
        %v2204 = vrot.slane %v2203, 2
        %v2205 = vmax.f32 %v2203, %v2204
        %v2206 = vrot.slane %v2205, 1
        %v2207 = vmax.f32 %v2205, %v2206
        %v2208 = vsel %vm2172, %v2060, -inf
        %v2209 = vrot.slane %v2208, 4
        %v2210 = vmax.f32 %v2208, %v2209
        %v2211 = vrot.slane %v2210, 2
        %v2212 = vmax.f32 %v2210, %v2211
        %v2213 = vrot.slane %v2212, 1
        %v2214 = vmax.f32 %v2212, %v2213
        %v2215 = vsel %vm2172, %v2064, -inf
        %v2216 = vrot.slane %v2215, 4
        %v2217 = vmax.f32 %v2215, %v2216
        %v2218 = vrot.slane %v2217, 2
        %v2219 = vmax.f32 %v2217, %v2218
        %v2220 = vrot.slane %v2219, 1
        %v2221 = vmax.f32 %v2219, %v2220
        %v2222 = vsel %vm2172, %v2068, -inf
        %v2223 = vrot.slane %v2222, 4
        %v2224 = vmax.f32 %v2222, %v2223
        %v2225 = vrot.slane %v2224, 2
        %v2226 = vmax.f32 %v2224, %v2225
        %v2227 = vrot.slane %v2226, 1
        %v2228 = vmax.f32 %v2226, %v2227
        %v2229 = vsel %vm2172, %v2072, -inf
        %v2230 = vrot.slane %v2229, 4
        %v2231 = vmax.f32 %v2229, %v2230
        %v2232 = vrot.slane %v2231, 2
        %v2233 = vmax.f32 %v2231, %v2232
        %v2234 = vrot.slane %v2233, 1
        %v2235 = vmax.f32 %v2233, %v2234
        %v2236 = vsel %vm2172, %v2076, -inf
        %v2237 = vrot.slane %v2236, 4
        %v2238 = vmax.f32 %v2236, %v2237
        %v2239 = vrot.slane %v2238, 2
        %v2240 = vmax.f32 %v2238, %v2239
        %v2241 = vrot.slane %v2240, 1
        %v2242 = vmax.f32 %v2240, %v2241
        %v2243 = vsel %vm2172, %v2080, -inf
        %v2244 = vrot.slane %v2243, 4
        %v2245 = vmax.f32 %v2243, %v2244
        %v2246 = vrot.slane %v2245, 2
        %v2247 = vmax.f32 %v2245, %v2246
        %v2248 = vrot.slane %v2247, 1
        %v2249 = vmax.f32 %v2247, %v2248
        %v2250 = vsel %vm2172, %v2084, -inf
        %v2251 = vrot.slane %v2250, 4
        %v2252 = vmax.f32 %v2250, %v2251
        %v2253 = vrot.slane %v2252, 2
        %v2254 = vmax.f32 %v2252, %v2253
        %v2255 = vrot.slane %v2254, 1
        %v2256 = vmax.f32 %v2254, %v2255
        %v2257 = vsel %vm2172, %v2088, -inf
        %v2258 = vrot.slane %v2257, 4
        %v2259 = vmax.f32 %v2257, %v2258
        %v2260 = vrot.slane %v2259, 2
        %v2261 = vmax.f32 %v2259, %v2260
        %v2262 = vrot.slane %v2261, 1
        %v2263 = vmax.f32 %v2261, %v2262
        %v2264 = vsel %vm2172, %v2092, -inf
        %v2265 = vrot.slane %v2264, 4
        %v2266 = vmax.f32 %v2264, %v2265
        %v2267 = vrot.slane %v2266, 2
        %v2268 = vmax.f32 %v2266, %v2267
        %v2269 = vrot.slane %v2268, 1
        %v2270 = vmax.f32 %v2268, %v2269
        %v2271 = vsel %vm2172, %v2096, -inf
        %v2272 = vrot.slane %v2271, 4
        %v2273 = vmax.f32 %v2271, %v2272
        %v2274 = vrot.slane %v2273, 2
        %v2275 = vmax.f32 %v2273, %v2274
        %v2276 = vrot.slane %v2275, 1
        %v2277 = vmax.f32 %v2275, %v2276
        %v2278 = vsel %vm2172, %v2100, -inf
        %v2279 = vrot.slane %v2278, 4
        %v2280 = vmax.f32 %v2278, %v2279
        %v2281 = vrot.slane %v2280, 2
        %v2282 = vmax.f32 %v2280, %v2281
        %v2283 = vrot.slane %v2282, 1
        %v2284 = vmax.f32 %v2282, %v2283
        %v2285 = vsel %vm2172, %v2104, -inf
        %v2286 = vrot.slane %v2285, 4
        %v2287 = vmax.f32 %v2285, %v2286
        %v2288 = vrot.slane %v2287, 2
        %v2289 = vmax.f32 %v2287, %v2288
        %v2290 = vrot.slane %v2289, 1
        %v2291 = vmax.f32 %v2289, %v2290
        %v2292 = vsel %vm2172, %v2108, -inf
        %v2293 = vrot.slane %v2292, 4
        %v2294 = vmax.f32 %v2292, %v2293
        %v2295 = vrot.slane %v2294, 2
        %v2296 = vmax.f32 %v2294, %v2295
        %v2297 = vrot.slane %v2296, 1
        %v2298 = vmax.f32 %v2296, %v2297
        %v2299 = vsel %vm2172, %v2112, -inf
        %v2300 = vrot.slane %v2299, 4
        %v2301 = vmax.f32 %v2299, %v2300
        %v2302 = vrot.slane %v2301, 2
        %v2303 = vmax.f32 %v2301, %v2302
        %v2304 = vrot.slane %v2303, 1
        %v2305 = vmax.f32 %v2303, %v2304
        %v2306 = vsel %vm2172, %v2116, -inf
        %v2307 = vrot.slane %v2306, 4
        %v2308 = vmax.f32 %v2306, %v2307
        %v2309 = vrot.slane %v2308, 2
        %v2310 = vmax.f32 %v2308, %v2309
        %v2311 = vrot.slane %v2310, 1
        %v2312 = vmax.f32 %v2310, %v2311
        %v2313 = vsel %vm2172, %v2120, -inf
        %v2314 = vrot.slane %v2313, 4
        %v2315 = vmax.f32 %v2313, %v2314
        %v2316 = vrot.slane %v2315, 2
        %v2317 = vmax.f32 %v2315, %v2316
        %v2318 = vrot.slane %v2317, 1
        %v2319 = vmax.f32 %v2317, %v2318
        %v2320 = vsel %vm2172, %v2124, -inf
        %v2321 = vrot.slane %v2320, 4
        %v2322 = vmax.f32 %v2320, %v2321
        %v2323 = vrot.slane %v2322, 2
        %v2324 = vmax.f32 %v2322, %v2323
        %v2325 = vrot.slane %v2324, 1
        %v2326 = vmax.f32 %v2324, %v2325
        %v2327 = vsel %vm2172, %v2128, -inf
        %v2328 = vrot.slane %v2327, 4
        %v2329 = vmax.f32 %v2327, %v2328
        %v2330 = vrot.slane %v2329, 2
        %v2331 = vmax.f32 %v2329, %v2330
        %v2332 = vrot.slane %v2331, 1
        %v2333 = vmax.f32 %v2331, %v2332
        %v2334 = vsel %vm2172, %v2132, -inf
        %v2335 = vrot.slane %v2334, 4
        %v2336 = vmax.f32 %v2334, %v2335
        %v2337 = vrot.slane %v2336, 2
        %v2338 = vmax.f32 %v2336, %v2337
        %v2339 = vrot.slane %v2338, 1
        %v2340 = vmax.f32 %v2338, %v2339
        %v2341 = vsel %vm2172, %v2136, -inf
        %v2342 = vrot.slane %v2341, 4
        %v2343 = vmax.f32 %v2341, %v2342
        %v2344 = vrot.slane %v2343, 2
        %v2345 = vmax.f32 %v2343, %v2344
        %v2346 = vrot.slane %v2345, 1
        %v2347 = vmax.f32 %v2345, %v2346
        %v2348 = vsel %vm2172, %v2140, -inf
        %v2349 = vrot.slane %v2348, 4
        %v2350 = vmax.f32 %v2348, %v2349
        %v2351 = vrot.slane %v2350, 2
        %v2352 = vmax.f32 %v2350, %v2351
        %v2353 = vrot.slane %v2352, 1
        %v2354 = vmax.f32 %v2352, %v2353
        %v2355 = vsel %vm2172, %v2144, -inf
        %v2356 = vrot.slane %v2355, 4
        %v2357 = vmax.f32 %v2355, %v2356
        %v2358 = vrot.slane %v2357, 2
        %v2359 = vmax.f32 %v2357, %v2358
        %v2360 = vrot.slane %v2359, 1
        %v2361 = vmax.f32 %v2359, %v2360
        %v2362 = vperm.slane %v587, 0
        %v2363 = vmul.f32 %v2179, %v2362
        %v2364 = vmul.f32 %v2186, %v2362
        %v2365 = vmul.f32 %v2193, %v2362
        %v2366 = vmul.f32 %v2200, %v2362
        %v2367 = vmul.f32 %v2207, %v2362
        %v2368 = vmul.f32 %v2214, %v2362
        %v2369 = vmul.f32 %v2221, %v2362
        %v2370 = vmul.f32 %v2228, %v2362
        %v2371 = vmul.f32 %v2235, %v2362
        %v2372 = vmul.f32 %v2242, %v2362
        %v2373 = vmul.f32 %v2249, %v2362
        %v2374 = vmul.f32 %v2256, %v2362
        %v2375 = vmul.f32 %v2263, %v2362
        %v2376 = vmul.f32 %v2270, %v2362
        %v2377 = vmul.f32 %v2277, %v2362
        %v2378 = vmul.f32 %v2284, %v2362
        %v2379 = vmul.f32 %v2291, %v2362
        %v2380 = vmul.f32 %v2298, %v2362
        %v2381 = vmul.f32 %v2305, %v2362
        %v2382 = vmul.f32 %v2312, %v2362
        %v2383 = vmul.f32 %v2319, %v2362
        %v2384 = vmul.f32 %v2326, %v2362
        %v2385 = vmul.f32 %v2333, %v2362
        %v2386 = vmul.f32 %v2340, %v2362
        %v2387 = vmul.f32 %v2347, %v2362
        %v2388 = vmul.f32 %v2354, %v2362
        %v2389 = vmul.f32 %v2361, %v2362
        %v2390 = vperm.slane %v588, 0
        %v2391 = vadd.f32 %v2363, %v2390
        %v2392 = vadd.f32 %v2364, %v2390
        %v2393 = vadd.f32 %v2365, %v2390
        %v2394 = vadd.f32 %v2366, %v2390
        %v2395 = vadd.f32 %v2367, %v2390
        %v2396 = vadd.f32 %v2368, %v2390
        %v2397 = vadd.f32 %v2369, %v2390
        %v2398 = vadd.f32 %v2370, %v2390
        %v2399 = vadd.f32 %v2371, %v2390
        %v2400 = vadd.f32 %v2372, %v2390
        %v2401 = vadd.f32 %v2373, %v2390
        %v2402 = vadd.f32 %v2374, %v2390
        %v2403 = vadd.f32 %v2375, %v2390
        %v2404 = vadd.f32 %v2376, %v2390
        %v2405 = vadd.f32 %v2377, %v2390
        %v2406 = vadd.f32 %v2378, %v2390
        %v2407 = vadd.f32 %v2379, %v2390
        %v2408 = vadd.f32 %v2380, %v2390
        %v2409 = vadd.f32 %v2381, %v2390
        %v2410 = vadd.f32 %v2382, %v2390
        %v2411 = vadd.f32 %v2383, %v2390
        %v2412 = vadd.f32 %v2384, %v2390
        %v2413 = vadd.f32 %v2385, %v2390
        %v2414 = vadd.f32 %v2386, %v2390
        %v2415 = vadd.f32 %v2387, %v2390
        %v2416 = vadd.f32 %v2388, %v2390
        %v2417 = vadd.f32 %v2389, %v2390
        %2418 = vst [vmem:[#allocation2] sm:$0xff] 0.0
        %2419 = vst [vmem:[#allocation2 + $0x8] sm:$0xff] 0.0
        %2420 = vst [vmem:[#allocation2 + $0x10] sm:$0xff] 0.0
        %2421 = vst [vmem:[#allocation2 + $0x18] sm:$0xff] 0.0
        %2422 = vst [vmem:[#allocation2 + $0x20] sm:$0xf] 0.0
        %v2450 = vrot.slane %v2392, 7
        %vm2451 = vcmask 1041409
        %v2452 = vsel %vm2451, %v2450, %v2391
        %v2453 = vrot.slane %v2393, 6
        %vm2454 = vcmask 1042434
        %v2455 = vsel %vm2454, %v2453, %v2452
        %v2456 = vrot.slane %v2394, 5
        %vm2457 = vcmask 1043459
        %v2458 = vsel %vm2457, %v2456, %v2455
        %v2459 = vrot.slane %v2395, 4
        %vm2460 = vcmask 1044484
        %v2461 = vsel %vm2460, %v2459, %v2458
        %v2462 = vrot.slane %v2396, 3
        %vm2463 = vcmask 1045509
        %v2464 = vsel %vm2463, %v2462, %v2461
        %v2465 = vrot.slane %v2397, 2
        %vm2466 = vcmask 1046534
        %v2467 = vsel %vm2466, %v2465, %v2464
        %v2468 = vrot.slane %v2398, 1
        %vm2469 = vcmask 1047559
        %v2470 = vsel %vm2469, %v2468, %v2467
        %v2471 = vrot.slane %v2400, 7
        %v2472 = vsel %vm2451, %v2471, %v2399
        %v2473 = vrot.slane %v2401, 6
        %v2474 = vsel %vm2454, %v2473, %v2472
        %v2475 = vrot.slane %v2402, 5
        %v2476 = vsel %vm2457, %v2475, %v2474
        %v2477 = vrot.slane %v2403, 4
        %v2478 = vsel %vm2460, %v2477, %v2476
        %v2479 = vrot.slane %v2404, 3
        %v2480 = vsel %vm2463, %v2479, %v2478
        %v2481 = vrot.slane %v2405, 2
        %v2482 = vsel %vm2466, %v2481, %v2480
        %v2483 = vrot.slane %v2406, 1
        %v2484 = vsel %vm2469, %v2483, %v2482
        %v2485 = vrot.slane %v2408, 7
        %v2486 = vsel %vm2451, %v2485, %v2407
        %v2487 = vrot.slane %v2409, 6
        %v2488 = vsel %vm2454, %v2487, %v2486
        %v2489 = vrot.slane %v2410, 5
        %v2490 = vsel %vm2457, %v2489, %v2488
        %v2491 = vrot.slane %v2411, 4
        %v2492 = vsel %vm2460, %v2491, %v2490
        %v2493 = vrot.slane %v2412, 3
        %v2494 = vsel %vm2463, %v2493, %v2492
        %v2495 = vrot.slane %v2413, 2
        %v2496 = vsel %vm2466, %v2495, %v2494
        %v2497 = vrot.slane %v2414, 1
        %v2498 = vsel %vm2469, %v2497, %v2496
        %v2499 = vrot.slane %v2416, 7
        %v2500 = vsel %vm2451, %v2499, %v2415
        %v2501 = vrot.slane %v2417, 6
        %v2502 = vsel %vm2454, %v2501, %v2500
        %2507 = vst [vmem:[#allocation2 + $0x4] sm:$0xff] %v2470
        %2508 = vst [vmem:[#allocation2 + $0xc] sm:$0xff] %v2484
        %2509 = vst [vmem:[#allocation2 + $0x14] sm:$0xff] %v2498
        %2510 = vst [vmem:[#allocation2 + $0x1c] sm:$0x7] %v2502
        %v2511 = vld [vmem:[%s6] sm:$0x1]
        %v2512 = vld [vmem:[%s6 + $0x1] sm:$0x1]
        %v2513 = vld [vmem:[%s6 + $0x2] sm:$0x1]
        %v2514 = vld [vmem:[#allocation2] sm:$0xff]
        %v2515 = vld [vmem:[#allocation2 + $0x8] sm:$0xff]
        %v2516 = vld [vmem:[#allocation2 + $0x10] sm:$0xff]
        %v2517 = vld [vmem:[#allocation2 + $0x18] sm:$0x7]
        %v2518 = vpack.c.bf16 %v2515, %v2514
        %v2519 = vpack.c.bf16 %v2517, %v2516
        %v2520 = vld [vmem:[#allocation8] sm:$0xf]
        %v2521 = vld [vmem:[#allocation8 + $0x4] sm:$0xf]
        %v2522 = vld [vmem:[#allocation8 + $0x8] sm:$0xf]
        %v2523 = vld [vmem:[#allocation8 + $0xc] sm:$0xf]
        %v2524 = vld [vmem:[#allocation8 + $0x10] sm:$0xf]
        %v2525 = vld [vmem:[#allocation8 + $0x14] sm:$0xf]
        %v2526 = vld [vmem:[#allocation8 + $0x18] sm:$0xf]
        %v2527 = vld [vmem:[#allocation8 + $0x1c] sm:$0xf]
        %v2528 = vld [vmem:[#allocation8 + $0x20] sm:$0xf]
        %v2529 = vld [vmem:[#allocation8 + $0x24] sm:$0xf]
        %v2530 = vld [vmem:[#allocation8 + $0x28] sm:$0xf]
        %v2531 = vld [vmem:[#allocation8 + $0x2c] sm:$0xf]
        %v2532 = vld [vmem:[#allocation8 + $0x30] sm:$0xf]
        %v2533 = vld [vmem:[#allocation8 + $0x34] sm:$0xf]
        %v2534 = vld [vmem:[#allocation8 + $0x38] sm:$0xf]
        %v2535 = vld [vmem:[#allocation8 + $0x3c] sm:$0xf]
        %v2536 = vld [vmem:[#allocation2 + $0x1] sm:$0xff]
        %v2537 = vld [vmem:[#allocation2 + $0x9] sm:$0xff]
        %v2538 = vld [vmem:[#allocation2 + $0x11] sm:$0xff]
        %v2539 = vld [vmem:[#allocation2 + $0x19] sm:$0x7]
        %v2540 = vpack.c.bf16 %v2537, %v2536
        %v2541 = vpack.c.bf16 %v2539, %v2538
        %s2542 = scalar_lea.vmem [#allocation8], 64
        %v2543 = vld [vmem:[%s2542] sm:$0xf]
        %v2544 = vld [vmem:[%s2542 + $0x4] sm:$0xf]
        %v2545 = vld [vmem:[%s2542 + $0x8] sm:$0xf]
        %v2546 = vld [vmem:[%s2542 + $0xc] sm:$0xf]
        %v2547 = vld [vmem:[%s2542 + $0x10] sm:$0xf]
        %v2548 = vld [vmem:[%s2542 + $0x14] sm:$0xf]
        %v2549 = vld [vmem:[%s2542 + $0x18] sm:$0xf]
        %v2550 = vld [vmem:[%s2542 + $0x1c] sm:$0xf]
        %v2551 = vld [vmem:[%s2542 + $0x20] sm:$0xf]
        %v2552 = vld [vmem:[%s2542 + $0x24] sm:$0xf]
        %v2553 = vld [vmem:[%s2542 + $0x28] sm:$0xf]
        %v2554 = vld [vmem:[%s2542 + $0x2c] sm:$0xf]
        %v2555 = vld [vmem:[%s2542 + $0x30] sm:$0xf]
        %v2556 = vld [vmem:[%s2542 + $0x34] sm:$0xf]
        %v2557 = vld [vmem:[%s2542 + $0x38] sm:$0xf]
        %v2558 = vld [vmem:[%s2542 + $0x3c] sm:$0xf]
        %v2575 = vunpack.c.l.b16 %v2543
        %v2576 = vunpack.c.l.b16 %v2544
        %v2577 = vunpack.c.l.b16 %v2545
        %v2578 = vunpack.c.l.b16 %v2546
        %v2579 = vunpack.c.l.b16 %v2547
        %v2580 = vunpack.c.l.b16 %v2548
        %v2581 = vunpack.c.l.b16 %v2549
        %v2582 = vunpack.c.l.b16 %v2550
        %v2583 = vunpack.c.l.b16 %v2551
        %v2584 = vunpack.c.l.b16 %v2552
        %v2585 = vunpack.c.l.b16 %v2553
        %v2586 = vunpack.c.l.b16 %v2554
        %v2587 = vunpack.c.l.b16 %v2555
        %v2588 = vunpack.c.l.b16 %v2556
        %v2589 = vunpack.c.l.b16 %v2557
        %v2590 = vunpack.c.l.b16 %v2558
        %v2591 = vpack.c.b16 %v2576, %v2575
        %v2592 = vpack.c.b16 %v2578, %v2577
        %v2593 = vpack.c.b16 %v2580, %v2579
        %v2594 = vpack.c.b16 %v2582, %v2581
        %v2595 = vpack.c.b16 %v2584, %v2583
        %v2596 = vpack.c.b16 %v2586, %v2585
        %v2597 = vpack.c.b16 %v2588, %v2587
        %v2598 = vpack.c.b16 %v2590, %v2589
        %2607 = vmatpush.bf16.msra.mxu0 %v2598
        %2608 = vmatpush.bf16.msra.mxu0 %v2597
        %2609 = vmatpush.bf16.msra.mxu0 %v2596
        %2610 = vmatpush.bf16.msra.mxu0 %v2595
        %2611 = vmatpush.bf16.msra.mxu0 %v2594
        %2612 = vmatpush.bf16.msra.mxu0 %v2593
        %2613 = vmatpush.bf16.msra.mxu0 %v2592
        %2614 = vmatpush.bf16.msra.mxu0 %v2591
        %2615 = vmatmul.bf16.gmra.mxu0 %v2540
        %v2616 = vpop.f32.mrf.mxu0
        %v2617 = vadd.f32 0.0, %v2616
        %v2618 = vpop.f32.mrf.mxu0
        %v2619 = vadd.f32 0.0, %v2618
        %2620 = vmatmul.bf16.gmra.mxu0 %v2541
        %v2621 = vpop.f32.mrf.mxu0
        %v2622 = vadd.f32 0.0, %v2621
        %v2623 = vpop.f32.mrf.mxu0
        %v2624 = vadd.f32 0.0, %v2623
        %2625 = vdwg.mxu0
        %v2642 = vunpack.c.l.b16 %v2520
        %v2643 = vunpack.c.l.b16 %v2521
        %v2644 = vunpack.c.l.b16 %v2522
        %v2645 = vunpack.c.l.b16 %v2523
        %v2646 = vunpack.c.l.b16 %v2524
        %v2647 = vunpack.c.l.b16 %v2525
        %v2648 = vunpack.c.l.b16 %v2526
        %v2649 = vunpack.c.l.b16 %v2527
        %v2650 = vunpack.c.l.b16 %v2528
        %v2651 = vunpack.c.l.b16 %v2529
        %v2652 = vunpack.c.l.b16 %v2530
        %v2653 = vunpack.c.l.b16 %v2531
        %v2654 = vunpack.c.l.b16 %v2532
        %v2655 = vunpack.c.l.b16 %v2533
        %v2656 = vunpack.c.l.b16 %v2534
        %v2657 = vunpack.c.l.b16 %v2535
        %v2658 = vpack.c.b16 %v2643, %v2642
        %v2659 = vpack.c.b16 %v2645, %v2644
        %v2660 = vpack.c.b16 %v2647, %v2646
        %v2661 = vpack.c.b16 %v2649, %v2648
        %v2662 = vpack.c.b16 %v2651, %v2650
        %v2663 = vpack.c.b16 %v2653, %v2652
        %v2664 = vpack.c.b16 %v2655, %v2654
        %v2665 = vpack.c.b16 %v2657, %v2656
        %2674 = vmatpush.bf16.msra.mxu0 %v2665
        %2675 = vmatpush.bf16.msra.mxu0 %v2664
        %2676 = vmatpush.bf16.msra.mxu0 %v2663
        %2677 = vmatpush.bf16.msra.mxu0 %v2662
        %2678 = vmatpush.bf16.msra.mxu0 %v2661
        %2679 = vmatpush.bf16.msra.mxu0 %v2660
        %2680 = vmatpush.bf16.msra.mxu0 %v2659
        %2681 = vmatpush.bf16.msra.mxu0 %v2658
        %2682 = vmatmul.bf16.gmra.mxu0 %v2518
        %v2683 = vpop.f32.mrf.mxu0
        %v2684 = vadd.f32 %v2617, %v2683
        %v2685 = vpop.f32.mrf.mxu0
        %v2686 = vadd.f32 %v2619, %v2685
        %2687 = vmatmul.bf16.gmra.mxu0 %v2519
        %v2688 = vpop.f32.mrf.mxu0
        %v2689 = vadd.f32 %v2622, %v2688
        %v2690 = vpop.f32.mrf.mxu0
        %v2691 = vadd.f32 %v2624, %v2690
        %2692 = vdwg.mxu0
        %v2693 = vld [vmem:[#allocation2 + $0x2] sm:$0xff]
        %v2694 = vld [vmem:[#allocation2 + $0xa] sm:$0xff]
        %v2695 = vld [vmem:[#allocation2 + $0x12] sm:$0xff]
        %v2696 = vld [vmem:[#allocation2 + $0x1a] sm:$0x7]
        %v2697 = vpack.c.bf16 %v2694, %v2693
        %v2698 = vpack.c.bf16 %v2696, %v2695
        %s2699 = scalar_lea.vmem [#allocation8], 128
        %v2700 = vld [vmem:[%s2699] sm:$0xf]
        %v2701 = vld [vmem:[%s2699 + $0x4] sm:$0xf]
        %v2702 = vld [vmem:[%s2699 + $0x8] sm:$0xf]
        %v2703 = vld [vmem:[%s2699 + $0xc] sm:$0xf]
        %v2704 = vld [vmem:[%s2699 + $0x10] sm:$0xf]
        %v2705 = vld [vmem:[%s2699 + $0x14] sm:$0xf]
        %v2706 = vld [vmem:[%s2699 + $0x18] sm:$0xf]
        %v2707 = vld [vmem:[%s2699 + $0x1c] sm:$0xf]
        %v2708 = vld [vmem:[%s2699 + $0x20] sm:$0xf]
        %v2709 = vld [vmem:[%s2699 + $0x24] sm:$0xf]
        %v2710 = vld [vmem:[%s2699 + $0x28] sm:$0xf]
        %v2711 = vld [vmem:[%s2699 + $0x2c] sm:$0xf]
        %v2712 = vld [vmem:[%s2699 + $0x30] sm:$0xf]
        %v2713 = vld [vmem:[%s2699 + $0x34] sm:$0xf]
        %v2714 = vld [vmem:[%s2699 + $0x38] sm:$0xf]
        %v2715 = vld [vmem:[%s2699 + $0x3c] sm:$0xf]
        %v2732 = vunpack.c.l.b16 %v2700
        %v2733 = vunpack.c.l.b16 %v2701
        %v2734 = vunpack.c.l.b16 %v2702
        %v2735 = vunpack.c.l.b16 %v2703
        %v2736 = vunpack.c.l.b16 %v2704
        %v2737 = vunpack.c.l.b16 %v2705
        %v2738 = vunpack.c.l.b16 %v2706
        %v2739 = vunpack.c.l.b16 %v2707
        %v2740 = vunpack.c.l.b16 %v2708
        %v2741 = vunpack.c.l.b16 %v2709
        %v2742 = vunpack.c.l.b16 %v2710
        %v2743 = vunpack.c.l.b16 %v2711
        %v2744 = vunpack.c.l.b16 %v2712
        %v2745 = vunpack.c.l.b16 %v2713
        %v2746 = vunpack.c.l.b16 %v2714
        %v2747 = vunpack.c.l.b16 %v2715
        %v2748 = vpack.c.b16 %v2733, %v2732
        %v2749 = vpack.c.b16 %v2735, %v2734
        %v2750 = vpack.c.b16 %v2737, %v2736
        %v2751 = vpack.c.b16 %v2739, %v2738
        %v2752 = vpack.c.b16 %v2741, %v2740
        %v2753 = vpack.c.b16 %v2743, %v2742
        %v2754 = vpack.c.b16 %v2745, %v2744
        %v2755 = vpack.c.b16 %v2747, %v2746
        %2764 = vmatpush.bf16.msra.mxu0 %v2755
        %2765 = vmatpush.bf16.msra.mxu0 %v2754
        %2766 = vmatpush.bf16.msra.mxu0 %v2753
        %2767 = vmatpush.bf16.msra.mxu0 %v2752
        %2768 = vmatpush.bf16.msra.mxu0 %v2751
        %2769 = vmatpush.bf16.msra.mxu0 %v2750
        %2770 = vmatpush.bf16.msra.mxu0 %v2749
        %2771 = vmatpush.bf16.msra.mxu0 %v2748
        %2772 = vmatmul.bf16.gmra.mxu0 %v2697
        %v2773 = vpop.f32.mrf.mxu0
        %v2774 = vadd.f32 0.0, %v2773
        %v2775 = vpop.f32.mrf.mxu0
        %v2776 = vadd.f32 0.0, %v2775
        %2777 = vmatmul.bf16.gmra.mxu0 %v2698
        %v2778 = vpop.f32.mrf.mxu0
        %v2779 = vadd.f32 0.0, %v2778
        %v2780 = vpop.f32.mrf.mxu0
        %v2781 = vadd.f32 0.0, %v2780
        %2782 = vdwg.mxu0
        %v2783 = vadd.f32 %v2684, %v2774
        %v2784 = vadd.f32 %v2686, %v2776
        %v2785 = vadd.f32 %v2689, %v2779
        %v2786 = vadd.f32 %v2691, %v2781
        %v2787 = vld [vmem:[#allocation2 + $0x3] sm:$0xff]
        %v2788 = vld [vmem:[#allocation2 + $0xb] sm:$0xff]
        %v2789 = vld [vmem:[#allocation2 + $0x13] sm:$0xff]
        %v2790 = vld [vmem:[#allocation2 + $0x1b] sm:$0x7]
        %v2791 = vpack.c.bf16 %v2788, %v2787
        %v2792 = vpack.c.bf16 %v2790, %v2789
        %s2793 = scalar_lea.vmem [#allocation8], 192
        %v2794 = vld [vmem:[%s2793] sm:$0xf]
        %v2795 = vld [vmem:[%s2793 + $0x4] sm:$0xf]
        %v2796 = vld [vmem:[%s2793 + $0x8] sm:$0xf]
        %v2797 = vld [vmem:[%s2793 + $0xc] sm:$0xf]
        %v2798 = vld [vmem:[%s2793 + $0x10] sm:$0xf]
        %v2799 = vld [vmem:[%s2793 + $0x14] sm:$0xf]
        %v2800 = vld [vmem:[%s2793 + $0x18] sm:$0xf]
        %v2801 = vld [vmem:[%s2793 + $0x1c] sm:$0xf]
        %v2802 = vld [vmem:[%s2793 + $0x20] sm:$0xf]
        %v2803 = vld [vmem:[%s2793 + $0x24] sm:$0xf]
        %v2804 = vld [vmem:[%s2793 + $0x28] sm:$0xf]
        %v2805 = vld [vmem:[%s2793 + $0x2c] sm:$0xf]
        %v2806 = vld [vmem:[%s2793 + $0x30] sm:$0xf]
        %v2807 = vld [vmem:[%s2793 + $0x34] sm:$0xf]
        %v2808 = vld [vmem:[%s2793 + $0x38] sm:$0xf]
        %v2809 = vld [vmem:[%s2793 + $0x3c] sm:$0xf]
        %v2826 = vunpack.c.l.b16 %v2794
        %v2827 = vunpack.c.l.b16 %v2795
        %v2828 = vunpack.c.l.b16 %v2796
        %v2829 = vunpack.c.l.b16 %v2797
        %v2830 = vunpack.c.l.b16 %v2798
        %v2831 = vunpack.c.l.b16 %v2799
        %v2832 = vunpack.c.l.b16 %v2800
        %v2833 = vunpack.c.l.b16 %v2801
        %v2834 = vunpack.c.l.b16 %v2802
        %v2835 = vunpack.c.l.b16 %v2803
        %v2836 = vunpack.c.l.b16 %v2804
        %v2837 = vunpack.c.l.b16 %v2805
        %v2838 = vunpack.c.l.b16 %v2806
        %v2839 = vunpack.c.l.b16 %v2807
        %v2840 = vunpack.c.l.b16 %v2808
        %v2841 = vunpack.c.l.b16 %v2809
        %v2842 = vpack.c.b16 %v2827, %v2826
        %v2843 = vpack.c.b16 %v2829, %v2828
        %v2844 = vpack.c.b16 %v2831, %v2830
        %v2845 = vpack.c.b16 %v2833, %v2832
        %v2846 = vpack.c.b16 %v2835, %v2834
        %v2847 = vpack.c.b16 %v2837, %v2836
        %v2848 = vpack.c.b16 %v2839, %v2838
        %v2849 = vpack.c.b16 %v2841, %v2840
        %2858 = vmatpush.bf16.msra.mxu0 %v2849
        %2859 = vmatpush.bf16.msra.mxu0 %v2848
        %2860 = vmatpush.bf16.msra.mxu0 %v2847
        %2861 = vmatpush.bf16.msra.mxu0 %v2846
        %2862 = vmatpush.bf16.msra.mxu0 %v2845
        %2863 = vmatpush.bf16.msra.mxu0 %v2844
        %2864 = vmatpush.bf16.msra.mxu0 %v2843
        %2865 = vmatpush.bf16.msra.mxu0 %v2842
        %2866 = vmatmul.bf16.gmra.mxu0 %v2791
        %v2867 = vpop.f32.mrf.mxu0
        %v2868 = vadd.f32 0.0, %v2867
        %v2869 = vpop.f32.mrf.mxu0
        %v2870 = vadd.f32 0.0, %v2869
        %2871 = vmatmul.bf16.gmra.mxu0 %v2792
        %v2872 = vpop.f32.mrf.mxu0
        %v2873 = vadd.f32 0.0, %v2872
        %v2874 = vpop.f32.mrf.mxu0
        %v2875 = vadd.f32 0.0, %v2874
        %2876 = vdwg.mxu0
        %v2877 = vadd.f32 %v2783, %v2868
        %v2878 = vadd.f32 %v2784, %v2870
        %v2879 = vadd.f32 %v2785, %v2873
        %v2880 = vadd.f32 %v2786, %v2875
        %v2881 = vld [vmem:[#allocation2 + $0x4] sm:$0xff]
        %v2882 = vld [vmem:[#allocation2 + $0xc] sm:$0xff]
        %v2883 = vld [vmem:[#allocation2 + $0x14] sm:$0xff]
        %v2884 = vld [vmem:[#allocation2 + $0x1c] sm:$0x7]
        %v2885 = vpack.c.bf16 %v2882, %v2881
        %v2886 = vpack.c.bf16 %v2884, %v2883
        %s2887 = scalar_lea.vmem [#allocation8], 256
        %v2888 = vld [vmem:[%s2887] sm:$0xf]
        %v2889 = vld [vmem:[%s2887 + $0x4] sm:$0xf]
        %v2890 = vld [vmem:[%s2887 + $0x8] sm:$0xf]
        %v2891 = vld [vmem:[%s2887 + $0xc] sm:$0xf]
        %v2892 = vld [vmem:[%s2887 + $0x10] sm:$0xf]
        %v2893 = vld [vmem:[%s2887 + $0x14] sm:$0xf]
        %v2894 = vld [vmem:[%s2887 + $0x18] sm:$0xf]
        %v2895 = vld [vmem:[%s2887 + $0x1c] sm:$0xf]
        %v2896 = vld [vmem:[%s2887 + $0x20] sm:$0xf]
        %v2897 = vld [vmem:[%s2887 + $0x24] sm:$0xf]
        %v2898 = vld [vmem:[%s2887 + $0x28] sm:$0xf]
        %v2899 = vld [vmem:[%s2887 + $0x2c] sm:$0xf]
        %v2900 = vld [vmem:[%s2887 + $0x30] sm:$0xf]
        %v2901 = vld [vmem:[%s2887 + $0x34] sm:$0xf]
        %v2902 = vld [vmem:[%s2887 + $0x38] sm:$0xf]
        %v2903 = vld [vmem:[%s2887 + $0x3c] sm:$0xf]
        %v2920 = vunpack.c.l.b16 %v2888
        %v2921 = vunpack.c.l.b16 %v2889
        %v2922 = vunpack.c.l.b16 %v2890
        %v2923 = vunpack.c.l.b16 %v2891
        %v2924 = vunpack.c.l.b16 %v2892
        %v2925 = vunpack.c.l.b16 %v2893
        %v2926 = vunpack.c.l.b16 %v2894
        %v2927 = vunpack.c.l.b16 %v2895
        %v2928 = vunpack.c.l.b16 %v2896
        %v2929 = vunpack.c.l.b16 %v2897
        %v2930 = vunpack.c.l.b16 %v2898
        %v2931 = vunpack.c.l.b16 %v2899
        %v2932 = vunpack.c.l.b16 %v2900
        %v2933 = vunpack.c.l.b16 %v2901
        %v2934 = vunpack.c.l.b16 %v2902
        %v2935 = vunpack.c.l.b16 %v2903
        %v2936 = vpack.c.b16 %v2921, %v2920
        %v2937 = vpack.c.b16 %v2923, %v2922
        %v2938 = vpack.c.b16 %v2925, %v2924
        %v2939 = vpack.c.b16 %v2927, %v2926
        %v2940 = vpack.c.b16 %v2929, %v2928
        %v2941 = vpack.c.b16 %v2931, %v2930
        %v2942 = vpack.c.b16 %v2933, %v2932
        %v2943 = vpack.c.b16 %v2935, %v2934
        %2952 = vmatpush.bf16.msra.mxu0 %v2943
        %2953 = vmatpush.bf16.msra.mxu0 %v2942
        %2954 = vmatpush.bf16.msra.mxu0 %v2941
        %2955 = vmatpush.bf16.msra.mxu0 %v2940
        %2956 = vmatpush.bf16.msra.mxu0 %v2939
        %2957 = vmatpush.bf16.msra.mxu0 %v2938
        %2958 = vmatpush.bf16.msra.mxu0 %v2937
        %2959 = vmatpush.bf16.msra.mxu0 %v2936
        %2960 = vmatmul.bf16.gmra.mxu0 %v2885
        %v2961 = vpop.f32.mrf.mxu0
        %v2962 = vadd.f32 0.0, %v2961
        %v2963 = vpop.f32.mrf.mxu0
        %v2964 = vadd.f32 0.0, %v2963
        %2965 = vmatmul.bf16.gmra.mxu0 %v2886
        %v2966 = vpop.f32.mrf.mxu0
        %v2967 = vadd.f32 0.0, %v2966
        %v2968 = vpop.f32.mrf.mxu0
        %v2969 = vadd.f32 0.0, %v2968
        %2970 = vdwg.mxu0
        %v2971 = vadd.f32 %v2877, %v2962
        %v2972 = vadd.f32 %v2878, %v2964
        %v2973 = vadd.f32 %v2879, %v2967
        %v2974 = vadd.f32 %v2880, %v2969
        %v2975 = vld [vmem:[#allocation2 + $0x5] sm:$0xff]
        %v2976 = vld [vmem:[#allocation2 + $0xd] sm:$0xff]
        %v2977 = vld [vmem:[#allocation2 + $0x15] sm:$0xff]
        %v2978 = vld [vmem:[#allocation2 + $0x1d] sm:$0x7]
        %v2979 = vpack.c.bf16 %v2976, %v2975
        %v2980 = vpack.c.bf16 %v2978, %v2977
        %s2981 = scalar_lea.vmem [#allocation8], 320
        %v2982 = vld [vmem:[%s2981] sm:$0xf]
        %v2983 = vld [vmem:[%s2981 + $0x4] sm:$0xf]
        %v2984 = vld [vmem:[%s2981 + $0x8] sm:$0xf]
        %v2985 = vld [vmem:[%s2981 + $0xc] sm:$0xf]
        %v2986 = vld [vmem:[%s2981 + $0x10] sm:$0xf]
        %v2987 = vld [vmem:[%s2981 + $0x14] sm:$0xf]
        %v2988 = vld [vmem:[%s2981 + $0x18] sm:$0xf]
        %v2989 = vld [vmem:[%s2981 + $0x1c] sm:$0xf]
        %v2990 = vld [vmem:[%s2981 + $0x20] sm:$0xf]
        %v2991 = vld [vmem:[%s2981 + $0x24] sm:$0xf]
        %v2992 = vld [vmem:[%s2981 + $0x28] sm:$0xf]
        %v2993 = vld [vmem:[%s2981 + $0x2c] sm:$0xf]
        %v2994 = vld [vmem:[%s2981 + $0x30] sm:$0xf]
        %v2995 = vld [vmem:[%s2981 + $0x34] sm:$0xf]
        %v2996 = vld [vmem:[%s2981 + $0x38] sm:$0xf]
        %v2997 = vld [vmem:[%s2981 + $0x3c] sm:$0xf]
        %v3014 = vunpack.c.l.b16 %v2982
        %v3015 = vunpack.c.l.b16 %v2983
        %v3016 = vunpack.c.l.b16 %v2984
        %v3017 = vunpack.c.l.b16 %v2985
        %v3018 = vunpack.c.l.b16 %v2986
        %v3019 = vunpack.c.l.b16 %v2987
        %v3020 = vunpack.c.l.b16 %v2988
        %v3021 = vunpack.c.l.b16 %v2989
        %v3022 = vunpack.c.l.b16 %v2990
        %v3023 = vunpack.c.l.b16 %v2991
        %v3024 = vunpack.c.l.b16 %v2992
        %v3025 = vunpack.c.l.b16 %v2993
        %v3026 = vunpack.c.l.b16 %v2994
        %v3027 = vunpack.c.l.b16 %v2995
        %v3028 = vunpack.c.l.b16 %v2996
        %v3029 = vunpack.c.l.b16 %v2997
        %v3030 = vpack.c.b16 %v3015, %v3014
        %v3031 = vpack.c.b16 %v3017, %v3016
        %v3032 = vpack.c.b16 %v3019, %v3018
        %v3033 = vpack.c.b16 %v3021, %v3020
        %v3034 = vpack.c.b16 %v3023, %v3022
        %v3035 = vpack.c.b16 %v3025, %v3024
        %v3036 = vpack.c.b16 %v3027, %v3026
        %v3037 = vpack.c.b16 %v3029, %v3028
        %3046 = vmatpush.bf16.msra.mxu0 %v3037
        %3047 = vmatpush.bf16.msra.mxu0 %v3036
        %3048 = vmatpush.bf16.msra.mxu0 %v3035
        %3049 = vmatpush.bf16.msra.mxu0 %v3034
        %3050 = vmatpush.bf16.msra.mxu0 %v3033
        %3051 = vmatpush.bf16.msra.mxu0 %v3032
        %3052 = vmatpush.bf16.msra.mxu0 %v3031
        %3053 = vmatpush.bf16.msra.mxu0 %v3030
        %3054 = vmatmul.bf16.gmra.mxu0 %v2979
        %v3055 = vpop.f32.mrf.mxu0
        %v3056 = vadd.f32 0.0, %v3055
        %v3057 = vpop.f32.mrf.mxu0
        %v3058 = vadd.f32 0.0, %v3057
        %3059 = vmatmul.bf16.gmra.mxu0 %v2980
        %v3060 = vpop.f32.mrf.mxu0
        %v3061 = vadd.f32 0.0, %v3060
        %v3062 = vpop.f32.mrf.mxu0
        %v3063 = vadd.f32 0.0, %v3062
        %3064 = vdwg.mxu0
        %v3065 = vadd.f32 %v2971, %v3056
        %v3066 = vadd.f32 %v2972, %v3058
        %v3067 = vadd.f32 %v2973, %v3061
        %v3068 = vadd.f32 %v2974, %v3063
        %v3069 = vld [vmem:[#allocation2 + $0x6] sm:$0xff]
        %v3070 = vld [vmem:[#allocation2 + $0xe] sm:$0xff]
        %v3071 = vld [vmem:[#allocation2 + $0x16] sm:$0xff]
        %v3072 = vld [vmem:[#allocation2 + $0x1e] sm:$0x7]
        %v3073 = vpack.c.bf16 %v3070, %v3069
        %v3074 = vpack.c.bf16 %v3072, %v3071
        %s3075 = scalar_lea.vmem [#allocation8], 384
        %v3076 = vld [vmem:[%s3075] sm:$0xf]
        %v3077 = vld [vmem:[%s3075 + $0x4] sm:$0xf]
        %v3078 = vld [vmem:[%s3075 + $0x8] sm:$0xf]
        %v3079 = vld [vmem:[%s3075 + $0xc] sm:$0xf]
        %v3080 = vld [vmem:[%s3075 + $0x10] sm:$0xf]
        %v3081 = vld [vmem:[%s3075 + $0x14] sm:$0xf]
        %v3082 = vld [vmem:[%s3075 + $0x18] sm:$0xf]
        %v3083 = vld [vmem:[%s3075 + $0x1c] sm:$0xf]
        %v3084 = vld [vmem:[%s3075 + $0x20] sm:$0xf]
        %v3085 = vld [vmem:[%s3075 + $0x24] sm:$0xf]
        %v3086 = vld [vmem:[%s3075 + $0x28] sm:$0xf]
        %v3087 = vld [vmem:[%s3075 + $0x2c] sm:$0xf]
        %v3088 = vld [vmem:[%s3075 + $0x30] sm:$0xf]
        %v3089 = vld [vmem:[%s3075 + $0x34] sm:$0xf]
        %v3090 = vld [vmem:[%s3075 + $0x38] sm:$0xf]
        %v3091 = vld [vmem:[%s3075 + $0x3c] sm:$0xf]
        %v3108 = vunpack.c.l.b16 %v3076
        %v3109 = vunpack.c.l.b16 %v3077
        %v3110 = vunpack.c.l.b16 %v3078
        %v3111 = vunpack.c.l.b16 %v3079
        %v3112 = vunpack.c.l.b16 %v3080
        %v3113 = vunpack.c.l.b16 %v3081
        %v3114 = vunpack.c.l.b16 %v3082
        %v3115 = vunpack.c.l.b16 %v3083
        %v3116 = vunpack.c.l.b16 %v3084
        %v3117 = vunpack.c.l.b16 %v3085
        %v3118 = vunpack.c.l.b16 %v3086
        %v3119 = vunpack.c.l.b16 %v3087
        %v3120 = vunpack.c.l.b16 %v3088
        %v3121 = vunpack.c.l.b16 %v3089
        %v3122 = vunpack.c.l.b16 %v3090
        %v3123 = vunpack.c.l.b16 %v3091
        %v3124 = vpack.c.b16 %v3109, %v3108
        %v3125 = vpack.c.b16 %v3111, %v3110
        %v3126 = vpack.c.b16 %v3113, %v3112
        %v3127 = vpack.c.b16 %v3115, %v3114
        %v3128 = vpack.c.b16 %v3117, %v3116
        %v3129 = vpack.c.b16 %v3119, %v3118
        %v3130 = vpack.c.b16 %v3121, %v3120
        %v3131 = vpack.c.b16 %v3123, %v3122
        %3140 = vmatpush.bf16.msra.mxu0 %v3131
        %3141 = vmatpush.bf16.msra.mxu0 %v3130
        %3142 = vmatpush.bf16.msra.mxu0 %v3129
        %3143 = vmatpush.bf16.msra.mxu0 %v3128
        %3144 = vmatpush.bf16.msra.mxu0 %v3127
        %3145 = vmatpush.bf16.msra.mxu0 %v3126
        %3146 = vmatpush.bf16.msra.mxu0 %v3125
        %3147 = vmatpush.bf16.msra.mxu0 %v3124
        %3148 = vmatmul.bf16.gmra.mxu0 %v3073
        %v3149 = vpop.f32.mrf.mxu0
        %v3150 = vadd.f32 0.0, %v3149
        %v3151 = vpop.f32.mrf.mxu0
        %v3152 = vadd.f32 0.0, %v3151
        %3153 = vmatmul.bf16.gmra.mxu0 %v3074
        %v3154 = vpop.f32.mrf.mxu0
        %v3155 = vadd.f32 0.0, %v3154
        %v3156 = vpop.f32.mrf.mxu0
        %v3157 = vadd.f32 0.0, %v3156
        %3158 = vdwg.mxu0
        %v3159 = vadd.f32 %v3065, %v3150
        %v3160 = vadd.f32 %v3066, %v3152
        %v3161 = vadd.f32 %v3067, %v3155
        %v3162 = vadd.f32 %v3068, %v3157
        %v3163 = vld [vmem:[#allocation2 + $0x7] sm:$0xff]
        %v3164 = vld [vmem:[#allocation2 + $0xf] sm:$0xff]
        %v3165 = vld [vmem:[#allocation2 + $0x17] sm:$0xff]
        %v3166 = vld [vmem:[#allocation2 + $0x1f] sm:$0x7]
        %v3167 = vpack.c.bf16 %v3164, %v3163
        %v3168 = vpack.c.bf16 %v3166, %v3165
        %s3169 = scalar_lea.vmem [#allocation8], 448
        %v3170 = vld [vmem:[%s3169] sm:$0xf]
        %v3171 = vld [vmem:[%s3169 + $0x4] sm:$0xf]
        %v3172 = vld [vmem:[%s3169 + $0x8] sm:$0xf]
        %v3173 = vld [vmem:[%s3169 + $0xc] sm:$0xf]
        %v3174 = vld [vmem:[%s3169 + $0x10] sm:$0xf]
        %v3175 = vld [vmem:[%s3169 + $0x14] sm:$0xf]
        %v3176 = vld [vmem:[%s3169 + $0x18] sm:$0xf]
        %v3177 = vld [vmem:[%s3169 + $0x1c] sm:$0xf]
        %v3178 = vld [vmem:[%s3169 + $0x20] sm:$0xf]
        %v3179 = vld [vmem:[%s3169 + $0x24] sm:$0xf]
        %v3180 = vld [vmem:[%s3169 + $0x28] sm:$0xf]
        %v3181 = vld [vmem:[%s3169 + $0x2c] sm:$0xf]
        %v3182 = vld [vmem:[%s3169 + $0x30] sm:$0xf]
        %v3183 = vld [vmem:[%s3169 + $0x34] sm:$0xf]
        %v3184 = vld [vmem:[%s3169 + $0x38] sm:$0xf]
        %v3185 = vld [vmem:[%s3169 + $0x3c] sm:$0xf]
        %v3202 = vunpack.c.l.b16 %v3170
        %v3203 = vunpack.c.l.b16 %v3171
        %v3204 = vunpack.c.l.b16 %v3172
        %v3205 = vunpack.c.l.b16 %v3173
        %v3206 = vunpack.c.l.b16 %v3174
        %v3207 = vunpack.c.l.b16 %v3175
        %v3208 = vunpack.c.l.b16 %v3176
        %v3209 = vunpack.c.l.b16 %v3177
        %v3210 = vunpack.c.l.b16 %v3178
        %v3211 = vunpack.c.l.b16 %v3179
        %v3212 = vunpack.c.l.b16 %v3180
        %v3213 = vunpack.c.l.b16 %v3181
        %v3214 = vunpack.c.l.b16 %v3182
        %v3215 = vunpack.c.l.b16 %v3183
        %v3216 = vunpack.c.l.b16 %v3184
        %v3217 = vunpack.c.l.b16 %v3185
        %v3218 = vpack.c.b16 %v3203, %v3202
        %v3219 = vpack.c.b16 %v3205, %v3204
        %v3220 = vpack.c.b16 %v3207, %v3206
        %v3221 = vpack.c.b16 %v3209, %v3208
        %v3222 = vpack.c.b16 %v3211, %v3210
        %v3223 = vpack.c.b16 %v3213, %v3212
        %v3224 = vpack.c.b16 %v3215, %v3214
        %v3225 = vpack.c.b16 %v3217, %v3216
        %3234 = vmatpush.bf16.msra.mxu0 %v3225
        %3235 = vmatpush.bf16.msra.mxu0 %v3224
        %3236 = vmatpush.bf16.msra.mxu0 %v3223
        %3237 = vmatpush.bf16.msra.mxu0 %v3222
        %3238 = vmatpush.bf16.msra.mxu0 %v3221
        %3239 = vmatpush.bf16.msra.mxu0 %v3220
        %3240 = vmatpush.bf16.msra.mxu0 %v3219
        %3241 = vmatpush.bf16.msra.mxu0 %v3218
        %3242 = vmatmul.bf16.gmra.mxu0 %v3167
        %v3243 = vpop.f32.mrf.mxu0
        %v3244 = vadd.f32 0.0, %v3243
        %v3245 = vpop.f32.mrf.mxu0
        %v3246 = vadd.f32 0.0, %v3245
        %3247 = vmatmul.bf16.gmra.mxu0 %v3168
        %v3248 = vpop.f32.mrf.mxu0
        %v3249 = vadd.f32 0.0, %v3248
        %v3250 = vpop.f32.mrf.mxu0
        %v3251 = vadd.f32 0.0, %v3250
        %3252 = vdwg.mxu0
        %v3253 = vadd.f32 %v3159, %v3244
        %v3254 = vadd.f32 %v3160, %v3246
        %v3255 = vadd.f32 %v3161, %v3249
        %v3256 = vadd.f32 %v3162, %v3251
        %v3257 = vld [vmem:[#allocation2 + $0x8] sm:$0xff]
        %v3258 = vld [vmem:[#allocation2 + $0x10] sm:$0xff]
        %v3259 = vld [vmem:[#allocation2 + $0x18] sm:$0xff]
        %v3260 = vld [vmem:[#allocation2 + $0x20] sm:$0x7]
        %v3261 = vpack.c.bf16 %v3258, %v3257
        %v3262 = vpack.c.bf16 %v3260, %v3259
        %s3263 = scalar_lea.vmem [#allocation8], 512
        %v3264 = vld [vmem:[%s3263] sm:$0xf]
        %v3265 = vld [vmem:[%s3263 + $0x4] sm:$0xf]
        %v3266 = vld [vmem:[%s3263 + $0x8] sm:$0xf]
        %v3267 = vld [vmem:[%s3263 + $0xc] sm:$0xf]
        %v3268 = vld [vmem:[%s3263 + $0x10] sm:$0xf]
        %v3269 = vld [vmem:[%s3263 + $0x14] sm:$0xf]
        %v3270 = vld [vmem:[%s3263 + $0x18] sm:$0xf]
        %v3271 = vld [vmem:[%s3263 + $0x1c] sm:$0xf]
        %v3272 = vld [vmem:[%s3263 + $0x20] sm:$0xf]
        %v3273 = vld [vmem:[%s3263 + $0x24] sm:$0xf]
        %v3274 = vld [vmem:[%s3263 + $0x28] sm:$0xf]
        %v3275 = vld [vmem:[%s3263 + $0x2c] sm:$0xf]
        %v3276 = vld [vmem:[%s3263 + $0x30] sm:$0xf]
        %v3277 = vld [vmem:[%s3263 + $0x34] sm:$0xf]
        %v3278 = vld [vmem:[%s3263 + $0x38] sm:$0xf]
        %v3279 = vld [vmem:[%s3263 + $0x3c] sm:$0xf]
        %v3296 = vunpack.c.l.b16 %v3264
        %v3297 = vunpack.c.l.b16 %v3265
        %v3298 = vunpack.c.l.b16 %v3266
        %v3299 = vunpack.c.l.b16 %v3267
        %v3300 = vunpack.c.l.b16 %v3268
        %v3301 = vunpack.c.l.b16 %v3269
        %v3302 = vunpack.c.l.b16 %v3270
        %v3303 = vunpack.c.l.b16 %v3271
        %v3304 = vunpack.c.l.b16 %v3272
        %v3305 = vunpack.c.l.b16 %v3273
        %v3306 = vunpack.c.l.b16 %v3274
        %v3307 = vunpack.c.l.b16 %v3275
        %v3308 = vunpack.c.l.b16 %v3276
        %v3309 = vunpack.c.l.b16 %v3277
        %v3310 = vunpack.c.l.b16 %v3278
        %v3311 = vunpack.c.l.b16 %v3279
        %v3312 = vpack.c.b16 %v3297, %v3296
        %v3313 = vpack.c.b16 %v3299, %v3298
        %v3314 = vpack.c.b16 %v3301, %v3300
        %v3315 = vpack.c.b16 %v3303, %v3302
        %v3316 = vpack.c.b16 %v3305, %v3304
        %v3317 = vpack.c.b16 %v3307, %v3306
        %v3318 = vpack.c.b16 %v3309, %v3308
        %v3319 = vpack.c.b16 %v3311, %v3310
        %3328 = vmatpush.bf16.msra.mxu0 %v3319
        %3329 = vmatpush.bf16.msra.mxu0 %v3318
        %3330 = vmatpush.bf16.msra.mxu0 %v3317
        %3331 = vmatpush.bf16.msra.mxu0 %v3316
        %3332 = vmatpush.bf16.msra.mxu0 %v3315
        %3333 = vmatpush.bf16.msra.mxu0 %v3314
        %3334 = vmatpush.bf16.msra.mxu0 %v3313
        %3335 = vmatpush.bf16.msra.mxu0 %v3312
        %3336 = vmatmul.bf16.gmra.mxu0 %v3261
        %v3337 = vpop.f32.mrf.mxu0
        %v3338 = vadd.f32 0.0, %v3337
        %v3339 = vpop.f32.mrf.mxu0
        %v3340 = vadd.f32 0.0, %v3339
        %3341 = vmatmul.bf16.gmra.mxu0 %v3262
        %v3342 = vpop.f32.mrf.mxu0
        %v3343 = vadd.f32 0.0, %v3342
        %v3344 = vpop.f32.mrf.mxu0
        %v3345 = vadd.f32 0.0, %v3344
        %3346 = vdwg.mxu0
        %v3347 = vadd.f32 %v3253, %v3338
        %v3348 = vadd.f32 %v3254, %v3340
        %v3349 = vadd.f32 %v3255, %v3343
        %v3350 = vadd.f32 %v3256, %v3345
        %v3351 = vld [vmem:[#allocation2 + $0x9] sm:$0xff]
        %v3352 = vld [vmem:[#allocation2 + $0x11] sm:$0xff]
        %v3353 = vld [vmem:[#allocation2 + $0x19] sm:$0xff]
        %v3354 = vld [vmem:[#allocation2 + $0x21] sm:$0x7]
        %v3355 = vpack.c.bf16 %v3352, %v3351
        %v3356 = vpack.c.bf16 %v3354, %v3353
        %s3357 = scalar_lea.vmem [#allocation8], 576
        %v3358 = vld [vmem:[%s3357] sm:$0xf]
        %v3359 = vld [vmem:[%s3357 + $0x4] sm:$0xf]
        %v3360 = vld [vmem:[%s3357 + $0x8] sm:$0xf]
        %v3361 = vld [vmem:[%s3357 + $0xc] sm:$0xf]
        %v3362 = vld [vmem:[%s3357 + $0x10] sm:$0xf]
        %v3363 = vld [vmem:[%s3357 + $0x14] sm:$0xf]
        %v3364 = vld [vmem:[%s3357 + $0x18] sm:$0xf]
        %v3365 = vld [vmem:[%s3357 + $0x1c] sm:$0xf]
        %v3366 = vld [vmem:[%s3357 + $0x20] sm:$0xf]
        %v3367 = vld [vmem:[%s3357 + $0x24] sm:$0xf]
        %v3368 = vld [vmem:[%s3357 + $0x28] sm:$0xf]
        %v3369 = vld [vmem:[%s3357 + $0x2c] sm:$0xf]
        %v3370 = vld [vmem:[%s3357 + $0x30] sm:$0xf]
        %v3371 = vld [vmem:[%s3357 + $0x34] sm:$0xf]
        %v3372 = vld [vmem:[%s3357 + $0x38] sm:$0xf]
        %v3373 = vld [vmem:[%s3357 + $0x3c] sm:$0xf]
        %v3390 = vunpack.c.l.b16 %v3358
        %v3391 = vunpack.c.l.b16 %v3359
        %v3392 = vunpack.c.l.b16 %v3360
        %v3393 = vunpack.c.l.b16 %v3361
        %v3394 = vunpack.c.l.b16 %v3362
        %v3395 = vunpack.c.l.b16 %v3363
        %v3396 = vunpack.c.l.b16 %v3364
        %v3397 = vunpack.c.l.b16 %v3365
        %v3398 = vunpack.c.l.b16 %v3366
        %v3399 = vunpack.c.l.b16 %v3367
        %v3400 = vunpack.c.l.b16 %v3368
        %v3401 = vunpack.c.l.b16 %v3369
        %v3402 = vunpack.c.l.b16 %v3370
        %v3403 = vunpack.c.l.b16 %v3371
        %v3404 = vunpack.c.l.b16 %v3372
        %v3405 = vunpack.c.l.b16 %v3373
        %v3406 = vpack.c.b16 %v3391, %v3390
        %v3407 = vpack.c.b16 %v3393, %v3392
        %v3408 = vpack.c.b16 %v3395, %v3394
        %v3409 = vpack.c.b16 %v3397, %v3396
        %v3410 = vpack.c.b16 %v3399, %v3398
        %v3411 = vpack.c.b16 %v3401, %v3400
        %v3412 = vpack.c.b16 %v3403, %v3402
        %v3413 = vpack.c.b16 %v3405, %v3404
        %3422 = vmatpush.bf16.msra.mxu0 %v3413
        %3423 = vmatpush.bf16.msra.mxu0 %v3412
        %3424 = vmatpush.bf16.msra.mxu0 %v3411
        %3425 = vmatpush.bf16.msra.mxu0 %v3410
        %3426 = vmatpush.bf16.msra.mxu0 %v3409
        %3427 = vmatpush.bf16.msra.mxu0 %v3408
        %3428 = vmatpush.bf16.msra.mxu0 %v3407
        %3429 = vmatpush.bf16.msra.mxu0 %v3406
        %3430 = vmatmul.bf16.gmra.mxu0 %v3355
        %v3431 = vpop.f32.mrf.mxu0
        %v3432 = vadd.f32 0.0, %v3431
        %v3433 = vpop.f32.mrf.mxu0
        %v3434 = vadd.f32 0.0, %v3433
        %3435 = vmatmul.bf16.gmra.mxu0 %v3356
        %v3436 = vpop.f32.mrf.mxu0
        %v3437 = vadd.f32 0.0, %v3436
        %v3438 = vpop.f32.mrf.mxu0
        %v3439 = vadd.f32 0.0, %v3438
        %3440 = vdwg.mxu0
        %v3441 = vadd.f32 %v3347, %v3432
        %v3442 = vadd.f32 %v3348, %v3434
        %v3443 = vadd.f32 %v3349, %v3437
        %v3444 = vadd.f32 %v3350, %v3439
        %v3445 = vperm.slane %v2511, 0
        %v3446 = vadd.f32 %v3441, %v3445
        %v3447 = vadd.f32 %v3442, %v3445
        %v3448 = vadd.f32 %v3443, %v3445
        %v3449 = vadd.f32 %v3444, %v3445
        %vm3450 = vcmp.gt.f32.partialorder %v3446, 0.0
        %vm3451 = vcmp.gt.f32.partialorder %v3447, 0.0
        %vm3452 = vcmp.gt.f32.partialorder %v3448, 0.0
        %vm3453 = vcmp.gt.f32.partialorder %v3449, 0.0
        %v3454 = vmin.f32 %v3446, 0.0
        %v3455 = vmin.f32 %v3447, 0.0
        %v3456 = vmin.f32 %v3448, 0.0
        %v3457 = vmin.f32 %v3449, 0.0
        %v3458 = vmul.f32 %v3454, 1.442695
        %v3459 = vpow.pop %v3458
        %v3460 = vmul.f32 %v3455, 1.442695
        %v3461 = vpow.pop %v3460
        %v3462 = vmul.f32 %v3456, 1.442695
        %v3463 = vpow.pop %v3462
        %v3464 = vmul.f32 %v3457, 1.442695
        %v3465 = vpow.pop %v3464
        %v3466 = vsub.f32 %v3459, 1.0
        %v3467 = vsub.f32 %v3461, 1.0
        %v3468 = vsub.f32 %v3463, 1.0
        %v3469 = vsub.f32 %v3465, 1.0
        %v3470 = vsel %vm3450, %v3446, %v3466
        %v3471 = vsel %vm3451, %v3447, %v3467
        %v3472 = vsel %vm3452, %v3448, %v3468
        %v3473 = vsel %vm3453, %v3449, %v3469
        %v3478 = vrot.slane %v3470, 1
        %v3479 = vrot.slane %v3470, 2
        %v3480 = vrot.slane %v3470, 3
        %v3481 = vrot.slane %v3470, 4
        %v3482 = vrot.slane %v3470, 5
        %v3483 = vrot.slane %v3470, 6
        %v3484 = vrot.slane %v3470, 7
        %v3485 = vrot.slane %v3471, 1
        %v3486 = vrot.slane %v3471, 2
        %v3487 = vrot.slane %v3471, 3
        %v3488 = vrot.slane %v3471, 4
        %v3489 = vrot.slane %v3471, 5
        %v3490 = vrot.slane %v3471, 6
        %v3491 = vrot.slane %v3471, 7
        %v3492 = vrot.slane %v3472, 1
        %v3493 = vrot.slane %v3472, 2
        %v3494 = vrot.slane %v3472, 3
        %v3495 = vrot.slane %v3472, 4
        %v3496 = vrot.slane %v3472, 5
        %v3497 = vrot.slane %v3472, 6
        %v3498 = vrot.slane %v3472, 7
        %v3499 = vrot.slane %v3473, 1
        %v3500 = vrot.slane %v3473, 2
        %3501 = vst [vmem:[#allocation1] ss:$9 sm:$0xff] %v3470
        %s3502 = scalar_lea.vmem [#allocation1], 1
        %3503 = vst [vmem:[%s3502] ss:$9 sm:$0xff] %v3478
        %s3504 = scalar_lea.vmem [#allocation1], 2
        %3505 = vst [vmem:[%s3504] ss:$9 sm:$0xff] %v3479
        %v3506 = vld [vmem:[#allocation1] sm:$0xff]
        %3507 = vst [vmem:[#allocation1] ss:$9 sm:$0xff] %v3480
        %3508 = vst [vmem:[%s3502] ss:$9 sm:$0xff] %v3481
        %3509 = vst [vmem:[%s3504] ss:$9 sm:$0xff] %v3482
        %v3510 = vld [vmem:[#allocation1] sm:$0xff]
        %3511 = vst [vmem:[#allocation1] ss:$9 sm:$0xff] %v3483
        %3512 = vst [vmem:[%s3502] ss:$9 sm:$0xff] %v3484
        %3513 = vst [vmem:[%s3504] ss:$9 sm:$0xff] %v3471
        %v3514 = vld [vmem:[#allocation1] sm:$0xff]
        %3515 = vst [vmem:[#allocation1] ss:$9 sm:$0xff] %v3485
        %3516 = vst [vmem:[%s3502] ss:$9 sm:$0xff] %v3486
        %3517 = vst [vmem:[%s3504] ss:$9 sm:$0xff] %v3487
        %v3518 = vld [vmem:[#allocation1] sm:$0xff]
        %3519 = vst [vmem:[#allocation1] ss:$9 sm:$0xff] %v3488
        %3520 = vst [vmem:[%s3502] ss:$9 sm:$0xff] %v3489
        %3521 = vst [vmem:[%s3504] ss:$9 sm:$0xff] %v3490
        %v3522 = vld [vmem:[#allocation1] sm:$0xff]
        %3523 = vst [vmem:[#allocation1] ss:$9 sm:$0xff] %v3491
        %3524 = vst [vmem:[%s3502] ss:$9 sm:$0xff] %v3472
        %3525 = vst [vmem:[%s3504] ss:$9 sm:$0xff] %v3492
        %v3526 = vld [vmem:[#allocation1] sm:$0xff]
        %3527 = vst [vmem:[#allocation1] ss:$9 sm:$0xff] %v3493
        %3528 = vst [vmem:[%s3502] ss:$9 sm:$0xff] %v3494
        %3529 = vst [vmem:[%s3504] ss:$9 sm:$0xff] %v3495
        %v3530 = vld [vmem:[#allocation1] sm:$0xff]
        %3531 = vst [vmem:[#allocation1] ss:$9 sm:$0xff] %v3496
        %3532 = vst [vmem:[%s3502] ss:$9 sm:$0xff] %v3497
        %3533 = vst [vmem:[%s3504] ss:$9 sm:$0xff] %v3498
        %v3534 = vld [vmem:[#allocation1] sm:$0xff]
        %3535 = vst [vmem:[#allocation1] ss:$9 sm:$0xff] %v3473
        %3536 = vst [vmem:[%s3502] ss:$9 sm:$0xff] %v3499
        %3537 = vst [vmem:[%s3504] ss:$9 sm:$0xff] %v3500
        %v3538 = vld [vmem:[#allocation1] sm:$0xff]
        %v3548 = vsel %vm2172, %v3506, -inf
        %v3549 = vrot.slane %v3548, 4
        %v3550 = vmax.f32 %v3548, %v3549
        %v3551 = vrot.slane %v3550, 2
        %v3552 = vmax.f32 %v3550, %v3551
        %v3553 = vrot.slane %v3552, 1
        %v3554 = vmax.f32 %v3552, %v3553
        %v3555 = vsel %vm2172, %v3510, -inf
        %v3556 = vrot.slane %v3555, 4
        %v3557 = vmax.f32 %v3555, %v3556
        %v3558 = vrot.slane %v3557, 2
        %v3559 = vmax.f32 %v3557, %v3558
        %v3560 = vrot.slane %v3559, 1
        %v3561 = vmax.f32 %v3559, %v3560
        %v3562 = vsel %vm2172, %v3514, -inf
        %v3563 = vrot.slane %v3562, 4
        %v3564 = vmax.f32 %v3562, %v3563
        %v3565 = vrot.slane %v3564, 2
        %v3566 = vmax.f32 %v3564, %v3565
        %v3567 = vrot.slane %v3566, 1
        %v3568 = vmax.f32 %v3566, %v3567
        %v3569 = vsel %vm2172, %v3518, -inf
        %v3570 = vrot.slane %v3569, 4
        %v3571 = vmax.f32 %v3569, %v3570
        %v3572 = vrot.slane %v3571, 2
        %v3573 = vmax.f32 %v3571, %v3572
        %v3574 = vrot.slane %v3573, 1
        %v3575 = vmax.f32 %v3573, %v3574
        %v3576 = vsel %vm2172, %v3522, -inf
        %v3577 = vrot.slane %v3576, 4
        %v3578 = vmax.f32 %v3576, %v3577
        %v3579 = vrot.slane %v3578, 2
        %v3580 = vmax.f32 %v3578, %v3579
        %v3581 = vrot.slane %v3580, 1
        %v3582 = vmax.f32 %v3580, %v3581
        %v3583 = vsel %vm2172, %v3526, -inf
        %v3584 = vrot.slane %v3583, 4
        %v3585 = vmax.f32 %v3583, %v3584
        %v3586 = vrot.slane %v3585, 2
        %v3587 = vmax.f32 %v3585, %v3586
        %v3588 = vrot.slane %v3587, 1
        %v3589 = vmax.f32 %v3587, %v3588
        %v3590 = vsel %vm2172, %v3530, -inf
        %v3591 = vrot.slane %v3590, 4
        %v3592 = vmax.f32 %v3590, %v3591
        %v3593 = vrot.slane %v3592, 2
        %v3594 = vmax.f32 %v3592, %v3593
        %v3595 = vrot.slane %v3594, 1
        %v3596 = vmax.f32 %v3594, %v3595
        %v3597 = vsel %vm2172, %v3534, -inf
        %v3598 = vrot.slane %v3597, 4
        %v3599 = vmax.f32 %v3597, %v3598
        %v3600 = vrot.slane %v3599, 2
        %v3601 = vmax.f32 %v3599, %v3600
        %v3602 = vrot.slane %v3601, 1
        %v3603 = vmax.f32 %v3601, %v3602
        %v3604 = vsel %vm2172, %v3538, -inf
        %v3605 = vrot.slane %v3604, 4
        %v3606 = vmax.f32 %v3604, %v3605
        %v3607 = vrot.slane %v3606, 2
        %v3608 = vmax.f32 %v3606, %v3607
        %v3609 = vrot.slane %v3608, 1
        %v3610 = vmax.f32 %v3608, %v3609
        %v3611 = vperm.slane %v2512, 0
        %v3612 = vmul.f32 %v3554, %v3611
        %v3613 = vmul.f32 %v3561, %v3611
        %v3614 = vmul.f32 %v3568, %v3611
        %v3615 = vmul.f32 %v3575, %v3611
        %v3616 = vmul.f32 %v3582, %v3611
        %v3617 = vmul.f32 %v3589, %v3611
        %v3618 = vmul.f32 %v3596, %v3611
        %v3619 = vmul.f32 %v3603, %v3611
        %v3620 = vmul.f32 %v3610, %v3611
        %v3621 = vperm.slane %v2513, 0
        %v3622 = vadd.f32 %v3612, %v3621
        %v3623 = vadd.f32 %v3613, %v3621
        %v3624 = vadd.f32 %v3614, %v3621
        %v3625 = vadd.f32 %v3615, %v3621
        %v3626 = vadd.f32 %v3616, %v3621
        %v3627 = vadd.f32 %v3617, %v3621
        %v3628 = vadd.f32 %v3618, %v3621
        %v3629 = vadd.f32 %v3619, %v3621
        %v3630 = vadd.f32 %v3620, %v3621
        %3631 = vst [vmem:[#allocation3] sm:$0xff] 0.0
        %3632 = vst [vmem:[#allocation3 + $0x8] sm:$0xff] 0.0
        %3633 = vst [vmem:[#allocation3 + $0x10] sm:$0x3] 0.0
        %v3643 = vrot.slane %v3623, 7
        %v3644 = vsel %vm2451, %v3643, %v3622
        %v3645 = vrot.slane %v3624, 6
        %v3646 = vsel %vm2454, %v3645, %v3644
        %v3647 = vrot.slane %v3625, 5
        %v3648 = vsel %vm2457, %v3647, %v3646
        %v3649 = vrot.slane %v3626, 4
        %v3650 = vsel %vm2460, %v3649, %v3648
        %v3651 = vrot.slane %v3627, 3
        %v3652 = vsel %vm2463, %v3651, %v3650
        %v3653 = vrot.slane %v3628, 2
        %v3654 = vsel %vm2466, %v3653, %v3652
        %v3655 = vrot.slane %v3629, 1
        %v3656 = vsel %vm2469, %v3655, %v3654
        %3659 = vst [vmem:[#allocation3 + $0x4] sm:$0xff] %v3656
        %3660 = vst [vmem:[#allocation3 + $0xc] sm:$0x1] %v3630
        %v3661 = vld [vmem:[%s7] sm:$0x1]
        %v3662 = vld [vmem:[%s7 + $0x1] sm:$0x1]
        %v3663 = vld [vmem:[%s7 + $0x2] sm:$0x1]
        %v3664 = vld [vmem:[#allocation3] sm:$0xff]
        %v3665 = vld [vmem:[#allocation3 + $0x8] sm:$0x1]
        %v3666 = vpack.c.bf16 %v3665, %v3664
        %v3667 = vld [vmem:[#allocation10] sm:$0xf]
        %v3668 = vld [vmem:[#allocation10 + $0x4] sm:$0xf]
        %v3669 = vld [vmem:[#allocation10 + $0x8] sm:$0xf]
        %v3670 = vld [vmem:[#allocation10 + $0xc] sm:$0xf]
        %v3671 = vld [vmem:[#allocation10 + $0x10] sm:$0xf]
        %v3672 = vld [vmem:[#allocation10 + $0x14] sm:$0xf]
        %v3673 = vld [vmem:[#allocation10 + $0x18] sm:$0xf]
        %v3674 = vld [vmem:[#allocation10 + $0x1c] sm:$0xf]
        %v3675 = vld [vmem:[#allocation10 + $0x20] sm:$0xf]
        %v3676 = vld [vmem:[#allocation10 + $0x24] sm:$0xf]
        %v3677 = vld [vmem:[#allocation10 + $0x28] sm:$0xf]
        %v3678 = vld [vmem:[#allocation10 + $0x2c] sm:$0xf]
        %v3679 = vld [vmem:[#allocation10 + $0x30] sm:$0xf]
        %v3680 = vld [vmem:[#allocation10 + $0x34] sm:$0xf]
        %v3681 = vld [vmem:[#allocation10 + $0x38] sm:$0xf]
        %v3682 = vld [vmem:[#allocation10 + $0x3c] sm:$0xf]
        %v3683 = vld [vmem:[#allocation3 + $0x1] sm:$0xff]
        %v3684 = vld [vmem:[#allocation3 + $0x9] sm:$0x1]
        %v3685 = vpack.c.bf16 %v3684, %v3683
        %s3686 = scalar_lea.vmem [#allocation10], 64
        %v3687 = vld [vmem:[%s3686] sm:$0xf]
        %v3688 = vld [vmem:[%s3686 + $0x4] sm:$0xf]
        %v3689 = vld [vmem:[%s3686 + $0x8] sm:$0xf]
        %v3690 = vld [vmem:[%s3686 + $0xc] sm:$0xf]
        %v3691 = vld [vmem:[%s3686 + $0x10] sm:$0xf]
        %v3692 = vld [vmem:[%s3686 + $0x14] sm:$0xf]
        %v3693 = vld [vmem:[%s3686 + $0x18] sm:$0xf]
        %v3694 = vld [vmem:[%s3686 + $0x1c] sm:$0xf]
        %v3695 = vld [vmem:[%s3686 + $0x20] sm:$0xf]
        %v3696 = vld [vmem:[%s3686 + $0x24] sm:$0xf]
        %v3697 = vld [vmem:[%s3686 + $0x28] sm:$0xf]
        %v3698 = vld [vmem:[%s3686 + $0x2c] sm:$0xf]
        %v3699 = vld [vmem:[%s3686 + $0x30] sm:$0xf]
        %v3700 = vld [vmem:[%s3686 + $0x34] sm:$0xf]
        %v3701 = vld [vmem:[%s3686 + $0x38] sm:$0xf]
        %v3702 = vld [vmem:[%s3686 + $0x3c] sm:$0xf]
        %v3719 = vunpack.c.l.b16 %v3687
        %v3720 = vunpack.c.l.b16 %v3688
        %v3721 = vunpack.c.l.b16 %v3689
        %v3722 = vunpack.c.l.b16 %v3690
        %v3723 = vunpack.c.l.b16 %v3691
        %v3724 = vunpack.c.l.b16 %v3692
        %v3725 = vunpack.c.l.b16 %v3693
        %v3726 = vunpack.c.l.b16 %v3694
        %v3727 = vunpack.c.l.b16 %v3695
        %v3728 = vunpack.c.l.b16 %v3696
        %v3729 = vunpack.c.l.b16 %v3697
        %v3730 = vunpack.c.l.b16 %v3698
        %v3731 = vunpack.c.l.b16 %v3699
        %v3732 = vunpack.c.l.b16 %v3700
        %v3733 = vunpack.c.l.b16 %v3701
        %v3734 = vunpack.c.l.b16 %v3702
        %v3735 = vpack.c.b16 %v3720, %v3719
        %v3736 = vpack.c.b16 %v3722, %v3721
        %v3737 = vpack.c.b16 %v3724, %v3723
        %v3738 = vpack.c.b16 %v3726, %v3725
        %v3739 = vpack.c.b16 %v3728, %v3727
        %v3740 = vpack.c.b16 %v3730, %v3729
        %v3741 = vpack.c.b16 %v3732, %v3731
        %v3742 = vpack.c.b16 %v3734, %v3733
        %3751 = vmatpush.bf16.msra.mxu0 %v3742
        %3752 = vmatpush.bf16.msra.mxu0 %v3741
        %3753 = vmatpush.bf16.msra.mxu0 %v3740
        %3754 = vmatpush.bf16.msra.mxu0 %v3739
        %3755 = vmatpush.bf16.msra.mxu0 %v3738
        %3756 = vmatpush.bf16.msra.mxu0 %v3737
        %3757 = vmatpush.bf16.msra.mxu0 %v3736
        %3758 = vmatpush.bf16.msra.mxu0 %v3735
        %3759 = vmatmul.bf16.gmra.mxu0 %v3685
        %v3760 = vpop.f32.mrf.mxu0
        %v3761 = vadd.f32 0.0, %v3760
        %v3762 = vpop.f32.mrf.mxu0
        %v3763 = vadd.f32 0.0, %v3762
        %3764 = vdwg.mxu0
        %v3781 = vunpack.c.l.b16 %v3667
        %v3782 = vunpack.c.l.b16 %v3668
        %v3783 = vunpack.c.l.b16 %v3669
        %v3784 = vunpack.c.l.b16 %v3670
        %v3785 = vunpack.c.l.b16 %v3671
        %v3786 = vunpack.c.l.b16 %v3672
        %v3787 = vunpack.c.l.b16 %v3673
        %v3788 = vunpack.c.l.b16 %v3674
        %v3789 = vunpack.c.l.b16 %v3675
        %v3790 = vunpack.c.l.b16 %v3676
        %v3791 = vunpack.c.l.b16 %v3677
        %v3792 = vunpack.c.l.b16 %v3678
        %v3793 = vunpack.c.l.b16 %v3679
        %v3794 = vunpack.c.l.b16 %v3680
        %v3795 = vunpack.c.l.b16 %v3681
        %v3796 = vunpack.c.l.b16 %v3682
        %v3797 = vpack.c.b16 %v3782, %v3781
        %v3798 = vpack.c.b16 %v3784, %v3783
        %v3799 = vpack.c.b16 %v3786, %v3785
        %v3800 = vpack.c.b16 %v3788, %v3787
        %v3801 = vpack.c.b16 %v3790, %v3789
        %v3802 = vpack.c.b16 %v3792, %v3791
        %v3803 = vpack.c.b16 %v3794, %v3793
        %v3804 = vpack.c.b16 %v3796, %v3795
        %3813 = vmatpush.bf16.msra.mxu0 %v3804
        %3814 = vmatpush.bf16.msra.mxu0 %v3803
        %3815 = vmatpush.bf16.msra.mxu0 %v3802
        %3816 = vmatpush.bf16.msra.mxu0 %v3801
        %3817 = vmatpush.bf16.msra.mxu0 %v3800
        %3818 = vmatpush.bf16.msra.mxu0 %v3799
        %3819 = vmatpush.bf16.msra.mxu0 %v3798
        %3820 = vmatpush.bf16.msra.mxu0 %v3797
        %3821 = vmatmul.bf16.gmra.mxu0 %v3666
        %v3822 = vpop.f32.mrf.mxu0
        %v3823 = vadd.f32 %v3761, %v3822
        %v3824 = vpop.f32.mrf.mxu0
        %v3825 = vadd.f32 %v3763, %v3824
        %3826 = vdwg.mxu0
        %v3827 = vld [vmem:[#allocation3 + $0x2] sm:$0xff]
        %v3828 = vld [vmem:[#allocation3 + $0xa] sm:$0x1]
        %v3829 = vpack.c.bf16 %v3828, %v3827
        %s3830 = scalar_lea.vmem [#allocation10], 128
        %v3831 = vld [vmem:[%s3830] sm:$0xf]
        %v3832 = vld [vmem:[%s3830 + $0x4] sm:$0xf]
        %v3833 = vld [vmem:[%s3830 + $0x8] sm:$0xf]
        %v3834 = vld [vmem:[%s3830 + $0xc] sm:$0xf]
        %v3835 = vld [vmem:[%s3830 + $0x10] sm:$0xf]
        %v3836 = vld [vmem:[%s3830 + $0x14] sm:$0xf]
        %v3837 = vld [vmem:[%s3830 + $0x18] sm:$0xf]
        %v3838 = vld [vmem:[%s3830 + $0x1c] sm:$0xf]
        %v3839 = vld [vmem:[%s3830 + $0x20] sm:$0xf]
        %v3840 = vld [vmem:[%s3830 + $0x24] sm:$0xf]
        %v3841 = vld [vmem:[%s3830 + $0x28] sm:$0xf]
        %v3842 = vld [vmem:[%s3830 + $0x2c] sm:$0xf]
        %v3843 = vld [vmem:[%s3830 + $0x30] sm:$0xf]
        %v3844 = vld [vmem:[%s3830 + $0x34] sm:$0xf]
        %v3845 = vld [vmem:[%s3830 + $0x38] sm:$0xf]
        %v3846 = vld [vmem:[%s3830 + $0x3c] sm:$0xf]
        %v3863 = vunpack.c.l.b16 %v3831
        %v3864 = vunpack.c.l.b16 %v3832
        %v3865 = vunpack.c.l.b16 %v3833
        %v3866 = vunpack.c.l.b16 %v3834
        %v3867 = vunpack.c.l.b16 %v3835
        %v3868 = vunpack.c.l.b16 %v3836
        %v3869 = vunpack.c.l.b16 %v3837
        %v3870 = vunpack.c.l.b16 %v3838
        %v3871 = vunpack.c.l.b16 %v3839
        %v3872 = vunpack.c.l.b16 %v3840
        %v3873 = vunpack.c.l.b16 %v3841
        %v3874 = vunpack.c.l.b16 %v3842
        %v3875 = vunpack.c.l.b16 %v3843
        %v3876 = vunpack.c.l.b16 %v3844
        %v3877 = vunpack.c.l.b16 %v3845
        %v3878 = vunpack.c.l.b16 %v3846
        %v3879 = vpack.c.b16 %v3864, %v3863
        %v3880 = vpack.c.b16 %v3866, %v3865
        %v3881 = vpack.c.b16 %v3868, %v3867
        %v3882 = vpack.c.b16 %v3870, %v3869
        %v3883 = vpack.c.b16 %v3872, %v3871
        %v3884 = vpack.c.b16 %v3874, %v3873
        %v3885 = vpack.c.b16 %v3876, %v3875
        %v3886 = vpack.c.b16 %v3878, %v3877
        %3895 = vmatpush.bf16.msra.mxu0 %v3886
        %3896 = vmatpush.bf16.msra.mxu0 %v3885
        %3897 = vmatpush.bf16.msra.mxu0 %v3884
        %3898 = vmatpush.bf16.msra.mxu0 %v3883
        %3899 = vmatpush.bf16.msra.mxu0 %v3882
        %3900 = vmatpush.bf16.msra.mxu0 %v3881
        %3901 = vmatpush.bf16.msra.mxu0 %v3880
        %3902 = vmatpush.bf16.msra.mxu0 %v3879
        %3903 = vmatmul.bf16.gmra.mxu0 %v3829
        %v3904 = vpop.f32.mrf.mxu0
        %v3905 = vadd.f32 0.0, %v3904
        %v3906 = vpop.f32.mrf.mxu0
        %v3907 = vadd.f32 0.0, %v3906
        %3908 = vdwg.mxu0
        %v3909 = vadd.f32 %v3823, %v3905
        %v3910 = vadd.f32 %v3825, %v3907
        %v3911 = vld [vmem:[#allocation3 + $0x3] sm:$0xff]
        %v3912 = vld [vmem:[#allocation3 + $0xb] sm:$0x1]
        %v3913 = vpack.c.bf16 %v3912, %v3911
        %s3914 = scalar_lea.vmem [#allocation10], 192
        %v3915 = vld [vmem:[%s3914] sm:$0xf]
        %v3916 = vld [vmem:[%s3914 + $0x4] sm:$0xf]
        %v3917 = vld [vmem:[%s3914 + $0x8] sm:$0xf]
        %v3918 = vld [vmem:[%s3914 + $0xc] sm:$0xf]
        %v3919 = vld [vmem:[%s3914 + $0x10] sm:$0xf]
        %v3920 = vld [vmem:[%s3914 + $0x14] sm:$0xf]
        %v3921 = vld [vmem:[%s3914 + $0x18] sm:$0xf]
        %v3922 = vld [vmem:[%s3914 + $0x1c] sm:$0xf]
        %v3923 = vld [vmem:[%s3914 + $0x20] sm:$0xf]
        %v3924 = vld [vmem:[%s3914 + $0x24] sm:$0xf]
        %v3925 = vld [vmem:[%s3914 + $0x28] sm:$0xf]
        %v3926 = vld [vmem:[%s3914 + $0x2c] sm:$0xf]
        %v3927 = vld [vmem:[%s3914 + $0x30] sm:$0xf]
        %v3928 = vld [vmem:[%s3914 + $0x34] sm:$0xf]
        %v3929 = vld [vmem:[%s3914 + $0x38] sm:$0xf]
        %v3930 = vld [vmem:[%s3914 + $0x3c] sm:$0xf]
        %v3947 = vunpack.c.l.b16 %v3915
        %v3948 = vunpack.c.l.b16 %v3916
        %v3949 = vunpack.c.l.b16 %v3917
        %v3950 = vunpack.c.l.b16 %v3918
        %v3951 = vunpack.c.l.b16 %v3919
        %v3952 = vunpack.c.l.b16 %v3920
        %v3953 = vunpack.c.l.b16 %v3921
        %v3954 = vunpack.c.l.b16 %v3922
        %v3955 = vunpack.c.l.b16 %v3923
        %v3956 = vunpack.c.l.b16 %v3924
        %v3957 = vunpack.c.l.b16 %v3925
        %v3958 = vunpack.c.l.b16 %v3926
        %v3959 = vunpack.c.l.b16 %v3927
        %v3960 = vunpack.c.l.b16 %v3928
        %v3961 = vunpack.c.l.b16 %v3929
        %v3962 = vunpack.c.l.b16 %v3930
        %v3963 = vpack.c.b16 %v3948, %v3947
        %v3964 = vpack.c.b16 %v3950, %v3949
        %v3965 = vpack.c.b16 %v3952, %v3951
        %v3966 = vpack.c.b16 %v3954, %v3953
        %v3967 = vpack.c.b16 %v3956, %v3955
        %v3968 = vpack.c.b16 %v3958, %v3957
        %v3969 = vpack.c.b16 %v3960, %v3959
        %v3970 = vpack.c.b16 %v3962, %v3961
        %3979 = vmatpush.bf16.msra.mxu0 %v3970
        %3980 = vmatpush.bf16.msra.mxu0 %v3969
        %3981 = vmatpush.bf16.msra.mxu0 %v3968
        %3982 = vmatpush.bf16.msra.mxu0 %v3967
        %3983 = vmatpush.bf16.msra.mxu0 %v3966
        %3984 = vmatpush.bf16.msra.mxu0 %v3965
        %3985 = vmatpush.bf16.msra.mxu0 %v3964
        %3986 = vmatpush.bf16.msra.mxu0 %v3963
        %3987 = vmatmul.bf16.gmra.mxu0 %v3913
        %v3988 = vpop.f32.mrf.mxu0
        %v3989 = vadd.f32 0.0, %v3988
        %v3990 = vpop.f32.mrf.mxu0
        %v3991 = vadd.f32 0.0, %v3990
        %3992 = vdwg.mxu0
        %v3993 = vadd.f32 %v3909, %v3989
        %v3994 = vadd.f32 %v3910, %v3991
        %v3995 = vld [vmem:[#allocation3 + $0x4] sm:$0xff]
        %v3996 = vld [vmem:[#allocation3 + $0xc] sm:$0x1]
        %v3997 = vpack.c.bf16 %v3996, %v3995
        %s3998 = scalar_lea.vmem [#allocation10], 256
        %v3999 = vld [vmem:[%s3998] sm:$0xf]
        %v4000 = vld [vmem:[%s3998 + $0x4] sm:$0xf]
        %v4001 = vld [vmem:[%s3998 + $0x8] sm:$0xf]
        %v4002 = vld [vmem:[%s3998 + $0xc] sm:$0xf]
        %v4003 = vld [vmem:[%s3998 + $0x10] sm:$0xf]
        %v4004 = vld [vmem:[%s3998 + $0x14] sm:$0xf]
        %v4005 = vld [vmem:[%s3998 + $0x18] sm:$0xf]
        %v4006 = vld [vmem:[%s3998 + $0x1c] sm:$0xf]
        %v4007 = vld [vmem:[%s3998 + $0x20] sm:$0xf]
        %v4008 = vld [vmem:[%s3998 + $0x24] sm:$0xf]
        %v4009 = vld [vmem:[%s3998 + $0x28] sm:$0xf]
        %v4010 = vld [vmem:[%s3998 + $0x2c] sm:$0xf]
        %v4011 = vld [vmem:[%s3998 + $0x30] sm:$0xf]
        %v4012 = vld [vmem:[%s3998 + $0x34] sm:$0xf]
        %v4013 = vld [vmem:[%s3998 + $0x38] sm:$0xf]
        %v4014 = vld [vmem:[%s3998 + $0x3c] sm:$0xf]
        %v4031 = vunpack.c.l.b16 %v3999
        %v4032 = vunpack.c.l.b16 %v4000
        %v4033 = vunpack.c.l.b16 %v4001
        %v4034 = vunpack.c.l.b16 %v4002
        %v4035 = vunpack.c.l.b16 %v4003
        %v4036 = vunpack.c.l.b16 %v4004
        %v4037 = vunpack.c.l.b16 %v4005
        %v4038 = vunpack.c.l.b16 %v4006
        %v4039 = vunpack.c.l.b16 %v4007
        %v4040 = vunpack.c.l.b16 %v4008
        %v4041 = vunpack.c.l.b16 %v4009
        %v4042 = vunpack.c.l.b16 %v4010
        %v4043 = vunpack.c.l.b16 %v4011
        %v4044 = vunpack.c.l.b16 %v4012
        %v4045 = vunpack.c.l.b16 %v4013
        %v4046 = vunpack.c.l.b16 %v4014
        %v4047 = vpack.c.b16 %v4032, %v4031
        %v4048 = vpack.c.b16 %v4034, %v4033
        %v4049 = vpack.c.b16 %v4036, %v4035
        %v4050 = vpack.c.b16 %v4038, %v4037
        %v4051 = vpack.c.b16 %v4040, %v4039
        %v4052 = vpack.c.b16 %v4042, %v4041
        %v4053 = vpack.c.b16 %v4044, %v4043
        %v4054 = vpack.c.b16 %v4046, %v4045
        %4063 = vmatpush.bf16.msra.mxu0 %v4054
        %4064 = vmatpush.bf16.msra.mxu0 %v4053
        %4065 = vmatpush.bf16.msra.mxu0 %v4052
        %4066 = vmatpush.bf16.msra.mxu0 %v4051
        %4067 = vmatpush.bf16.msra.mxu0 %v4050
        %4068 = vmatpush.bf16.msra.mxu0 %v4049
        %4069 = vmatpush.bf16.msra.mxu0 %v4048
        %4070 = vmatpush.bf16.msra.mxu0 %v4047
        %4071 = vmatmul.bf16.gmra.mxu0 %v3997
        %v4072 = vpop.f32.mrf.mxu0
        %v4073 = vadd.f32 0.0, %v4072
        %v4074 = vpop.f32.mrf.mxu0
        %v4075 = vadd.f32 0.0, %v4074
        %4076 = vdwg.mxu0
        %v4077 = vadd.f32 %v3993, %v4073
        %v4078 = vadd.f32 %v3994, %v4075
        %v4079 = vld [vmem:[#allocation3 + $0x5] sm:$0xff]
        %v4080 = vld [vmem:[#allocation3 + $0xd] sm:$0x1]
        %v4081 = vpack.c.bf16 %v4080, %v4079
        %s4082 = scalar_lea.vmem [#allocation10], 320
        %v4083 = vld [vmem:[%s4082] sm:$0xf]
        %v4084 = vld [vmem:[%s4082 + $0x4] sm:$0xf]
        %v4085 = vld [vmem:[%s4082 + $0x8] sm:$0xf]
        %v4086 = vld [vmem:[%s4082 + $0xc] sm:$0xf]
        %v4087 = vld [vmem:[%s4082 + $0x10] sm:$0xf]
        %v4088 = vld [vmem:[%s4082 + $0x14] sm:$0xf]
        %v4089 = vld [vmem:[%s4082 + $0x18] sm:$0xf]
        %v4090 = vld [vmem:[%s4082 + $0x1c] sm:$0xf]
        %v4091 = vld [vmem:[%s4082 + $0x20] sm:$0xf]
        %v4092 = vld [vmem:[%s4082 + $0x24] sm:$0xf]
        %v4093 = vld [vmem:[%s4082 + $0x28] sm:$0xf]
        %v4094 = vld [vmem:[%s4082 + $0x2c] sm:$0xf]
        %v4095 = vld [vmem:[%s4082 + $0x30] sm:$0xf]
        %v4096 = vld [vmem:[%s4082 + $0x34] sm:$0xf]
        %v4097 = vld [vmem:[%s4082 + $0x38] sm:$0xf]
        %v4098 = vld [vmem:[%s4082 + $0x3c] sm:$0xf]
        %v4115 = vunpack.c.l.b16 %v4083
        %v4116 = vunpack.c.l.b16 %v4084
        %v4117 = vunpack.c.l.b16 %v4085
        %v4118 = vunpack.c.l.b16 %v4086
        %v4119 = vunpack.c.l.b16 %v4087
        %v4120 = vunpack.c.l.b16 %v4088
        %v4121 = vunpack.c.l.b16 %v4089
        %v4122 = vunpack.c.l.b16 %v4090
        %v4123 = vunpack.c.l.b16 %v4091
        %v4124 = vunpack.c.l.b16 %v4092
        %v4125 = vunpack.c.l.b16 %v4093
        %v4126 = vunpack.c.l.b16 %v4094
        %v4127 = vunpack.c.l.b16 %v4095
        %v4128 = vunpack.c.l.b16 %v4096
        %v4129 = vunpack.c.l.b16 %v4097
        %v4130 = vunpack.c.l.b16 %v4098
        %v4131 = vpack.c.b16 %v4116, %v4115
        %v4132 = vpack.c.b16 %v4118, %v4117
        %v4133 = vpack.c.b16 %v4120, %v4119
        %v4134 = vpack.c.b16 %v4122, %v4121
        %v4135 = vpack.c.b16 %v4124, %v4123
        %v4136 = vpack.c.b16 %v4126, %v4125
        %v4137 = vpack.c.b16 %v4128, %v4127
        %v4138 = vpack.c.b16 %v4130, %v4129
        %4147 = vmatpush.bf16.msra.mxu0 %v4138
        %4148 = vmatpush.bf16.msra.mxu0 %v4137
        %4149 = vmatpush.bf16.msra.mxu0 %v4136
        %4150 = vmatpush.bf16.msra.mxu0 %v4135
        %4151 = vmatpush.bf16.msra.mxu0 %v4134
        %4152 = vmatpush.bf16.msra.mxu0 %v4133
        %4153 = vmatpush.bf16.msra.mxu0 %v4132
        %4154 = vmatpush.bf16.msra.mxu0 %v4131
        %4155 = vmatmul.bf16.gmra.mxu0 %v4081
        %v4156 = vpop.f32.mrf.mxu0
        %v4157 = vadd.f32 0.0, %v4156
        %v4158 = vpop.f32.mrf.mxu0
        %v4159 = vadd.f32 0.0, %v4158
        %4160 = vdwg.mxu0
        %v4161 = vadd.f32 %v4077, %v4157
        %v4162 = vadd.f32 %v4078, %v4159
        %v4163 = vld [vmem:[#allocation3 + $0x6] sm:$0xff]
        %v4164 = vld [vmem:[#allocation3 + $0xe] sm:$0x1]
        %v4165 = vpack.c.bf16 %v4164, %v4163
        %s4166 = scalar_lea.vmem [#allocation10], 384
        %v4167 = vld [vmem:[%s4166] sm:$0xf]
        %v4168 = vld [vmem:[%s4166 + $0x4] sm:$0xf]
        %v4169 = vld [vmem:[%s4166 + $0x8] sm:$0xf]
        %v4170 = vld [vmem:[%s4166 + $0xc] sm:$0xf]
        %v4171 = vld [vmem:[%s4166 + $0x10] sm:$0xf]
        %v4172 = vld [vmem:[%s4166 + $0x14] sm:$0xf]
        %v4173 = vld [vmem:[%s4166 + $0x18] sm:$0xf]
        %v4174 = vld [vmem:[%s4166 + $0x1c] sm:$0xf]
        %v4175 = vld [vmem:[%s4166 + $0x20] sm:$0xf]
        %v4176 = vld [vmem:[%s4166 + $0x24] sm:$0xf]
        %v4177 = vld [vmem:[%s4166 + $0x28] sm:$0xf]
        %v4178 = vld [vmem:[%s4166 + $0x2c] sm:$0xf]
        %v4179 = vld [vmem:[%s4166 + $0x30] sm:$0xf]
        %v4180 = vld [vmem:[%s4166 + $0x34] sm:$0xf]
        %v4181 = vld [vmem:[%s4166 + $0x38] sm:$0xf]
        %v4182 = vld [vmem:[%s4166 + $0x3c] sm:$0xf]
        %v4199 = vunpack.c.l.b16 %v4167
        %v4200 = vunpack.c.l.b16 %v4168
        %v4201 = vunpack.c.l.b16 %v4169
        %v4202 = vunpack.c.l.b16 %v4170
        %v4203 = vunpack.c.l.b16 %v4171
        %v4204 = vunpack.c.l.b16 %v4172
        %v4205 = vunpack.c.l.b16 %v4173
        %v4206 = vunpack.c.l.b16 %v4174
        %v4207 = vunpack.c.l.b16 %v4175
        %v4208 = vunpack.c.l.b16 %v4176
        %v4209 = vunpack.c.l.b16 %v4177
        %v4210 = vunpack.c.l.b16 %v4178
        %v4211 = vunpack.c.l.b16 %v4179
        %v4212 = vunpack.c.l.b16 %v4180
        %v4213 = vunpack.c.l.b16 %v4181
        %v4214 = vunpack.c.l.b16 %v4182
        %v4215 = vpack.c.b16 %v4200, %v4199
        %v4216 = vpack.c.b16 %v4202, %v4201
        %v4217 = vpack.c.b16 %v4204, %v4203
        %v4218 = vpack.c.b16 %v4206, %v4205
        %v4219 = vpack.c.b16 %v4208, %v4207
        %v4220 = vpack.c.b16 %v4210, %v4209
        %v4221 = vpack.c.b16 %v4212, %v4211
        %v4222 = vpack.c.b16 %v4214, %v4213
        %4231 = vmatpush.bf16.msra.mxu0 %v4222
        %4232 = vmatpush.bf16.msra.mxu0 %v4221
        %4233 = vmatpush.bf16.msra.mxu0 %v4220
        %4234 = vmatpush.bf16.msra.mxu0 %v4219
        %4235 = vmatpush.bf16.msra.mxu0 %v4218
        %4236 = vmatpush.bf16.msra.mxu0 %v4217
        %4237 = vmatpush.bf16.msra.mxu0 %v4216
        %4238 = vmatpush.bf16.msra.mxu0 %v4215
        %4239 = vmatmul.bf16.gmra.mxu0 %v4165
        %v4240 = vpop.f32.mrf.mxu0
        %v4241 = vadd.f32 0.0, %v4240
        %v4242 = vpop.f32.mrf.mxu0
        %v4243 = vadd.f32 0.0, %v4242
        %4244 = vdwg.mxu0
        %v4245 = vadd.f32 %v4161, %v4241
        %v4246 = vadd.f32 %v4162, %v4243
        %v4247 = vld [vmem:[#allocation3 + $0x7] sm:$0xff]
        %v4248 = vld [vmem:[#allocation3 + $0xf] sm:$0x1]
        %v4249 = vpack.c.bf16 %v4248, %v4247
        %s4250 = scalar_lea.vmem [#allocation10], 448
        %v4251 = vld [vmem:[%s4250] sm:$0xf]
        %v4252 = vld [vmem:[%s4250 + $0x4] sm:$0xf]
        %v4253 = vld [vmem:[%s4250 + $0x8] sm:$0xf]
        %v4254 = vld [vmem:[%s4250 + $0xc] sm:$0xf]
        %v4255 = vld [vmem:[%s4250 + $0x10] sm:$0xf]
        %v4256 = vld [vmem:[%s4250 + $0x14] sm:$0xf]
        %v4257 = vld [vmem:[%s4250 + $0x18] sm:$0xf]
        %v4258 = vld [vmem:[%s4250 + $0x1c] sm:$0xf]
        %v4259 = vld [vmem:[%s4250 + $0x20] sm:$0xf]
        %v4260 = vld [vmem:[%s4250 + $0x24] sm:$0xf]
        %v4261 = vld [vmem:[%s4250 + $0x28] sm:$0xf]
        %v4262 = vld [vmem:[%s4250 + $0x2c] sm:$0xf]
        %v4263 = vld [vmem:[%s4250 + $0x30] sm:$0xf]
        %v4264 = vld [vmem:[%s4250 + $0x34] sm:$0xf]
        %v4265 = vld [vmem:[%s4250 + $0x38] sm:$0xf]
        %v4266 = vld [vmem:[%s4250 + $0x3c] sm:$0xf]
        %v4283 = vunpack.c.l.b16 %v4251
        %v4284 = vunpack.c.l.b16 %v4252
        %v4285 = vunpack.c.l.b16 %v4253
        %v4286 = vunpack.c.l.b16 %v4254
        %v4287 = vunpack.c.l.b16 %v4255
        %v4288 = vunpack.c.l.b16 %v4256
        %v4289 = vunpack.c.l.b16 %v4257
        %v4290 = vunpack.c.l.b16 %v4258
        %v4291 = vunpack.c.l.b16 %v4259
        %v4292 = vunpack.c.l.b16 %v4260
        %v4293 = vunpack.c.l.b16 %v4261
        %v4294 = vunpack.c.l.b16 %v4262
        %v4295 = vunpack.c.l.b16 %v4263
        %v4296 = vunpack.c.l.b16 %v4264
        %v4297 = vunpack.c.l.b16 %v4265
        %v4298 = vunpack.c.l.b16 %v4266
        %v4299 = vpack.c.b16 %v4284, %v4283
        %v4300 = vpack.c.b16 %v4286, %v4285
        %v4301 = vpack.c.b16 %v4288, %v4287
        %v4302 = vpack.c.b16 %v4290, %v4289
        %v4303 = vpack.c.b16 %v4292, %v4291
        %v4304 = vpack.c.b16 %v4294, %v4293
        %v4305 = vpack.c.b16 %v4296, %v4295
        %v4306 = vpack.c.b16 %v4298, %v4297
        %4315 = vmatpush.bf16.msra.mxu0 %v4306
        %4316 = vmatpush.bf16.msra.mxu0 %v4305
        %4317 = vmatpush.bf16.msra.mxu0 %v4304
        %4318 = vmatpush.bf16.msra.mxu0 %v4303
        %4319 = vmatpush.bf16.msra.mxu0 %v4302
        %4320 = vmatpush.bf16.msra.mxu0 %v4301
        %4321 = vmatpush.bf16.msra.mxu0 %v4300
        %4322 = vmatpush.bf16.msra.mxu0 %v4299
        %4323 = vmatmul.bf16.gmra.mxu0 %v4249
        %v4324 = vpop.f32.mrf.mxu0
        %v4325 = vadd.f32 0.0, %v4324
        %v4326 = vpop.f32.mrf.mxu0
        %v4327 = vadd.f32 0.0, %v4326
        %4328 = vdwg.mxu0
        %v4329 = vadd.f32 %v4245, %v4325
        %v4330 = vadd.f32 %v4246, %v4327
        %v4331 = vld [vmem:[#allocation3 + $0x8] sm:$0xff]
        %v4332 = vld [vmem:[#allocation3 + $0x10] sm:$0x1]
        %v4333 = vpack.c.bf16 %v4332, %v4331
        %s4334 = scalar_lea.vmem [#allocation10], 512
        %v4335 = vld [vmem:[%s4334] sm:$0xf]
        %v4336 = vld [vmem:[%s4334 + $0x4] sm:$0xf]
        %v4337 = vld [vmem:[%s4334 + $0x8] sm:$0xf]
        %v4338 = vld [vmem:[%s4334 + $0xc] sm:$0xf]
        %v4339 = vld [vmem:[%s4334 + $0x10] sm:$0xf]
        %v4340 = vld [vmem:[%s4334 + $0x14] sm:$0xf]
        %v4341 = vld [vmem:[%s4334 + $0x18] sm:$0xf]
        %v4342 = vld [vmem:[%s4334 + $0x1c] sm:$0xf]
        %v4343 = vld [vmem:[%s4334 + $0x20] sm:$0xf]
        %v4344 = vld [vmem:[%s4334 + $0x24] sm:$0xf]
        %v4345 = vld [vmem:[%s4334 + $0x28] sm:$0xf]
        %v4346 = vld [vmem:[%s4334 + $0x2c] sm:$0xf]
        %v4347 = vld [vmem:[%s4334 + $0x30] sm:$0xf]
        %v4348 = vld [vmem:[%s4334 + $0x34] sm:$0xf]
        %v4349 = vld [vmem:[%s4334 + $0x38] sm:$0xf]
        %v4350 = vld [vmem:[%s4334 + $0x3c] sm:$0xf]
        %v4367 = vunpack.c.l.b16 %v4335
        %v4368 = vunpack.c.l.b16 %v4336
        %v4369 = vunpack.c.l.b16 %v4337
        %v4370 = vunpack.c.l.b16 %v4338
        %v4371 = vunpack.c.l.b16 %v4339
        %v4372 = vunpack.c.l.b16 %v4340
        %v4373 = vunpack.c.l.b16 %v4341
        %v4374 = vunpack.c.l.b16 %v4342
        %v4375 = vunpack.c.l.b16 %v4343
        %v4376 = vunpack.c.l.b16 %v4344
        %v4377 = vunpack.c.l.b16 %v4345
        %v4378 = vunpack.c.l.b16 %v4346
        %v4379 = vunpack.c.l.b16 %v4347
        %v4380 = vunpack.c.l.b16 %v4348
        %v4381 = vunpack.c.l.b16 %v4349
        %v4382 = vunpack.c.l.b16 %v4350
        %v4383 = vpack.c.b16 %v4368, %v4367
        %v4384 = vpack.c.b16 %v4370, %v4369
        %v4385 = vpack.c.b16 %v4372, %v4371
        %v4386 = vpack.c.b16 %v4374, %v4373
        %v4387 = vpack.c.b16 %v4376, %v4375
        %v4388 = vpack.c.b16 %v4378, %v4377
        %v4389 = vpack.c.b16 %v4380, %v4379
        %v4390 = vpack.c.b16 %v4382, %v4381
        %4399 = vmatpush.bf16.msra.mxu0 %v4390
        %4400 = vmatpush.bf16.msra.mxu0 %v4389
        %4401 = vmatpush.bf16.msra.mxu0 %v4388
        %4402 = vmatpush.bf16.msra.mxu0 %v4387
        %4403 = vmatpush.bf16.msra.mxu0 %v4386
        %4404 = vmatpush.bf16.msra.mxu0 %v4385
        %4405 = vmatpush.bf16.msra.mxu0 %v4384
        %4406 = vmatpush.bf16.msra.mxu0 %v4383
        %4407 = vmatmul.bf16.gmra.mxu0 %v4333
        %v4408 = vpop.f32.mrf.mxu0
        %v4409 = vadd.f32 0.0, %v4408
        %v4410 = vpop.f32.mrf.mxu0
        %v4411 = vadd.f32 0.0, %v4410
        %4412 = vdwg.mxu0
        %v4413 = vadd.f32 %v4329, %v4409
        %v4414 = vadd.f32 %v4330, %v4411
        %v4415 = vld [vmem:[#allocation3 + $0x9] sm:$0xff]
        %v4416 = vld [vmem:[#allocation3 + $0x11] sm:$0x1]
        %v4417 = vpack.c.bf16 %v4416, %v4415
        %s4418 = scalar_lea.vmem [#allocation10], 576
        %v4419 = vld [vmem:[%s4418] sm:$0xf]
        %v4420 = vld [vmem:[%s4418 + $0x4] sm:$0xf]
        %v4421 = vld [vmem:[%s4418 + $0x8] sm:$0xf]
        %v4422 = vld [vmem:[%s4418 + $0xc] sm:$0xf]
        %v4423 = vld [vmem:[%s4418 + $0x10] sm:$0xf]
        %v4424 = vld [vmem:[%s4418 + $0x14] sm:$0xf]
        %v4425 = vld [vmem:[%s4418 + $0x18] sm:$0xf]
        %v4426 = vld [vmem:[%s4418 + $0x1c] sm:$0xf]
        %v4427 = vld [vmem:[%s4418 + $0x20] sm:$0xf]
        %v4428 = vld [vmem:[%s4418 + $0x24] sm:$0xf]
        %v4429 = vld [vmem:[%s4418 + $0x28] sm:$0xf]
        %v4430 = vld [vmem:[%s4418 + $0x2c] sm:$0xf]
        %v4431 = vld [vmem:[%s4418 + $0x30] sm:$0xf]
        %v4432 = vld [vmem:[%s4418 + $0x34] sm:$0xf]
        %v4433 = vld [vmem:[%s4418 + $0x38] sm:$0xf]
        %v4434 = vld [vmem:[%s4418 + $0x3c] sm:$0xf]
        %v4451 = vunpack.c.l.b16 %v4419
        %v4452 = vunpack.c.l.b16 %v4420
        %v4453 = vunpack.c.l.b16 %v4421
        %v4454 = vunpack.c.l.b16 %v4422
        %v4455 = vunpack.c.l.b16 %v4423
        %v4456 = vunpack.c.l.b16 %v4424
        %v4457 = vunpack.c.l.b16 %v4425
        %v4458 = vunpack.c.l.b16 %v4426
        %v4459 = vunpack.c.l.b16 %v4427
        %v4460 = vunpack.c.l.b16 %v4428
        %v4461 = vunpack.c.l.b16 %v4429
        %v4462 = vunpack.c.l.b16 %v4430
        %v4463 = vunpack.c.l.b16 %v4431
        %v4464 = vunpack.c.l.b16 %v4432
        %v4465 = vunpack.c.l.b16 %v4433
        %v4466 = vunpack.c.l.b16 %v4434
        %v4467 = vpack.c.b16 %v4452, %v4451
        %v4468 = vpack.c.b16 %v4454, %v4453
        %v4469 = vpack.c.b16 %v4456, %v4455
        %v4470 = vpack.c.b16 %v4458, %v4457
        %v4471 = vpack.c.b16 %v4460, %v4459
        %v4472 = vpack.c.b16 %v4462, %v4461
        %v4473 = vpack.c.b16 %v4464, %v4463
        %v4474 = vpack.c.b16 %v4466, %v4465
        %4483 = vmatpush.bf16.msra.mxu0 %v4474
        %4484 = vmatpush.bf16.msra.mxu0 %v4473
        %4485 = vmatpush.bf16.msra.mxu0 %v4472
        %4486 = vmatpush.bf16.msra.mxu0 %v4471
        %4487 = vmatpush.bf16.msra.mxu0 %v4470
        %4488 = vmatpush.bf16.msra.mxu0 %v4469
        %4489 = vmatpush.bf16.msra.mxu0 %v4468
        %4490 = vmatpush.bf16.msra.mxu0 %v4467
        %4491 = vmatmul.bf16.gmra.mxu0 %v4417
        %v4492 = vpop.f32.mrf.mxu0
        %v4493 = vadd.f32 0.0, %v4492
        %v4494 = vpop.f32.mrf.mxu0
        %v4495 = vadd.f32 0.0, %v4494
        %4496 = vdwg.mxu0
        %v4497 = vadd.f32 %v4413, %v4493
        %v4498 = vadd.f32 %v4414, %v4495
        %v4499 = vperm.slane %v3661, 0
        %v4500 = vadd.f32 %v4497, %v4499
        %v4501 = vadd.f32 %v4498, %v4499
        %vm4502 = vcmp.gt.f32.partialorder %v4500, 0.0
        %vm4503 = vcmp.gt.f32.partialorder %v4501, 0.0
        %v4504 = vmin.f32 %v4500, 0.0
        %v4505 = vmin.f32 %v4501, 0.0
        %v4506 = vmul.f32 %v4504, 1.442695
        %v4507 = vpow.pop %v4506
        %v4508 = vmul.f32 %v4505, 1.442695
        %v4509 = vpow.pop %v4508
        %v4510 = vsub.f32 %v4507, 1.0
        %v4511 = vsub.f32 %v4509, 1.0
        %v4512 = vsel %vm4502, %v4500, %v4510
        %v4513 = vsel %vm4503, %v4501, %v4511
        %v4516 = vrot.slane %v4512, 1
        %v4517 = vrot.slane %v4512, 2
        %v4518 = vrot.slane %v4512, 3
        %v4519 = vrot.slane %v4512, 4
        %v4520 = vrot.slane %v4512, 5
        %v4521 = vrot.slane %v4512, 6
        %v4522 = vrot.slane %v4512, 7
        %4523 = vst [vmem:[#allocation1] ss:$9 sm:$0xff] %v4512
        %s4524 = scalar_lea.vmem [#allocation1], 1
        %4525 = vst [vmem:[%s4524] ss:$9 sm:$0xff] %v4516
        %s4526 = scalar_lea.vmem [#allocation1], 2
        %4527 = vst [vmem:[%s4526] ss:$9 sm:$0xff] %v4517
        %v4528 = vld [vmem:[#allocation1] sm:$0xff]
        %4529 = vst [vmem:[#allocation1] ss:$9 sm:$0xff] %v4518
        %4530 = vst [vmem:[%s4524] ss:$9 sm:$0xff] %v4519
        %4531 = vst [vmem:[%s4526] ss:$9 sm:$0xff] %v4520
        %v4532 = vld [vmem:[#allocation1] sm:$0xff]
        %4533 = vst [vmem:[#allocation1] ss:$9 sm:$0xff] %v4521
        %4534 = vst [vmem:[%s4524] ss:$9 sm:$0xff] %v4522
        %4535 = vst [vmem:[%s4526] ss:$9 sm:$0xff] %v4513
        %v4536 = vld [vmem:[#allocation1] sm:$0xff]
        %v4540 = vsel %vm2172, %v4528, -inf
        %v4541 = vrot.slane %v4540, 4
        %v4542 = vmax.f32 %v4540, %v4541
        %v4543 = vrot.slane %v4542, 2
        %v4544 = vmax.f32 %v4542, %v4543
        %v4545 = vrot.slane %v4544, 1
        %v4546 = vmax.f32 %v4544, %v4545
        %v4547 = vsel %vm2172, %v4532, -inf
        %v4548 = vrot.slane %v4547, 4
        %v4549 = vmax.f32 %v4547, %v4548
        %v4550 = vrot.slane %v4549, 2
        %v4551 = vmax.f32 %v4549, %v4550
        %v4552 = vrot.slane %v4551, 1
        %v4553 = vmax.f32 %v4551, %v4552
        %v4554 = vsel %vm2172, %v4536, -inf
        %v4555 = vrot.slane %v4554, 4
        %v4556 = vmax.f32 %v4554, %v4555
        %v4557 = vrot.slane %v4556, 2
        %v4558 = vmax.f32 %v4556, %v4557
        %v4559 = vrot.slane %v4558, 1
        %v4560 = vmax.f32 %v4558, %v4559
        %v4561 = vperm.slane %v3662, 0
        %v4562 = vmul.f32 %v4546, %v4561
        %v4563 = vmul.f32 %v4553, %v4561
        %v4564 = vmul.f32 %v4560, %v4561
        %v4565 = vperm.slane %v3663, 0
        %v4566 = vadd.f32 %v4562, %v4565
        %v4567 = vadd.f32 %v4563, %v4565
        %v4568 = vadd.f32 %v4564, %v4565
        %4569 = vst [vmem:[#allocation4] sm:$0xff] 0.0
        %4570 = vst [vmem:[#allocation4 + $0x8] sm:$0xf] 0.0
        %v4574 = vrot.slane %v4567, 7
        %v4575 = vsel %vm2451, %v4574, %v4566
        %v4576 = vrot.slane %v4568, 6
        %v4577 = vsel %vm2454, %v4576, %v4575
        %4579 = vst [vmem:[#allocation4 + $0x4] sm:$0x7] %v4577
        %v4580 = vld [vmem:[%s8] ss:$4 sm:$0x3]
        %s4581 = scalar_lea.vmem %s8, 1
        %v4582 = vld [vmem:[%s4581] ss:$4 sm:$0x3]
        %s4583 = scalar_lea.vmem %s8, 2
        %v4584 = vld [vmem:[%s4583] ss:$4 sm:$0x3]
        %v4585 = vld [vmem:[#allocation4] sm:$0x7]
        %v4586 = vpack.c.bf16 %v4585, %v4585
        %v4587 = vld [vmem:[#allocation11] sm:$0xff]
        %v4588 = vld [vmem:[#allocation11 + $0x8] sm:$0xff]
        %v4589 = vld [vmem:[#allocation11 + $0x10] sm:$0xff]
        %v4590 = vld [vmem:[#allocation11 + $0x18] sm:$0xff]
        %v4591 = vld [vmem:[#allocation11 + $0x20] sm:$0xff]
        %v4592 = vld [vmem:[#allocation11 + $0x28] sm:$0xff]
        %v4593 = vld [vmem:[#allocation11 + $0x30] sm:$0xff]
        %v4594 = vld [vmem:[#allocation11 + $0x38] sm:$0xff]
        %v4595 = vld [vmem:[#allocation11 + $0x40] sm:$0xff]
        %v4596 = vld [vmem:[#allocation11 + $0x48] sm:$0xff]
        %v4597 = vld [vmem:[#allocation11 + $0x50] sm:$0xff]
        %v4598 = vld [vmem:[#allocation11 + $0x58] sm:$0xff]
        %v4599 = vld [vmem:[#allocation11 + $0x60] sm:$0xff]
        %v4600 = vld [vmem:[#allocation11 + $0x68] sm:$0xff]
        %v4601 = vld [vmem:[#allocation11 + $0x70] sm:$0xff]
        %v4602 = vld [vmem:[#allocation11 + $0x78] sm:$0xff]
        %v4603 = vld [vmem:[#allocation4 + $0x1] sm:$0x7]
        %v4604 = vpack.c.bf16 %v4603, %v4603
        %s4605 = scalar_lea.vmem [#allocation11], 128
        %v4606 = vld [vmem:[%s4605] sm:$0xff]
        %v4607 = vld [vmem:[%s4605 + $0x8] sm:$0xff]
        %v4608 = vld [vmem:[%s4605 + $0x10] sm:$0xff]
        %v4609 = vld [vmem:[%s4605 + $0x18] sm:$0xff]
        %v4610 = vld [vmem:[%s4605 + $0x20] sm:$0xff]
        %v4611 = vld [vmem:[%s4605 + $0x28] sm:$0xff]
        %v4612 = vld [vmem:[%s4605 + $0x30] sm:$0xff]
        %v4613 = vld [vmem:[%s4605 + $0x38] sm:$0xff]
        %v4614 = vld [vmem:[%s4605 + $0x40] sm:$0xff]
        %v4615 = vld [vmem:[%s4605 + $0x48] sm:$0xff]
        %v4616 = vld [vmem:[%s4605 + $0x50] sm:$0xff]
        %v4617 = vld [vmem:[%s4605 + $0x58] sm:$0xff]
        %v4618 = vld [vmem:[%s4605 + $0x60] sm:$0xff]
        %v4619 = vld [vmem:[%s4605 + $0x68] sm:$0xff]
        %v4620 = vld [vmem:[%s4605 + $0x70] sm:$0xff]
        %v4621 = vld [vmem:[%s4605 + $0x78] sm:$0xff]
        %v4638 = vunpack.c.l.b16 %v4606
        %v4639 = vunpack.c.h.b16 %v4606
        %v4640 = vunpack.c.l.b16 %v4607
        %v4641 = vunpack.c.h.b16 %v4607
        %v4642 = vunpack.c.l.b16 %v4608
        %v4643 = vunpack.c.h.b16 %v4608
        %v4644 = vunpack.c.l.b16 %v4609
        %v4645 = vunpack.c.h.b16 %v4609
        %v4646 = vunpack.c.l.b16 %v4610
        %v4647 = vunpack.c.h.b16 %v4610
        %v4648 = vunpack.c.l.b16 %v4611
        %v4649 = vunpack.c.h.b16 %v4611
        %v4650 = vunpack.c.l.b16 %v4612
        %v4651 = vunpack.c.h.b16 %v4612
        %v4652 = vunpack.c.l.b16 %v4613
        %v4653 = vunpack.c.h.b16 %v4613
        %v4654 = vunpack.c.l.b16 %v4614
        %v4655 = vunpack.c.h.b16 %v4614
        %v4656 = vunpack.c.l.b16 %v4615
        %v4657 = vunpack.c.h.b16 %v4615
        %v4658 = vunpack.c.l.b16 %v4616
        %v4659 = vunpack.c.h.b16 %v4616
        %v4660 = vunpack.c.l.b16 %v4617
        %v4661 = vunpack.c.h.b16 %v4617
        %v4662 = vunpack.c.l.b16 %v4618
        %v4663 = vunpack.c.h.b16 %v4618
        %v4664 = vunpack.c.l.b16 %v4619
        %v4665 = vunpack.c.h.b16 %v4619
        %v4666 = vunpack.c.l.b16 %v4620
        %v4667 = vunpack.c.h.b16 %v4620
        %v4668 = vunpack.c.l.b16 %v4621
        %v4669 = vunpack.c.h.b16 %v4621
        %v4670 = vpack.c.b16 %v4640, %v4638
        %v4671 = vpack.c.b16 %v4641, %v4639
        %v4672 = vpack.c.b16 %v4644, %v4642
        %v4673 = vpack.c.b16 %v4645, %v4643
        %v4674 = vpack.c.b16 %v4648, %v4646
        %v4675 = vpack.c.b16 %v4649, %v4647
        %v4676 = vpack.c.b16 %v4652, %v4650
        %v4677 = vpack.c.b16 %v4653, %v4651
        %v4678 = vpack.c.b16 %v4656, %v4654
        %v4679 = vpack.c.b16 %v4657, %v4655
        %v4680 = vpack.c.b16 %v4660, %v4658
        %v4681 = vpack.c.b16 %v4661, %v4659
        %v4682 = vpack.c.b16 %v4664, %v4662
        %v4683 = vpack.c.b16 %v4665, %v4663
        %v4684 = vpack.c.b16 %v4668, %v4666
        %v4685 = vpack.c.b16 %v4669, %v4667
        %4702 = vmatpush.bf16.msra.mxu0 %v4684
        %4703 = vmatpush.bf16.msra.mxu0 %v4682
        %4704 = vmatpush.bf16.msra.mxu0 %v4680
        %4705 = vmatpush.bf16.msra.mxu0 %v4678
        %4706 = vmatpush.bf16.msra.mxu0 %v4676
        %4707 = vmatpush.bf16.msra.mxu0 %v4674
        %4708 = vmatpush.bf16.msra.mxu0 %v4672
        %4709 = vmatpush.bf16.msra.mxu0 %v4670
        %4710 = vmatmul.bf16.gmra.mxu0 %v4604
        %v4711 = vpop.f32.mrf.mxu0
        %v4712 = vadd.f32 0.0, %v4711
        %v4713 = vpop.f32.mrf.mxu0
        %4714 = vdwg.mxu0
        %4715 = vmatpush.bf16.msra.mxu0 %v4685
        %4716 = vmatpush.bf16.msra.mxu0 %v4683
        %4717 = vmatpush.bf16.msra.mxu0 %v4681
        %4718 = vmatpush.bf16.msra.mxu0 %v4679
        %4719 = vmatpush.bf16.msra.mxu0 %v4677
        %4720 = vmatpush.bf16.msra.mxu0 %v4675
        %4721 = vmatpush.bf16.msra.mxu0 %v4673
        %4722 = vmatpush.bf16.msra.mxu0 %v4671
        %4723 = vmatmul.bf16.gmra.mxu0 %v4604
        %v4724 = vpop.f32.mrf.mxu0
        %v4725 = vadd.f32 0.0, %v4724
        %v4726 = vpop.f32.mrf.mxu0
        %4727 = vdwg.mxu0
        %v4744 = vunpack.c.l.b16 %v4587
        %v4745 = vunpack.c.h.b16 %v4587
        %v4746 = vunpack.c.l.b16 %v4588
        %v4747 = vunpack.c.h.b16 %v4588
        %v4748 = vunpack.c.l.b16 %v4589
        %v4749 = vunpack.c.h.b16 %v4589
        %v4750 = vunpack.c.l.b16 %v4590
        %v4751 = vunpack.c.h.b16 %v4590
        %v4752 = vunpack.c.l.b16 %v4591
        %v4753 = vunpack.c.h.b16 %v4591
        %v4754 = vunpack.c.l.b16 %v4592
        %v4755 = vunpack.c.h.b16 %v4592
        %v4756 = vunpack.c.l.b16 %v4593
        %v4757 = vunpack.c.h.b16 %v4593
        %v4758 = vunpack.c.l.b16 %v4594
        %v4759 = vunpack.c.h.b16 %v4594
        %v4760 = vunpack.c.l.b16 %v4595
        %v4761 = vunpack.c.h.b16 %v4595
        %v4762 = vunpack.c.l.b16 %v4596
        %v4763 = vunpack.c.h.b16 %v4596
        %v4764 = vunpack.c.l.b16 %v4597
        %v4765 = vunpack.c.h.b16 %v4597
        %v4766 = vunpack.c.l.b16 %v4598
        %v4767 = vunpack.c.h.b16 %v4598
        %v4768 = vunpack.c.l.b16 %v4599
        %v4769 = vunpack.c.h.b16 %v4599
        %v4770 = vunpack.c.l.b16 %v4600
        %v4771 = vunpack.c.h.b16 %v4600
        %v4772 = vunpack.c.l.b16 %v4601
        %v4773 = vunpack.c.h.b16 %v4601
        %v4774 = vunpack.c.l.b16 %v4602
        %v4775 = vunpack.c.h.b16 %v4602
        %v4776 = vpack.c.b16 %v4746, %v4744
        %v4777 = vpack.c.b16 %v4747, %v4745
        %v4778 = vpack.c.b16 %v4750, %v4748
        %v4779 = vpack.c.b16 %v4751, %v4749
        %v4780 = vpack.c.b16 %v4754, %v4752
        %v4781 = vpack.c.b16 %v4755, %v4753
        %v4782 = vpack.c.b16 %v4758, %v4756
        %v4783 = vpack.c.b16 %v4759, %v4757
        %v4784 = vpack.c.b16 %v4762, %v4760
        %v4785 = vpack.c.b16 %v4763, %v4761
        %v4786 = vpack.c.b16 %v4766, %v4764
        %v4787 = vpack.c.b16 %v4767, %v4765
        %v4788 = vpack.c.b16 %v4770, %v4768
        %v4789 = vpack.c.b16 %v4771, %v4769
        %v4790 = vpack.c.b16 %v4774, %v4772
        %v4791 = vpack.c.b16 %v4775, %v4773
        %4808 = vmatpush.bf16.msra.mxu0 %v4790
        %4809 = vmatpush.bf16.msra.mxu0 %v4788
        %4810 = vmatpush.bf16.msra.mxu0 %v4786
        %4811 = vmatpush.bf16.msra.mxu0 %v4784
        %4812 = vmatpush.bf16.msra.mxu0 %v4782
        %4813 = vmatpush.bf16.msra.mxu0 %v4780
        %4814 = vmatpush.bf16.msra.mxu0 %v4778
        %4815 = vmatpush.bf16.msra.mxu0 %v4776
        %4816 = vmatmul.bf16.gmra.mxu0 %v4586
        %v4817 = vpop.f32.mrf.mxu0
        %v4818 = vadd.f32 %v4712, %v4817
        %v4819 = vpop.f32.mrf.mxu0
        %4820 = vdwg.mxu0
        %4821 = vmatpush.bf16.msra.mxu0 %v4791
        %4822 = vmatpush.bf16.msra.mxu0 %v4789
        %4823 = vmatpush.bf16.msra.mxu0 %v4787
        %4824 = vmatpush.bf16.msra.mxu0 %v4785
        %4825 = vmatpush.bf16.msra.mxu0 %v4783
        %4826 = vmatpush.bf16.msra.mxu0 %v4781
        %4827 = vmatpush.bf16.msra.mxu0 %v4779
        %4828 = vmatpush.bf16.msra.mxu0 %v4777
        %4829 = vmatmul.bf16.gmra.mxu0 %v4586
        %v4830 = vpop.f32.mrf.mxu0
        %v4831 = vadd.f32 %v4725, %v4830
        %v4832 = vpop.f32.mrf.mxu0
        %4833 = vdwg.mxu0
        %v4834 = vld [vmem:[#allocation4 + $0x2] sm:$0x7]
        %v4835 = vpack.c.bf16 %v4834, %v4834
        %s4836 = scalar_lea.vmem [#allocation11], 256
        %v4837 = vld [vmem:[%s4836] sm:$0xff]
        %v4838 = vld [vmem:[%s4836 + $0x8] sm:$0xff]
        %v4839 = vld [vmem:[%s4836 + $0x10] sm:$0xff]
        %v4840 = vld [vmem:[%s4836 + $0x18] sm:$0xff]
        %v4841 = vld [vmem:[%s4836 + $0x20] sm:$0xff]
        %v4842 = vld [vmem:[%s4836 + $0x28] sm:$0xff]
        %v4843 = vld [vmem:[%s4836 + $0x30] sm:$0xff]
        %v4844 = vld [vmem:[%s4836 + $0x38] sm:$0xff]
        %v4845 = vld [vmem:[%s4836 + $0x40] sm:$0xff]
        %v4846 = vld [vmem:[%s4836 + $0x48] sm:$0xff]
        %v4847 = vld [vmem:[%s4836 + $0x50] sm:$0xff]
        %v4848 = vld [vmem:[%s4836 + $0x58] sm:$0xff]
        %v4849 = vld [vmem:[%s4836 + $0x60] sm:$0xff]
        %v4850 = vld [vmem:[%s4836 + $0x68] sm:$0xff]
        %v4851 = vld [vmem:[%s4836 + $0x70] sm:$0xff]
        %v4852 = vld [vmem:[%s4836 + $0x78] sm:$0xff]
        %v4869 = vunpack.c.l.b16 %v4837
        %v4870 = vunpack.c.h.b16 %v4837
        %v4871 = vunpack.c.l.b16 %v4838
        %v4872 = vunpack.c.h.b16 %v4838
        %v4873 = vunpack.c.l.b16 %v4839
        %v4874 = vunpack.c.h.b16 %v4839
        %v4875 = vunpack.c.l.b16 %v4840
        %v4876 = vunpack.c.h.b16 %v4840
        %v4877 = vunpack.c.l.b16 %v4841
        %v4878 = vunpack.c.h.b16 %v4841
        %v4879 = vunpack.c.l.b16 %v4842
        %v4880 = vunpack.c.h.b16 %v4842
        %v4881 = vunpack.c.l.b16 %v4843
        %v4882 = vunpack.c.h.b16 %v4843
        %v4883 = vunpack.c.l.b16 %v4844
        %v4884 = vunpack.c.h.b16 %v4844
        %v4885 = vunpack.c.l.b16 %v4845
        %v4886 = vunpack.c.h.b16 %v4845
        %v4887 = vunpack.c.l.b16 %v4846
        %v4888 = vunpack.c.h.b16 %v4846
        %v4889 = vunpack.c.l.b16 %v4847
        %v4890 = vunpack.c.h.b16 %v4847
        %v4891 = vunpack.c.l.b16 %v4848
        %v4892 = vunpack.c.h.b16 %v4848
        %v4893 = vunpack.c.l.b16 %v4849
        %v4894 = vunpack.c.h.b16 %v4849
        %v4895 = vunpack.c.l.b16 %v4850
        %v4896 = vunpack.c.h.b16 %v4850
        %v4897 = vunpack.c.l.b16 %v4851
        %v4898 = vunpack.c.h.b16 %v4851
        %v4899 = vunpack.c.l.b16 %v4852
        %v4900 = vunpack.c.h.b16 %v4852
        %v4901 = vpack.c.b16 %v4871, %v4869
        %v4902 = vpack.c.b16 %v4872, %v4870
        %v4903 = vpack.c.b16 %v4875, %v4873
        %v4904 = vpack.c.b16 %v4876, %v4874
        %v4905 = vpack.c.b16 %v4879, %v4877
        %v4906 = vpack.c.b16 %v4880, %v4878
        %v4907 = vpack.c.b16 %v4883, %v4881
        %v4908 = vpack.c.b16 %v4884, %v4882
        %v4909 = vpack.c.b16 %v4887, %v4885
        %v4910 = vpack.c.b16 %v4888, %v4886
        %v4911 = vpack.c.b16 %v4891, %v4889
        %v4912 = vpack.c.b16 %v4892, %v4890
        %v4913 = vpack.c.b16 %v4895, %v4893
        %v4914 = vpack.c.b16 %v4896, %v4894
        %v4915 = vpack.c.b16 %v4899, %v4897
        %v4916 = vpack.c.b16 %v4900, %v4898
        %4933 = vmatpush.bf16.msra.mxu0 %v4915
        %4934 = vmatpush.bf16.msra.mxu0 %v4913
        %4935 = vmatpush.bf16.msra.mxu0 %v4911
        %4936 = vmatpush.bf16.msra.mxu0 %v4909
        %4937 = vmatpush.bf16.msra.mxu0 %v4907
        %4938 = vmatpush.bf16.msra.mxu0 %v4905
        %4939 = vmatpush.bf16.msra.mxu0 %v4903
        %4940 = vmatpush.bf16.msra.mxu0 %v4901
        %4941 = vmatmul.bf16.gmra.mxu0 %v4835
        %v4942 = vpop.f32.mrf.mxu0
        %v4943 = vadd.f32 0.0, %v4942
        %v4944 = vpop.f32.mrf.mxu0
        %4945 = vdwg.mxu0
        %4946 = vmatpush.bf16.msra.mxu0 %v4916
        %4947 = vmatpush.bf16.msra.mxu0 %v4914
        %4948 = vmatpush.bf16.msra.mxu0 %v4912
        %4949 = vmatpush.bf16.msra.mxu0 %v4910
        %4950 = vmatpush.bf16.msra.mxu0 %v4908
        %4951 = vmatpush.bf16.msra.mxu0 %v4906
        %4952 = vmatpush.bf16.msra.mxu0 %v4904
        %4953 = vmatpush.bf16.msra.mxu0 %v4902
        %4954 = vmatmul.bf16.gmra.mxu0 %v4835
        %v4955 = vpop.f32.mrf.mxu0
        %v4956 = vadd.f32 0.0, %v4955
        %v4957 = vpop.f32.mrf.mxu0
        %4958 = vdwg.mxu0
        %v4959 = vadd.f32 %v4818, %v4943
        %v4960 = vadd.f32 %v4831, %v4956
        %v4961 = vld [vmem:[#allocation4 + $0x3] sm:$0x7]
        %v4962 = vpack.c.bf16 %v4961, %v4961
        %s4963 = scalar_lea.vmem [#allocation11], 384
        %v4964 = vld [vmem:[%s4963] sm:$0xff]
        %v4965 = vld [vmem:[%s4963 + $0x8] sm:$0xff]
        %v4966 = vld [vmem:[%s4963 + $0x10] sm:$0xff]
        %v4967 = vld [vmem:[%s4963 + $0x18] sm:$0xff]
        %v4968 = vld [vmem:[%s4963 + $0x20] sm:$0xff]
        %v4969 = vld [vmem:[%s4963 + $0x28] sm:$0xff]
        %v4970 = vld [vmem:[%s4963 + $0x30] sm:$0xff]
        %v4971 = vld [vmem:[%s4963 + $0x38] sm:$0xff]
        %v4972 = vld [vmem:[%s4963 + $0x40] sm:$0xff]
        %v4973 = vld [vmem:[%s4963 + $0x48] sm:$0xff]
        %v4974 = vld [vmem:[%s4963 + $0x50] sm:$0xff]
        %v4975 = vld [vmem:[%s4963 + $0x58] sm:$0xff]
        %v4976 = vld [vmem:[%s4963 + $0x60] sm:$0xff]
        %v4977 = vld [vmem:[%s4963 + $0x68] sm:$0xff]
        %v4978 = vld [vmem:[%s4963 + $0x70] sm:$0xff]
        %v4979 = vld [vmem:[%s4963 + $0x78] sm:$0xff]
        %v4996 = vunpack.c.l.b16 %v4964
        %v4997 = vunpack.c.h.b16 %v4964
        %v4998 = vunpack.c.l.b16 %v4965
        %v4999 = vunpack.c.h.b16 %v4965
        %v5000 = vunpack.c.l.b16 %v4966
        %v5001 = vunpack.c.h.b16 %v4966
        %v5002 = vunpack.c.l.b16 %v4967
        %v5003 = vunpack.c.h.b16 %v4967
        %v5004 = vunpack.c.l.b16 %v4968
        %v5005 = vunpack.c.h.b16 %v4968
        %v5006 = vunpack.c.l.b16 %v4969
        %v5007 = vunpack.c.h.b16 %v4969
        %v5008 = vunpack.c.l.b16 %v4970
        %v5009 = vunpack.c.h.b16 %v4970
        %v5010 = vunpack.c.l.b16 %v4971
        %v5011 = vunpack.c.h.b16 %v4971
        %v5012 = vunpack.c.l.b16 %v4972
        %v5013 = vunpack.c.h.b16 %v4972
        %v5014 = vunpack.c.l.b16 %v4973
        %v5015 = vunpack.c.h.b16 %v4973
        %v5016 = vunpack.c.l.b16 %v4974
        %v5017 = vunpack.c.h.b16 %v4974
        %v5018 = vunpack.c.l.b16 %v4975
        %v5019 = vunpack.c.h.b16 %v4975
        %v5020 = vunpack.c.l.b16 %v4976
        %v5021 = vunpack.c.h.b16 %v4976
        %v5022 = vunpack.c.l.b16 %v4977
        %v5023 = vunpack.c.h.b16 %v4977
        %v5024 = vunpack.c.l.b16 %v4978
        %v5025 = vunpack.c.h.b16 %v4978
        %v5026 = vunpack.c.l.b16 %v4979
        %v5027 = vunpack.c.h.b16 %v4979
        %v5028 = vpack.c.b16 %v4998, %v4996
        %v5029 = vpack.c.b16 %v4999, %v4997
        %v5030 = vpack.c.b16 %v5002, %v5000
        %v5031 = vpack.c.b16 %v5003, %v5001
        %v5032 = vpack.c.b16 %v5006, %v5004
        %v5033 = vpack.c.b16 %v5007, %v5005
        %v5034 = vpack.c.b16 %v5010, %v5008
        %v5035 = vpack.c.b16 %v5011, %v5009
        %v5036 = vpack.c.b16 %v5014, %v5012
        %v5037 = vpack.c.b16 %v5015, %v5013
        %v5038 = vpack.c.b16 %v5018, %v5016
        %v5039 = vpack.c.b16 %v5019, %v5017
        %v5040 = vpack.c.b16 %v5022, %v5020
        %v5041 = vpack.c.b16 %v5023, %v5021
        %v5042 = vpack.c.b16 %v5026, %v5024
        %v5043 = vpack.c.b16 %v5027, %v5025
        %5060 = vmatpush.bf16.msra.mxu0 %v5042
        %5061 = vmatpush.bf16.msra.mxu0 %v5040
        %5062 = vmatpush.bf16.msra.mxu0 %v5038
        %5063 = vmatpush.bf16.msra.mxu0 %v5036
        %5064 = vmatpush.bf16.msra.mxu0 %v5034
        %5065 = vmatpush.bf16.msra.mxu0 %v5032
        %5066 = vmatpush.bf16.msra.mxu0 %v5030
        %5067 = vmatpush.bf16.msra.mxu0 %v5028
        %5068 = vmatmul.bf16.gmra.mxu0 %v4962
        %v5069 = vpop.f32.mrf.mxu0
        %v5070 = vadd.f32 0.0, %v5069
        %v5071 = vpop.f32.mrf.mxu0
        %5072 = vdwg.mxu0
        %5073 = vmatpush.bf16.msra.mxu0 %v5043
        %5074 = vmatpush.bf16.msra.mxu0 %v5041
        %5075 = vmatpush.bf16.msra.mxu0 %v5039
        %5076 = vmatpush.bf16.msra.mxu0 %v5037
        %5077 = vmatpush.bf16.msra.mxu0 %v5035
        %5078 = vmatpush.bf16.msra.mxu0 %v5033
        %5079 = vmatpush.bf16.msra.mxu0 %v5031
        %5080 = vmatpush.bf16.msra.mxu0 %v5029
        %5081 = vmatmul.bf16.gmra.mxu0 %v4962
        %v5082 = vpop.f32.mrf.mxu0
        %v5083 = vadd.f32 0.0, %v5082
        %v5084 = vpop.f32.mrf.mxu0
        %5085 = vdwg.mxu0
        %v5086 = vadd.f32 %v4959, %v5070
        %v5087 = vadd.f32 %v4960, %v5083
        %v5088 = vld [vmem:[#allocation4 + $0x4] sm:$0x7]
        %v5089 = vpack.c.bf16 %v5088, %v5088
        %s5090 = scalar_lea.vmem [#allocation11], 512
        %v5091 = vld [vmem:[%s5090] sm:$0xff]
        %v5092 = vld [vmem:[%s5090 + $0x8] sm:$0xff]
        %v5093 = vld [vmem:[%s5090 + $0x10] sm:$0xff]
        %v5094 = vld [vmem:[%s5090 + $0x18] sm:$0xff]
        %v5095 = vld [vmem:[%s5090 + $0x20] sm:$0xff]
        %v5096 = vld [vmem:[%s5090 + $0x28] sm:$0xff]
        %v5097 = vld [vmem:[%s5090 + $0x30] sm:$0xff]
        %v5098 = vld [vmem:[%s5090 + $0x38] sm:$0xff]
        %v5099 = vld [vmem:[%s5090 + $0x40] sm:$0xff]
        %v5100 = vld [vmem:[%s5090 + $0x48] sm:$0xff]
        %v5101 = vld [vmem:[%s5090 + $0x50] sm:$0xff]
        %v5102 = vld [vmem:[%s5090 + $0x58] sm:$0xff]
        %v5103 = vld [vmem:[%s5090 + $0x60] sm:$0xff]
        %v5104 = vld [vmem:[%s5090 + $0x68] sm:$0xff]
        %v5105 = vld [vmem:[%s5090 + $0x70] sm:$0xff]
        %v5106 = vld [vmem:[%s5090 + $0x78] sm:$0xff]
        %v5123 = vunpack.c.l.b16 %v5091
        %v5124 = vunpack.c.h.b16 %v5091
        %v5125 = vunpack.c.l.b16 %v5092
        %v5126 = vunpack.c.h.b16 %v5092
        %v5127 = vunpack.c.l.b16 %v5093
        %v5128 = vunpack.c.h.b16 %v5093
        %v5129 = vunpack.c.l.b16 %v5094
        %v5130 = vunpack.c.h.b16 %v5094
        %v5131 = vunpack.c.l.b16 %v5095
        %v5132 = vunpack.c.h.b16 %v5095
        %v5133 = vunpack.c.l.b16 %v5096
        %v5134 = vunpack.c.h.b16 %v5096
        %v5135 = vunpack.c.l.b16 %v5097
        %v5136 = vunpack.c.h.b16 %v5097
        %v5137 = vunpack.c.l.b16 %v5098
        %v5138 = vunpack.c.h.b16 %v5098
        %v5139 = vunpack.c.l.b16 %v5099
        %v5140 = vunpack.c.h.b16 %v5099
        %v5141 = vunpack.c.l.b16 %v5100
        %v5142 = vunpack.c.h.b16 %v5100
        %v5143 = vunpack.c.l.b16 %v5101
        %v5144 = vunpack.c.h.b16 %v5101
        %v5145 = vunpack.c.l.b16 %v5102
        %v5146 = vunpack.c.h.b16 %v5102
        %v5147 = vunpack.c.l.b16 %v5103
        %v5148 = vunpack.c.h.b16 %v5103
        %v5149 = vunpack.c.l.b16 %v5104
        %v5150 = vunpack.c.h.b16 %v5104
        %v5151 = vunpack.c.l.b16 %v5105
        %v5152 = vunpack.c.h.b16 %v5105
        %v5153 = vunpack.c.l.b16 %v5106
        %v5154 = vunpack.c.h.b16 %v5106
        %v5155 = vpack.c.b16 %v5125, %v5123
        %v5156 = vpack.c.b16 %v5126, %v5124
        %v5157 = vpack.c.b16 %v5129, %v5127
        %v5158 = vpack.c.b16 %v5130, %v5128
        %v5159 = vpack.c.b16 %v5133, %v5131
        %v5160 = vpack.c.b16 %v5134, %v5132
        %v5161 = vpack.c.b16 %v5137, %v5135
        %v5162 = vpack.c.b16 %v5138, %v5136
        %v5163 = vpack.c.b16 %v5141, %v5139
        %v5164 = vpack.c.b16 %v5142, %v5140
        %v5165 = vpack.c.b16 %v5145, %v5143
        %v5166 = vpack.c.b16 %v5146, %v5144
        %v5167 = vpack.c.b16 %v5149, %v5147
        %v5168 = vpack.c.b16 %v5150, %v5148
        %v5169 = vpack.c.b16 %v5153, %v5151
        %v5170 = vpack.c.b16 %v5154, %v5152
        %5187 = vmatpush.bf16.msra.mxu0 %v5169
        %5188 = vmatpush.bf16.msra.mxu0 %v5167
        %5189 = vmatpush.bf16.msra.mxu0 %v5165
        %5190 = vmatpush.bf16.msra.mxu0 %v5163
        %5191 = vmatpush.bf16.msra.mxu0 %v5161
        %5192 = vmatpush.bf16.msra.mxu0 %v5159
        %5193 = vmatpush.bf16.msra.mxu0 %v5157
        %5194 = vmatpush.bf16.msra.mxu0 %v5155
        %5195 = vmatmul.bf16.gmra.mxu0 %v5089
        %v5196 = vpop.f32.mrf.mxu0
        %v5197 = vadd.f32 0.0, %v5196
        %v5198 = vpop.f32.mrf.mxu0
        %5199 = vdwg.mxu0
        %5200 = vmatpush.bf16.msra.mxu0 %v5170
        %5201 = vmatpush.bf16.msra.mxu0 %v5168
        %5202 = vmatpush.bf16.msra.mxu0 %v5166
        %5203 = vmatpush.bf16.msra.mxu0 %v5164
        %5204 = vmatpush.bf16.msra.mxu0 %v5162
        %5205 = vmatpush.bf16.msra.mxu0 %v5160
        %5206 = vmatpush.bf16.msra.mxu0 %v5158
        %5207 = vmatpush.bf16.msra.mxu0 %v5156
        %5208 = vmatmul.bf16.gmra.mxu0 %v5089
        %v5209 = vpop.f32.mrf.mxu0
        %v5210 = vadd.f32 0.0, %v5209
        %v5211 = vpop.f32.mrf.mxu0
        %5212 = vdwg.mxu0
        %v5213 = vadd.f32 %v5086, %v5197
        %v5214 = vadd.f32 %v5087, %v5210
        %v5215 = vld [vmem:[#allocation4 + $0x5] sm:$0x7]
        %v5216 = vpack.c.bf16 %v5215, %v5215
        %s5217 = scalar_lea.vmem [#allocation11], 640
        %v5218 = vld [vmem:[%s5217] sm:$0xff]
        %v5219 = vld [vmem:[%s5217 + $0x8] sm:$0xff]
        %v5220 = vld [vmem:[%s5217 + $0x10] sm:$0xff]
        %v5221 = vld [vmem:[%s5217 + $0x18] sm:$0xff]
        %v5222 = vld [vmem:[%s5217 + $0x20] sm:$0xff]
        %v5223 = vld [vmem:[%s5217 + $0x28] sm:$0xff]
        %v5224 = vld [vmem:[%s5217 + $0x30] sm:$0xff]
        %v5225 = vld [vmem:[%s5217 + $0x38] sm:$0xff]
        %v5226 = vld [vmem:[%s5217 + $0x40] sm:$0xff]
        %v5227 = vld [vmem:[%s5217 + $0x48] sm:$0xff]
        %v5228 = vld [vmem:[%s5217 + $0x50] sm:$0xff]
        %v5229 = vld [vmem:[%s5217 + $0x58] sm:$0xff]
        %v5230 = vld [vmem:[%s5217 + $0x60] sm:$0xff]
        %v5231 = vld [vmem:[%s5217 + $0x68] sm:$0xff]
        %v5232 = vld [vmem:[%s5217 + $0x70] sm:$0xff]
        %v5233 = vld [vmem:[%s5217 + $0x78] sm:$0xff]
        %v5250 = vunpack.c.l.b16 %v5218
        %v5251 = vunpack.c.h.b16 %v5218
        %v5252 = vunpack.c.l.b16 %v5219
        %v5253 = vunpack.c.h.b16 %v5219
        %v5254 = vunpack.c.l.b16 %v5220
        %v5255 = vunpack.c.h.b16 %v5220
        %v5256 = vunpack.c.l.b16 %v5221
        %v5257 = vunpack.c.h.b16 %v5221
        %v5258 = vunpack.c.l.b16 %v5222
        %v5259 = vunpack.c.h.b16 %v5222
        %v5260 = vunpack.c.l.b16 %v5223
        %v5261 = vunpack.c.h.b16 %v5223
        %v5262 = vunpack.c.l.b16 %v5224
        %v5263 = vunpack.c.h.b16 %v5224
        %v5264 = vunpack.c.l.b16 %v5225
        %v5265 = vunpack.c.h.b16 %v5225
        %v5266 = vunpack.c.l.b16 %v5226
        %v5267 = vunpack.c.h.b16 %v5226
        %v5268 = vunpack.c.l.b16 %v5227
        %v5269 = vunpack.c.h.b16 %v5227
        %v5270 = vunpack.c.l.b16 %v5228
        %v5271 = vunpack.c.h.b16 %v5228
        %v5272 = vunpack.c.l.b16 %v5229
        %v5273 = vunpack.c.h.b16 %v5229
        %v5274 = vunpack.c.l.b16 %v5230
        %v5275 = vunpack.c.h.b16 %v5230
        %v5276 = vunpack.c.l.b16 %v5231
        %v5277 = vunpack.c.h.b16 %v5231
        %v5278 = vunpack.c.l.b16 %v5232
        %v5279 = vunpack.c.h.b16 %v5232
        %v5280 = vunpack.c.l.b16 %v5233
        %v5281 = vunpack.c.h.b16 %v5233
        %v5282 = vpack.c.b16 %v5252, %v5250
        %v5283 = vpack.c.b16 %v5253, %v5251
        %v5284 = vpack.c.b16 %v5256, %v5254
        %v5285 = vpack.c.b16 %v5257, %v5255
        %v5286 = vpack.c.b16 %v5260, %v5258
        %v5287 = vpack.c.b16 %v5261, %v5259
        %v5288 = vpack.c.b16 %v5264, %v5262
        %v5289 = vpack.c.b16 %v5265, %v5263
        %v5290 = vpack.c.b16 %v5268, %v5266
        %v5291 = vpack.c.b16 %v5269, %v5267
        %v5292 = vpack.c.b16 %v5272, %v5270
        %v5293 = vpack.c.b16 %v5273, %v5271
        %v5294 = vpack.c.b16 %v5276, %v5274
        %v5295 = vpack.c.b16 %v5277, %v5275
        %v5296 = vpack.c.b16 %v5280, %v5278
        %v5297 = vpack.c.b16 %v5281, %v5279
        %5314 = vmatpush.bf16.msra.mxu0 %v5296
        %5315 = vmatpush.bf16.msra.mxu0 %v5294
        %5316 = vmatpush.bf16.msra.mxu0 %v5292
        %5317 = vmatpush.bf16.msra.mxu0 %v5290
        %5318 = vmatpush.bf16.msra.mxu0 %v5288
        %5319 = vmatpush.bf16.msra.mxu0 %v5286
        %5320 = vmatpush.bf16.msra.mxu0 %v5284
        %5321 = vmatpush.bf16.msra.mxu0 %v5282
        %5322 = vmatmul.bf16.gmra.mxu0 %v5216
        %v5323 = vpop.f32.mrf.mxu0
        %v5324 = vadd.f32 0.0, %v5323
        %v5325 = vpop.f32.mrf.mxu0
        %5326 = vdwg.mxu0
        %5327 = vmatpush.bf16.msra.mxu0 %v5297
        %5328 = vmatpush.bf16.msra.mxu0 %v5295
        %5329 = vmatpush.bf16.msra.mxu0 %v5293
        %5330 = vmatpush.bf16.msra.mxu0 %v5291
        %5331 = vmatpush.bf16.msra.mxu0 %v5289
        %5332 = vmatpush.bf16.msra.mxu0 %v5287
        %5333 = vmatpush.bf16.msra.mxu0 %v5285
        %5334 = vmatpush.bf16.msra.mxu0 %v5283
        %5335 = vmatmul.bf16.gmra.mxu0 %v5216
        %v5336 = vpop.f32.mrf.mxu0
        %v5337 = vadd.f32 0.0, %v5336
        %v5338 = vpop.f32.mrf.mxu0
        %5339 = vdwg.mxu0
        %v5340 = vadd.f32 %v5213, %v5324
        %v5341 = vadd.f32 %v5214, %v5337
        %v5342 = vld [vmem:[#allocation4 + $0x6] sm:$0x7]
        %v5343 = vpack.c.bf16 %v5342, %v5342
        %s5344 = scalar_lea.vmem [#allocation11], 768
        %v5345 = vld [vmem:[%s5344] sm:$0xff]
        %v5346 = vld [vmem:[%s5344 + $0x8] sm:$0xff]
        %v5347 = vld [vmem:[%s5344 + $0x10] sm:$0xff]
        %v5348 = vld [vmem:[%s5344 + $0x18] sm:$0xff]
        %v5349 = vld [vmem:[%s5344 + $0x20] sm:$0xff]
        %v5350 = vld [vmem:[%s5344 + $0x28] sm:$0xff]
        %v5351 = vld [vmem:[%s5344 + $0x30] sm:$0xff]
        %v5352 = vld [vmem:[%s5344 + $0x38] sm:$0xff]
        %v5353 = vld [vmem:[%s5344 + $0x40] sm:$0xff]
        %v5354 = vld [vmem:[%s5344 + $0x48] sm:$0xff]
        %v5355 = vld [vmem:[%s5344 + $0x50] sm:$0xff]
        %v5356 = vld [vmem:[%s5344 + $0x58] sm:$0xff]
        %v5357 = vld [vmem:[%s5344 + $0x60] sm:$0xff]
        %v5358 = vld [vmem:[%s5344 + $0x68] sm:$0xff]
        %v5359 = vld [vmem:[%s5344 + $0x70] sm:$0xff]
        %v5360 = vld [vmem:[%s5344 + $0x78] sm:$0xff]
        %v5377 = vunpack.c.l.b16 %v5345
        %v5378 = vunpack.c.h.b16 %v5345
        %v5379 = vunpack.c.l.b16 %v5346
        %v5380 = vunpack.c.h.b16 %v5346
        %v5381 = vunpack.c.l.b16 %v5347
        %v5382 = vunpack.c.h.b16 %v5347
        %v5383 = vunpack.c.l.b16 %v5348
        %v5384 = vunpack.c.h.b16 %v5348
        %v5385 = vunpack.c.l.b16 %v5349
        %v5386 = vunpack.c.h.b16 %v5349
        %v5387 = vunpack.c.l.b16 %v5350
        %v5388 = vunpack.c.h.b16 %v5350
        %v5389 = vunpack.c.l.b16 %v5351
        %v5390 = vunpack.c.h.b16 %v5351
        %v5391 = vunpack.c.l.b16 %v5352
        %v5392 = vunpack.c.h.b16 %v5352
        %v5393 = vunpack.c.l.b16 %v5353
        %v5394 = vunpack.c.h.b16 %v5353
        %v5395 = vunpack.c.l.b16 %v5354
        %v5396 = vunpack.c.h.b16 %v5354
        %v5397 = vunpack.c.l.b16 %v5355
        %v5398 = vunpack.c.h.b16 %v5355
        %v5399 = vunpack.c.l.b16 %v5356
        %v5400 = vunpack.c.h.b16 %v5356
        %v5401 = vunpack.c.l.b16 %v5357
        %v5402 = vunpack.c.h.b16 %v5357
        %v5403 = vunpack.c.l.b16 %v5358
        %v5404 = vunpack.c.h.b16 %v5358
        %v5405 = vunpack.c.l.b16 %v5359
        %v5406 = vunpack.c.h.b16 %v5359
        %v5407 = vunpack.c.l.b16 %v5360
        %v5408 = vunpack.c.h.b16 %v5360
        %v5409 = vpack.c.b16 %v5379, %v5377
        %v5410 = vpack.c.b16 %v5380, %v5378
        %v5411 = vpack.c.b16 %v5383, %v5381
        %v5412 = vpack.c.b16 %v5384, %v5382
        %v5413 = vpack.c.b16 %v5387, %v5385
        %v5414 = vpack.c.b16 %v5388, %v5386
        %v5415 = vpack.c.b16 %v5391, %v5389
        %v5416 = vpack.c.b16 %v5392, %v5390
        %v5417 = vpack.c.b16 %v5395, %v5393
        %v5418 = vpack.c.b16 %v5396, %v5394
        %v5419 = vpack.c.b16 %v5399, %v5397
        %v5420 = vpack.c.b16 %v5400, %v5398
        %v5421 = vpack.c.b16 %v5403, %v5401
        %v5422 = vpack.c.b16 %v5404, %v5402
        %v5423 = vpack.c.b16 %v5407, %v5405
        %v5424 = vpack.c.b16 %v5408, %v5406
        %5441 = vmatpush.bf16.msra.mxu0 %v5423
        %5442 = vmatpush.bf16.msra.mxu0 %v5421
        %5443 = vmatpush.bf16.msra.mxu0 %v5419
        %5444 = vmatpush.bf16.msra.mxu0 %v5417
        %5445 = vmatpush.bf16.msra.mxu0 %v5415
        %5446 = vmatpush.bf16.msra.mxu0 %v5413
        %5447 = vmatpush.bf16.msra.mxu0 %v5411
        %5448 = vmatpush.bf16.msra.mxu0 %v5409
        %5449 = vmatmul.bf16.gmra.mxu0 %v5343
        %v5450 = vpop.f32.mrf.mxu0
        %v5451 = vadd.f32 0.0, %v5450
        %v5452 = vpop.f32.mrf.mxu0
        %5453 = vdwg.mxu0
        %5454 = vmatpush.bf16.msra.mxu0 %v5424
        %5455 = vmatpush.bf16.msra.mxu0 %v5422
        %5456 = vmatpush.bf16.msra.mxu0 %v5420
        %5457 = vmatpush.bf16.msra.mxu0 %v5418
        %5458 = vmatpush.bf16.msra.mxu0 %v5416
        %5459 = vmatpush.bf16.msra.mxu0 %v5414
        %5460 = vmatpush.bf16.msra.mxu0 %v5412
        %5461 = vmatpush.bf16.msra.mxu0 %v5410
        %5462 = vmatmul.bf16.gmra.mxu0 %v5343
        %v5463 = vpop.f32.mrf.mxu0
        %v5464 = vadd.f32 0.0, %v5463
        %v5465 = vpop.f32.mrf.mxu0
        %5466 = vdwg.mxu0
        %v5467 = vadd.f32 %v5340, %v5451
        %v5468 = vadd.f32 %v5341, %v5464
        %v5469 = vld [vmem:[#allocation4 + $0x7] sm:$0x7]
        %v5470 = vpack.c.bf16 %v5469, %v5469
        %s5471 = scalar_lea.vmem [#allocation11], 896
        %v5472 = vld [vmem:[%s5471] sm:$0xff]
        %v5473 = vld [vmem:[%s5471 + $0x8] sm:$0xff]
        %v5474 = vld [vmem:[%s5471 + $0x10] sm:$0xff]
        %v5475 = vld [vmem:[%s5471 + $0x18] sm:$0xff]
        %v5476 = vld [vmem:[%s5471 + $0x20] sm:$0xff]
        %v5477 = vld [vmem:[%s5471 + $0x28] sm:$0xff]
        %v5478 = vld [vmem:[%s5471 + $0x30] sm:$0xff]
        %v5479 = vld [vmem:[%s5471 + $0x38] sm:$0xff]
        %v5480 = vld [vmem:[%s5471 + $0x40] sm:$0xff]
        %v5481 = vld [vmem:[%s5471 + $0x48] sm:$0xff]
        %v5482 = vld [vmem:[%s5471 + $0x50] sm:$0xff]
        %v5483 = vld [vmem:[%s5471 + $0x58] sm:$0xff]
        %v5484 = vld [vmem:[%s5471 + $0x60] sm:$0xff]
        %v5485 = vld [vmem:[%s5471 + $0x68] sm:$0xff]
        %v5486 = vld [vmem:[%s5471 + $0x70] sm:$0xff]
        %v5487 = vld [vmem:[%s5471 + $0x78] sm:$0xff]
        %v5504 = vunpack.c.l.b16 %v5472
        %v5505 = vunpack.c.h.b16 %v5472
        %v5506 = vunpack.c.l.b16 %v5473
        %v5507 = vunpack.c.h.b16 %v5473
        %v5508 = vunpack.c.l.b16 %v5474
        %v5509 = vunpack.c.h.b16 %v5474
        %v5510 = vunpack.c.l.b16 %v5475
        %v5511 = vunpack.c.h.b16 %v5475
        %v5512 = vunpack.c.l.b16 %v5476
        %v5513 = vunpack.c.h.b16 %v5476
        %v5514 = vunpack.c.l.b16 %v5477
        %v5515 = vunpack.c.h.b16 %v5477
        %v5516 = vunpack.c.l.b16 %v5478
        %v5517 = vunpack.c.h.b16 %v5478
        %v5518 = vunpack.c.l.b16 %v5479
        %v5519 = vunpack.c.h.b16 %v5479
        %v5520 = vunpack.c.l.b16 %v5480
        %v5521 = vunpack.c.h.b16 %v5480
        %v5522 = vunpack.c.l.b16 %v5481
        %v5523 = vunpack.c.h.b16 %v5481
        %v5524 = vunpack.c.l.b16 %v5482
        %v5525 = vunpack.c.h.b16 %v5482
        %v5526 = vunpack.c.l.b16 %v5483
        %v5527 = vunpack.c.h.b16 %v5483
        %v5528 = vunpack.c.l.b16 %v5484
        %v5529 = vunpack.c.h.b16 %v5484
        %v5530 = vunpack.c.l.b16 %v5485
        %v5531 = vunpack.c.h.b16 %v5485
        %v5532 = vunpack.c.l.b16 %v5486
        %v5533 = vunpack.c.h.b16 %v5486
        %v5534 = vunpack.c.l.b16 %v5487
        %v5535 = vunpack.c.h.b16 %v5487
        %v5536 = vpack.c.b16 %v5506, %v5504
        %v5537 = vpack.c.b16 %v5507, %v5505
        %v5538 = vpack.c.b16 %v5510, %v5508
        %v5539 = vpack.c.b16 %v5511, %v5509
        %v5540 = vpack.c.b16 %v5514, %v5512
        %v5541 = vpack.c.b16 %v5515, %v5513
        %v5542 = vpack.c.b16 %v5518, %v5516
        %v5543 = vpack.c.b16 %v5519, %v5517
        %v5544 = vpack.c.b16 %v5522, %v5520
        %v5545 = vpack.c.b16 %v5523, %v5521
        %v5546 = vpack.c.b16 %v5526, %v5524
        %v5547 = vpack.c.b16 %v5527, %v5525
        %v5548 = vpack.c.b16 %v5530, %v5528
        %v5549 = vpack.c.b16 %v5531, %v5529
        %v5550 = vpack.c.b16 %v5534, %v5532
        %v5551 = vpack.c.b16 %v5535, %v5533
        %5568 = vmatpush.bf16.msra.mxu0 %v5550
        %5569 = vmatpush.bf16.msra.mxu0 %v5548
        %5570 = vmatpush.bf16.msra.mxu0 %v5546
        %5571 = vmatpush.bf16.msra.mxu0 %v5544
        %5572 = vmatpush.bf16.msra.mxu0 %v5542
        %5573 = vmatpush.bf16.msra.mxu0 %v5540
        %5574 = vmatpush.bf16.msra.mxu0 %v5538
        %5575 = vmatpush.bf16.msra.mxu0 %v5536
        %5576 = vmatmul.bf16.gmra.mxu0 %v5470
        %v5577 = vpop.f32.mrf.mxu0
        %v5578 = vadd.f32 0.0, %v5577
        %v5579 = vpop.f32.mrf.mxu0
        %5580 = vdwg.mxu0
        %5581 = vmatpush.bf16.msra.mxu0 %v5551
        %5582 = vmatpush.bf16.msra.mxu0 %v5549
        %5583 = vmatpush.bf16.msra.mxu0 %v5547
        %5584 = vmatpush.bf16.msra.mxu0 %v5545
        %5585 = vmatpush.bf16.msra.mxu0 %v5543
        %5586 = vmatpush.bf16.msra.mxu0 %v5541
        %5587 = vmatpush.bf16.msra.mxu0 %v5539
        %5588 = vmatpush.bf16.msra.mxu0 %v5537
        %5589 = vmatmul.bf16.gmra.mxu0 %v5470
        %v5590 = vpop.f32.mrf.mxu0
        %v5591 = vadd.f32 0.0, %v5590
        %v5592 = vpop.f32.mrf.mxu0
        %5593 = vdwg.mxu0
        %v5594 = vadd.f32 %v5467, %v5578
        %v5595 = vadd.f32 %v5468, %v5591
        %v5596 = vld [vmem:[#allocation4 + $0x8] sm:$0x7]
        %v5597 = vpack.c.bf16 %v5596, %v5596
        %s5598 = scalar_lea.vmem [#allocation11], 1024
        %v5599 = vld [vmem:[%s5598] sm:$0xff]
        %v5600 = vld [vmem:[%s5598 + $0x8] sm:$0xff]
        %v5601 = vld [vmem:[%s5598 + $0x10] sm:$0xff]
        %v5602 = vld [vmem:[%s5598 + $0x18] sm:$0xff]
        %v5603 = vld [vmem:[%s5598 + $0x20] sm:$0xff]
        %v5604 = vld [vmem:[%s5598 + $0x28] sm:$0xff]
        %v5605 = vld [vmem:[%s5598 + $0x30] sm:$0xff]
        %v5606 = vld [vmem:[%s5598 + $0x38] sm:$0xff]
        %v5607 = vld [vmem:[%s5598 + $0x40] sm:$0xff]
        %v5608 = vld [vmem:[%s5598 + $0x48] sm:$0xff]
        %v5609 = vld [vmem:[%s5598 + $0x50] sm:$0xff]
        %v5610 = vld [vmem:[%s5598 + $0x58] sm:$0xff]
        %v5611 = vld [vmem:[%s5598 + $0x60] sm:$0xff]
        %v5612 = vld [vmem:[%s5598 + $0x68] sm:$0xff]
        %v5613 = vld [vmem:[%s5598 + $0x70] sm:$0xff]
        %v5614 = vld [vmem:[%s5598 + $0x78] sm:$0xff]
        %v5631 = vunpack.c.l.b16 %v5599
        %v5632 = vunpack.c.h.b16 %v5599
        %v5633 = vunpack.c.l.b16 %v5600
        %v5634 = vunpack.c.h.b16 %v5600
        %v5635 = vunpack.c.l.b16 %v5601
        %v5636 = vunpack.c.h.b16 %v5601
        %v5637 = vunpack.c.l.b16 %v5602
        %v5638 = vunpack.c.h.b16 %v5602
        %v5639 = vunpack.c.l.b16 %v5603
        %v5640 = vunpack.c.h.b16 %v5603
        %v5641 = vunpack.c.l.b16 %v5604
        %v5642 = vunpack.c.h.b16 %v5604
        %v5643 = vunpack.c.l.b16 %v5605
        %v5644 = vunpack.c.h.b16 %v5605
        %v5645 = vunpack.c.l.b16 %v5606
        %v5646 = vunpack.c.h.b16 %v5606
        %v5647 = vunpack.c.l.b16 %v5607
        %v5648 = vunpack.c.h.b16 %v5607
        %v5649 = vunpack.c.l.b16 %v5608
        %v5650 = vunpack.c.h.b16 %v5608
        %v5651 = vunpack.c.l.b16 %v5609
        %v5652 = vunpack.c.h.b16 %v5609
        %v5653 = vunpack.c.l.b16 %v5610
        %v5654 = vunpack.c.h.b16 %v5610
        %v5655 = vunpack.c.l.b16 %v5611
        %v5656 = vunpack.c.h.b16 %v5611
        %v5657 = vunpack.c.l.b16 %v5612
        %v5658 = vunpack.c.h.b16 %v5612
        %v5659 = vunpack.c.l.b16 %v5613
        %v5660 = vunpack.c.h.b16 %v5613
        %v5661 = vunpack.c.l.b16 %v5614
        %v5662 = vunpack.c.h.b16 %v5614
        %v5663 = vpack.c.b16 %v5633, %v5631
        %v5664 = vpack.c.b16 %v5634, %v5632
        %v5665 = vpack.c.b16 %v5637, %v5635
        %v5666 = vpack.c.b16 %v5638, %v5636
        %v5667 = vpack.c.b16 %v5641, %v5639
        %v5668 = vpack.c.b16 %v5642, %v5640
        %v5669 = vpack.c.b16 %v5645, %v5643
        %v5670 = vpack.c.b16 %v5646, %v5644
        %v5671 = vpack.c.b16 %v5649, %v5647
        %v5672 = vpack.c.b16 %v5650, %v5648
        %v5673 = vpack.c.b16 %v5653, %v5651
        %v5674 = vpack.c.b16 %v5654, %v5652
        %v5675 = vpack.c.b16 %v5657, %v5655
        %v5676 = vpack.c.b16 %v5658, %v5656
        %v5677 = vpack.c.b16 %v5661, %v5659
        %v5678 = vpack.c.b16 %v5662, %v5660
        %5695 = vmatpush.bf16.msra.mxu0 %v5677
        %5696 = vmatpush.bf16.msra.mxu0 %v5675
        %5697 = vmatpush.bf16.msra.mxu0 %v5673
        %5698 = vmatpush.bf16.msra.mxu0 %v5671
        %5699 = vmatpush.bf16.msra.mxu0 %v5669
        %5700 = vmatpush.bf16.msra.mxu0 %v5667
        %5701 = vmatpush.bf16.msra.mxu0 %v5665
        %5702 = vmatpush.bf16.msra.mxu0 %v5663
        %5703 = vmatmul.bf16.gmra.mxu0 %v5597
        %v5704 = vpop.f32.mrf.mxu0
        %v5705 = vadd.f32 0.0, %v5704
        %v5706 = vpop.f32.mrf.mxu0
        %5707 = vdwg.mxu0
        %5708 = vmatpush.bf16.msra.mxu0 %v5678
        %5709 = vmatpush.bf16.msra.mxu0 %v5676
        %5710 = vmatpush.bf16.msra.mxu0 %v5674
        %5711 = vmatpush.bf16.msra.mxu0 %v5672
        %5712 = vmatpush.bf16.msra.mxu0 %v5670
        %5713 = vmatpush.bf16.msra.mxu0 %v5668
        %5714 = vmatpush.bf16.msra.mxu0 %v5666
        %5715 = vmatpush.bf16.msra.mxu0 %v5664
        %5716 = vmatmul.bf16.gmra.mxu0 %v5597
        %v5717 = vpop.f32.mrf.mxu0
        %v5718 = vadd.f32 0.0, %v5717
        %v5719 = vpop.f32.mrf.mxu0
        %5720 = vdwg.mxu0
        %v5721 = vadd.f32 %v5594, %v5705
        %v5722 = vadd.f32 %v5595, %v5718
        %v5723 = vld [vmem:[#allocation4 + $0x9] sm:$0x7]
        %v5724 = vpack.c.bf16 %v5723, %v5723
        %s5725 = scalar_lea.vmem [#allocation11], 1152
        %v5726 = vld [vmem:[%s5725] sm:$0xff]
        %v5727 = vld [vmem:[%s5725 + $0x8] sm:$0xff]
        %v5728 = vld [vmem:[%s5725 + $0x10] sm:$0xff]
        %v5729 = vld [vmem:[%s5725 + $0x18] sm:$0xff]
        %v5730 = vld [vmem:[%s5725 + $0x20] sm:$0xff]
        %v5731 = vld [vmem:[%s5725 + $0x28] sm:$0xff]
        %v5732 = vld [vmem:[%s5725 + $0x30] sm:$0xff]
        %v5733 = vld [vmem:[%s5725 + $0x38] sm:$0xff]
        %v5734 = vld [vmem:[%s5725 + $0x40] sm:$0xff]
        %v5735 = vld [vmem:[%s5725 + $0x48] sm:$0xff]
        %v5736 = vld [vmem:[%s5725 + $0x50] sm:$0xff]
        %v5737 = vld [vmem:[%s5725 + $0x58] sm:$0xff]
        %v5738 = vld [vmem:[%s5725 + $0x60] sm:$0xff]
        %v5739 = vld [vmem:[%s5725 + $0x68] sm:$0xff]
        %v5740 = vld [vmem:[%s5725 + $0x70] sm:$0xff]
        %v5741 = vld [vmem:[%s5725 + $0x78] sm:$0xff]
        %v5758 = vunpack.c.l.b16 %v5726
        %v5759 = vunpack.c.h.b16 %v5726
        %v5760 = vunpack.c.l.b16 %v5727
        %v5761 = vunpack.c.h.b16 %v5727
        %v5762 = vunpack.c.l.b16 %v5728
        %v5763 = vunpack.c.h.b16 %v5728
        %v5764 = vunpack.c.l.b16 %v5729
        %v5765 = vunpack.c.h.b16 %v5729
        %v5766 = vunpack.c.l.b16 %v5730
        %v5767 = vunpack.c.h.b16 %v5730
        %v5768 = vunpack.c.l.b16 %v5731
        %v5769 = vunpack.c.h.b16 %v5731
        %v5770 = vunpack.c.l.b16 %v5732
        %v5771 = vunpack.c.h.b16 %v5732
        %v5772 = vunpack.c.l.b16 %v5733
        %v5773 = vunpack.c.h.b16 %v5733
        %v5774 = vunpack.c.l.b16 %v5734
        %v5775 = vunpack.c.h.b16 %v5734
        %v5776 = vunpack.c.l.b16 %v5735
        %v5777 = vunpack.c.h.b16 %v5735
        %v5778 = vunpack.c.l.b16 %v5736
        %v5779 = vunpack.c.h.b16 %v5736
        %v5780 = vunpack.c.l.b16 %v5737
        %v5781 = vunpack.c.h.b16 %v5737
        %v5782 = vunpack.c.l.b16 %v5738
        %v5783 = vunpack.c.h.b16 %v5738
        %v5784 = vunpack.c.l.b16 %v5739
        %v5785 = vunpack.c.h.b16 %v5739
        %v5786 = vunpack.c.l.b16 %v5740
        %v5787 = vunpack.c.h.b16 %v5740
        %v5788 = vunpack.c.l.b16 %v5741
        %v5789 = vunpack.c.h.b16 %v5741
        %v5790 = vpack.c.b16 %v5760, %v5758
        %v5791 = vpack.c.b16 %v5761, %v5759
        %v5792 = vpack.c.b16 %v5764, %v5762
        %v5793 = vpack.c.b16 %v5765, %v5763
        %v5794 = vpack.c.b16 %v5768, %v5766
        %v5795 = vpack.c.b16 %v5769, %v5767
        %v5796 = vpack.c.b16 %v5772, %v5770
        %v5797 = vpack.c.b16 %v5773, %v5771
        %v5798 = vpack.c.b16 %v5776, %v5774
        %v5799 = vpack.c.b16 %v5777, %v5775
        %v5800 = vpack.c.b16 %v5780, %v5778
        %v5801 = vpack.c.b16 %v5781, %v5779
        %v5802 = vpack.c.b16 %v5784, %v5782
        %v5803 = vpack.c.b16 %v5785, %v5783
        %v5804 = vpack.c.b16 %v5788, %v5786
        %v5805 = vpack.c.b16 %v5789, %v5787
        %5822 = vmatpush.bf16.msra.mxu0 %v5804
        %5823 = vmatpush.bf16.msra.mxu0 %v5802
        %5824 = vmatpush.bf16.msra.mxu0 %v5800
        %5825 = vmatpush.bf16.msra.mxu0 %v5798
        %5826 = vmatpush.bf16.msra.mxu0 %v5796
        %5827 = vmatpush.bf16.msra.mxu0 %v5794
        %5828 = vmatpush.bf16.msra.mxu0 %v5792
        %5829 = vmatpush.bf16.msra.mxu0 %v5790
        %5830 = vmatmul.bf16.gmra.mxu0 %v5724
        %v5831 = vpop.f32.mrf.mxu0
        %v5832 = vadd.f32 0.0, %v5831
        %v5833 = vpop.f32.mrf.mxu0
        %5834 = vdwg.mxu0
        %5835 = vmatpush.bf16.msra.mxu0 %v5805
        %5836 = vmatpush.bf16.msra.mxu0 %v5803
        %5837 = vmatpush.bf16.msra.mxu0 %v5801
        %5838 = vmatpush.bf16.msra.mxu0 %v5799
        %5839 = vmatpush.bf16.msra.mxu0 %v5797
        %5840 = vmatpush.bf16.msra.mxu0 %v5795
        %5841 = vmatpush.bf16.msra.mxu0 %v5793
        %5842 = vmatpush.bf16.msra.mxu0 %v5791
        %5843 = vmatmul.bf16.gmra.mxu0 %v5724
        %v5844 = vpop.f32.mrf.mxu0
        %v5845 = vadd.f32 0.0, %v5844
        %v5846 = vpop.f32.mrf.mxu0
        %5847 = vdwg.mxu0
        %v5848 = vadd.f32 %v5721, %v5832
        %v5849 = vadd.f32 %v5722, %v5845
        %v5851 = vperm.slane %v4580, 0
        %v5852 = vperm.slane %v4580, 1
        %v5855 = vadd.f32 %v5848, %v5851
        %v5856 = vadd.f32 %v5849, %v5852
        %vm5857 = vcmp.gt.f32.partialorder %v5855, 0.0
        %vm5858 = vcmp.gt.f32.partialorder %v5856, 0.0
        %v5859 = vmin.f32 %v5855, 0.0
        %v5860 = vmin.f32 %v5856, 0.0
        %v5861 = vmul.f32 %v5859, 1.442695
        %v5862 = vpow.pop %v5861
        %v5863 = vmul.f32 %v5860, 1.442695
        %v5864 = vpow.pop %v5863
        %v5865 = vsub.f32 %v5862, 1.0
        %v5866 = vsub.f32 %v5864, 1.0
        %v5867 = vsel %vm5857, %v5855, %v5865
        %v5868 = vsel %vm5858, %v5856, %v5866
        %v5869 = vsel %vm2172, %v5867, -inf
        %v5870 = vrot.slane %v5869, 4
        %v5871 = vmax.f32 %v5869, %v5870
        %v5872 = vrot.slane %v5871, 2
        %v5873 = vmax.f32 %v5871, %v5872
        %v5874 = vrot.slane %v5873, 1
        %v5875 = vmax.f32 %v5873, %v5874
        %v5876 = vsel %vm2172, %v5868, -inf
        %v5877 = vrot.slane %v5876, 4
        %v5878 = vmax.f32 %v5876, %v5877
        %v5879 = vrot.slane %v5878, 2
        %v5880 = vmax.f32 %v5878, %v5879
        %v5881 = vrot.slane %v5880, 1
        %v5882 = vmax.f32 %v5880, %v5881
        %v5884 = vperm.slane %v4582, 0
        %v5885 = vperm.slane %v4582, 1
        %v5888 = vmul.f32 %v5875, %v5884
        %v5889 = vmul.f32 %v5882, %v5885
        %v5891 = vperm.slane %v4584, 0
        %v5892 = vperm.slane %v4584, 1
        %v5895 = vadd.f32 %v5888, %v5891
        %v5896 = vadd.f32 %v5889, %v5892
        %v5897 = vpack.c.bf16 %v5895, %v5895
        %v5898 = vpack.c.bf16 %v5896, %v5896
        %v5899 = vld [vmem:[%s9] sm:$0xf]
        %v5900 = vld [vmem:[%s9 + $0x4] sm:$0xf]
        %v5901 = vld [vmem:[%s9 + $0x8] sm:$0xf]
        %v5902 = vld [vmem:[%s9 + $0xc] sm:$0xf]
        %v5903 = vld [vmem:[%s9 + $0x10] sm:$0xf]
        %v5904 = vld [vmem:[%s9 + $0x14] sm:$0xf]
        %v5905 = vld [vmem:[%s9 + $0x18] sm:$0xf]
        %v5906 = vld [vmem:[%s9 + $0x1c] sm:$0xf]
        %v5907 = vld [vmem:[%s9 + $0x20] sm:$0xf]
        %v5908 = vld [vmem:[%s9 + $0x24] sm:$0xf]
        %v5909 = vld [vmem:[%s9 + $0x28] sm:$0xf]
        %v5910 = vld [vmem:[%s9 + $0x2c] sm:$0xf]
        %v5911 = vld [vmem:[%s9 + $0x30] sm:$0xf]
        %v5912 = vld [vmem:[%s9 + $0x34] sm:$0xf]
        %v5913 = vld [vmem:[%s9 + $0x38] sm:$0xf]
        %v5914 = vld [vmem:[%s9 + $0x3c] sm:$0xf]
        %v5915 = vld [vmem:[%s9 + $0x40] sm:$0xf]
        %v5916 = vld [vmem:[%s9 + $0x44] sm:$0xf]
        %v5917 = vld [vmem:[%s9 + $0x48] sm:$0xf]
        %v5918 = vld [vmem:[%s9 + $0x4c] sm:$0xf]
        %v5919 = vld [vmem:[%s9 + $0x50] sm:$0xf]
        %v5920 = vld [vmem:[%s9 + $0x54] sm:$0xf]
        %v5921 = vld [vmem:[%s9 + $0x58] sm:$0xf]
        %v5922 = vld [vmem:[%s9 + $0x5c] sm:$0xf]
        %v5923 = vld [vmem:[%s9 + $0x60] sm:$0xf]
        %v5924 = vld [vmem:[%s9 + $0x64] sm:$0xf]
        %v5925 = vld [vmem:[%s9 + $0x68] sm:$0xf]
        %v5926 = vld [vmem:[%s9 + $0x6c] sm:$0xf]
        %v5927 = vld [vmem:[%s9 + $0x70] sm:$0xf]
        %v5928 = vld [vmem:[%s9 + $0x74] sm:$0xf]
        %v5929 = vld [vmem:[%s9 + $0x78] sm:$0xf]
        %v5930 = vld [vmem:[%s9 + $0x7c] sm:$0xf]
        %v5931 = vld [vmem:[%s10] sm:$0x1]
        %v5964 = vunpack.c.l.b16 %v5899
        %v5965 = vunpack.c.l.b16 %v5900
        %v5966 = vunpack.c.l.b16 %v5901
        %v5967 = vunpack.c.l.b16 %v5902
        %v5968 = vunpack.c.l.b16 %v5903
        %v5969 = vunpack.c.l.b16 %v5904
        %v5970 = vunpack.c.l.b16 %v5905
        %v5971 = vunpack.c.l.b16 %v5906
        %v5972 = vunpack.c.l.b16 %v5907
        %v5973 = vunpack.c.l.b16 %v5908
        %v5974 = vunpack.c.l.b16 %v5909
        %v5975 = vunpack.c.l.b16 %v5910
        %v5976 = vunpack.c.l.b16 %v5911
        %v5977 = vunpack.c.l.b16 %v5912
        %v5978 = vunpack.c.l.b16 %v5913
        %v5979 = vunpack.c.l.b16 %v5914
        %v5980 = vunpack.c.l.b16 %v5915
        %v5981 = vunpack.c.l.b16 %v5916
        %v5982 = vunpack.c.l.b16 %v5917
        %v5983 = vunpack.c.l.b16 %v5918
        %v5984 = vunpack.c.l.b16 %v5919
        %v5985 = vunpack.c.l.b16 %v5920
        %v5986 = vunpack.c.l.b16 %v5921
        %v5987 = vunpack.c.l.b16 %v5922
        %v5988 = vunpack.c.l.b16 %v5923
        %v5989 = vunpack.c.l.b16 %v5924
        %v5990 = vunpack.c.l.b16 %v5925
        %v5991 = vunpack.c.l.b16 %v5926
        %v5992 = vunpack.c.l.b16 %v5927
        %v5993 = vunpack.c.l.b16 %v5928
        %v5994 = vunpack.c.l.b16 %v5929
        %v5995 = vunpack.c.l.b16 %v5930
        %v5996 = vpack.c.b16 %v5965, %v5964
        %v5997 = vpack.c.b16 %v5967, %v5966
        %v5998 = vpack.c.b16 %v5969, %v5968
        %v5999 = vpack.c.b16 %v5971, %v5970
        %v6000 = vpack.c.b16 %v5973, %v5972
        %v6001 = vpack.c.b16 %v5975, %v5974
        %v6002 = vpack.c.b16 %v5977, %v5976
        %v6003 = vpack.c.b16 %v5979, %v5978
        %v6004 = vpack.c.b16 %v5981, %v5980
        %v6005 = vpack.c.b16 %v5983, %v5982
        %v6006 = vpack.c.b16 %v5985, %v5984
        %v6007 = vpack.c.b16 %v5987, %v5986
        %v6008 = vpack.c.b16 %v5989, %v5988
        %v6009 = vpack.c.b16 %v5991, %v5990
        %v6010 = vpack.c.b16 %v5993, %v5992
        %v6011 = vpack.c.b16 %v5995, %v5994
        %6028 = vmatpush.bf16.msra.mxu0 %v6003
        %6029 = vmatpush.bf16.msra.mxu0 %v6002
        %6030 = vmatpush.bf16.msra.mxu0 %v6001
        %6031 = vmatpush.bf16.msra.mxu0 %v6000
        %6032 = vmatpush.bf16.msra.mxu0 %v5999
        %6033 = vmatpush.bf16.msra.mxu0 %v5998
        %6034 = vmatpush.bf16.msra.mxu0 %v5997
        %6035 = vmatpush.bf16.msra.mxu0 %v5996
        %6036 = vmatmul.bf16.gmra.mxu0 %v5897
        %v6037 = vpop.f32.mrf.mxu0
        %v6038 = vadd.f32 %v5931, %v6037
        %v6039 = vpop.f32.mrf.mxu0
        %6040 = vdwg.mxu0
        %6041 = vmatpush.bf16.msra.mxu0 %v6011
        %6042 = vmatpush.bf16.msra.mxu0 %v6010
        %6043 = vmatpush.bf16.msra.mxu0 %v6009
        %6044 = vmatpush.bf16.msra.mxu0 %v6008
        %6045 = vmatpush.bf16.msra.mxu0 %v6007
        %6046 = vmatpush.bf16.msra.mxu0 %v6006
        %6047 = vmatpush.bf16.msra.mxu0 %v6005
        %6048 = vmatpush.bf16.msra.mxu0 %v6004
        %6049 = vmatmul.bf16.gmra.mxu0 %v5898
        %v6050 = vpop.f32.mrf.mxu0
        %v6051 = vadd.f32 %v6038, %v6050
        %v6052 = vpop.f32.mrf.mxu0
        %6053 = vdwg.mxu0
        %v6054 = vpack.c.bf16 %v6051, %v6051
        %v6055 = vld [vmem:[%s11] sm:$0xff]
        %v6056 = vld [vmem:[%s11 + $0x8] sm:$0xf]
        %v6057 = vld [vmem:[%s11 + $0xc] sm:$0xff]
        %v6058 = vld [vmem:[%s11 + $0x14] sm:$0xf]
        %v6059 = vld [vmem:[%s11 + $0x18] sm:$0xff]
        %v6060 = vld [vmem:[%s11 + $0x20] sm:$0xf]
        %v6061 = vld [vmem:[%s11 + $0x24] sm:$0xff]
        %v6062 = vld [vmem:[%s11 + $0x2c] sm:$0xf]
        %v6063 = vld [vmem:[%s11 + $0x30] sm:$0xff]
        %v6064 = vld [vmem:[%s11 + $0x38] sm:$0xf]
        %v6065 = vld [vmem:[%s11 + $0x3c] sm:$0xff]
        %v6066 = vld [vmem:[%s11 + $0x44] sm:$0xf]
        %v6067 = vld [vmem:[%s11 + $0x48] sm:$0xff]
        %v6068 = vld [vmem:[%s11 + $0x50] sm:$0xf]
        %v6069 = vld [vmem:[%s11 + $0x54] sm:$0xff]
        %v6070 = vld [vmem:[%s11 + $0x5c] sm:$0xf]
        %v6071 = vld [vmem:[%s11 + $0x60] sm:$0xff]
        %v6072 = vld [vmem:[%s11 + $0x68] sm:$0xf]
        %v6073 = vld [vmem:[%s11 + $0x6c] sm:$0xff]
        %v6074 = vld [vmem:[%s11 + $0x74] sm:$0xf]
        %v6075 = vld [vmem:[%s11 + $0x78] sm:$0xff]
        %v6076 = vld [vmem:[%s11 + $0x80] sm:$0xf]
        %v6077 = vld [vmem:[%s11 + $0x84] sm:$0xff]
        %v6078 = vld [vmem:[%s11 + $0x8c] sm:$0xf]
        %v6079 = vld [vmem:[%s11 + $0x90] sm:$0xff]
        %v6080 = vld [vmem:[%s11 + $0x98] sm:$0xf]
        %v6081 = vld [vmem:[%s11 + $0x9c] sm:$0xff]
        %v6082 = vld [vmem:[%s11 + $0xa4] sm:$0xf]
        %v6083 = vld [vmem:[%s11 + $0xa8] sm:$0xff]
        %v6084 = vld [vmem:[%s11 + $0xb0] sm:$0xf]
        %v6085 = vld [vmem:[%s11 + $0xb4] sm:$0xff]
        %v6086 = vld [vmem:[%s11 + $0xbc] sm:$0xf]
        %v6087 = vld [vmem:[%s12] sm:$0x7]
        %v6120 = vunpack.c.l.b16 %v6055
        %v6121 = vunpack.c.h.b16 %v6055
        %v6122 = vunpack.c.l.b16 %v6056
        %v6123 = vunpack.c.l.b16 %v6057
        %v6124 = vunpack.c.h.b16 %v6057
        %v6125 = vunpack.c.l.b16 %v6058
        %v6126 = vunpack.c.l.b16 %v6059
        %v6127 = vunpack.c.h.b16 %v6059
        %v6128 = vunpack.c.l.b16 %v6060
        %v6129 = vunpack.c.l.b16 %v6061
        %v6130 = vunpack.c.h.b16 %v6061
        %v6131 = vunpack.c.l.b16 %v6062
        %v6132 = vunpack.c.l.b16 %v6063
        %v6133 = vunpack.c.h.b16 %v6063
        %v6134 = vunpack.c.l.b16 %v6064
        %v6135 = vunpack.c.l.b16 %v6065
        %v6136 = vunpack.c.h.b16 %v6065
        %v6137 = vunpack.c.l.b16 %v6066
        %v6138 = vunpack.c.l.b16 %v6067
        %v6139 = vunpack.c.h.b16 %v6067
        %v6140 = vunpack.c.l.b16 %v6068
        %v6141 = vunpack.c.l.b16 %v6069
        %v6142 = vunpack.c.h.b16 %v6069
        %v6143 = vunpack.c.l.b16 %v6070
        %v6144 = vunpack.c.l.b16 %v6071
        %v6145 = vunpack.c.h.b16 %v6071
        %v6146 = vunpack.c.l.b16 %v6072
        %v6147 = vunpack.c.l.b16 %v6073
        %v6148 = vunpack.c.h.b16 %v6073
        %v6149 = vunpack.c.l.b16 %v6074
        %v6150 = vunpack.c.l.b16 %v6075
        %v6151 = vunpack.c.h.b16 %v6075
        %v6152 = vunpack.c.l.b16 %v6076
        %v6153 = vunpack.c.l.b16 %v6077
        %v6154 = vunpack.c.h.b16 %v6077
        %v6155 = vunpack.c.l.b16 %v6078
        %v6156 = vunpack.c.l.b16 %v6079
        %v6157 = vunpack.c.h.b16 %v6079
        %v6158 = vunpack.c.l.b16 %v6080
        %v6159 = vunpack.c.l.b16 %v6081
        %v6160 = vunpack.c.h.b16 %v6081
        %v6161 = vunpack.c.l.b16 %v6082
        %v6162 = vunpack.c.l.b16 %v6083
        %v6163 = vunpack.c.h.b16 %v6083
        %v6164 = vunpack.c.l.b16 %v6084
        %v6165 = vunpack.c.l.b16 %v6085
        %v6166 = vunpack.c.h.b16 %v6085
        %v6167 = vunpack.c.l.b16 %v6086
        %v6168 = vpack.c.b16 %v6123, %v6120
        %v6169 = vpack.c.b16 %v6124, %v6121
        %v6170 = vpack.c.b16 %v6125, %v6122
        %v6171 = vpack.c.b16 %v6129, %v6126
        %v6172 = vpack.c.b16 %v6130, %v6127
        %v6173 = vpack.c.b16 %v6131, %v6128
        %v6174 = vpack.c.b16 %v6135, %v6132
        %v6175 = vpack.c.b16 %v6136, %v6133
        %v6176 = vpack.c.b16 %v6137, %v6134
        %v6177 = vpack.c.b16 %v6141, %v6138
        %v6178 = vpack.c.b16 %v6142, %v6139
        %v6179 = vpack.c.b16 %v6143, %v6140
        %v6180 = vpack.c.b16 %v6147, %v6144
        %v6181 = vpack.c.b16 %v6148, %v6145
        %v6182 = vpack.c.b16 %v6149, %v6146
        %v6183 = vpack.c.b16 %v6153, %v6150
        %v6184 = vpack.c.b16 %v6154, %v6151
        %v6185 = vpack.c.b16 %v6155, %v6152
        %v6186 = vpack.c.b16 %v6159, %v6156
        %v6187 = vpack.c.b16 %v6160, %v6157
        %v6188 = vpack.c.b16 %v6161, %v6158
        %v6189 = vpack.c.b16 %v6165, %v6162
        %v6190 = vpack.c.b16 %v6166, %v6163
        %v6191 = vpack.c.b16 %v6167, %v6164
        %v6217 = vperm.slane %v6087, 0
        %v6218 = vperm.slane %v6087, 1
        %v6219 = vperm.slane %v6087, 2
        %6223 = vmatpush.bf16.msra.mxu0 %v6189
        %6224 = vmatpush.bf16.msra.mxu0 %v6186
        %6225 = vmatpush.bf16.msra.mxu0 %v6183
        %6226 = vmatpush.bf16.msra.mxu0 %v6180
        %6227 = vmatpush.bf16.msra.mxu0 %v6177
        %6228 = vmatpush.bf16.msra.mxu0 %v6174
        %6229 = vmatpush.bf16.msra.mxu0 %v6171
        %6230 = vmatpush.bf16.msra.mxu0 %v6168
        %6231 = vmatmul.bf16.gmra.mxu0 %v6054
        %v6232 = vpop.f32.mrf.mxu0
        %v6233 = vadd.f32 %v6217, %v6232
        %v6234 = vpop.f32.mrf.mxu0
        %6235 = vdwg.mxu0
        %6236 = vmatpush.bf16.msra.mxu0 %v6190
        %6237 = vmatpush.bf16.msra.mxu0 %v6187
        %6238 = vmatpush.bf16.msra.mxu0 %v6184
        %6239 = vmatpush.bf16.msra.mxu0 %v6181
        %6240 = vmatpush.bf16.msra.mxu0 %v6178
        %6241 = vmatpush.bf16.msra.mxu0 %v6175
        %6242 = vmatpush.bf16.msra.mxu0 %v6172
        %6243 = vmatpush.bf16.msra.mxu0 %v6169
        %6244 = vmatmul.bf16.gmra.mxu0 %v6054
        %v6245 = vpop.f32.mrf.mxu0
        %v6246 = vadd.f32 %v6218, %v6245
        %v6247 = vpop.f32.mrf.mxu0
        %6248 = vdwg.mxu0
        %6249 = vmatpush.bf16.msra.mxu0 %v6191
        %6250 = vmatpush.bf16.msra.mxu0 %v6188
        %6251 = vmatpush.bf16.msra.mxu0 %v6185
        %6252 = vmatpush.bf16.msra.mxu0 %v6182
        %6253 = vmatpush.bf16.msra.mxu0 %v6179
        %6254 = vmatpush.bf16.msra.mxu0 %v6176
        %6255 = vmatpush.bf16.msra.mxu0 %v6173
        %6256 = vmatpush.bf16.msra.mxu0 %v6170
        %6257 = vmatmul.bf16.gmra.mxu0 %v6054
        %v6258 = vpop.f32.mrf.mxu0
        %v6259 = vadd.f32 %v6219, %v6258
        %v6260 = vpop.f32.mrf.mxu0
        %6261 = vdwg.mxu0
        %v6262 = vld [vmem:[%s13] sm:$0x7]
        %v6263 = vadd.f32 %v6233, %v6262
        %v6264 = vxor.u32 %v6263, 2147483648
        %v6265 = vmul.f32 %v6264, 1.442695
        %v6266 = vpow.pop %v6265
        %v6267 = vadd.f32 %v6266, 1.0
        %v6268 = vrcp.pop %v6267
        %v6269 = vmul.f32 %v6267, %v6268
        %v6270 = vsub.f32 1.0, %v6269
        %v6271 = vmul.f32 %v6268, %v6270
        %v6272 = vadd.f32 %v6268, %v6271
        %vm6273 = vweird.f32 %v6267
        %vm6274 = vweird.f32 %v6268
        %vm6275 = vmor %vm6273, %vm6274
        %v6276 = vsel %vm6275, %v6268, %v6272
        %v6277 = vand.u32 2147483647, %v6267
        %vm6278 = vcmp.eq.f32.partialorder %v6277, 8.507059e+37
        %v6279 = vand.u32 %v6267, 2147483648
        %v6280 = vor.u32 1.1754944e-38, %v6279
        %v6281 = vsel %vm6278, %v6280, %v6276
        %v6282 = vmul.f32 1.0, %v6281
        %v6284 = vperm.slane %v6262, 1
        %v6286 = vadd.f32 %v6246, %v6284
        %v6287 = vxor.u32 %v6286, 2147483648
        %v6288 = vmul.f32 %v6287, 1.442695
        %v6289 = vpow.pop %v6288
        %v6290 = vadd.f32 %v6289, 1.0
        %v6291 = vrcp.pop %v6290
        %v6292 = vmul.f32 %v6290, %v6291
        %v6293 = vsub.f32 1.0, %v6292
        %v6294 = vmul.f32 %v6291, %v6293
        %v6295 = vadd.f32 %v6291, %v6294
        %vm6296 = vweird.f32 %v6290
        %vm6297 = vweird.f32 %v6291
        %vm6298 = vmor %vm6296, %vm6297
        %v6299 = vsel %vm6298, %v6291, %v6295
        %v6300 = vand.u32 2147483647, %v6290
        %vm6301 = vcmp.eq.f32.partialorder %v6300, 8.507059e+37
        %v6302 = vand.u32 %v6290, 2147483648
        %v6303 = vor.u32 1.1754944e-38, %v6302
        %v6304 = vsel %vm6301, %v6303, %v6299
        %v6305 = vmul.f32 1.0, %v6304
        %v6306 = vperm.slane %v6262, 2
        %v6308 = vmul.f32 %v6282, %v6306
        %v6309 = vadd.f32 %v6259, %v6308
        %v6310 = vtanh.pop %v6309
        %v6311 = vsub.f32 1.0, %v6305
        %v6312 = vmul.f32 %v6311, %v6310
        %v6313 = vpack.c.bf16 %v6312, %v6312
        %v6314 = vld [vmem:[%s14] sm:$0xf]
        %v6315 = vld [vmem:[%s14 + $0x4] sm:$0xf]
        %v6316 = vld [vmem:[%s14 + $0x8] sm:$0xf]
        %v6317 = vld [vmem:[%s14 + $0xc] sm:$0xf]
        %v6318 = vld [vmem:[%s14 + $0x10] sm:$0xf]
        %v6319 = vld [vmem:[%s14 + $0x14] sm:$0xf]
        %v6320 = vld [vmem:[%s14 + $0x18] sm:$0xf]
        %v6321 = vld [vmem:[%s14 + $0x1c] sm:$0xf]
        %v6322 = vld [vmem:[%s14 + $0x20] sm:$0xf]
        %v6323 = vld [vmem:[%s14 + $0x24] sm:$0xf]
        %v6324 = vld [vmem:[%s14 + $0x28] sm:$0xf]
        %v6325 = vld [vmem:[%s14 + $0x2c] sm:$0xf]
        %v6326 = vld [vmem:[%s14 + $0x30] sm:$0xf]
        %v6327 = vld [vmem:[%s14 + $0x34] sm:$0xf]
        %v6328 = vld [vmem:[%s14 + $0x38] sm:$0xf]
        %v6329 = vld [vmem:[%s14 + $0x3c] sm:$0xf]
        %v6330 = vld [vmem:[%s15] sm:$0x1]
        %v6347 = vunpack.c.l.b16 %v6314
        %v6348 = vunpack.c.l.b16 %v6315
        %v6349 = vunpack.c.l.b16 %v6316
        %v6350 = vunpack.c.l.b16 %v6317
        %v6351 = vunpack.c.l.b16 %v6318
        %v6352 = vunpack.c.l.b16 %v6319
        %v6353 = vunpack.c.l.b16 %v6320
        %v6354 = vunpack.c.l.b16 %v6321
        %v6355 = vunpack.c.l.b16 %v6322
        %v6356 = vunpack.c.l.b16 %v6323
        %v6357 = vunpack.c.l.b16 %v6324
        %v6358 = vunpack.c.l.b16 %v6325
        %v6359 = vunpack.c.l.b16 %v6326
        %v6360 = vunpack.c.l.b16 %v6327
        %v6361 = vunpack.c.l.b16 %v6328
        %v6362 = vunpack.c.l.b16 %v6329
        %v6363 = vpack.c.b16 %v6348, %v6347
        %v6364 = vpack.c.b16 %v6350, %v6349
        %v6365 = vpack.c.b16 %v6352, %v6351
        %v6366 = vpack.c.b16 %v6354, %v6353
        %v6367 = vpack.c.b16 %v6356, %v6355
        %v6368 = vpack.c.b16 %v6358, %v6357
        %v6369 = vpack.c.b16 %v6360, %v6359
        %v6370 = vpack.c.b16 %v6362, %v6361
        %6379 = vmatpush.bf16.msra.mxu0 %v6370
        %6380 = vmatpush.bf16.msra.mxu0 %v6369
        %6381 = vmatpush.bf16.msra.mxu0 %v6368
        %6382 = vmatpush.bf16.msra.mxu0 %v6367
        %6383 = vmatpush.bf16.msra.mxu0 %v6366
        %6384 = vmatpush.bf16.msra.mxu0 %v6365
        %6385 = vmatpush.bf16.msra.mxu0 %v6364
        %6386 = vmatpush.bf16.msra.mxu0 %v6363
        %6387 = vmatmul.bf16.gmra.mxu0 %v6313
        %v6388 = vpop.f32.mrf.mxu0
        %v6389 = vadd.f32 %v6330, %v6388
        %v6390 = vpop.f32.mrf.mxu0
        %6391 = vdwg.mxu0
        %6392 = vst [vmem:[%s580] sm:$0x1] %v6389
        %s6393 = sand.u32 %s382, 1
        %s6394 = scalar_lea.sflag [#allocation7], %s6393
        %s6395 = sand.u32 %s382, 1
        %s6396 = scalar_lea.vmem [#allocation13], %s6395
        // Predicated region
        $region101: #{cnn_gru_forward.1} parent=83 // pred_check
          %p6397 = pneg %p392
        $region102: #{cnn_gru_forward.1} parent=83 // pred_check_branch
          %6399 = sbr.rel (%p6397) target = $region104
        $region103: #{cnn_gru_forward.1} parent=83 // pred_region
          %6401 = vsyncadd %s6394, 0
          %s6402 = scalar_lea.hbm %s16, %s33
          %s6404 = sshll.u32 %s6396, 4
          %s6405 = int_to_ptr.vmem [resolvable:$true] %s6404
          %s6406 = sshll.u32 %s6402, 4
          %s6407 = int_to_ptr.hbm [resolvable:$true] %s6406
          %6409 = dma.vmem_to_hbm [thread:$0]  %s6405, 16, %s6407, %s6394
        $region104: #{cnn_gru_forward.1} parent=83 // pred_fallthru
          _
      $region84: #{cnn_gru_forward.1} parent=5 // pred_fallthru
        _
      %p6410 = scmp.le.s32.totalorder 2, %s28
      // Predicated region
      $region105: #{cnn_gru_forward.1} parent=5 // pred_check
        %p6411 = pneg %p6410
      $region106: #{cnn_gru_forward.1} parent=5 // pred_check_branch
        %6413 = sbr.rel (%p6411) target = $region108
      $region107: #{cnn_gru_forward.1} parent=5 // pred_region
        %s6414 = ssub.s32 %s28, 2
        // Predicated region
        $region109: #{cnn_gru_forward.1} parent=107 // pred_check
          %p6415 = pneg %p398
        $region110: #{cnn_gru_forward.1} parent=107 // pred_check_branch
          %6417 = sbr.rel (%p6415) target = $region112
        $region111: #{cnn_gru_forward.1} parent=107 // pred_region
          %s6418 = sand.u32 %s383, 1
          %s6419 = scalar_lea.sflag [#allocation7], %s6418
          %s6420 = sand.u32 %s383, 1
          %s6421 = scalar_lea.vmem [#allocation13], %s6420
          %6423 = dma.done %s6419, 16
        $region112: #{cnn_gru_forward.1} parent=107 // pred_fallthru
          _
      $region108: #{cnn_gru_forward.1} parent=5 // pred_fallthru
        _
    $region6: #{cnn_gru_forward.1} parent=1 // loop_footer
      %s32 = sadd.s32 1, %s28
    $region7: #{cnn_gru_forward.1} parent=1 // loop_footer_branch
      %27 = sbr.rel target = $region3
    $region8: #{cnn_gru_forward.1} parent=1 // loop_exit
      _
    %6424 = vsyncpa [#allocation6], 1
    %s6425 = scalar_lea.sflag [#allocation6], 1
    %6426 = vsyncpa %s6425, 1
    %6427 = vsyncpa [#allocation9], 1
    %6428 = vsyncpa [#allocation12], 1
    %6429 = vsyncpa [#allocation7], 1
    %s6430 = scalar_lea.sflag [#allocation7], 1
    %6431 = vsyncpa %s6430, 1

</llo_original>
